<compile_context>
chip_gen: v7x
topology: tpu7x:2x2x1
jax: 0.10.0
libtpu: 0.0.40
codegen_flags: <defaults>
</compile_context>

<pallas_src>
import math

import jax
import jax.numpy as jnp
from jax.experimental import pallas as pl
from jax.experimental.pallas import tpu as pltpu

NUM_LAYERS = 6
LN_EPS = 1e-5


# ----------------------------------------------------------------------------
# Fused Pallas kernel: 6 post-norm encoder layers + Linear->ReLU head
# ----------------------------------------------------------------------------
def fused_transform_kernel(x_ref, bias_ref,
                           wqkv_ref, bqkv_ref, wo_ref, bo_ref,
                           g1_ref, be1_ref, w1_ref, b1_ref,
                           w2_ref, b2_ref, g2_ref, be2_ref,
                           wh_ref, bh_ref, o_ref):
    """x_ref: (B, L, D); bias_ref: (B, 1, L) additive key-padding bias (0 / -1e9);
    wqkv: (NL, D, 3D) fused QKV (1/sqrt(D) folded into Q block); o_ref: (B*L, Npad)."""
    B, L, D = x_ref.shape
    NL = wqkv_ref.shape[0]
    BL = B * L

    x = x_ref[...].reshape(BL, D)          # (B*L, D) slab for all linear ops
    bias = bias_ref[...]                   # (B, 1, L)

    for li in range(NL):                   # static unroll; all weights VMEM-resident
        # --- fused QKV projection (attention scale pre-folded into Wq) ---
        qkv = jnp.dot(x, wqkv_ref[li], preferred_element_type=jnp.float32) + bqkv_ref[li]
        q = qkv[:, :D].reshape(B, L, D)
        k = qkv[:, D:2 * D].reshape(B, L, D)
        v = qkv[:, 2 * D:].reshape(B, L, D)

        # --- single-head attention, batched over B (no explicit k transpose) ---
        s = jnp.einsum('bqd,bkd->bqk', q, k,
                       preferred_element_type=jnp.float32) + bias        # (B, L, L)
        m = jnp.max(s, axis=-1, keepdims=True)
        p = jnp.exp(s - m)
        p = p * pl.reciprocal(jnp.sum(p, axis=-1, keepdims=True), approx=True)
        ctx = jnp.einsum('bqk,bkd->bqd', p, v,
                         preferred_element_type=jnp.float32).reshape(BL, D)

        attn = jnp.dot(ctx, wo_ref[li], preferred_element_type=jnp.float32) + bo_ref[li]

        # --- residual + layernorm 1 ---
        h = x + attn
        mu = jnp.mean(h, axis=-1, keepdims=True)
        var = jnp.mean((h - mu) ** 2, axis=-1, keepdims=True)
        h = (h - mu) * jax.lax.rsqrt(var + LN_EPS) * g1_ref[li] + be1_ref[li]

        # --- feed-forward (D -> 2D -> D, ReLU) ---
        ff = jnp.dot(h, w1_ref[li], preferred_element_type=jnp.float32) + b1_ref[li]
        ff = jnp.maximum(ff, 0.0)
        ff = jnp.dot(ff, w2_ref[li], preferred_element_type=jnp.float32) + b2_ref[li]

        # --- residual + layernorm 2 ---
        h2 = h + ff
        mu2 = jnp.mean(h2, axis=-1, keepdims=True)
        var2 = jnp.mean((h2 - mu2) ** 2, axis=-1, keepdims=True)
        x = (h2 - mu2) * jax.lax.rsqrt(var2 + LN_EPS) * g2_ref[li] + be2_ref[li]

    # --- head: Linear(nin -> nout padded to 128 lanes) + ReLU (dropout = identity) ---
    y = jnp.dot(x, wh_ref[...], preferred_element_type=jnp.float32) + bh_ref[...]
    o_ref[...] = jnp.maximum(y, 0.0)


# ----------------------------------------------------------------------------
# Wrappers / glue
# ----------------------------------------------------------------------------
def _full_spec(a):
    n = a.ndim
    return pl.BlockSpec(a.shape, lambda i, _n=n: (0,) * _n)


def run_fused_transform(x, bias, packed):
    B, L, D = x.shape
    npad = packed["wh"].shape[1]
    order = ("wqkv", "bqkv", "wo", "bo", "g1", "be1",
             "w1", "b1", "w2", "b2", "g2", "be2", "wh", "bh")
    args = [x, bias] + [packed[k] for k in order]
    return pl.pallas_call(
        fused_transform_kernel,
        out_shape=jax.ShapeDtypeStruct((B * L, npad), jnp.float32),
        grid=(1,),
        in_specs=[_full_spec(a) for a in args],
        out_specs=pl.BlockSpec((B * L, npad), lambda i: (0, 0)),
        compiler_params=pltpu.CompilerParams(dimension_semantics=("arbitrary",)),
    )(*args)


def positional_encoding(L, dim_model, max_wavelength=10000.0):
    # Matches the PyTorch PositionalEncoder (exponent divided by n_sin-1 / n_cos-1).
    n_sin = dim_model // 2
    n_cos = dim_model - n_sin
    scale = max_wavelength / (2.0 * math.pi)
    sin_term = scale ** (jnp.arange(n_sin, dtype=jnp.float32) / (n_sin - 1))
    cos_term = scale ** (jnp.arange(n_cos, dtype=jnp.float32) / (n_cos - 1))
    pos = jnp.arange(L, dtype=jnp.float32)[:, None]            # (L, 1)
    sin_pos = jnp.sin(pos / sin_term[None, :])                 # (L, n_sin)
    cos_pos = jnp.cos(pos / cos_term[None, :])                 # (L, n_cos)
    return jnp.concatenate([sin_pos, cos_pos], axis=1)         # (L, dim_model)


def init_params(key, nin, nout, words, num_layers=NUM_LAYERS):
    std = 0.02
    ff = 2 * nin
    ks = jax.random.split(key, 8)
    emb = jax.random.normal(ks[0], (words, nin), jnp.float32) * std
    emb = emb.at[0].set(0.0)               # padding_idx = 0
    return dict(
        emb=emb,
        wq=jax.random.normal(ks[1], (num_layers, nin, nin), jnp.float32) * std,
        wk=jax.random.normal(ks[2], (num_layers, nin, nin), jnp.float32) * std,
        wv=jax.random.normal(ks[3], (num_layers, nin, nin), jnp.float32) * std,
        wo=jax.random.normal(ks[4], (num_layers, nin, nin), jnp.float32) * std,
        bq=jnp.zeros((num_layers, 1, nin), jnp.float32),
        bk=jnp.zeros((num_layers, 1, nin), jnp.float32),
        bv=jnp.zeros((num_layers, 1, nin), jnp.float32),
        bo=jnp.zeros((num_layers, 1, nin), jnp.float32),
        g1=jnp.ones((num_layers, 1, nin), jnp.float32),
        be1=jnp.zeros((num_layers, 1, nin), jnp.float32),
        w1=jax.random.normal(ks[5], (num_layers, nin, ff), jnp.float32) * std,
        b1=jnp.zeros((num_layers, 1, ff), jnp.float32),
        w2=jax.random.normal(ks[6], (num_layers, ff, nin), jnp.float32) * std,
        b2=jnp.zeros((num_layers, 1, nin), jnp.float32),
        g2=jnp.ones((num_layers, 1, nin), jnp.float32),
        be2=jnp.zeros((num_layers, 1, nin), jnp.float32),
        head_w=jax.random.normal(ks[7], (nin, nout), jnp.float32) * std,
        head_b=jnp.zeros((1, nout), jnp.float32),
    )


def pack_params(p):
    """Fold attention scale into Wq, fuse QKV, and pad the head to a lane-dense width."""
    nin = p["wq"].shape[1]
    nout = p["head_w"].shape[1]
    scale = 1.0 / math.sqrt(float(nin))     # nhead = 1 -> head_dim = nin
    wqkv = jnp.concatenate([p["wq"] * scale, p["wk"], p["wv"]], axis=2)   # (NL, D, 3D)
    bqkv = jnp.concatenate([p["bq"] * scale, p["bk"], p["bv"]], axis=2)   # (NL, 1, 3D)
    npad = ((nout + 127) // 128) * 128
    wh = jnp.zeros((nin, npad), jnp.float32).at[:, :nout].set(p["head_w"])
    bh = jnp.zeros((1, npad), jnp.float32).at[:, :nout].set(p["head_b"])
    return dict(wqkv=wqkv, bqkv=bqkv, wo=p["wo"], bo=p["bo"],
                g1=p["g1"], be1=p["be1"], w1=p["w1"], b1=p["b1"],
                w2=p["w2"], b2=p["b2"], g2=p["g2"], be2=p["be2"],
                wh=wh, bh=bh)


def embedding_transform_forward(tokens, params):
    """tokens: (B, L, 1) int32 -> (B, L, nout) f32 (eval mode: dropout = identity)."""
    B, L, _ = tokens.shape
    emb = params["emb"]
    nin = emb.shape[1]
    nout = params["head_w"].shape[1]

    # mask = ~x.sum(dim=2).bool(): True where token == 0 (padding)
    pad_mask = (tokens.sum(axis=2) == 0)                                       # (B, L)
    bias = jnp.where(pad_mask, jnp.float32(-1e9), jnp.float32(0.0))[:, None, :]  # (B, 1, L)

    # embedding lookup (gather) + positional encoding stay in plain JAX glue
    x = jnp.take(emb, tokens[..., 0], axis=0)                                  # (B, L, nin)
    x = x + positional_encoding(L, nin)[None, :, :]

    packed = pack_params(params)
    y = run_fused_transform(x.astype(jnp.float32), bias, packed)               # (B*L, npad)
    return y[:, :nout].reshape(B, L, nout)


if __name__ == "__main__":
    B, L = 2, 8
    NIN, NOUT = 32, 16
    WORDS = 257

    key = jax.random.PRNGKey(0)
    k_tok, k_par = jax.random.split(key)

    tokens = jax.random.randint(k_tok, (B, L, 1), 1, WORDS, dtype=jnp.int32)
    # add some padding positions (token 0) to exercise the key-padding mask
    tokens = tokens.at[0, L - 1, 0].set(0)
    tokens = tokens.at[1, L - 2, 0].set(0)
    tokens = tokens.at[1, L - 1, 0].set(0)

    params = init_params(k_par, NIN, NOUT, WORDS, NUM_LAYERS)

    out = jax.block_until_ready(embedding_transform_forward(tokens, params))

    assert out.shape == (B, L, NOUT)
    assert bool(jnp.all(jnp.isfinite(out)))
    print("KERNEL_OK")
</pallas_src>

<mosaic_0001>
module attributes {stable_mosaic.version = 11 : i64} {
  func.func @fused_transform_kernel(%arg0: i32, %arg1: memref<2x8x32xf32, #tpu.memory_space<vmem>>, %arg2: memref<2x1x8xf32, #tpu.memory_space<vmem>>, %arg3: memref<6x32x96xf32, #tpu.memory_space<vmem>>, %arg4: memref<6x1x96xf32, #tpu.memory_space<vmem>>, %arg5: memref<6x32x32xf32, #tpu.memory_space<vmem>>, %arg6: memref<6x1x32xf32, #tpu.memory_space<vmem>>, %arg7: memref<6x1x32xf32, #tpu.memory_space<vmem>>, %arg8: memref<6x1x32xf32, #tpu.memory_space<vmem>>, %arg9: memref<6x32x64xf32, #tpu.memory_space<vmem>>, %arg10: memref<6x1x64xf32, #tpu.memory_space<vmem>>, %arg11: memref<6x64x32xf32, #tpu.memory_space<vmem>>, %arg12: memref<6x1x32xf32, #tpu.memory_space<vmem>>, %arg13: memref<6x1x32xf32, #tpu.memory_space<vmem>>, %arg14: memref<6x1x32xf32, #tpu.memory_space<vmem>>, %arg15: memref<32x128xf32, #tpu.memory_space<vmem>>, %arg16: memref<1x128xf32, #tpu.memory_space<vmem>>, %arg17: memref<16x128xf32, #tpu.memory_space<vmem>>) attributes {dimension_semantics = [#tpu.dimension_semantics<arbitrary>], iteration_bounds = array<i64: 1>, scalar_prefetch = 0 : i64, scratch_operands = 0 : i64, tpu.core_type = #tpu.core_type<tc>, window_params = [{pipeline_mode = #tpu.pipeline_mode<synchronous>, transform_indices = @transform_0, window_bounds = array<i64: 2, 8, 32>}, {pipeline_mode = #tpu.pipeline_mode<synchronous>, transform_indices = @transform_1, window_bounds = array<i64: 2, 1, 8>}, {pipeline_mode = #tpu.pipeline_mode<synchronous>, transform_indices = @transform_2, window_bounds = array<i64: 6, 32, 96>}, {pipeline_mode = #tpu.pipeline_mode<synchronous>, transform_indices = @transform_3, window_bounds = array<i64: 6, 1, 96>}, {pipeline_mode = #tpu.pipeline_mode<synchronous>, transform_indices = @transform_4, window_bounds = array<i64: 6, 32, 32>}, {pipeline_mode = #tpu.pipeline_mode<synchronous>, transform_indices = @transform_5, window_bounds = array<i64: 6, 1, 32>}, {pipeline_mode = #tpu.pipeline_mode<synchronous>, transform_indices = @transform_6, window_bounds = array<i64: 6, 1, 32>}, {pipeline_mode = #tpu.pipeline_mode<synchronous>, transform_indices = @transform_7, window_bounds = array<i64: 6, 1, 32>}, {pipeline_mode = #tpu.pipeline_mode<synchronous>, transform_indices = @transform_8, window_bounds = array<i64: 6, 32, 64>}, {pipeline_mode = #tpu.pipeline_mode<synchronous>, transform_indices = @transform_9, window_bounds = array<i64: 6, 1, 64>}, {pipeline_mode = #tpu.pipeline_mode<synchronous>, transform_indices = @transform_10, window_bounds = array<i64: 6, 64, 32>}, {pipeline_mode = #tpu.pipeline_mode<synchronous>, transform_indices = @transform_11, window_bounds = array<i64: 6, 1, 32>}, {pipeline_mode = #tpu.pipeline_mode<synchronous>, transform_indices = @transform_12, window_bounds = array<i64: 6, 1, 32>}, {pipeline_mode = #tpu.pipeline_mode<synchronous>, transform_indices = @transform_13, window_bounds = array<i64: 6, 1, 32>}, {pipeline_mode = #tpu.pipeline_mode<synchronous>, transform_indices = @transform_14, window_bounds = array<i64: 32, 128>}, {pipeline_mode = #tpu.pipeline_mode<synchronous>, transform_indices = @transform_15, window_bounds = array<i64: 1, 128>}, {pipeline_mode = #tpu.pipeline_mode<synchronous>, transform_indices = @transform_16, window_bounds = array<i64: 16, 128>}]} {
    %c0 = arith.constant 0 : index
    %c0_0 = arith.constant 0 : index
    %c0_1 = arith.constant 0 : index
    %0 = vector.load %arg1[%c0, %c0_0, %c0_1] : memref<2x8x32xf32, #tpu.memory_space<vmem>>, vector<2x8x32xf32>
    %1 = vector.shape_cast %0 : vector<2x8x32xf32> to vector<16x32xf32>
    %c0_2 = arith.constant 0 : index
    %c0_3 = arith.constant 0 : index
    %c0_4 = arith.constant 0 : index
    %2 = vector.load %arg2[%c0_2, %c0_3, %c0_4] : memref<2x1x8xf32, #tpu.memory_space<vmem>>, vector<2x1x8xf32>
    %c0_5 = arith.constant 0 : index
    %c0_6 = arith.constant 0 : index
    %c0_7 = arith.constant 0 : index
    %3 = vector.load %arg3[%c0_5, %c0_6, %c0_7] : memref<6x32x96xf32, #tpu.memory_space<vmem>>, vector<1x32x96xf32>
    %4 = vector.shape_cast %3 : vector<1x32x96xf32> to vector<32x96xf32>
    %cst = arith.constant dense<0.000000e+00> : vector<16x96xf32>
    %5 = tpu.matmul %1, %4, %cst {dimension_numbers = #tpu.dot_dimension_numbers<[1], [0], [0], [1], [0, 0, 1, 1], [], []>} : vector<16x32xf32>, vector<32x96xf32>, vector<16x96xf32> -> vector<16x96xf32>
    %c0_8 = arith.constant 0 : index
    %c0_9 = arith.constant 0 : index
    %c0_10 = arith.constant 0 : index
    %6 = vector.load %arg4[%c0_8, %c0_9, %c0_10] : memref<6x1x96xf32, #tpu.memory_space<vmem>>, vector<1x1x96xf32>
    %7 = vector.shape_cast %6 : vector<1x1x96xf32> to vector<1x96xf32>
    %8 = vector.broadcast %7 : vector<1x96xf32> to vector<16x96xf32>
    %9 = arith.addf %5, %8 : vector<16x96xf32>
    %10 = vector.extract_strided_slice %9 {offsets = [0, 0], sizes = [16, 32], strides = [1, 1]} : vector<16x96xf32> to vector<16x32xf32>
    %11 = vector.shape_cast %10 : vector<16x32xf32> to vector<2x8x32xf32>
    %12 = vector.extract_strided_slice %9 {offsets = [0, 32], sizes = [16, 32], strides = [1, 1]} : vector<16x96xf32> to vector<16x32xf32>
    %13 = vector.shape_cast %12 : vector<16x32xf32> to vector<2x8x32xf32>
    %14 = vector.extract_strided_slice %9 {offsets = [0, 64], sizes = [16, 32], strides = [1, 1]} : vector<16x96xf32> to vector<16x32xf32>
    %15 = vector.shape_cast %14 : vector<16x32xf32> to vector<2x8x32xf32>
    "tpu.trace_start"() <{level = 10 : i32, message = "bqd,bkd->bqk"}> : () -> ()
    %cst_11 = arith.constant dense<0.000000e+00> : vector<2x8x8xf32>
    %16 = tpu.matmul %11, %13, %cst_11 {dimension_numbers = #tpu.dot_dimension_numbers<[2], [2], [1], [1], [0, 0, 0, 1, 1, 1], [0], [0]>} : vector<2x8x32xf32>, vector<2x8x32xf32>, vector<2x8x8xf32> -> vector<2x8x8xf32>
    "tpu.trace_stop"() : () -> ()
    %17 = vector.broadcast %2 : vector<2x1x8xf32> to vector<2x8x8xf32>
    %18 = arith.addf %16, %17 : vector<2x8x8xf32>
    %cst_12 = arith.constant dense<0xFF800000> : vector<2x8xf32>
    %19 = vector.multi_reduction <maximumf>, %18, %cst_12 [2] : vector<2x8x8xf32> to vector<2x8xf32>
    %20 = vector.shape_cast %19 : vector<2x8xf32> to vector<2x8x1xf32>
    %21 = vector.broadcast %20 : vector<2x8x1xf32> to vector<2x8x8xf32>
    %22 = arith.subf %18, %21 : vector<2x8x8xf32>
    %23 = math.exp %22 : vector<2x8x8xf32>
    %cst_13 = arith.constant dense<0.000000e+00> : vector<2x8xf32>
    %24 = vector.multi_reduction <add>, %23, %cst_13 [2] : vector<2x8x8xf32> to vector<2x8xf32>
    %25 = vector.shape_cast %24 : vector<2x8xf32> to vector<2x8x1xf32>
    %26 = tpu.reciprocal %25 {approx = true} : vector<2x8x1xf32> -> vector<2x8x1xf32>
    %27 = vector.broadcast %26 : vector<2x8x1xf32> to vector<2x8x8xf32>
    %28 = arith.mulf %23, %27 : vector<2x8x8xf32>
    "tpu.trace_start"() <{level = 10 : i32, message = "bqk,bkd->bqd"}> : () -> ()
    %cst_14 = arith.constant dense<0.000000e+00> : vector<2x8x32xf32>
    %29 = tpu.matmul %28, %15, %cst_14 {dimension_numbers = #tpu.dot_dimension_numbers<[2], [1], [1], [2], [0, 0, 0, 1, 1, 2], [0], [0]>} : vector<2x8x8xf32>, vector<2x8x32xf32>, vector<2x8x32xf32> -> vector<2x8x32xf32>
    "tpu.trace_stop"() : () -> ()
    %30 = vector.shape_cast %29 : vector<2x8x32xf32> to vector<16x32xf32>
    %c0_15 = arith.constant 0 : index
    %c0_16 = arith.constant 0 : index
    %c0_17 = arith.constant 0 : index
    %31 = vector.load %arg5[%c0_15, %c0_16, %c0_17] : memref<6x32x32xf32, #tpu.memory_space<vmem>>, vector<1x32x32xf32>
    %32 = vector.shape_cast %31 : vector<1x32x32xf32> to vector<32x32xf32>
    %cst_18 = arith.constant dense<0.000000e+00> : vector<16x32xf32>
    %33 = tpu.matmul %30, %32, %cst_18 {dimension_numbers = #tpu.dot_dimension_numbers<[1], [0], [0], [1], [0, 0, 1, 1], [], []>} : vector<16x32xf32>, vector<32x32xf32>, vector<16x32xf32> -> vector<16x32xf32>
    %c0_19 = arith.constant 0 : index
    %c0_20 = arith.constant 0 : index
    %c0_21 = arith.constant 0 : index
    %34 = vector.load %arg6[%c0_19, %c0_20, %c0_21] : memref<6x1x32xf32, #tpu.memory_space<vmem>>, vector<1x1x32xf32>
    %35 = vector.shape_cast %34 : vector<1x1x32xf32> to vector<1x32xf32>
    %36 = vector.broadcast %35 : vector<1x32xf32> to vector<16x32xf32>
    %37 = arith.addf %33, %36 : vector<16x32xf32>
    %38 = arith.addf %1, %37 : vector<16x32xf32>
    %cst_22 = arith.constant dense<0.000000e+00> : vector<16xf32>
    %39 = vector.multi_reduction <add>, %38, %cst_22 [1] : vector<16x32xf32> to vector<16xf32>
    %40 = vector.shape_cast %39 : vector<16xf32> to vector<16x1xf32>
    %cst_23 = arith.constant 3.200000e+01 : f32
    %41 = vector.broadcast %cst_23 : f32 to vector<16x1xf32>
    %42 = arith.divf %40, %41 : vector<16x1xf32>
    %43 = vector.broadcast %42 : vector<16x1xf32> to vector<16x32xf32>
    %44 = arith.subf %38, %43 : vector<16x32xf32>
    %45 = arith.mulf %44, %44 : vector<16x32xf32>
    %cst_24 = arith.constant dense<0.000000e+00> : vector<16xf32>
    %46 = vector.multi_reduction <add>, %45, %cst_24 [1] : vector<16x32xf32> to vector<16xf32>
    %47 = vector.shape_cast %46 : vector<16xf32> to vector<16x1xf32>
    %cst_25 = arith.constant 3.200000e+01 : f32
    %48 = vector.broadcast %cst_25 : f32 to vector<16x1xf32>
    %49 = arith.divf %47, %48 : vector<16x1xf32>
    %50 = vector.broadcast %42 : vector<16x1xf32> to vector<16x32xf32>
    %51 = arith.subf %38, %50 : vector<16x32xf32>
    %cst_26 = arith.constant 9.99999974E-6 : f32
    %52 = vector.broadcast %cst_26 : f32 to vector<16x1xf32>
    %53 = arith.addf %49, %52 : vector<16x1xf32>
    %54 = math.rsqrt %53 : vector<16x1xf32>
    %55 = vector.broadcast %54 : vector<16x1xf32> to vector<16x32xf32>
    %56 = arith.mulf %51, %55 : vector<16x32xf32>
    %c0_27 = arith.constant 0 : index
    %c0_28 = arith.constant 0 : index
    %c0_29 = arith.constant 0 : index
    %57 = vector.load %arg7[%c0_27, %c0_28, %c0_29] : memref<6x1x32xf32, #tpu.memory_space<vmem>>, vector<1x1x32xf32>
    %58 = vector.shape_cast %57 : vector<1x1x32xf32> to vector<1x32xf32>
    %59 = vector.broadcast %58 : vector<1x32xf32> to vector<16x32xf32>
    %60 = arith.mulf %56, %59 : vector<16x32xf32>
    %c0_30 = arith.constant 0 : index
    %c0_31 = arith.constant 0 : index
    %c0_32 = arith.constant 0 : index
    %61 = vector.load %arg8[%c0_30, %c0_31, %c0_32] : memref<6x1x32xf32, #tpu.memory_space<vmem>>, vector<1x1x32xf32>
    %62 = vector.shape_cast %61 : vector<1x1x32xf32> to vector<1x32xf32>
    %63 = vector.broadcast %62 : vector<1x32xf32> to vector<16x32xf32>
    %64 = arith.addf %60, %63 : vector<16x32xf32>
    %c0_33 = arith.constant 0 : index
    %c0_34 = arith.constant 0 : index
    %c0_35 = arith.constant 0 : index
    %65 = vector.load %arg9[%c0_33, %c0_34, %c0_35] : memref<6x32x64xf32, #tpu.memory_space<vmem>>, vector<1x32x64xf32>
    %66 = vector.shape_cast %65 : vector<1x32x64xf32> to vector<32x64xf32>
    %cst_36 = arith.constant dense<0.000000e+00> : vector<16x64xf32>
    %67 = tpu.matmul %64, %66, %cst_36 {dimension_numbers = #tpu.dot_dimension_numbers<[1], [0], [0], [1], [0, 0, 1, 1], [], []>} : vector<16x32xf32>, vector<32x64xf32>, vector<16x64xf32> -> vector<16x64xf32>
    %c0_37 = arith.constant 0 : index
    %c0_38 = arith.constant 0 : index
    %c0_39 = arith.constant 0 : index
    %68 = vector.load %arg10[%c0_37, %c0_38, %c0_39] : memref<6x1x64xf32, #tpu.memory_space<vmem>>, vector<1x1x64xf32>
    %69 = vector.shape_cast %68 : vector<1x1x64xf32> to vector<1x64xf32>
    %70 = vector.broadcast %69 : vector<1x64xf32> to vector<16x64xf32>
    %71 = arith.addf %67, %70 : vector<16x64xf32>
    %cst_40 = arith.constant 0.000000e+00 : f32
    %72 = vector.broadcast %cst_40 : f32 to vector<16x64xf32>
    %73 = arith.maximumf %71, %72 : vector<16x64xf32>
    %c0_41 = arith.constant 0 : index
    %c0_42 = arith.constant 0 : index
    %c0_43 = arith.constant 0 : index
    %74 = vector.load %arg11[%c0_41, %c0_42, %c0_43] : memref<6x64x32xf32, #tpu.memory_space<vmem>>, vector<1x64x32xf32>
    %75 = vector.shape_cast %74 : vector<1x64x32xf32> to vector<64x32xf32>
    %cst_44 = arith.constant dense<0.000000e+00> : vector<16x32xf32>
    %76 = tpu.matmul %73, %75, %cst_44 {dimension_numbers = #tpu.dot_dimension_numbers<[1], [0], [0], [1], [0, 0, 1, 1], [], []>} : vector<16x64xf32>, vector<64x32xf32>, vector<16x32xf32> -> vector<16x32xf32>
    %c0_45 = arith.constant 0 : index
    %c0_46 = arith.constant 0 : index
    %c0_47 = arith.constant 0 : index
    %77 = vector.load %arg12[%c0_45, %c0_46, %c0_47] : memref<6x1x32xf32, #tpu.memory_space<vmem>>, vector<1x1x32xf32>
    %78 = vector.shape_cast %77 : vector<1x1x32xf32> to vector<1x32xf32>
    %79 = vector.broadcast %78 : vector<1x32xf32> to vector<16x32xf32>
    %80 = arith.addf %76, %79 : vector<16x32xf32>
    %81 = arith.addf %64, %80 : vector<16x32xf32>
    %cst_48 = arith.constant dense<0.000000e+00> : vector<16xf32>
    %82 = vector.multi_reduction <add>, %81, %cst_48 [1] : vector<16x32xf32> to vector<16xf32>
    %83 = vector.shape_cast %82 : vector<16xf32> to vector<16x1xf32>
    %cst_49 = arith.constant 3.200000e+01 : f32
    %84 = vector.broadcast %cst_49 : f32 to vector<16x1xf32>
    %85 = arith.divf %83, %84 : vector<16x1xf32>
    %86 = vector.broadcast %85 : vector<16x1xf32> to vector<16x32xf32>
    %87 = arith.subf %81, %86 : vector<16x32xf32>
    %88 = arith.mulf %87, %87 : vector<16x32xf32>
    %cst_50 = arith.constant dense<0.000000e+00> : vector<16xf32>
    %89 = vector.multi_reduction <add>, %88, %cst_50 [1] : vector<16x32xf32> to vector<16xf32>
    %90 = vector.shape_cast %89 : vector<16xf32> to vector<16x1xf32>
    %cst_51 = arith.constant 3.200000e+01 : f32
    %91 = vector.broadcast %cst_51 : f32 to vector<16x1xf32>
    %92 = arith.divf %90, %91 : vector<16x1xf32>
    %93 = vector.broadcast %85 : vector<16x1xf32> to vector<16x32xf32>
    %94 = arith.subf %81, %93 : vector<16x32xf32>
    %cst_52 = arith.constant 9.99999974E-6 : f32
    %95 = vector.broadcast %cst_52 : f32 to vector<16x1xf32>
    %96 = arith.addf %92, %95 : vector<16x1xf32>
    %97 = math.rsqrt %96 : vector<16x1xf32>
    %98 = vector.broadcast %97 : vector<16x1xf32> to vector<16x32xf32>
    %99 = arith.mulf %94, %98 : vector<16x32xf32>
    %c0_53 = arith.constant 0 : index
    %c0_54 = arith.constant 0 : index
    %c0_55 = arith.constant 0 : index
    %100 = vector.load %arg13[%c0_53, %c0_54, %c0_55] : memref<6x1x32xf32, #tpu.memory_space<vmem>>, vector<1x1x32xf32>
    %101 = vector.shape_cast %100 : vector<1x1x32xf32> to vector<1x32xf32>
    %102 = vector.broadcast %101 : vector<1x32xf32> to vector<16x32xf32>
    %103 = arith.mulf %99, %102 : vector<16x32xf32>
    %c0_56 = arith.constant 0 : index
    %c0_57 = arith.constant 0 : index
    %c0_58 = arith.constant 0 : index
    %104 = vector.load %arg14[%c0_56, %c0_57, %c0_58] : memref<6x1x32xf32, #tpu.memory_space<vmem>>, vector<1x1x32xf32>
    %105 = vector.shape_cast %104 : vector<1x1x32xf32> to vector<1x32xf32>
    %106 = vector.broadcast %105 : vector<1x32xf32> to vector<16x32xf32>
    %107 = arith.addf %103, %106 : vector<16x32xf32>
    %c1 = arith.constant 1 : index
    %c0_59 = arith.constant 0 : index
    %c0_60 = arith.constant 0 : index
    %108 = vector.load %arg3[%c1, %c0_59, %c0_60] : memref<6x32x96xf32, #tpu.memory_space<vmem>>, vector<1x32x96xf32>
    %109 = vector.shape_cast %108 : vector<1x32x96xf32> to vector<32x96xf32>
    %cst_61 = arith.constant dense<0.000000e+00> : vector<16x96xf32>
    %110 = tpu.matmul %107, %109, %cst_61 {dimension_numbers = #tpu.dot_dimension_numbers<[1], [0], [0], [1], [0, 0, 1, 1], [], []>} : vector<16x32xf32>, vector<32x96xf32>, vector<16x96xf32> -> vector<16x96xf32>
    %c1_62 = arith.constant 1 : index
    %c0_63 = arith.constant 0 : index
    %c0_64 = arith.constant 0 : index
    %111 = vector.load %arg4[%c1_62, %c0_63, %c0_64] : memref<6x1x96xf32, #tpu.memory_space<vmem>>, vector<1x1x96xf32>
    %112 = vector.shape_cast %111 : vector<1x1x96xf32> to vector<1x96xf32>
    %113 = vector.broadcast %112 : vector<1x96xf32> to vector<16x96xf32>
    %114 = arith.addf %110, %113 : vector<16x96xf32>
    %115 = vector.extract_strided_slice %114 {offsets = [0, 0], sizes = [16, 32], strides = [1, 1]} : vector<16x96xf32> to vector<16x32xf32>
    %116 = vector.shape_cast %115 : vector<16x32xf32> to vector<2x8x32xf32>
    %117 = vector.extract_strided_slice %114 {offsets = [0, 32], sizes = [16, 32], strides = [1, 1]} : vector<16x96xf32> to vector<16x32xf32>
    %118 = vector.shape_cast %117 : vector<16x32xf32> to vector<2x8x32xf32>
    %119 = vector.extract_strided_slice %114 {offsets = [0, 64], sizes = [16, 32], strides = [1, 1]} : vector<16x96xf32> to vector<16x32xf32>
    %120 = vector.shape_cast %119 : vector<16x32xf32> to vector<2x8x32xf32>
    "tpu.trace_start"() <{level = 10 : i32, message = "bqd,bkd->bqk"}> : () -> ()
    %cst_65 = arith.constant dense<0.000000e+00> : vector<2x8x8xf32>
    %121 = tpu.matmul %116, %118, %cst_65 {dimension_numbers = #tpu.dot_dimension_numbers<[2], [2], [1], [1], [0, 0, 0, 1, 1, 1], [0], [0]>} : vector<2x8x32xf32>, vector<2x8x32xf32>, vector<2x8x8xf32> -> vector<2x8x8xf32>
    "tpu.trace_stop"() : () -> ()
    %122 = vector.broadcast %2 : vector<2x1x8xf32> to vector<2x8x8xf32>
    %123 = arith.addf %121, %122 : vector<2x8x8xf32>
    %cst_66 = arith.constant dense<0xFF800000> : vector<2x8xf32>
    %124 = vector.multi_reduction <maximumf>, %123, %cst_66 [2] : vector<2x8x8xf32> to vector<2x8xf32>
    %125 = vector.shape_cast %124 : vector<2x8xf32> to vector<2x8x1xf32>
    %126 = vector.broadcast %125 : vector<2x8x1xf32> to vector<2x8x8xf32>
    %127 = arith.subf %123, %126 : vector<2x8x8xf32>
    %128 = math.exp %127 : vector<2x8x8xf32>
    %cst_67 = arith.constant dense<0.000000e+00> : vector<2x8xf32>
    %129 = vector.multi_reduction <add>, %128, %cst_67 [2] : vector<2x8x8xf32> to vector<2x8xf32>
    %130 = vector.shape_cast %129 : vector<2x8xf32> to vector<2x8x1xf32>
    %131 = tpu.reciprocal %130 {approx = true} : vector<2x8x1xf32> -> vector<2x8x1xf32>
    %132 = vector.broadcast %131 : vector<2x8x1xf32> to vector<2x8x8xf32>
    %133 = arith.mulf %128, %132 : vector<2x8x8xf32>
    "tpu.trace_start"() <{level = 10 : i32, message = "bqk,bkd->bqd"}> : () -> ()
    %cst_68 = arith.constant dense<0.000000e+00> : vector<2x8x32xf32>
    %134 = tpu.matmul %133, %120, %cst_68 {dimension_numbers = #tpu.dot_dimension_numbers<[2], [1], [1], [2], [0, 0, 0, 1, 1, 2], [0], [0]>} : vector<2x8x8xf32>, vector<2x8x32xf32>, vector<2x8x32xf32> -> vector<2x8x32xf32>
    "tpu.trace_stop"() : () -> ()
    %135 = vector.shape_cast %134 : vector<2x8x32xf32> to vector<16x32xf32>
    %c1_69 = arith.constant 1 : index
    %c0_70 = arith.constant 0 : index
    %c0_71 = arith.constant 0 : index
    %136 = vector.load %arg5[%c1_69, %c0_70, %c0_71] : memref<6x32x32xf32, #tpu.memory_space<vmem>>, vector<1x32x32xf32>
    %137 = vector.shape_cast %136 : vector<1x32x32xf32> to vector<32x32xf32>
    %cst_72 = arith.constant dense<0.000000e+00> : vector<16x32xf32>
    %138 = tpu.matmul %135, %137, %cst_72 {dimension_numbers = #tpu.dot_dimension_numbers<[1], [0], [0], [1], [0, 0, 1, 1], [], []>} : vector<16x32xf32>, vector<32x32xf32>, vector<16x32xf32> -> vector<16x32xf32>
    %c1_73 = arith.constant 1 : index
    %c0_74 = arith.constant 0 : index
    %c0_75 = arith.constant 0 : index
    %139 = vector.load %arg6[%c1_73, %c0_74, %c0_75] : memref<6x1x32xf32, #tpu.memory_space<vmem>>, vector<1x1x32xf32>
    %140 = vector.shape_cast %139 : vector<1x1x32xf32> to vector<1x32xf32>
    %141 = vector.broadcast %140 : vector<1x32xf32> to vector<16x32xf32>
    %142 = arith.addf %138, %141 : vector<16x32xf32>
    %143 = arith.addf %107, %142 : vector<16x32xf32>
    %cst_76 = arith.constant dense<0.000000e+00> : vector<16xf32>
    %144 = vector.multi_reduction <add>, %143, %cst_76 [1] : vector<16x32xf32> to vector<16xf32>
    %145 = vector.shape_cast %144 : vector<16xf32> to vector<16x1xf32>
    %cst_77 = arith.constant 3.200000e+01 : f32
    %146 = vector.broadcast %cst_77 : f32 to vector<16x1xf32>
    %147 = arith.divf %145, %146 : vector<16x1xf32>
    %148 = vector.broadcast %147 : vector<16x1xf32> to vector<16x32xf32>
    %149 = arith.subf %143, %148 : vector<16x32xf32>
    %150 = arith.mulf %149, %149 : vector<16x32xf32>
    %cst_78 = arith.constant dense<0.000000e+00> : vector<16xf32>
    %151 = vector.multi_reduction <add>, %150, %cst_78 [1] : vector<16x32xf32> to vector<16xf32>
    %152 = vector.shape_cast %151 : vector<16xf32> to vector<16x1xf32>
    %cst_79 = arith.constant 3.200000e+01 : f32
    %153 = vector.broadcast %cst_79 : f32 to vector<16x1xf32>
    %154 = arith.divf %152, %153 : vector<16x1xf32>
    %155 = vector.broadcast %147 : vector<16x1xf32> to vector<16x32xf32>
    %156 = arith.subf %143, %155 : vector<16x32xf32>
    %cst_80 = arith.constant 9.99999974E-6 : f32
    %157 = vector.broadcast %cst_80 : f32 to vector<16x1xf32>
    %158 = arith.addf %154, %157 : vector<16x1xf32>
    %159 = math.rsqrt %158 : vector<16x1xf32>
    %160 = vector.broadcast %159 : vector<16x1xf32> to vector<16x32xf32>
    %161 = arith.mulf %156, %160 : vector<16x32xf32>
    %c1_81 = arith.constant 1 : index
    %c0_82 = arith.constant 0 : index
    %c0_83 = arith.constant 0 : index
    %162 = vector.load %arg7[%c1_81, %c0_82, %c0_83] : memref<6x1x32xf32, #tpu.memory_space<vmem>>, vector<1x1x32xf32>
    %163 = vector.shape_cast %162 : vector<1x1x32xf32> to vector<1x32xf32>
    %164 = vector.broadcast %163 : vector<1x32xf32> to vector<16x32xf32>
    %165 = arith.mulf %161, %164 : vector<16x32xf32>
    %c1_84 = arith.constant 1 : index
    %c0_85 = arith.constant 0 : index
    %c0_86 = arith.constant 0 : index
    %166 = vector.load %arg8[%c1_84, %c0_85, %c0_86] : memref<6x1x32xf32, #tpu.memory_space<vmem>>, vector<1x1x32xf32>
    %167 = vector.shape_cast %166 : vector<1x1x32xf32> to vector<1x32xf32>
    %168 = vector.broadcast %167 : vector<1x32xf32> to vector<16x32xf32>
    %169 = arith.addf %165, %168 : vector<16x32xf32>
    %c1_87 = arith.constant 1 : index
    %c0_88 = arith.constant 0 : index
    %c0_89 = arith.constant 0 : index
    %170 = vector.load %arg9[%c1_87, %c0_88, %c0_89] : memref<6x32x64xf32, #tpu.memory_space<vmem>>, vector<1x32x64xf32>
    %171 = vector.shape_cast %170 : vector<1x32x64xf32> to vector<32x64xf32>
    %cst_90 = arith.constant dense<0.000000e+00> : vector<16x64xf32>
    %172 = tpu.matmul %169, %171, %cst_90 {dimension_numbers = #tpu.dot_dimension_numbers<[1], [0], [0], [1], [0, 0, 1, 1], [], []>} : vector<16x32xf32>, vector<32x64xf32>, vector<16x64xf32> -> vector<16x64xf32>
    %c1_91 = arith.constant 1 : index
    %c0_92 = arith.constant 0 : index
    %c0_93 = arith.constant 0 : index
    %173 = vector.load %arg10[%c1_91, %c0_92, %c0_93] : memref<6x1x64xf32, #tpu.memory_space<vmem>>, vector<1x1x64xf32>
    %174 = vector.shape_cast %173 : vector<1x1x64xf32> to vector<1x64xf32>
    %175 = vector.broadcast %174 : vector<1x64xf32> to vector<16x64xf32>
    %176 = arith.addf %172, %175 : vector<16x64xf32>
    %cst_94 = arith.constant 0.000000e+00 : f32
    %177 = vector.broadcast %cst_94 : f32 to vector<16x64xf32>
    %178 = arith.maximumf %176, %177 : vector<16x64xf32>
    %c1_95 = arith.constant 1 : index
    %c0_96 = arith.constant 0 : index
    %c0_97 = arith.constant 0 : index
    %179 = vector.load %arg11[%c1_95, %c0_96, %c0_97] : memref<6x64x32xf32, #tpu.memory_space<vmem>>, vector<1x64x32xf32>
    %180 = vector.shape_cast %179 : vector<1x64x32xf32> to vector<64x32xf32>
    %cst_98 = arith.constant dense<0.000000e+00> : vector<16x32xf32>
    %181 = tpu.matmul %178, %180, %cst_98 {dimension_numbers = #tpu.dot_dimension_numbers<[1], [0], [0], [1], [0, 0, 1, 1], [], []>} : vector<16x64xf32>, vector<64x32xf32>, vector<16x32xf32> -> vector<16x32xf32>
    %c1_99 = arith.constant 1 : index
    %c0_100 = arith.constant 0 : index
    %c0_101 = arith.constant 0 : index
    %182 = vector.load %arg12[%c1_99, %c0_100, %c0_101] : memref<6x1x32xf32, #tpu.memory_space<vmem>>, vector<1x1x32xf32>
    %183 = vector.shape_cast %182 : vector<1x1x32xf32> to vector<1x32xf32>
    %184 = vector.broadcast %183 : vector<1x32xf32> to vector<16x32xf32>
    %185 = arith.addf %181, %184 : vector<16x32xf32>
    %186 = arith.addf %169, %185 : vector<16x32xf32>
    %cst_102 = arith.constant dense<0.000000e+00> : vector<16xf32>
    %187 = vector.multi_reduction <add>, %186, %cst_102 [1] : vector<16x32xf32> to vector<16xf32>
    %188 = vector.shape_cast %187 : vector<16xf32> to vector<16x1xf32>
    %cst_103 = arith.constant 3.200000e+01 : f32
    %189 = vector.broadcast %cst_103 : f32 to vector<16x1xf32>
    %190 = arith.divf %188, %189 : vector<16x1xf32>
    %191 = vector.broadcast %190 : vector<16x1xf32> to vector<16x32xf32>
    %192 = arith.subf %186, %191 : vector<16x32xf32>
    %193 = arith.mulf %192, %192 : vector<16x32xf32>
    %cst_104 = arith.constant dense<0.000000e+00> : vector<16xf32>
    %194 = vector.multi_reduction <add>, %193, %cst_104 [1] : vector<16x32xf32> to vector<16xf32>
    %195 = vector.shape_cast %194 : vector<16xf32> to vector<16x1xf32>
    %cst_105 = arith.constant 3.200000e+01 : f32
    %196 = vector.broadcast %cst_105 : f32 to vector<16x1xf32>
    %197 = arith.divf %195, %196 : vector<16x1xf32>
    %198 = vector.broadcast %190 : vector<16x1xf32> to vector<16x32xf32>
    %199 = arith.subf %186, %198 : vector<16x32xf32>
    %cst_106 = arith.constant 9.99999974E-6 : f32
    %200 = vector.broadcast %cst_106 : f32 to vector<16x1xf32>
    %201 = arith.addf %197, %200 : vector<16x1xf32>
    %202 = math.rsqrt %201 : vector<16x1xf32>
    %203 = vector.broadcast %202 : vector<16x1xf32> to vector<16x32xf32>
    %204 = arith.mulf %199, %203 : vector<16x32xf32>
    %c1_107 = arith.constant 1 : index
    %c0_108 = arith.constant 0 : index
    %c0_109 = arith.constant 0 : index
    %205 = vector.load %arg13[%c1_107, %c0_108, %c0_109] : memref<6x1x32xf32, #tpu.memory_space<vmem>>, vector<1x1x32xf32>
    %206 = vector.shape_cast %205 : vector<1x1x32xf32> to vector<1x32xf32>
    %207 = vector.broadcast %206 : vector<1x32xf32> to vector<16x32xf32>
    %208 = arith.mulf %204, %207 : vector<16x32xf32>
    %c1_110 = arith.constant 1 : index
    %c0_111 = arith.constant 0 : index
    %c0_112 = arith.constant 0 : index
    %209 = vector.load %arg14[%c1_110, %c0_111, %c0_112] : memref<6x1x32xf32, #tpu.memory_space<vmem>>, vector<1x1x32xf32>
    %210 = vector.shape_cast %209 : vector<1x1x32xf32> to vector<1x32xf32>
    %211 = vector.broadcast %210 : vector<1x32xf32> to vector<16x32xf32>
    %212 = arith.addf %208, %211 : vector<16x32xf32>
    %c2 = arith.constant 2 : index
    %c0_113 = arith.constant 0 : index
    %c0_114 = arith.constant 0 : index
    %213 = vector.load %arg3[%c2, %c0_113, %c0_114] : memref<6x32x96xf32, #tpu.memory_space<vmem>>, vector<1x32x96xf32>
    %214 = vector.shape_cast %213 : vector<1x32x96xf32> to vector<32x96xf32>
    %cst_115 = arith.constant dense<0.000000e+00> : vector<16x96xf32>
    %215 = tpu.matmul %212, %214, %cst_115 {dimension_numbers = #tpu.dot_dimension_numbers<[1], [0], [0], [1], [0, 0, 1, 1], [], []>} : vector<16x32xf32>, vector<32x96xf32>, vector<16x96xf32> -> vector<16x96xf32>
    %c2_116 = arith.constant 2 : index
    %c0_117 = arith.constant 0 : index
    %c0_118 = arith.constant 0 : index
    %216 = vector.load %arg4[%c2_116, %c0_117, %c0_118] : memref<6x1x96xf32, #tpu.memory_space<vmem>>, vector<1x1x96xf32>
    %217 = vector.shape_cast %216 : vector<1x1x96xf32> to vector<1x96xf32>
    %218 = vector.broadcast %217 : vector<1x96xf32> to vector<16x96xf32>
    %219 = arith.addf %215, %218 : vector<16x96xf32>
    %220 = vector.extract_strided_slice %219 {offsets = [0, 0], sizes = [16, 32], strides = [1, 1]} : vector<16x96xf32> to vector<16x32xf32>
    %221 = vector.shape_cast %220 : vector<16x32xf32> to vector<2x8x32xf32>
    %222 = vector.extract_strided_slice %219 {offsets = [0, 32], sizes = [16, 32], strides = [1, 1]} : vector<16x96xf32> to vector<16x32xf32>
    %223 = vector.shape_cast %222 : vector<16x32xf32> to vector<2x8x32xf32>
    %224 = vector.extract_strided_slice %219 {offsets = [0, 64], sizes = [16, 32], strides = [1, 1]} : vector<16x96xf32> to vector<16x32xf32>
    %225 = vector.shape_cast %224 : vector<16x32xf32> to vector<2x8x32xf32>
    "tpu.trace_start"() <{level = 10 : i32, message = "bqd,bkd->bqk"}> : () -> ()
    %cst_119 = arith.constant dense<0.000000e+00> : vector<2x8x8xf32>
    %226 = tpu.matmul %221, %223, %cst_119 {dimension_numbers = #tpu.dot_dimension_numbers<[2], [2], [1], [1], [0, 0, 0, 1, 1, 1], [0], [0]>} : vector<2x8x32xf32>, vector<2x8x32xf32>, vector<2x8x8xf32> -> vector<2x8x8xf32>
    "tpu.trace_stop"() : () -> ()
    %227 = vector.broadcast %2 : vector<2x1x8xf32> to vector<2x8x8xf32>
    %228 = arith.addf %226, %227 : vector<2x8x8xf32>
    %cst_120 = arith.constant dense<0xFF800000> : vector<2x8xf32>
    %229 = vector.multi_reduction <maximumf>, %228, %cst_120 [2] : vector<2x8x8xf32> to vector<2x8xf32>
    %230 = vector.shape_cast %229 : vector<2x8xf32> to vector<2x8x1xf32>
    %231 = vector.broadcast %230 : vector<2x8x1xf32> to vector<2x8x8xf32>
    %232 = arith.subf %228, %231 : vector<2x8x8xf32>
    %233 = math.exp %232 : vector<2x8x8xf32>
    %cst_121 = arith.constant dense<0.000000e+00> : vector<2x8xf32>
    %234 = vector.multi_reduction <add>, %233, %cst_121 [2] : vector<2x8x8xf32> to vector<2x8xf32>
    %235 = vector.shape_cast %234 : vector<2x8xf32> to vector<2x8x1xf32>
    %236 = tpu.reciprocal %235 {approx = true} : vector<2x8x1xf32> -> vector<2x8x1xf32>
    %237 = vector.broadcast %236 : vector<2x8x1xf32> to vector<2x8x8xf32>
    %238 = arith.mulf %233, %237 : vector<2x8x8xf32>
    "tpu.trace_start"() <{level = 10 : i32, message = "bqk,bkd->bqd"}> : () -> ()
    %cst_122 = arith.constant dense<0.000000e+00> : vector<2x8x32xf32>
    %239 = tpu.matmul %238, %225, %cst_122 {dimension_numbers = #tpu.dot_dimension_numbers<[2], [1], [1], [2], [0, 0, 0, 1, 1, 2], [0], [0]>} : vector<2x8x8xf32>, vector<2x8x32xf32>, vector<2x8x32xf32> -> vector<2x8x32xf32>
    "tpu.trace_stop"() : () -> ()
    %240 = vector.shape_cast %239 : vector<2x8x32xf32> to vector<16x32xf32>
    %c2_123 = arith.constant 2 : index
    %c0_124 = arith.constant 0 : index
    %c0_125 = arith.constant 0 : index
    %241 = vector.load %arg5[%c2_123, %c0_124, %c0_125] : memref<6x32x32xf32, #tpu.memory_space<vmem>>, vector<1x32x32xf32>
    %242 = vector.shape_cast %241 : vector<1x32x32xf32> to vector<32x32xf32>
    %cst_126 = arith.constant dense<0.000000e+00> : vector<16x32xf32>
    %243 = tpu.matmul %240, %242, %cst_126 {dimension_numbers = #tpu.dot_dimension_numbers<[1], [0], [0], [1], [0, 0, 1, 1], [], []>} : vector<16x32xf32>, vector<32x32xf32>, vector<16x32xf32> -> vector<16x32xf32>
    %c2_127 = arith.constant 2 : index
    %c0_128 = arith.constant 0 : index
    %c0_129 = arith.constant 0 : index
    %244 = vector.load %arg6[%c2_127, %c0_128, %c0_129] : memref<6x1x32xf32, #tpu.memory_space<vmem>>, vector<1x1x32xf32>
    %245 = vector.shape_cast %244 : vector<1x1x32xf32> to vector<1x32xf32>
    %246 = vector.broadcast %245 : vector<1x32xf32> to vector<16x32xf32>
    %247 = arith.addf %243, %246 : vector<16x32xf32>
    %248 = arith.addf %212, %247 : vector<16x32xf32>
    %cst_130 = arith.constant dense<0.000000e+00> : vector<16xf32>
    %249 = vector.multi_reduction <add>, %248, %cst_130 [1] : vector<16x32xf32> to vector<16xf32>
    %250 = vector.shape_cast %249 : vector<16xf32> to vector<16x1xf32>
    %cst_131 = arith.constant 3.200000e+01 : f32
    %251 = vector.broadcast %cst_131 : f32 to vector<16x1xf32>
    %252 = arith.divf %250, %251 : vector<16x1xf32>
    %253 = vector.broadcast %252 : vector<16x1xf32> to vector<16x32xf32>
    %254 = arith.subf %248, %253 : vector<16x32xf32>
    %255 = arith.mulf %254, %254 : vector<16x32xf32>
    %cst_132 = arith.constant dense<0.000000e+00> : vector<16xf32>
    %256 = vector.multi_reduction <add>, %255, %cst_132 [1] : vector<16x32xf32> to vector<16xf32>
    %257 = vector.shape_cast %256 : vector<16xf32> to vector<16x1xf32>
    %cst_133 = arith.constant 3.200000e+01 : f32
    %258 = vector.broadcast %cst_133 : f32 to vector<16x1xf32>
    %259 = arith.divf %257, %258 : vector<16x1xf32>
    %260 = vector.broadcast %252 : vector<16x1xf32> to vector<16x32xf32>
    %261 = arith.subf %248, %260 : vector<16x32xf32>
    %cst_134 = arith.constant 9.99999974E-6 : f32
    %262 = vector.broadcast %cst_134 : f32 to vector<16x1xf32>
    %263 = arith.addf %259, %262 : vector<16x1xf32>
    %264 = math.rsqrt %263 : vector<16x1xf32>
    %265 = vector.broadcast %264 : vector<16x1xf32> to vector<16x32xf32>
    %266 = arith.mulf %261, %265 : vector<16x32xf32>
    %c2_135 = arith.constant 2 : index
    %c0_136 = arith.constant 0 : index
    %c0_137 = arith.constant 0 : index
    %267 = vector.load %arg7[%c2_135, %c0_136, %c0_137] : memref<6x1x32xf32, #tpu.memory_space<vmem>>, vector<1x1x32xf32>
    %268 = vector.shape_cast %267 : vector<1x1x32xf32> to vector<1x32xf32>
    %269 = vector.broadcast %268 : vector<1x32xf32> to vector<16x32xf32>
    %270 = arith.mulf %266, %269 : vector<16x32xf32>
    %c2_138 = arith.constant 2 : index
    %c0_139 = arith.constant 0 : index
    %c0_140 = arith.constant 0 : index
    %271 = vector.load %arg8[%c2_138, %c0_139, %c0_140] : memref<6x1x32xf32, #tpu.memory_space<vmem>>, vector<1x1x32xf32>
    %272 = vector.shape_cast %271 : vector<1x1x32xf32> to vector<1x32xf32>
    %273 = vector.broadcast %272 : vector<1x32xf32> to vector<16x32xf32>
    %274 = arith.addf %270, %273 : vector<16x32xf32>
    %c2_141 = arith.constant 2 : index
    %c0_142 = arith.constant 0 : index
    %c0_143 = arith.constant 0 : index
    %275 = vector.load %arg9[%c2_141, %c0_142, %c0_143] : memref<6x32x64xf32, #tpu.memory_space<vmem>>, vector<1x32x64xf32>
    %276 = vector.shape_cast %275 : vector<1x32x64xf32> to vector<32x64xf32>
    %cst_144 = arith.constant dense<0.000000e+00> : vector<16x64xf32>
    %277 = tpu.matmul %274, %276, %cst_144 {dimension_numbers = #tpu.dot_dimension_numbers<[1], [0], [0], [1], [0, 0, 1, 1], [], []>} : vector<16x32xf32>, vector<32x64xf32>, vector<16x64xf32> -> vector<16x64xf32>
    %c2_145 = arith.constant 2 : index
    %c0_146 = arith.constant 0 : index
    %c0_147 = arith.constant 0 : index
    %278 = vector.load %arg10[%c2_145, %c0_146, %c0_147] : memref<6x1x64xf32, #tpu.memory_space<vmem>>, vector<1x1x64xf32>
    %279 = vector.shape_cast %278 : vector<1x1x64xf32> to vector<1x64xf32>
    %280 = vector.broadcast %279 : vector<1x64xf32> to vector<16x64xf32>
    %281 = arith.addf %277, %280 : vector<16x64xf32>
    %cst_148 = arith.constant 0.000000e+00 : f32
    %282 = vector.broadcast %cst_148 : f32 to vector<16x64xf32>
    %283 = arith.maximumf %281, %282 : vector<16x64xf32>
    %c2_149 = arith.constant 2 : index
    %c0_150 = arith.constant 0 : index
    %c0_151 = arith.constant 0 : index
    %284 = vector.load %arg11[%c2_149, %c0_150, %c0_151] : memref<6x64x32xf32, #tpu.memory_space<vmem>>, vector<1x64x32xf32>
    %285 = vector.shape_cast %284 : vector<1x64x32xf32> to vector<64x32xf32>
    %cst_152 = arith.constant dense<0.000000e+00> : vector<16x32xf32>
    %286 = tpu.matmul %283, %285, %cst_152 {dimension_numbers = #tpu.dot_dimension_numbers<[1], [0], [0], [1], [0, 0, 1, 1], [], []>} : vector<16x64xf32>, vector<64x32xf32>, vector<16x32xf32> -> vector<16x32xf32>
    %c2_153 = arith.constant 2 : index
    %c0_154 = arith.constant 0 : index
    %c0_155 = arith.constant 0 : index
    %287 = vector.load %arg12[%c2_153, %c0_154, %c0_155] : memref<6x1x32xf32, #tpu.memory_space<vmem>>, vector<1x1x32xf32>
    %288 = vector.shape_cast %287 : vector<1x1x32xf32> to vector<1x32xf32>
    %289 = vector.broadcast %288 : vector<1x32xf32> to vector<16x32xf32>
    %290 = arith.addf %286, %289 : vector<16x32xf32>
    %291 = arith.addf %274, %290 : vector<16x32xf32>
    %cst_156 = arith.constant dense<0.000000e+00> : vector<16xf32>
    %292 = vector.multi_reduction <add>, %291, %cst_156 [1] : vector<16x32xf32> to vector<16xf32>
    %293 = vector.shape_cast %292 : vector<16xf32> to vector<16x1xf32>
    %cst_157 = arith.constant 3.200000e+01 : f32
    %294 = vector.broadcast %cst_157 : f32 to vector<16x1xf32>
    %295 = arith.divf %293, %294 : vector<16x1xf32>
    %296 = vector.broadcast %295 : vector<16x1xf32> to vector<16x32xf32>
    %297 = arith.subf %291, %296 : vector<16x32xf32>
    %298 = arith.mulf %297, %297 : vector<16x32xf32>
    %cst_158 = arith.constant dense<0.000000e+00> : vector<16xf32>
    %299 = vector.multi_reduction <add>, %298, %cst_158 [1] : vector<16x32xf32> to vector<16xf32>
    %300 = vector.shape_cast %299 : vector<16xf32> to vector<16x1xf32>
    %cst_159 = arith.constant 3.200000e+01 : f32
    %301 = vector.broadcast %cst_159 : f32 to vector<16x1xf32>
    %302 = arith.divf %300, %301 : vector<16x1xf32>
    %303 = vector.broadcast %295 : vector<16x1xf32> to vector<16x32xf32>
    %304 = arith.subf %291, %303 : vector<16x32xf32>
    %cst_160 = arith.constant 9.99999974E-6 : f32
    %305 = vector.broadcast %cst_160 : f32 to vector<16x1xf32>
    %306 = arith.addf %302, %305 : vector<16x1xf32>
    %307 = math.rsqrt %306 : vector<16x1xf32>
    %308 = vector.broadcast %307 : vector<16x1xf32> to vector<16x32xf32>
    %309 = arith.mulf %304, %308 : vector<16x32xf32>
    %c2_161 = arith.constant 2 : index
    %c0_162 = arith.constant 0 : index
    %c0_163 = arith.constant 0 : index
    %310 = vector.load %arg13[%c2_161, %c0_162, %c0_163] : memref<6x1x32xf32, #tpu.memory_space<vmem>>, vector<1x1x32xf32>
    %311 = vector.shape_cast %310 : vector<1x1x32xf32> to vector<1x32xf32>
    %312 = vector.broadcast %311 : vector<1x32xf32> to vector<16x32xf32>
    %313 = arith.mulf %309, %312 : vector<16x32xf32>
    %c2_164 = arith.constant 2 : index
    %c0_165 = arith.constant 0 : index
    %c0_166 = arith.constant 0 : index
    %314 = vector.load %arg14[%c2_164, %c0_165, %c0_166] : memref<6x1x32xf32, #tpu.memory_space<vmem>>, vector<1x1x32xf32>
    %315 = vector.shape_cast %314 : vector<1x1x32xf32> to vector<1x32xf32>
    %316 = vector.broadcast %315 : vector<1x32xf32> to vector<16x32xf32>
    %317 = arith.addf %313, %316 : vector<16x32xf32>
    %c3 = arith.constant 3 : index
    %c0_167 = arith.constant 0 : index
    %c0_168 = arith.constant 0 : index
    %318 = vector.load %arg3[%c3, %c0_167, %c0_168] : memref<6x32x96xf32, #tpu.memory_space<vmem>>, vector<1x32x96xf32>
    %319 = vector.shape_cast %318 : vector<1x32x96xf32> to vector<32x96xf32>
    %cst_169 = arith.constant dense<0.000000e+00> : vector<16x96xf32>
    %320 = tpu.matmul %317, %319, %cst_169 {dimension_numbers = #tpu.dot_dimension_numbers<[1], [0], [0], [1], [0, 0, 1, 1], [], []>} : vector<16x32xf32>, vector<32x96xf32>, vector<16x96xf32> -> vector<16x96xf32>
    %c3_170 = arith.constant 3 : index
    %c0_171 = arith.constant 0 : index
    %c0_172 = arith.constant 0 : index
    %321 = vector.load %arg4[%c3_170, %c0_171, %c0_172] : memref<6x1x96xf32, #tpu.memory_space<vmem>>, vector<1x1x96xf32>
    %322 = vector.shape_cast %321 : vector<1x1x96xf32> to vector<1x96xf32>
    %323 = vector.broadcast %322 : vector<1x96xf32> to vector<16x96xf32>
    %324 = arith.addf %320, %323 : vector<16x96xf32>
    %325 = vector.extract_strided_slice %324 {offsets = [0, 0], sizes = [16, 32], strides = [1, 1]} : vector<16x96xf32> to vector<16x32xf32>
    %326 = vector.shape_cast %325 : vector<16x32xf32> to vector<2x8x32xf32>
    %327 = vector.extract_strided_slice %324 {offsets = [0, 32], sizes = [16, 32], strides = [1, 1]} : vector<16x96xf32> to vector<16x32xf32>
    %328 = vector.shape_cast %327 : vector<16x32xf32> to vector<2x8x32xf32>
    %329 = vector.extract_strided_slice %324 {offsets = [0, 64], sizes = [16, 32], strides = [1, 1]} : vector<16x96xf32> to vector<16x32xf32>
    %330 = vector.shape_cast %329 : vector<16x32xf32> to vector<2x8x32xf32>
    "tpu.trace_start"() <{level = 10 : i32, message = "bqd,bkd->bqk"}> : () -> ()
    %cst_173 = arith.constant dense<0.000000e+00> : vector<2x8x8xf32>
    %331 = tpu.matmul %326, %328, %cst_173 {dimension_numbers = #tpu.dot_dimension_numbers<[2], [2], [1], [1], [0, 0, 0, 1, 1, 1], [0], [0]>} : vector<2x8x32xf32>, vector<2x8x32xf32>, vector<2x8x8xf32> -> vector<2x8x8xf32>
    "tpu.trace_stop"() : () -> ()
    %332 = vector.broadcast %2 : vector<2x1x8xf32> to vector<2x8x8xf32>
    %333 = arith.addf %331, %332 : vector<2x8x8xf32>
    %cst_174 = arith.constant dense<0xFF800000> : vector<2x8xf32>
    %334 = vector.multi_reduction <maximumf>, %333, %cst_174 [2] : vector<2x8x8xf32> to vector<2x8xf32>
    %335 = vector.shape_cast %334 : vector<2x8xf32> to vector<2x8x1xf32>
    %336 = vector.broadcast %335 : vector<2x8x1xf32> to vector<2x8x8xf32>
    %337 = arith.subf %333, %336 : vector<2x8x8xf32>
    %338 = math.exp %337 : vector<2x8x8xf32>
    %cst_175 = arith.constant dense<0.000000e+00> : vector<2x8xf32>
    %339 = vector.multi_reduction <add>, %338, %cst_175 [2] : vector<2x8x8xf32> to vector<2x8xf32>
    %340 = vector.shape_cast %339 : vector<2x8xf32> to vector<2x8x1xf32>
    %341 = tpu.reciprocal %340 {approx = true} : vector<2x8x1xf32> -> vector<2x8x1xf32>
    %342 = vector.broadcast %341 : vector<2x8x1xf32> to vector<2x8x8xf32>
    %343 = arith.mulf %338, %342 : vector<2x8x8xf32>
    "tpu.trace_start"() <{level = 10 : i32, message = "bqk,bkd->bqd"}> : () -> ()
    %cst_176 = arith.constant dense<0.000000e+00> : vector<2x8x32xf32>
    %344 = tpu.matmul %343, %330, %cst_176 {dimension_numbers = #tpu.dot_dimension_numbers<[2], [1], [1], [2], [0, 0, 0, 1, 1, 2], [0], [0]>} : vector<2x8x8xf32>, vector<2x8x32xf32>, vector<2x8x32xf32> -> vector<2x8x32xf32>
    "tpu.trace_stop"() : () -> ()
    %345 = vector.shape_cast %344 : vector<2x8x32xf32> to vector<16x32xf32>
    %c3_177 = arith.constant 3 : index
    %c0_178 = arith.constant 0 : index
    %c0_179 = arith.constant 0 : index
    %346 = vector.load %arg5[%c3_177, %c0_178, %c0_179] : memref<6x32x32xf32, #tpu.memory_space<vmem>>, vector<1x32x32xf32>
    %347 = vector.shape_cast %346 : vector<1x32x32xf32> to vector<32x32xf32>
    %cst_180 = arith.constant dense<0.000000e+00> : vector<16x32xf32>
    %348 = tpu.matmul %345, %347, %cst_180 {dimension_numbers = #tpu.dot_dimension_numbers<[1], [0], [0], [1], [0, 0, 1, 1], [], []>} : vector<16x32xf32>, vector<32x32xf32>, vector<16x32xf32> -> vector<16x32xf32>
    %c3_181 = arith.constant 3 : index
    %c0_182 = arith.constant 0 : index
    %c0_183 = arith.constant 0 : index
    %349 = vector.load %arg6[%c3_181, %c0_182, %c0_183] : memref<6x1x32xf32, #tpu.memory_space<vmem>>, vector<1x1x32xf32>
    %350 = vector.shape_cast %349 : vector<1x1x32xf32> to vector<1x32xf32>
    %351 = vector.broadcast %350 : vector<1x32xf32> to vector<16x32xf32>
    %352 = arith.addf %348, %351 : vector<16x32xf32>
    %353 = arith.addf %317, %352 : vector<16x32xf32>
    %cst_184 = arith.constant dense<0.000000e+00> : vector<16xf32>
    %354 = vector.multi_reduction <add>, %353, %cst_184 [1] : vector<16x32xf32> to vector<16xf32>
    %355 = vector.shape_cast %354 : vector<16xf32> to vector<16x1xf32>
    %cst_185 = arith.constant 3.200000e+01 : f32
    %356 = vector.broadcast %cst_185 : f32 to vector<16x1xf32>
    %357 = arith.divf %355, %356 : vector<16x1xf32>
    %358 = vector.broadcast %357 : vector<16x1xf32> to vector<16x32xf32>
    %359 = arith.subf %353, %358 : vector<16x32xf32>
    %360 = arith.mulf %359, %359 : vector<16x32xf32>
    %cst_186 = arith.constant dense<0.000000e+00> : vector<16xf32>
    %361 = vector.multi_reduction <add>, %360, %cst_186 [1] : vector<16x32xf32> to vector<16xf32>
    %362 = vector.shape_cast %361 : vector<16xf32> to vector<16x1xf32>
    %cst_187 = arith.constant 3.200000e+01 : f32
    %363 = vector.broadcast %cst_187 : f32 to vector<16x1xf32>
    %364 = arith.divf %362, %363 : vector<16x1xf32>
    %365 = vector.broadcast %357 : vector<16x1xf32> to vector<16x32xf32>
    %366 = arith.subf %353, %365 : vector<16x32xf32>
    %cst_188 = arith.constant 9.99999974E-6 : f32
    %367 = vector.broadcast %cst_188 : f32 to vector<16x1xf32>
    %368 = arith.addf %364, %367 : vector<16x1xf32>
    %369 = math.rsqrt %368 : vector<16x1xf32>
    %370 = vector.broadcast %369 : vector<16x1xf32> to vector<16x32xf32>
    %371 = arith.mulf %366, %370 : vector<16x32xf32>
    %c3_189 = arith.constant 3 : index
    %c0_190 = arith.constant 0 : index
    %c0_191 = arith.constant 0 : index
    %372 = vector.load %arg7[%c3_189, %c0_190, %c0_191] : memref<6x1x32xf32, #tpu.memory_space<vmem>>, vector<1x1x32xf32>
    %373 = vector.shape_cast %372 : vector<1x1x32xf32> to vector<1x32xf32>
    %374 = vector.broadcast %373 : vector<1x32xf32> to vector<16x32xf32>
    %375 = arith.mulf %371, %374 : vector<16x32xf32>
    %c3_192 = arith.constant 3 : index
    %c0_193 = arith.constant 0 : index
    %c0_194 = arith.constant 0 : index
    %376 = vector.load %arg8[%c3_192, %c0_193, %c0_194] : memref<6x1x32xf32, #tpu.memory_space<vmem>>, vector<1x1x32xf32>
    %377 = vector.shape_cast %376 : vector<1x1x32xf32> to vector<1x32xf32>
    %378 = vector.broadcast %377 : vector<1x32xf32> to vector<16x32xf32>
    %379 = arith.addf %375, %378 : vector<16x32xf32>
    %c3_195 = arith.constant 3 : index
    %c0_196 = arith.constant 0 : index
    %c0_197 = arith.constant 0 : index
    %380 = vector.load %arg9[%c3_195, %c0_196, %c0_197] : memref<6x32x64xf32, #tpu.memory_space<vmem>>, vector<1x32x64xf32>
    %381 = vector.shape_cast %380 : vector<1x32x64xf32> to vector<32x64xf32>
    %cst_198 = arith.constant dense<0.000000e+00> : vector<16x64xf32>
    %382 = tpu.matmul %379, %381, %cst_198 {dimension_numbers = #tpu.dot_dimension_numbers<[1], [0], [0], [1], [0, 0, 1, 1], [], []>} : vector<16x32xf32>, vector<32x64xf32>, vector<16x64xf32> -> vector<16x64xf32>
    %c3_199 = arith.constant 3 : index
    %c0_200 = arith.constant 0 : index
    %c0_201 = arith.constant 0 : index
    %383 = vector.load %arg10[%c3_199, %c0_200, %c0_201] : memref<6x1x64xf32, #tpu.memory_space<vmem>>, vector<1x1x64xf32>
    %384 = vector.shape_cast %383 : vector<1x1x64xf32> to vector<1x64xf32>
    %385 = vector.broadcast %384 : vector<1x64xf32> to vector<16x64xf32>
    %386 = arith.addf %382, %385 : vector<16x64xf32>
    %cst_202 = arith.constant 0.000000e+00 : f32
    %387 = vector.broadcast %cst_202 : f32 to vector<16x64xf32>
    %388 = arith.maximumf %386, %387 : vector<16x64xf32>
    %c3_203 = arith.constant 3 : index
    %c0_204 = arith.constant 0 : index
    %c0_205 = arith.constant 0 : index
    %389 = vector.load %arg11[%c3_203, %c0_204, %c0_205] : memref<6x64x32xf32, #tpu.memory_space<vmem>>, vector<1x64x32xf32>
    %390 = vector.shape_cast %389 : vector<1x64x32xf32> to vector<64x32xf32>
    %cst_206 = arith.constant dense<0.000000e+00> : vector<16x32xf32>
    %391 = tpu.matmul %388, %390, %cst_206 {dimension_numbers = #tpu.dot_dimension_numbers<[1], [0], [0], [1], [0, 0, 1, 1], [], []>} : vector<16x64xf32>, vector<64x32xf32>, vector<16x32xf32> -> vector<16x32xf32>
    %c3_207 = arith.constant 3 : index
    %c0_208 = arith.constant 0 : index
    %c0_209 = arith.constant 0 : index
    %392 = vector.load %arg12[%c3_207, %c0_208, %c0_209] : memref<6x1x32xf32, #tpu.memory_space<vmem>>, vector<1x1x32xf32>
    %393 = vector.shape_cast %392 : vector<1x1x32xf32> to vector<1x32xf32>
    %394 = vector.broadcast %393 : vector<1x32xf32> to vector<16x32xf32>
    %395 = arith.addf %391, %394 : vector<16x32xf32>
    %396 = arith.addf %379, %395 : vector<16x32xf32>
    %cst_210 = arith.constant dense<0.000000e+00> : vector<16xf32>
    %397 = vector.multi_reduction <add>, %396, %cst_210 [1] : vector<16x32xf32> to vector<16xf32>
    %398 = vector.shape_cast %397 : vector<16xf32> to vector<16x1xf32>
    %cst_211 = arith.constant 3.200000e+01 : f32
    %399 = vector.broadcast %cst_211 : f32 to vector<16x1xf32>
    %400 = arith.divf %398, %399 : vector<16x1xf32>
    %401 = vector.broadcast %400 : vector<16x1xf32> to vector<16x32xf32>
    %402 = arith.subf %396, %401 : vector<16x32xf32>
    %403 = arith.mulf %402, %402 : vector<16x32xf32>
    %cst_212 = arith.constant dense<0.000000e+00> : vector<16xf32>
    %404 = vector.multi_reduction <add>, %403, %cst_212 [1] : vector<16x32xf32> to vector<16xf32>
    %405 = vector.shape_cast %404 : vector<16xf32> to vector<16x1xf32>
    %cst_213 = arith.constant 3.200000e+01 : f32
    %406 = vector.broadcast %cst_213 : f32 to vector<16x1xf32>
    %407 = arith.divf %405, %406 : vector<16x1xf32>
    %408 = vector.broadcast %400 : vector<16x1xf32> to vector<16x32xf32>
    %409 = arith.subf %396, %408 : vector<16x32xf32>
    %cst_214 = arith.constant 9.99999974E-6 : f32
    %410 = vector.broadcast %cst_214 : f32 to vector<16x1xf32>
    %411 = arith.addf %407, %410 : vector<16x1xf32>
    %412 = math.rsqrt %411 : vector<16x1xf32>
    %413 = vector.broadcast %412 : vector<16x1xf32> to vector<16x32xf32>
    %414 = arith.mulf %409, %413 : vector<16x32xf32>
    %c3_215 = arith.constant 3 : index
    %c0_216 = arith.constant 0 : index
    %c0_217 = arith.constant 0 : index
    %415 = vector.load %arg13[%c3_215, %c0_216, %c0_217] : memref<6x1x32xf32, #tpu.memory_space<vmem>>, vector<1x1x32xf32>
    %416 = vector.shape_cast %415 : vector<1x1x32xf32> to vector<1x32xf32>
    %417 = vector.broadcast %416 : vector<1x32xf32> to vector<16x32xf32>
    %418 = arith.mulf %414, %417 : vector<16x32xf32>
    %c3_218 = arith.constant 3 : index
    %c0_219 = arith.constant 0 : index
    %c0_220 = arith.constant 0 : index
    %419 = vector.load %arg14[%c3_218, %c0_219, %c0_220] : memref<6x1x32xf32, #tpu.memory_space<vmem>>, vector<1x1x32xf32>
    %420 = vector.shape_cast %419 : vector<1x1x32xf32> to vector<1x32xf32>
    %421 = vector.broadcast %420 : vector<1x32xf32> to vector<16x32xf32>
    %422 = arith.addf %418, %421 : vector<16x32xf32>
    %c4 = arith.constant 4 : index
    %c0_221 = arith.constant 0 : index
    %c0_222 = arith.constant 0 : index
    %423 = vector.load %arg3[%c4, %c0_221, %c0_222] : memref<6x32x96xf32, #tpu.memory_space<vmem>>, vector<1x32x96xf32>
    %424 = vector.shape_cast %423 : vector<1x32x96xf32> to vector<32x96xf32>
    %cst_223 = arith.constant dense<0.000000e+00> : vector<16x96xf32>
    %425 = tpu.matmul %422, %424, %cst_223 {dimension_numbers = #tpu.dot_dimension_numbers<[1], [0], [0], [1], [0, 0, 1, 1], [], []>} : vector<16x32xf32>, vector<32x96xf32>, vector<16x96xf32> -> vector<16x96xf32>
    %c4_224 = arith.constant 4 : index
    %c0_225 = arith.constant 0 : index
    %c0_226 = arith.constant 0 : index
    %426 = vector.load %arg4[%c4_224, %c0_225, %c0_226] : memref<6x1x96xf32, #tpu.memory_space<vmem>>, vector<1x1x96xf32>
    %427 = vector.shape_cast %426 : vector<1x1x96xf32> to vector<1x96xf32>
    %428 = vector.broadcast %427 : vector<1x96xf32> to vector<16x96xf32>
    %429 = arith.addf %425, %428 : vector<16x96xf32>
    %430 = vector.extract_strided_slice %429 {offsets = [0, 0], sizes = [16, 32], strides = [1, 1]} : vector<16x96xf32> to vector<16x32xf32>
    %431 = vector.shape_cast %430 : vector<16x32xf32> to vector<2x8x32xf32>
    %432 = vector.extract_strided_slice %429 {offsets = [0, 32], sizes = [16, 32], strides = [1, 1]} : vector<16x96xf32> to vector<16x32xf32>
    %433 = vector.shape_cast %432 : vector<16x32xf32> to vector<2x8x32xf32>
    %434 = vector.extract_strided_slice %429 {offsets = [0, 64], sizes = [16, 32], strides = [1, 1]} : vector<16x96xf32> to vector<16x32xf32>
    %435 = vector.shape_cast %434 : vector<16x32xf32> to vector<2x8x32xf32>
    "tpu.trace_start"() <{level = 10 : i32, message = "bqd,bkd->bqk"}> : () -> ()
    %cst_227 = arith.constant dense<0.000000e+00> : vector<2x8x8xf32>
    %436 = tpu.matmul %431, %433, %cst_227 {dimension_numbers = #tpu.dot_dimension_numbers<[2], [2], [1], [1], [0, 0, 0, 1, 1, 1], [0], [0]>} : vector<2x8x32xf32>, vector<2x8x32xf32>, vector<2x8x8xf32> -> vector<2x8x8xf32>
    "tpu.trace_stop"() : () -> ()
    %437 = vector.broadcast %2 : vector<2x1x8xf32> to vector<2x8x8xf32>
    %438 = arith.addf %436, %437 : vector<2x8x8xf32>
    %cst_228 = arith.constant dense<0xFF800000> : vector<2x8xf32>
    %439 = vector.multi_reduction <maximumf>, %438, %cst_228 [2] : vector<2x8x8xf32> to vector<2x8xf32>
    %440 = vector.shape_cast %439 : vector<2x8xf32> to vector<2x8x1xf32>
    %441 = vector.broadcast %440 : vector<2x8x1xf32> to vector<2x8x8xf32>
    %442 = arith.subf %438, %441 : vector<2x8x8xf32>
    %443 = math.exp %442 : vector<2x8x8xf32>
    %cst_229 = arith.constant dense<0.000000e+00> : vector<2x8xf32>
    %444 = vector.multi_reduction <add>, %443, %cst_229 [2] : vector<2x8x8xf32> to vector<2x8xf32>
    %445 = vector.shape_cast %444 : vector<2x8xf32> to vector<2x8x1xf32>
    %446 = tpu.reciprocal %445 {approx = true} : vector<2x8x1xf32> -> vector<2x8x1xf32>
    %447 = vector.broadcast %446 : vector<2x8x1xf32> to vector<2x8x8xf32>
    %448 = arith.mulf %443, %447 : vector<2x8x8xf32>
    "tpu.trace_start"() <{level = 10 : i32, message = "bqk,bkd->bqd"}> : () -> ()
    %cst_230 = arith.constant dense<0.000000e+00> : vector<2x8x32xf32>
    %449 = tpu.matmul %448, %435, %cst_230 {dimension_numbers = #tpu.dot_dimension_numbers<[2], [1], [1], [2], [0, 0, 0, 1, 1, 2], [0], [0]>} : vector<2x8x8xf32>, vector<2x8x32xf32>, vector<2x8x32xf32> -> vector<2x8x32xf32>
    "tpu.trace_stop"() : () -> ()
    %450 = vector.shape_cast %449 : vector<2x8x32xf32> to vector<16x32xf32>
    %c4_231 = arith.constant 4 : index
    %c0_232 = arith.constant 0 : index
    %c0_233 = arith.constant 0 : index
    %451 = vector.load %arg5[%c4_231, %c0_232, %c0_233] : memref<6x32x32xf32, #tpu.memory_space<vmem>>, vector<1x32x32xf32>
    %452 = vector.shape_cast %451 : vector<1x32x32xf32> to vector<32x32xf32>
    %cst_234 = arith.constant dense<0.000000e+00> : vector<16x32xf32>
    %453 = tpu.matmul %450, %452, %cst_234 {dimension_numbers = #tpu.dot_dimension_numbers<[1], [0], [0], [1], [0, 0, 1, 1], [], []>} : vector<16x32xf32>, vector<32x32xf32>, vector<16x32xf32> -> vector<16x32xf32>
    %c4_235 = arith.constant 4 : index
    %c0_236 = arith.constant 0 : index
    %c0_237 = arith.constant 0 : index
    %454 = vector.load %arg6[%c4_235, %c0_236, %c0_237] : memref<6x1x32xf32, #tpu.memory_space<vmem>>, vector<1x1x32xf32>
    %455 = vector.shape_cast %454 : vector<1x1x32xf32> to vector<1x32xf32>
    %456 = vector.broadcast %455 : vector<1x32xf32> to vector<16x32xf32>
    %457 = arith.addf %453, %456 : vector<16x32xf32>
    %458 = arith.addf %422, %457 : vector<16x32xf32>
    %cst_238 = arith.constant dense<0.000000e+00> : vector<16xf32>
    %459 = vector.multi_reduction <add>, %458, %cst_238 [1] : vector<16x32xf32> to vector<16xf32>
    %460 = vector.shape_cast %459 : vector<16xf32> to vector<16x1xf32>
    %cst_239 = arith.constant 3.200000e+01 : f32
    %461 = vector.broadcast %cst_239 : f32 to vector<16x1xf32>
    %462 = arith.divf %460, %461 : vector<16x1xf32>
    %463 = vector.broadcast %462 : vector<16x1xf32> to vector<16x32xf32>
    %464 = arith.subf %458, %463 : vector<16x32xf32>
    %465 = arith.mulf %464, %464 : vector<16x32xf32>
    %cst_240 = arith.constant dense<0.000000e+00> : vector<16xf32>
    %466 = vector.multi_reduction <add>, %465, %cst_240 [1] : vector<16x32xf32> to vector<16xf32>
    %467 = vector.shape_cast %466 : vector<16xf32> to vector<16x1xf32>
    %cst_241 = arith.constant 3.200000e+01 : f32
    %468 = vector.broadcast %cst_241 : f32 to vector<16x1xf32>
    %469 = arith.divf %467, %468 : vector<16x1xf32>
    %470 = vector.broadcast %462 : vector<16x1xf32> to vector<16x32xf32>
    %471 = arith.subf %458, %470 : vector<16x32xf32>
    %cst_242 = arith.constant 9.99999974E-6 : f32
    %472 = vector.broadcast %cst_242 : f32 to vector<16x1xf32>
    %473 = arith.addf %469, %472 : vector<16x1xf32>
    %474 = math.rsqrt %473 : vector<16x1xf32>
    %475 = vector.broadcast %474 : vector<16x1xf32> to vector<16x32xf32>
    %476 = arith.mulf %471, %475 : vector<16x32xf32>
    %c4_243 = arith.constant 4 : index
    %c0_244 = arith.constant 0 : index
    %c0_245 = arith.constant 0 : index
    %477 = vector.load %arg7[%c4_243, %c0_244, %c0_245] : memref<6x1x32xf32, #tpu.memory_space<vmem>>, vector<1x1x32xf32>
    %478 = vector.shape_cast %477 : vector<1x1x32xf32> to vector<1x32xf32>
    %479 = vector.broadcast %478 : vector<1x32xf32> to vector<16x32xf32>
    %480 = arith.mulf %476, %479 : vector<16x32xf32>
    %c4_246 = arith.constant 4 : index
    %c0_247 = arith.constant 0 : index
    %c0_248 = arith.constant 0 : index
    %481 = vector.load %arg8[%c4_246, %c0_247, %c0_248] : memref<6x1x32xf32, #tpu.memory_space<vmem>>, vector<1x1x32xf32>
    %482 = vector.shape_cast %481 : vector<1x1x32xf32> to vector<1x32xf32>
    %483 = vector.broadcast %482 : vector<1x32xf32> to vector<16x32xf32>
    %484 = arith.addf %480, %483 : vector<16x32xf32>
    %c4_249 = arith.constant 4 : index
    %c0_250 = arith.constant 0 : index
    %c0_251 = arith.constant 0 : index
    %485 = vector.load %arg9[%c4_249, %c0_250, %c0_251] : memref<6x32x64xf32, #tpu.memory_space<vmem>>, vector<1x32x64xf32>
    %486 = vector.shape_cast %485 : vector<1x32x64xf32> to vector<32x64xf32>
    %cst_252 = arith.constant dense<0.000000e+00> : vector<16x64xf32>
    %487 = tpu.matmul %484, %486, %cst_252 {dimension_numbers = #tpu.dot_dimension_numbers<[1], [0], [0], [1], [0, 0, 1, 1], [], []>} : vector<16x32xf32>, vector<32x64xf32>, vector<16x64xf32> -> vector<16x64xf32>
    %c4_253 = arith.constant 4 : index
    %c0_254 = arith.constant 0 : index
    %c0_255 = arith.constant 0 : index
    %488 = vector.load %arg10[%c4_253, %c0_254, %c0_255] : memref<6x1x64xf32, #tpu.memory_space<vmem>>, vector<1x1x64xf32>
    %489 = vector.shape_cast %488 : vector<1x1x64xf32> to vector<1x64xf32>
    %490 = vector.broadcast %489 : vector<1x64xf32> to vector<16x64xf32>
    %491 = arith.addf %487, %490 : vector<16x64xf32>
    %cst_256 = arith.constant 0.000000e+00 : f32
    %492 = vector.broadcast %cst_256 : f32 to vector<16x64xf32>
    %493 = arith.maximumf %491, %492 : vector<16x64xf32>
    %c4_257 = arith.constant 4 : index
    %c0_258 = arith.constant 0 : index
    %c0_259 = arith.constant 0 : index
    %494 = vector.load %arg11[%c4_257, %c0_258, %c0_259] : memref<6x64x32xf32, #tpu.memory_space<vmem>>, vector<1x64x32xf32>
    %495 = vector.shape_cast %494 : vector<1x64x32xf32> to vector<64x32xf32>
    %cst_260 = arith.constant dense<0.000000e+00> : vector<16x32xf32>
    %496 = tpu.matmul %493, %495, %cst_260 {dimension_numbers = #tpu.dot_dimension_numbers<[1], [0], [0], [1], [0, 0, 1, 1], [], []>} : vector<16x64xf32>, vector<64x32xf32>, vector<16x32xf32> -> vector<16x32xf32>
    %c4_261 = arith.constant 4 : index
    %c0_262 = arith.constant 0 : index
    %c0_263 = arith.constant 0 : index
    %497 = vector.load %arg12[%c4_261, %c0_262, %c0_263] : memref<6x1x32xf32, #tpu.memory_space<vmem>>, vector<1x1x32xf32>
    %498 = vector.shape_cast %497 : vector<1x1x32xf32> to vector<1x32xf32>
    %499 = vector.broadcast %498 : vector<1x32xf32> to vector<16x32xf32>
    %500 = arith.addf %496, %499 : vector<16x32xf32>
    %501 = arith.addf %484, %500 : vector<16x32xf32>
    %cst_264 = arith.constant dense<0.000000e+00> : vector<16xf32>
    %502 = vector.multi_reduction <add>, %501, %cst_264 [1] : vector<16x32xf32> to vector<16xf32>
    %503 = vector.shape_cast %502 : vector<16xf32> to vector<16x1xf32>
    %cst_265 = arith.constant 3.200000e+01 : f32
    %504 = vector.broadcast %cst_265 : f32 to vector<16x1xf32>
    %505 = arith.divf %503, %504 : vector<16x1xf32>
    %506 = vector.broadcast %505 : vector<16x1xf32> to vector<16x32xf32>
    %507 = arith.subf %501, %506 : vector<16x32xf32>
    %508 = arith.mulf %507, %507 : vector<16x32xf32>
    %cst_266 = arith.constant dense<0.000000e+00> : vector<16xf32>
    %509 = vector.multi_reduction <add>, %508, %cst_266 [1] : vector<16x32xf32> to vector<16xf32>
    %510 = vector.shape_cast %509 : vector<16xf32> to vector<16x1xf32>
    %cst_267 = arith.constant 3.200000e+01 : f32
    %511 = vector.broadcast %cst_267 : f32 to vector<16x1xf32>
    %512 = arith.divf %510, %511 : vector<16x1xf32>
    %513 = vector.broadcast %505 : vector<16x1xf32> to vector<16x32xf32>
    %514 = arith.subf %501, %513 : vector<16x32xf32>
    %cst_268 = arith.constant 9.99999974E-6 : f32
    %515 = vector.broadcast %cst_268 : f32 to vector<16x1xf32>
    %516 = arith.addf %512, %515 : vector<16x1xf32>
    %517 = math.rsqrt %516 : vector<16x1xf32>
    %518 = vector.broadcast %517 : vector<16x1xf32> to vector<16x32xf32>
    %519 = arith.mulf %514, %518 : vector<16x32xf32>
    %c4_269 = arith.constant 4 : index
    %c0_270 = arith.constant 0 : index
    %c0_271 = arith.constant 0 : index
    %520 = vector.load %arg13[%c4_269, %c0_270, %c0_271] : memref<6x1x32xf32, #tpu.memory_space<vmem>>, vector<1x1x32xf32>
    %521 = vector.shape_cast %520 : vector<1x1x32xf32> to vector<1x32xf32>
    %522 = vector.broadcast %521 : vector<1x32xf32> to vector<16x32xf32>
    %523 = arith.mulf %519, %522 : vector<16x32xf32>
    %c4_272 = arith.constant 4 : index
    %c0_273 = arith.constant 0 : index
    %c0_274 = arith.constant 0 : index
    %524 = vector.load %arg14[%c4_272, %c0_273, %c0_274] : memref<6x1x32xf32, #tpu.memory_space<vmem>>, vector<1x1x32xf32>
    %525 = vector.shape_cast %524 : vector<1x1x32xf32> to vector<1x32xf32>
    %526 = vector.broadcast %525 : vector<1x32xf32> to vector<16x32xf32>
    %527 = arith.addf %523, %526 : vector<16x32xf32>
    %c5 = arith.constant 5 : index
    %c0_275 = arith.constant 0 : index
    %c0_276 = arith.constant 0 : index
    %528 = vector.load %arg3[%c5, %c0_275, %c0_276] : memref<6x32x96xf32, #tpu.memory_space<vmem>>, vector<1x32x96xf32>
    %529 = vector.shape_cast %528 : vector<1x32x96xf32> to vector<32x96xf32>
    %cst_277 = arith.constant dense<0.000000e+00> : vector<16x96xf32>
    %530 = tpu.matmul %527, %529, %cst_277 {dimension_numbers = #tpu.dot_dimension_numbers<[1], [0], [0], [1], [0, 0, 1, 1], [], []>} : vector<16x32xf32>, vector<32x96xf32>, vector<16x96xf32> -> vector<16x96xf32>
    %c5_278 = arith.constant 5 : index
    %c0_279 = arith.constant 0 : index
    %c0_280 = arith.constant 0 : index
    %531 = vector.load %arg4[%c5_278, %c0_279, %c0_280] : memref<6x1x96xf32, #tpu.memory_space<vmem>>, vector<1x1x96xf32>
    %532 = vector.shape_cast %531 : vector<1x1x96xf32> to vector<1x96xf32>
    %533 = vector.broadcast %532 : vector<1x96xf32> to vector<16x96xf32>
    %534 = arith.addf %530, %533 : vector<16x96xf32>
    %535 = vector.extract_strided_slice %534 {offsets = [0, 0], sizes = [16, 32], strides = [1, 1]} : vector<16x96xf32> to vector<16x32xf32>
    %536 = vector.shape_cast %535 : vector<16x32xf32> to vector<2x8x32xf32>
    %537 = vector.extract_strided_slice %534 {offsets = [0, 32], sizes = [16, 32], strides = [1, 1]} : vector<16x96xf32> to vector<16x32xf32>
    %538 = vector.shape_cast %537 : vector<16x32xf32> to vector<2x8x32xf32>
    %539 = vector.extract_strided_slice %534 {offsets = [0, 64], sizes = [16, 32], strides = [1, 1]} : vector<16x96xf32> to vector<16x32xf32>
    %540 = vector.shape_cast %539 : vector<16x32xf32> to vector<2x8x32xf32>
    "tpu.trace_start"() <{level = 10 : i32, message = "bqd,bkd->bqk"}> : () -> ()
    %cst_281 = arith.constant dense<0.000000e+00> : vector<2x8x8xf32>
    %541 = tpu.matmul %536, %538, %cst_281 {dimension_numbers = #tpu.dot_dimension_numbers<[2], [2], [1], [1], [0, 0, 0, 1, 1, 1], [0], [0]>} : vector<2x8x32xf32>, vector<2x8x32xf32>, vector<2x8x8xf32> -> vector<2x8x8xf32>
    "tpu.trace_stop"() : () -> ()
    %542 = vector.broadcast %2 : vector<2x1x8xf32> to vector<2x8x8xf32>
    %543 = arith.addf %541, %542 : vector<2x8x8xf32>
    %cst_282 = arith.constant dense<0xFF800000> : vector<2x8xf32>
    %544 = vector.multi_reduction <maximumf>, %543, %cst_282 [2] : vector<2x8x8xf32> to vector<2x8xf32>
    %545 = vector.shape_cast %544 : vector<2x8xf32> to vector<2x8x1xf32>
    %546 = vector.broadcast %545 : vector<2x8x1xf32> to vector<2x8x8xf32>
    %547 = arith.subf %543, %546 : vector<2x8x8xf32>
    %548 = math.exp %547 : vector<2x8x8xf32>
    %cst_283 = arith.constant dense<0.000000e+00> : vector<2x8xf32>
    %549 = vector.multi_reduction <add>, %548, %cst_283 [2] : vector<2x8x8xf32> to vector<2x8xf32>
    %550 = vector.shape_cast %549 : vector<2x8xf32> to vector<2x8x1xf32>
    %551 = tpu.reciprocal %550 {approx = true} : vector<2x8x1xf32> -> vector<2x8x1xf32>
    %552 = vector.broadcast %551 : vector<2x8x1xf32> to vector<2x8x8xf32>
    %553 = arith.mulf %548, %552 : vector<2x8x8xf32>
    "tpu.trace_start"() <{level = 10 : i32, message = "bqk,bkd->bqd"}> : () -> ()
    %cst_284 = arith.constant dense<0.000000e+00> : vector<2x8x32xf32>
    %554 = tpu.matmul %553, %540, %cst_284 {dimension_numbers = #tpu.dot_dimension_numbers<[2], [1], [1], [2], [0, 0, 0, 1, 1, 2], [0], [0]>} : vector<2x8x8xf32>, vector<2x8x32xf32>, vector<2x8x32xf32> -> vector<2x8x32xf32>
    "tpu.trace_stop"() : () -> ()
    %555 = vector.shape_cast %554 : vector<2x8x32xf32> to vector<16x32xf32>
    %c5_285 = arith.constant 5 : index
    %c0_286 = arith.constant 0 : index
    %c0_287 = arith.constant 0 : index
    %556 = vector.load %arg5[%c5_285, %c0_286, %c0_287] : memref<6x32x32xf32, #tpu.memory_space<vmem>>, vector<1x32x32xf32>
    %557 = vector.shape_cast %556 : vector<1x32x32xf32> to vector<32x32xf32>
    %cst_288 = arith.constant dense<0.000000e+00> : vector<16x32xf32>
    %558 = tpu.matmul %555, %557, %cst_288 {dimension_numbers = #tpu.dot_dimension_numbers<[1], [0], [0], [1], [0, 0, 1, 1], [], []>} : vector<16x32xf32>, vector<32x32xf32>, vector<16x32xf32> -> vector<16x32xf32>
    %c5_289 = arith.constant 5 : index
    %c0_290 = arith.constant 0 : index
    %c0_291 = arith.constant 0 : index
    %559 = vector.load %arg6[%c5_289, %c0_290, %c0_291] : memref<6x1x32xf32, #tpu.memory_space<vmem>>, vector<1x1x32xf32>
    %560 = vector.shape_cast %559 : vector<1x1x32xf32> to vector<1x32xf32>
    %561 = vector.broadcast %560 : vector<1x32xf32> to vector<16x32xf32>
    %562 = arith.addf %558, %561 : vector<16x32xf32>
    %563 = arith.addf %527, %562 : vector<16x32xf32>
    %cst_292 = arith.constant dense<0.000000e+00> : vector<16xf32>
    %564 = vector.multi_reduction <add>, %563, %cst_292 [1] : vector<16x32xf32> to vector<16xf32>
    %565 = vector.shape_cast %564 : vector<16xf32> to vector<16x1xf32>
    %cst_293 = arith.constant 3.200000e+01 : f32
    %566 = vector.broadcast %cst_293 : f32 to vector<16x1xf32>
    %567 = arith.divf %565, %566 : vector<16x1xf32>
    %568 = vector.broadcast %567 : vector<16x1xf32> to vector<16x32xf32>
    %569 = arith.subf %563, %568 : vector<16x32xf32>
    %570 = arith.mulf %569, %569 : vector<16x32xf32>
    %cst_294 = arith.constant dense<0.000000e+00> : vector<16xf32>
    %571 = vector.multi_reduction <add>, %570, %cst_294 [1] : vector<16x32xf32> to vector<16xf32>
    %572 = vector.shape_cast %571 : vector<16xf32> to vector<16x1xf32>
    %cst_295 = arith.constant 3.200000e+01 : f32
    %573 = vector.broadcast %cst_295 : f32 to vector<16x1xf32>
    %574 = arith.divf %572, %573 : vector<16x1xf32>
    %575 = vector.broadcast %567 : vector<16x1xf32> to vector<16x32xf32>
    %576 = arith.subf %563, %575 : vector<16x32xf32>
    %cst_296 = arith.constant 9.99999974E-6 : f32
    %577 = vector.broadcast %cst_296 : f32 to vector<16x1xf32>
    %578 = arith.addf %574, %577 : vector<16x1xf32>
    %579 = math.rsqrt %578 : vector<16x1xf32>
    %580 = vector.broadcast %579 : vector<16x1xf32> to vector<16x32xf32>
    %581 = arith.mulf %576, %580 : vector<16x32xf32>
    %c5_297 = arith.constant 5 : index
    %c0_298 = arith.constant 0 : index
    %c0_299 = arith.constant 0 : index
    %582 = vector.load %arg7[%c5_297, %c0_298, %c0_299] : memref<6x1x32xf32, #tpu.memory_space<vmem>>, vector<1x1x32xf32>
    %583 = vector.shape_cast %582 : vector<1x1x32xf32> to vector<1x32xf32>
    %584 = vector.broadcast %583 : vector<1x32xf32> to vector<16x32xf32>
    %585 = arith.mulf %581, %584 : vector<16x32xf32>
    %c5_300 = arith.constant 5 : index
    %c0_301 = arith.constant 0 : index
    %c0_302 = arith.constant 0 : index
    %586 = vector.load %arg8[%c5_300, %c0_301, %c0_302] : memref<6x1x32xf32, #tpu.memory_space<vmem>>, vector<1x1x32xf32>
    %587 = vector.shape_cast %586 : vector<1x1x32xf32> to vector<1x32xf32>
    %588 = vector.broadcast %587 : vector<1x32xf32> to vector<16x32xf32>
    %589 = arith.addf %585, %588 : vector<16x32xf32>
    %c5_303 = arith.constant 5 : index
    %c0_304 = arith.constant 0 : index
    %c0_305 = arith.constant 0 : index
    %590 = vector.load %arg9[%c5_303, %c0_304, %c0_305] : memref<6x32x64xf32, #tpu.memory_space<vmem>>, vector<1x32x64xf32>
    %591 = vector.shape_cast %590 : vector<1x32x64xf32> to vector<32x64xf32>
    %cst_306 = arith.constant dense<0.000000e+00> : vector<16x64xf32>
    %592 = tpu.matmul %589, %591, %cst_306 {dimension_numbers = #tpu.dot_dimension_numbers<[1], [0], [0], [1], [0, 0, 1, 1], [], []>} : vector<16x32xf32>, vector<32x64xf32>, vector<16x64xf32> -> vector<16x64xf32>
    %c5_307 = arith.constant 5 : index
    %c0_308 = arith.constant 0 : index
    %c0_309 = arith.constant 0 : index
    %593 = vector.load %arg10[%c5_307, %c0_308, %c0_309] : memref<6x1x64xf32, #tpu.memory_space<vmem>>, vector<1x1x64xf32>
    %594 = vector.shape_cast %593 : vector<1x1x64xf32> to vector<1x64xf32>
    %595 = vector.broadcast %594 : vector<1x64xf32> to vector<16x64xf32>
    %596 = arith.addf %592, %595 : vector<16x64xf32>
    %cst_310 = arith.constant 0.000000e+00 : f32
    %597 = vector.broadcast %cst_310 : f32 to vector<16x64xf32>
    %598 = arith.maximumf %596, %597 : vector<16x64xf32>
    %c5_311 = arith.constant 5 : index
    %c0_312 = arith.constant 0 : index
    %c0_313 = arith.constant 0 : index
    %599 = vector.load %arg11[%c5_311, %c0_312, %c0_313] : memref<6x64x32xf32, #tpu.memory_space<vmem>>, vector<1x64x32xf32>
    %600 = vector.shape_cast %599 : vector<1x64x32xf32> to vector<64x32xf32>
    %cst_314 = arith.constant dense<0.000000e+00> : vector<16x32xf32>
    %601 = tpu.matmul %598, %600, %cst_314 {dimension_numbers = #tpu.dot_dimension_numbers<[1], [0], [0], [1], [0, 0, 1, 1], [], []>} : vector<16x64xf32>, vector<64x32xf32>, vector<16x32xf32> -> vector<16x32xf32>
    %c5_315 = arith.constant 5 : index
    %c0_316 = arith.constant 0 : index
    %c0_317 = arith.constant 0 : index
    %602 = vector.load %arg12[%c5_315, %c0_316, %c0_317] : memref<6x1x32xf32, #tpu.memory_space<vmem>>, vector<1x1x32xf32>
    %603 = vector.shape_cast %602 : vector<1x1x32xf32> to vector<1x32xf32>
    %604 = vector.broadcast %603 : vector<1x32xf32> to vector<16x32xf32>
    %605 = arith.addf %601, %604 : vector<16x32xf32>
    %606 = arith.addf %589, %605 : vector<16x32xf32>
    %cst_318 = arith.constant dense<0.000000e+00> : vector<16xf32>
    %607 = vector.multi_reduction <add>, %606, %cst_318 [1] : vector<16x32xf32> to vector<16xf32>
    %608 = vector.shape_cast %607 : vector<16xf32> to vector<16x1xf32>
    %cst_319 = arith.constant 3.200000e+01 : f32
    %609 = vector.broadcast %cst_319 : f32 to vector<16x1xf32>
    %610 = arith.divf %608, %609 : vector<16x1xf32>
    %611 = vector.broadcast %610 : vector<16x1xf32> to vector<16x32xf32>
    %612 = arith.subf %606, %611 : vector<16x32xf32>
    %613 = arith.mulf %612, %612 : vector<16x32xf32>
    %cst_320 = arith.constant dense<0.000000e+00> : vector<16xf32>
    %614 = vector.multi_reduction <add>, %613, %cst_320 [1] : vector<16x32xf32> to vector<16xf32>
    %615 = vector.shape_cast %614 : vector<16xf32> to vector<16x1xf32>
    %cst_321 = arith.constant 3.200000e+01 : f32
    %616 = vector.broadcast %cst_321 : f32 to vector<16x1xf32>
    %617 = arith.divf %615, %616 : vector<16x1xf32>
    %618 = vector.broadcast %610 : vector<16x1xf32> to vector<16x32xf32>
    %619 = arith.subf %606, %618 : vector<16x32xf32>
    %cst_322 = arith.constant 9.99999974E-6 : f32
    %620 = vector.broadcast %cst_322 : f32 to vector<16x1xf32>
    %621 = arith.addf %617, %620 : vector<16x1xf32>
    %622 = math.rsqrt %621 : vector<16x1xf32>
    %623 = vector.broadcast %622 : vector<16x1xf32> to vector<16x32xf32>
    %624 = arith.mulf %619, %623 : vector<16x32xf32>
    %c5_323 = arith.constant 5 : index
    %c0_324 = arith.constant 0 : index
    %c0_325 = arith.constant 0 : index
    %625 = vector.load %arg13[%c5_323, %c0_324, %c0_325] : memref<6x1x32xf32, #tpu.memory_space<vmem>>, vector<1x1x32xf32>
    %626 = vector.shape_cast %625 : vector<1x1x32xf32> to vector<1x32xf32>
    %627 = vector.broadcast %626 : vector<1x32xf32> to vector<16x32xf32>
    %628 = arith.mulf %624, %627 : vector<16x32xf32>
    %c5_326 = arith.constant 5 : index
    %c0_327 = arith.constant 0 : index
    %c0_328 = arith.constant 0 : index
    %629 = vector.load %arg14[%c5_326, %c0_327, %c0_328] : memref<6x1x32xf32, #tpu.memory_space<vmem>>, vector<1x1x32xf32>
    %630 = vector.shape_cast %629 : vector<1x1x32xf32> to vector<1x32xf32>
    %631 = vector.broadcast %630 : vector<1x32xf32> to vector<16x32xf32>
    %632 = arith.addf %628, %631 : vector<16x32xf32>
    %c0_329 = arith.constant 0 : index
    %c0_330 = arith.constant 0 : index
    %633 = vector.load %arg15[%c0_329, %c0_330] : memref<32x128xf32, #tpu.memory_space<vmem>>, vector<32x128xf32>
    %cst_331 = arith.constant dense<0.000000e+00> : vector<16x128xf32>
    %634 = tpu.matmul %632, %633, %cst_331 {dimension_numbers = #tpu.dot_dimension_numbers<[1], [0], [0], [1], [0, 0, 1, 1], [], []>} : vector<16x32xf32>, vector<32x128xf32>, vector<16x128xf32> -> vector<16x128xf32>
    %c0_332 = arith.constant 0 : index
    %c0_333 = arith.constant 0 : index
    %635 = vector.load %arg16[%c0_332, %c0_333] : memref<1x128xf32, #tpu.memory_space<vmem>>, vector<1x128xf32>
    %636 = vector.broadcast %635 : vector<1x128xf32> to vector<16x128xf32>
    %637 = arith.addf %634, %636 : vector<16x128xf32>
    %cst_334 = arith.constant 0.000000e+00 : f32
    %638 = vector.broadcast %cst_334 : f32 to vector<16x128xf32>
    %639 = arith.maximumf %637, %638 : vector<16x128xf32>
    %c0_335 = arith.constant 0 : index
    %c0_336 = arith.constant 0 : index
    %640 = vector.load %arg17[%c0_335, %c0_336] : memref<16x128xf32, #tpu.memory_space<vmem>>, vector<16x128xf32>
    tpu.vector_store %arg17[%c0_335, %c0_336], %639 {strides = array<i32>} : memref<16x128xf32, #tpu.memory_space<vmem>>, vector<16x128xf32>,
    return
  }
  func.func @transform_0(%arg0: i32) -> (i32, i32, i32) {
    %c0_i32 = arith.constant 0 : i32
    %c0_i32_0 = arith.constant 0 : i32
    %c0_i32_1 = arith.constant 0 : i32
    %c0_i32_2 = arith.constant 0 : i32
    return %c0_i32, %c0_i32_0, %c0_i32_1 : i32, i32, i32
  }
  func.func @transform_1(%arg0: i32) -> (i32, i32, i32) {
    %c0_i32 = arith.constant 0 : i32
    %c0_i32_0 = arith.constant 0 : i32
    %c0_i32_1 = arith.constant 0 : i32
    %c0_i32_2 = arith.constant 0 : i32
    return %c0_i32, %c0_i32_0, %c0_i32_1 : i32, i32, i32
  }
  func.func @transform_2(%arg0: i32) -> (i32, i32, i32) {
    %c0_i32 = arith.constant 0 : i32
    %c0_i32_0 = arith.constant 0 : i32
    %c0_i32_1 = arith.constant 0 : i32
    %c0_i32_2 = arith.constant 0 : i32
    return %c0_i32, %c0_i32_0, %c0_i32_1 : i32, i32, i32
  }
  func.func @transform_3(%arg0: i32) -> (i32, i32, i32) {
    %c0_i32 = arith.constant 0 : i32
    %c0_i32_0 = arith.constant 0 : i32
    %c0_i32_1 = arith.constant 0 : i32
    %c0_i32_2 = arith.constant 0 : i32
    return %c0_i32, %c0_i32_0, %c0_i32_1 : i32, i32, i32
  }
  func.func @transform_4(%arg0: i32) -> (i32, i32, i32) {
    %c0_i32 = arith.constant 0 : i32
    %c0_i32_0 = arith.constant 0 : i32
    %c0_i32_1 = arith.constant 0 : i32
    %c0_i32_2 = arith.constant 0 : i32
    return %c0_i32, %c0_i32_0, %c0_i32_1 : i32, i32, i32
  }
  func.func @transform_5(%arg0: i32) -> (i32, i32, i32) {
    %c0_i32 = arith.constant 0 : i32
    %c0_i32_0 = arith.constant 0 : i32
    %c0_i32_1 = arith.constant 0 : i32
    %c0_i32_2 = arith.constant 0 : i32
    return %c0_i32, %c0_i32_0, %c0_i32_1 : i32, i32, i32
  }
  func.func @transform_6(%arg0: i32) -> (i32, i32, i32) {
    %c0_i32 = arith.constant 0 : i32
    %c0_i32_0 = arith.constant 0 : i32
    %c0_i32_1 = arith.constant 0 : i32
    %c0_i32_2 = arith.constant 0 : i32
    return %c0_i32, %c0_i32_0, %c0_i32_1 : i32, i32, i32
  }
  func.func @transform_7(%arg0: i32) -> (i32, i32, i32) {
    %c0_i32 = arith.constant 0 : i32
    %c0_i32_0 = arith.constant 0 : i32
    %c0_i32_1 = arith.constant 0 : i32
    %c0_i32_2 = arith.constant 0 : i32
    return %c0_i32, %c0_i32_0, %c0_i32_1 : i32, i32, i32
  }
  func.func @transform_8(%arg0: i32) -> (i32, i32, i32) {
    %c0_i32 = arith.constant 0 : i32
    %c0_i32_0 = arith.constant 0 : i32
    %c0_i32_1 = arith.constant 0 : i32
    %c0_i32_2 = arith.constant 0 : i32
    return %c0_i32, %c0_i32_0, %c0_i32_1 : i32, i32, i32
  }
  func.func @transform_9(%arg0: i32) -> (i32, i32, i32) {
    %c0_i32 = arith.constant 0 : i32
    %c0_i32_0 = arith.constant 0 : i32
    %c0_i32_1 = arith.constant 0 : i32
    %c0_i32_2 = arith.constant 0 : i32
    return %c0_i32, %c0_i32_0, %c0_i32_1 : i32, i32, i32
  }
  func.func @transform_10(%arg0: i32) -> (i32, i32, i32) {
    %c0_i32 = arith.constant 0 : i32
    %c0_i32_0 = arith.constant 0 : i32
    %c0_i32_1 = arith.constant 0 : i32
    %c0_i32_2 = arith.constant 0 : i32
    return %c0_i32, %c0_i32_0, %c0_i32_1 : i32, i32, i32
  }
  func.func @transform_11(%arg0: i32) -> (i32, i32, i32) {
    %c0_i32 = arith.constant 0 : i32
    %c0_i32_0 = arith.constant 0 : i32
    %c0_i32_1 = arith.constant 0 : i32
    %c0_i32_2 = arith.constant 0 : i32
    return %c0_i32, %c0_i32_0, %c0_i32_1 : i32, i32, i32
  }
  func.func @transform_12(%arg0: i32) -> (i32, i32, i32) {
    %c0_i32 = arith.constant 0 : i32
    %c0_i32_0 = arith.constant 0 : i32
    %c0_i32_1 = arith.constant 0 : i32
    %c0_i32_2 = arith.constant 0 : i32
    return %c0_i32, %c0_i32_0, %c0_i32_1 : i32, i32, i32
  }
  func.func @transform_13(%arg0: i32) -> (i32, i32, i32) {
    %c0_i32 = arith.constant 0 : i32
    %c0_i32_0 = arith.constant 0 : i32
    %c0_i32_1 = arith.constant 0 : i32
    %c0_i32_2 = arith.constant 0 : i32
    return %c0_i32, %c0_i32_0, %c0_i32_1 : i32, i32, i32
  }
  func.func @transform_14(%arg0: i32) -> (i32, i32) {
    %c0_i32 = arith.constant 0 : i32
    %c0_i32_0 = arith.constant 0 : i32
    %c0_i32_1 = arith.constant 0 : i32
    return %c0_i32, %c0_i32_0 : i32, i32
  }
  func.func @transform_15(%arg0: i32) -> (i32, i32) {
    %c0_i32 = arith.constant 0 : i32
    %c0_i32_0 = arith.constant 0 : i32
    %c0_i32_1 = arith.constant 0 : i32
    return %c0_i32, %c0_i32_0 : i32, i32
  }
  func.func @transform_16(%arg0: i32) -> (i32, i32) {
    %c0_i32 = arith.constant 0 : i32
    %c0_i32_0 = arith.constant 0 : i32
    %c0_i32_1 = arith.constant 0 : i32
    return %c0_i32, %c0_i32_0 : i32, i32
  }
}

</mosaic_0001>

<llo_original>
// kernel: tpu_custom_call.1
$region0: #{tpu_custom_call.1}
  #allocation0 [shape = 'u32[]', space=smem, size = 0x4, offset = 0x4, fixed_abs, tag = 'smem constant byte address 0x4 - core index']
  #allocation1 [shape = 'u32[144,128]{1,0:T(1,128)}', space=vmem, size = 0x12000, scoped, tag = 'internal scratch']
  %s0 = inlined_call_operand.hbm [shape: f32[2,8,32], index: 0, kind: input, shape index: {}]
  %s1 = inlined_call_operand.hbm [shape: f32[2,1,8], index: 1, kind: input, shape index: {}]
  %s2 = inlined_call_operand.vmem [shape: f32[6,32,96], index: 2, kind: input, shape index: {}]
  %s3 = inlined_call_operand.hbm [shape: f32[6,1,96], index: 3, kind: input, shape index: {}]
  %s4 = inlined_call_operand.vmem [shape: f32[6,32,32], index: 4, kind: input, shape index: {}]
  %s5 = inlined_call_operand.hbm [shape: f32[6,1,32], index: 5, kind: input, shape index: {}]
  %s6 = inlined_call_operand.hbm [shape: f32[6,1,32], index: 6, kind: input, shape index: {}]
  %s7 = inlined_call_operand.hbm [shape: f32[6,1,32], index: 7, kind: input, shape index: {}]
  %s8 = inlined_call_operand.vmem [shape: f32[6,32,64], index: 8, kind: input, shape index: {}]
  %s9 = inlined_call_operand.hbm [shape: f32[6,1,64], index: 9, kind: input, shape index: {}]
  %s10 = inlined_call_operand.vmem [shape: f32[6,64,32], index: 10, kind: input, shape index: {}]
  %s11 = inlined_call_operand.hbm [shape: f32[6,1,32], index: 11, kind: input, shape index: {}]
  %s12 = inlined_call_operand.vmem [shape: f32[6,1,32], index: 12, kind: input, shape index: {}]
  %s13 = inlined_call_operand.vmem [shape: f32[6,1,32], index: 13, kind: input, shape index: {}]
  %s14 = inlined_call_operand.vmem [shape: f32[32,128], index: 14, kind: input, shape index: {}]
  %s15 = inlined_call_operand.vmem [shape: f32[1,128], index: 15, kind: input, shape index: {}]
  %s16 = inlined_call_operand.hbm [shape: f32[16,128], index: 16, kind: output, shape index: {}]
  %s17 = sld [smem:[#allocation0]]
  $region106: #{tpu_custom_call.1} parent=0
    _
  %s19 = ssub.s32 1, %s17
  %s20 = scalar_select 0, %s19, %s17
  $region1: #{tpu_custom_call.1} parent=0
    #allocation2 [shape = 'u8[8192]{0}', space=vmem, size = 0x2000, scoped, tag = 'input window, operand 0, single buffered']
    #allocation3 [shape = 's32[1]{0}', space=sflag, size = 0x4, scoped, tag = 'scoped memory for tpu_custom_call.1']
    #allocation4 [shape = 's32[1]{0}', space=sflag, size = 0x4, scoped, tag = 'scoped memory for tpu_custom_call.1']
    #allocation5 [shape = 'u8[1024]{0}', space=vmem, size = 0x400, scoped, tag = 'input window, operand 1, single buffered']
    #allocation6 [shape = 's32[1]{0}', space=sflag, size = 0x4, scoped, tag = 'scoped memory for tpu_custom_call.1']
    #allocation7 [shape = 'u8[3072]{0}', space=vmem, size = 0xc00, scoped, tag = 'input window, operand 3, single buffered']
    #allocation8 [shape = 'u8[3072]{0}', space=vmem, size = 0xc00, scoped, tag = 'input window, operand 5, single buffered']
    #allocation9 [shape = 's32[1]{0}', space=sflag, size = 0x4, scoped, tag = 'scoped memory for tpu_custom_call.1']
    #allocation10 [shape = 'u8[3072]{0}', space=vmem, size = 0xc00, scoped, tag = 'input window, operand 6, single buffered']
    #allocation11 [shape = 'u8[3072]{0}', space=vmem, size = 0xc00, scoped, tag = 'input window, operand 7, single buffered']
    #allocation12 [shape = 's32[1]{0}', space=sflag, size = 0x4, scoped, tag = 'scoped memory for tpu_custom_call.1']
    #allocation13 [shape = 'u8[3072]{0}', space=vmem, size = 0xc00, scoped, tag = 'input window, operand 9, single buffered']
    #allocation14 [shape = 'u8[3072]{0}', space=vmem, size = 0xc00, scoped, tag = 'input window, operand 11, single buffered']
    #allocation15 [shape = 's32[1]{0}', space=sflag, size = 0x4, scoped, tag = 'scoped memory for tpu_custom_call.1']
    #allocation16 [shape = 'u8[8192]{0}', space=vmem, size = 0x2000, scoped, tag = 'output window, operand 0, single buffered']
    %21 = vsyncpa [#allocation3], 0
    %22 = vsyncpa [#allocation6], 0
    %23 = vsyncpa [#allocation9], 0
    %24 = vsyncpa [#allocation12], 0
    %25 = vsyncpa [#allocation15], 0
    %26 = vsyncpa [#allocation4], 0
    // Predicated region
    $region2: #{tpu_custom_call.1} parent=1 // pred_check
      _
    $region3: #{tpu_custom_call.1} parent=1 // pred_check_branch
      %28 = sbr.rel (0) target = $region5
    $region4: #{tpu_custom_call.1} parent=1 // pred_region
      %s30 = ssub.s32 256, 256
      %31 = vsyncadd [#allocation3], %s30
      %s32 = sshll.u32 [#allocation2], 4
      %s33 = int_to_ptr.vmem [resolvable:$true] %s32
      %38 = dma.hbm_to_vmem [thread:$0]  %s0, 256, %s33, [#allocation3], 128, 128, 8
    $region5: #{tpu_custom_call.1} parent=1 // pred_fallthru
      _
    // Predicated region
    $region6: #{tpu_custom_call.1} parent=1 // pred_check
      _
    $region7: #{tpu_custom_call.1} parent=1 // pred_check_branch
      %40 = sbr.rel (0) target = $region9
    $region8: #{tpu_custom_call.1} parent=1 // pred_region
      %s42 = ssub.s32 32, 32
      %43 = vsyncadd [#allocation6], %s42
      %s44 = sshll.u32 [#allocation5], 4
      %s45 = int_to_ptr.vmem [resolvable:$true] %s44
      %50 = dma.hbm_to_vmem [thread:$0]  %s1, 32, %s45, [#allocation6], 16, 16, 1
    $region9: #{tpu_custom_call.1} parent=1 // pred_fallthru
      _
    // Predicated region
    $region10: #{tpu_custom_call.1} parent=1 // pred_check
      _
    $region11: #{tpu_custom_call.1} parent=1 // pred_check_branch
      %52 = sbr.rel (0) target = $region13
    $region12: #{tpu_custom_call.1} parent=1 // pred_region
      _
    $region13: #{tpu_custom_call.1} parent=1 // pred_fallthru
      _
    // Predicated region
    $region14: #{tpu_custom_call.1} parent=1 // pred_check
      _
    $region15: #{tpu_custom_call.1} parent=1 // pred_check_branch
      %54 = sbr.rel (0) target = $region17
    $region16: #{tpu_custom_call.1} parent=1 // pred_region
      %s56 = ssub.s32 96, 96
      %57 = vsyncadd [#allocation6], %s56
      %s58 = sshll.u32 [#allocation7], 4
      %s59 = int_to_ptr.vmem [resolvable:$true] %s58
      %64 = dma.hbm_to_vmem [thread:$0]  %s3, 96, %s59, [#allocation6], 16, 16, 1
    $region17: #{tpu_custom_call.1} parent=1 // pred_fallthru
      _
    // Predicated region
    $region18: #{tpu_custom_call.1} parent=1 // pred_check
      _
    $region19: #{tpu_custom_call.1} parent=1 // pred_check_branch
      %66 = sbr.rel (0) target = $region21
    $region20: #{tpu_custom_call.1} parent=1 // pred_region
      _
    $region21: #{tpu_custom_call.1} parent=1 // pred_fallthru
      _
    // Predicated region
    $region22: #{tpu_custom_call.1} parent=1 // pred_check
      _
    $region23: #{tpu_custom_call.1} parent=1 // pred_check_branch
      %68 = sbr.rel (0) target = $region25
    $region24: #{tpu_custom_call.1} parent=1 // pred_region
      %s70 = ssub.s32 96, 96
      %71 = vsyncadd [#allocation9], %s70
      %s72 = sshll.u32 [#allocation8], 4
      %s73 = int_to_ptr.vmem [resolvable:$true] %s72
      %78 = dma.hbm_to_vmem [thread:$0]  %s5, 96, %s73, [#allocation9], 16, 16, 1
    $region25: #{tpu_custom_call.1} parent=1 // pred_fallthru
      _
    // Predicated region
    $region26: #{tpu_custom_call.1} parent=1 // pred_check
      _
    $region27: #{tpu_custom_call.1} parent=1 // pred_check_branch
      %80 = sbr.rel (0) target = $region29
    $region28: #{tpu_custom_call.1} parent=1 // pred_region
      %s82 = ssub.s32 96, 96
      %83 = vsyncadd [#allocation9], %s82
      %s84 = sshll.u32 [#allocation10], 4
      %s85 = int_to_ptr.vmem [resolvable:$true] %s84
      %90 = dma.hbm_to_vmem [thread:$0]  %s6, 96, %s85, [#allocation9], 16, 16, 1
    $region29: #{tpu_custom_call.1} parent=1 // pred_fallthru
      _
    // Predicated region
    $region30: #{tpu_custom_call.1} parent=1 // pred_check
      _
    $region31: #{tpu_custom_call.1} parent=1 // pred_check_branch
      %92 = sbr.rel (0) target = $region33
    $region32: #{tpu_custom_call.1} parent=1 // pred_region
      %s94 = ssub.s32 96, 96
      %95 = vsyncadd [#allocation12], %s94
      %s96 = sshll.u32 [#allocation11], 4
      %s97 = int_to_ptr.vmem [resolvable:$true] %s96
      %102 = dma.hbm_to_vmem [thread:$0]  %s7, 96, %s97, [#allocation12], 16, 16, 1
    $region33: #{tpu_custom_call.1} parent=1 // pred_fallthru
      _
    // Predicated region
    $region34: #{tpu_custom_call.1} parent=1 // pred_check
      _
    $region35: #{tpu_custom_call.1} parent=1 // pred_check_branch
      %104 = sbr.rel (0) target = $region37
    $region36: #{tpu_custom_call.1} parent=1 // pred_region
      _
    $region37: #{tpu_custom_call.1} parent=1 // pred_fallthru
      _
    // Predicated region
    $region38: #{tpu_custom_call.1} parent=1 // pred_check
      _
    $region39: #{tpu_custom_call.1} parent=1 // pred_check_branch
      %106 = sbr.rel (0) target = $region41
    $region40: #{tpu_custom_call.1} parent=1 // pred_region
      %s108 = ssub.s32 96, 96
      %109 = vsyncadd [#allocation12], %s108
      %s110 = sshll.u32 [#allocation13], 4
      %s111 = int_to_ptr.vmem [resolvable:$true] %s110
      %116 = dma.hbm_to_vmem [thread:$0]  %s9, 96, %s111, [#allocation12], 16, 16, 1
    $region41: #{tpu_custom_call.1} parent=1 // pred_fallthru
      _
    // Predicated region
    $region42: #{tpu_custom_call.1} parent=1 // pred_check
      _
    $region43: #{tpu_custom_call.1} parent=1 // pred_check_branch
      %118 = sbr.rel (0) target = $region45
    $region44: #{tpu_custom_call.1} parent=1 // pred_region
      _
    $region45: #{tpu_custom_call.1} parent=1 // pred_fallthru
      _
    // Predicated region
    $region46: #{tpu_custom_call.1} parent=1 // pred_check
      _
    $region47: #{tpu_custom_call.1} parent=1 // pred_check_branch
      %120 = sbr.rel (0) target = $region49
    $region48: #{tpu_custom_call.1} parent=1 // pred_region
      %s122 = ssub.s32 96, 96
      %123 = vsyncadd [#allocation15], %s122
      %s124 = sshll.u32 [#allocation14], 4
      %s125 = int_to_ptr.vmem [resolvable:$true] %s124
      %130 = dma.hbm_to_vmem [thread:$0]  %s11, 96, %s125, [#allocation15], 16, 16, 1
    $region49: #{tpu_custom_call.1} parent=1 // pred_fallthru
      _
    // Predicated region
    $region50: #{tpu_custom_call.1} parent=1 // pred_check
      _
    $region51: #{tpu_custom_call.1} parent=1 // pred_check_branch
      %132 = sbr.rel (0) target = $region53
    $region52: #{tpu_custom_call.1} parent=1 // pred_region
      _
    $region53: #{tpu_custom_call.1} parent=1 // pred_fallthru
      _
    // Predicated region
    $region54: #{tpu_custom_call.1} parent=1 // pred_check
      _
    $region55: #{tpu_custom_call.1} parent=1 // pred_check_branch
      %134 = sbr.rel (0) target = $region57
    $region56: #{tpu_custom_call.1} parent=1 // pred_region
      _
    $region57: #{tpu_custom_call.1} parent=1 // pred_fallthru
      _
    // Predicated region
    $region58: #{tpu_custom_call.1} parent=1 // pred_check
      _
    $region59: #{tpu_custom_call.1} parent=1 // pred_check_branch
      %136 = sbr.rel (0) target = $region61
    $region60: #{tpu_custom_call.1} parent=1 // pred_region
      _
    $region61: #{tpu_custom_call.1} parent=1 // pred_fallthru
      _
    // Predicated region
    $region62: #{tpu_custom_call.1} parent=1 // pred_check
      _
    $region63: #{tpu_custom_call.1} parent=1 // pred_check_branch
      %138 = sbr.rel (0) target = $region65
    $region64: #{tpu_custom_call.1} parent=1 // pred_region
      _
    $region65: #{tpu_custom_call.1} parent=1 // pred_fallthru
      _
    // Predicated region
    $region66: #{tpu_custom_call.1} parent=1 // pred_check
      _
    $region67: #{tpu_custom_call.1} parent=1 // pred_check_branch
      %140 = sbr.rel (0) target = $region69
    $region68: #{tpu_custom_call.1} parent=1 // pred_region
      %141 = dma.done [#allocation3], 256
    $region69: #{tpu_custom_call.1} parent=1 // pred_fallthru
      _
    // Predicated region
    $region70: #{tpu_custom_call.1} parent=1 // pred_check
      _
    $region71: #{tpu_custom_call.1} parent=1 // pred_check_branch
      %143 = sbr.rel (0) target = $region73
    $region72: #{tpu_custom_call.1} parent=1 // pred_region
      %144 = dma.done [#allocation6], 32
    $region73: #{tpu_custom_call.1} parent=1 // pred_fallthru
      _
    // Predicated region
    $region74: #{tpu_custom_call.1} parent=1 // pred_check
      _
    $region75: #{tpu_custom_call.1} parent=1 // pred_check_branch
      %146 = sbr.rel (0) target = $region77
    $region76: #{tpu_custom_call.1} parent=1 // pred_region
      %147 = dma.done [#allocation6], 96
    $region77: #{tpu_custom_call.1} parent=1 // pred_fallthru
      _
    // Predicated region
    $region78: #{tpu_custom_call.1} parent=1 // pred_check
      _
    $region79: #{tpu_custom_call.1} parent=1 // pred_check_branch
      %149 = sbr.rel (0) target = $region81
    $region80: #{tpu_custom_call.1} parent=1 // pred_region
      %150 = dma.done [#allocation9], 96
    $region81: #{tpu_custom_call.1} parent=1 // pred_fallthru
      _
    // Predicated region
    $region82: #{tpu_custom_call.1} parent=1 // pred_check
      _
    $region83: #{tpu_custom_call.1} parent=1 // pred_check_branch
      %152 = sbr.rel (0) target = $region85
    $region84: #{tpu_custom_call.1} parent=1 // pred_region
      %153 = dma.done [#allocation9], 96
    $region85: #{tpu_custom_call.1} parent=1 // pred_fallthru
      _
    // Predicated region
    $region86: #{tpu_custom_call.1} parent=1 // pred_check
      _
    $region87: #{tpu_custom_call.1} parent=1 // pred_check_branch
      %155 = sbr.rel (0) target = $region89
    $region88: #{tpu_custom_call.1} parent=1 // pred_region
      %156 = dma.done [#allocation12], 96
    $region89: #{tpu_custom_call.1} parent=1 // pred_fallthru
      _
    // Predicated region
    $region90: #{tpu_custom_call.1} parent=1 // pred_check
      _
    $region91: #{tpu_custom_call.1} parent=1 // pred_check_branch
      %158 = sbr.rel (0) target = $region93
    $region92: #{tpu_custom_call.1} parent=1 // pred_region
      %159 = dma.done [#allocation12], 96
    $region93: #{tpu_custom_call.1} parent=1 // pred_fallthru
      _
    // Predicated region
    $region94: #{tpu_custom_call.1} parent=1 // pred_check
      _
    $region95: #{tpu_custom_call.1} parent=1 // pred_check_branch
      %161 = sbr.rel (0) target = $region97
    $region96: #{tpu_custom_call.1} parent=1 // pred_region
      %162 = dma.done [#allocation15], 96
    $region97: #{tpu_custom_call.1} parent=1 // pred_fallthru
      _
    %v163 = vld [vmem:[#allocation2] sm:$0xff]
    %v164 = vld [vmem:[#allocation2 + $0x8] sm:$0xff]
    %v165 = vld [vmem:[#allocation5] sm:$0x1]
    %v166 = vld [vmem:[#allocation5 + $0x1] sm:$0x1]
    %v167 = vld [vmem:[%s2] sm:$0xff]
    %v168 = vld [vmem:[%s2 + $0x8] sm:$0xff]
    %v169 = vld [vmem:[%s2 + $0x10] sm:$0xff]
    %v170 = vld [vmem:[%s2 + $0x18] sm:$0xff]
    %v171 = vld [vmem:[#allocation7] sm:$0x1]
    %v173 = vlaneseq
    %v174 = vshrl.u32 %v173, 7
    %v175 = vsub.s32 0, %v174
    %v176 = vrot.slane %v171, %v175
    %vm178 = vcmask 261120
    %v180 = vsel %vm178, %v163, 0
    %v183 = vsel %vm178, %v164, 0
    %185 = vmatprep.subr.mxu0 0.0
    %186 = vmatpush1.msra.mxu0 %v167
    %187 = vmatprep.subr.mxu0 0.0
    %188 = vmatpush1.msra.mxu0 %v168
    %189 = vmatprep.subr.mxu0 0.0
    %190 = vmatpush1.msra.mxu0 %v169
    %191 = vmatprep.subr.mxu0 0.0
    %192 = vmatpush1.msra.mxu0 %v170
    %193 = vmatprep.subr.mxu0 0.0
    %194 = vmatpush1.msra.mxu0 0.0
    %195 = vmatprep.subr.mxu0 0.0
    %196 = vmatpush1.msra.mxu0 0.0
    %197 = vmatprep.subr.mxu0 0.0
    %198 = vmatpush1.msra.mxu0 0.0
    %199 = vmatprep.subr.mxu0 0.0
    %200 = vmatpush1.msra.mxu0 0.0
    %201 = vmatprep.subr.mxu0 0.0
    %202 = vmatpush1.msra.mxu0 0.0
    %203 = vmatprep.subr.mxu0 0.0
    %204 = vmatpush1.msra.mxu0 0.0
    %205 = vmatprep.subr.mxu0 0.0
    %206 = vmatpush1.msra.mxu0 0.0
    %207 = vmatprep.subr.mxu0 0.0
    %208 = vmatpush1.msra.mxu0 0.0
    %209 = vmatprep.subr.mxu0 0.0
    %210 = vmatpush1.msra.mxu0 0.0
    %211 = vmatprep.subr.mxu0 0.0
    %212 = vmatpush1.msra.mxu0 0.0
    %213 = vmatprep.subr.mxu0 0.0
    %214 = vmatpush1.msra.mxu0 0.0
    %215 = vmatprep.subr.mxu0 0.0
    %216 = vmatpush1.msra.mxu0 0.0
    %217 = vmatprep.subr.mxu0 0.0
    %218 = vmatpush1.msra.mxu0 0.0
    %219 = vmatprep.subr.mxu0 0.0
    %220 = vmatpush1.msra.mxu0 0.0
    %221 = vmatprep.subr.mxu0 0.0
    %222 = vmatpush1.msra.mxu0 0.0
    %223 = vmatprep.subr.mxu0 0.0
    %224 = vmatpush1.msra.mxu0 0.0
    %225 = vmatprep.subr.mxu0 0.0
    %226 = vmatpush1.msra.mxu0 0.0
    %227 = vmatprep.subr.mxu0 0.0
    %228 = vmatpush1.msra.mxu0 0.0
    %229 = vmatprep.subr.mxu0 0.0
    %230 = vmatpush1.msra.mxu0 0.0
    %231 = vmatprep.subr.mxu0 0.0
    %232 = vmatpush1.msra.mxu0 0.0
    %233 = vmatprep.subr.mxu0 0.0
    %234 = vmatpush1.msra.mxu0 0.0
    %235 = vmatprep.subr.mxu0 0.0
    %236 = vmatpush1.msra.mxu0 0.0
    %237 = vmatprep.subr.mxu0 0.0
    %238 = vmatpush1.msra.mxu0 0.0
    %239 = vmatprep.subr.mxu0 0.0
    %240 = vmatpush1.msra.mxu0 0.0
    %241 = vmatprep.subr.mxu0 0.0
    %242 = vmatpush1.msra.mxu0 0.0
    %243 = vmatprep.subr.mxu0 0.0
    %244 = vmatpush1.msra.mxu0 0.0
    %245 = vmatprep.subr.mxu0 0.0
    %246 = vmatpush1.msra.mxu0 0.0
    %247 = vmatprep.subr.mxu0 0.0
    %248 = vmatpush1.msra.mxu0 0.0
    %249 = vmatprep.mubr.f32.mxu0 0.0
    %250 = vmatmul.mubr.f32.gmra.mrb[0].mxu0 %v180
    %v251 = vpop.f32.mrb[0].mxu0
    %v252 = vadd.f32 %v176, %v251
    %v253 = vpop.f32.mrb[0].mxu0
    %254 = vmatprep.mubr.f32.mxu0 0.0
    %255 = vmatmul.mubr.f32.gmra.mrb[0].mxu0 %v183
    %v256 = vpop.f32.mrb[0].mxu0
    %v257 = vadd.f32 %v176, %v256
    %v258 = vpop.f32.mrb[0].mxu0
    %259 = vdwg.mxu0
    %v262 = vlaneseq
    %v263 = vshrl.u32 %v262, 7
    %v264 = vsub.s32 0, %v263
    %v265 = vrot.slane %v165, %v264
    %v266 = vlaneseq
    %v267 = vshrl.u32 %v266, 7
    %v268 = vsub.s32 0, %v267
    %v269 = vrot.slane %v166, %v268
    %273 = vrot.lane.b32.xlu0 %v252, 96
    %v274 = vpop.permute.xlu0 %273
    %v275 = vsel %vm178, %v252, 0
    %v277 = vsel %vm178, %v274, 0
    %279 = vmatprep.subr.mxu0 0.0
    %280 = vmatpush1.xpose.msra.mxu0 %v277
    %281 = vmatprep.subr.mxu0 0.0
    %282 = vmatpush1.xpose.msra.mxu0 0.0
    %283 = vmatprep.subr.mxu0 0.0
    %284 = vmatpush1.xpose.msra.mxu0 0.0
    %285 = vmatprep.subr.mxu0 0.0
    %286 = vmatpush1.xpose.msra.mxu0 0.0
    %287 = vmatprep.subr.mxu0 0.0
    %288 = vmatpush1.xpose.msra.mxu0 0.0
    %289 = vmatprep.subr.mxu0 0.0
    %290 = vmatpush1.xpose.msra.mxu0 0.0
    %291 = vmatprep.subr.mxu0 0.0
    %292 = vmatpush1.xpose.msra.mxu0 0.0
    %293 = vmatprep.subr.mxu0 0.0
    %294 = vmatpush1.xpose.msra.mxu0 0.0
    %295 = vmatprep.subr.mxu0 0.0
    %296 = vmatpush1.xpose.msra.mxu0 0.0
    %297 = vmatprep.subr.mxu0 0.0
    %298 = vmatpush1.xpose.msra.mxu0 0.0
    %299 = vmatprep.subr.mxu0 0.0
    %300 = vmatpush1.xpose.msra.mxu0 0.0
    %301 = vmatprep.subr.mxu0 0.0
    %302 = vmatpush1.xpose.msra.mxu0 0.0
    %303 = vmatprep.subr.mxu0 0.0
    %304 = vmatpush1.xpose.msra.mxu0 0.0
    %305 = vmatprep.subr.mxu0 0.0
    %306 = vmatpush1.xpose.msra.mxu0 0.0
    %307 = vmatprep.subr.mxu0 0.0
    %308 = vmatpush1.xpose.msra.mxu0 0.0
    %309 = vmatprep.subr.mxu0 0.0
    %310 = vmatpush1.xpose.msra.mxu0 0.0
    %311 = vmatprep.subr.mxu0 0.0
    %312 = vmatpush1.xpose.msra.mxu0 0.0
    %313 = vmatprep.subr.mxu0 0.0
    %314 = vmatpush1.xpose.msra.mxu0 0.0
    %315 = vmatprep.subr.mxu0 0.0
    %316 = vmatpush1.xpose.msra.mxu0 0.0
    %317 = vmatprep.subr.mxu0 0.0
    %318 = vmatpush1.xpose.msra.mxu0 0.0
    %319 = vmatprep.subr.mxu0 0.0
    %320 = vmatpush1.xpose.msra.mxu0 0.0
    %321 = vmatprep.subr.mxu0 0.0
    %322 = vmatpush1.xpose.msra.mxu0 0.0
    %323 = vmatprep.subr.mxu0 0.0
    %324 = vmatpush1.xpose.msra.mxu0 0.0
    %325 = vmatprep.subr.mxu0 0.0
    %326 = vmatpush1.xpose.msra.mxu0 0.0
    %327 = vmatprep.subr.mxu0 0.0
    %328 = vmatpush1.xpose.msra.mxu0 0.0
    %329 = vmatprep.subr.mxu0 0.0
    %330 = vmatpush1.xpose.msra.mxu0 0.0
    %331 = vmatprep.subr.mxu0 0.0
    %332 = vmatpush1.xpose.msra.mxu0 0.0
    %333 = vmatprep.subr.mxu0 0.0
    %334 = vmatpush1.xpose.msra.mxu0 0.0
    %335 = vmatprep.subr.mxu0 0.0
    %336 = vmatpush1.xpose.msra.mxu0 0.0
    %337 = vmatprep.subr.mxu0 0.0
    %338 = vmatpush1.xpose.msra.mxu0 0.0
    %339 = vmatprep.subr.mxu0 0.0
    %340 = vmatpush1.xpose.msra.mxu0 0.0
    %341 = vmatprep.subr.mxu0 0.0
    %342 = vmatpush1.xpose.msra.mxu0 0.0
    %343 = vmatprep.mubr.f32.mxu0 0.0
    %344 = vmatmul.mubr.f32.gmra.mrb[0].mxu0 %v275
    %v345 = vpop.f32.mrb[0].mxu0
    %v346 = vadd.f32 %v265, %v345
    %v347 = vpop.f32.mrb[0].mxu0
    %348 = vdwg.mxu0
    %350 = vrot.lane.b32.xlu0 %v257, 96
    %v351 = vpop.permute.xlu0 %350
    %v352 = vsel %vm178, %v257, 0
    %v354 = vsel %vm178, %v351, 0
    %356 = vmatprep.subr.mxu0 0.0
    %357 = vmatpush1.xpose.msra.mxu0 %v354
    %358 = vmatprep.subr.mxu0 0.0
    %359 = vmatpush1.xpose.msra.mxu0 0.0
    %360 = vmatprep.subr.mxu0 0.0
    %361 = vmatpush1.xpose.msra.mxu0 0.0
    %362 = vmatprep.subr.mxu0 0.0
    %363 = vmatpush1.xpose.msra.mxu0 0.0
    %364 = vmatprep.subr.mxu0 0.0
    %365 = vmatpush1.xpose.msra.mxu0 0.0
    %366 = vmatprep.subr.mxu0 0.0
    %367 = vmatpush1.xpose.msra.mxu0 0.0
    %368 = vmatprep.subr.mxu0 0.0
    %369 = vmatpush1.xpose.msra.mxu0 0.0
    %370 = vmatprep.subr.mxu0 0.0
    %371 = vmatpush1.xpose.msra.mxu0 0.0
    %372 = vmatprep.subr.mxu0 0.0
    %373 = vmatpush1.xpose.msra.mxu0 0.0
    %374 = vmatprep.subr.mxu0 0.0
    %375 = vmatpush1.xpose.msra.mxu0 0.0
    %376 = vmatprep.subr.mxu0 0.0
    %377 = vmatpush1.xpose.msra.mxu0 0.0
    %378 = vmatprep.subr.mxu0 0.0
    %379 = vmatpush1.xpose.msra.mxu0 0.0
    %380 = vmatprep.subr.mxu0 0.0
    %381 = vmatpush1.xpose.msra.mxu0 0.0
    %382 = vmatprep.subr.mxu0 0.0
    %383 = vmatpush1.xpose.msra.mxu0 0.0
    %384 = vmatprep.subr.mxu0 0.0
    %385 = vmatpush1.xpose.msra.mxu0 0.0
    %386 = vmatprep.subr.mxu0 0.0
    %387 = vmatpush1.xpose.msra.mxu0 0.0
    %388 = vmatprep.subr.mxu0 0.0
    %389 = vmatpush1.xpose.msra.mxu0 0.0
    %390 = vmatprep.subr.mxu0 0.0
    %391 = vmatpush1.xpose.msra.mxu0 0.0
    %392 = vmatprep.subr.mxu0 0.0
    %393 = vmatpush1.xpose.msra.mxu0 0.0
    %394 = vmatprep.subr.mxu0 0.0
    %395 = vmatpush1.xpose.msra.mxu0 0.0
    %396 = vmatprep.subr.mxu0 0.0
    %397 = vmatpush1.xpose.msra.mxu0 0.0
    %398 = vmatprep.subr.mxu0 0.0
    %399 = vmatpush1.xpose.msra.mxu0 0.0
    %400 = vmatprep.subr.mxu0 0.0
    %401 = vmatpush1.xpose.msra.mxu0 0.0
    %402 = vmatprep.subr.mxu0 0.0
    %403 = vmatpush1.xpose.msra.mxu0 0.0
    %404 = vmatprep.subr.mxu0 0.0
    %405 = vmatpush1.xpose.msra.mxu0 0.0
    %406 = vmatprep.subr.mxu0 0.0
    %407 = vmatpush1.xpose.msra.mxu0 0.0
    %408 = vmatprep.subr.mxu0 0.0
    %409 = vmatpush1.xpose.msra.mxu0 0.0
    %410 = vmatprep.subr.mxu0 0.0
    %411 = vmatpush1.xpose.msra.mxu0 0.0
    %412 = vmatprep.subr.mxu0 0.0
    %413 = vmatpush1.xpose.msra.mxu0 0.0
    %414 = vmatprep.subr.mxu0 0.0
    %415 = vmatpush1.xpose.msra.mxu0 0.0
    %416 = vmatprep.subr.mxu0 0.0
    %417 = vmatpush1.xpose.msra.mxu0 0.0
    %418 = vmatprep.subr.mxu0 0.0
    %419 = vmatpush1.xpose.msra.mxu0 0.0
    %420 = vmatprep.mubr.f32.mxu0 0.0
    %421 = vmatmul.mubr.f32.gmra.mrb[0].mxu0 %v352
    %v422 = vpop.f32.mrb[0].mxu0
    %v423 = vadd.f32 %v269, %v422
    %v424 = vpop.f32.mrb[0].mxu0
    %425 = vdwg.mxu0
    %vm426 = vcmask 64512
    %v427 = vsel %vm426, %v346, -inf
    %428 = vmax.xlane.f32.xlu0 %v427
    %v429 = vpop.xlane.xlu0 %428
    %v430 = vsel %vm426, %v423, -inf
    %431 = vmax.xlane.f32.xlu0 %v430
    %v432 = vpop.xlane.xlu0 %431
    %v433 = vsub.f32 %v346, %v429
    %v434 = vsub.f32 %v423, %v432
    %v435 = vmul.f32 %v433, 1.442695
    %v436 = vpow.pop %v435
    %v437 = vmul.f32 %v434, 1.442695
    %v438 = vpow.pop %v437
    %v439 = vsel %vm426, %v436, 0.0
    %440 = vadd.xlane.f32.xlu0 %v439
    %v441 = vpop.xlane.xlu0 %440
    %v442 = vsel %vm426, %v438, 0.0
    %443 = vadd.xlane.f32.xlu0 %v442
    %v444 = vpop.xlane.xlu0 %443
    %v445 = vrcp.pop %v441
    %v446 = vrcp.pop %v444
    %v447 = vmul.f32 %v436, %v445
    %v448 = vmul.f32 %v438, %v446
    %449 = vrot.lane.b32.xlu0 %v252, 64
    %v450 = vpop.permute.xlu0 %449
    %v453 = vsel %vm426, %v447, 0
    %455 = vmatprep.subr.mxu0 0.0
    %456 = vmatpush1.msra.mxu0 %v450
    %457 = vmatprep.subr.mxu0 0.0
    %458 = vmatpush1.msra.mxu0 0.0
    %459 = vmatprep.subr.mxu0 0.0
    %460 = vmatpush1.msra.mxu0 0.0
    %461 = vmatprep.subr.mxu0 0.0
    %462 = vmatpush1.msra.mxu0 0.0
    %463 = vmatprep.subr.mxu0 0.0
    %464 = vmatpush1.msra.mxu0 0.0
    %465 = vmatprep.subr.mxu0 0.0
    %466 = vmatpush1.msra.mxu0 0.0
    %467 = vmatprep.subr.mxu0 0.0
    %468 = vmatpush1.msra.mxu0 0.0
    %469 = vmatprep.subr.mxu0 0.0
    %470 = vmatpush1.msra.mxu0 0.0
    %471 = vmatprep.subr.mxu0 0.0
    %472 = vmatpush1.msra.mxu0 0.0
    %473 = vmatprep.subr.mxu0 0.0
    %474 = vmatpush1.msra.mxu0 0.0
    %475 = vmatprep.subr.mxu0 0.0
    %476 = vmatpush1.msra.mxu0 0.0
    %477 = vmatprep.subr.mxu0 0.0
    %478 = vmatpush1.msra.mxu0 0.0
    %479 = vmatprep.subr.mxu0 0.0
    %480 = vmatpush1.msra.mxu0 0.0
    %481 = vmatprep.subr.mxu0 0.0
    %482 = vmatpush1.msra.mxu0 0.0
    %483 = vmatprep.subr.mxu0 0.0
    %484 = vmatpush1.msra.mxu0 0.0
    %485 = vmatprep.subr.mxu0 0.0
    %486 = vmatpush1.msra.mxu0 0.0
    %487 = vmatprep.subr.mxu0 0.0
    %488 = vmatpush1.msra.mxu0 0.0
    %489 = vmatprep.subr.mxu0 0.0
    %490 = vmatpush1.msra.mxu0 0.0
    %491 = vmatprep.subr.mxu0 0.0
    %492 = vmatpush1.msra.mxu0 0.0
    %493 = vmatprep.subr.mxu0 0.0
    %494 = vmatpush1.msra.mxu0 0.0
    %495 = vmatprep.subr.mxu0 0.0
    %496 = vmatpush1.msra.mxu0 0.0
    %497 = vmatprep.subr.mxu0 0.0
    %498 = vmatpush1.msra.mxu0 0.0
    %499 = vmatprep.subr.mxu0 0.0
    %500 = vmatpush1.msra.mxu0 0.0
    %501 = vmatprep.subr.mxu0 0.0
    %502 = vmatpush1.msra.mxu0 0.0
    %503 = vmatprep.subr.mxu0 0.0
    %504 = vmatpush1.msra.mxu0 0.0
    %505 = vmatprep.subr.mxu0 0.0
    %506 = vmatpush1.msra.mxu0 0.0
    %507 = vmatprep.subr.mxu0 0.0
    %508 = vmatpush1.msra.mxu0 0.0
    %509 = vmatprep.subr.mxu0 0.0
    %510 = vmatpush1.msra.mxu0 0.0
    %511 = vmatprep.subr.mxu0 0.0
    %512 = vmatpush1.msra.mxu0 0.0
    %513 = vmatprep.subr.mxu0 0.0
    %514 = vmatpush1.msra.mxu0 0.0
    %515 = vmatprep.subr.mxu0 0.0
    %516 = vmatpush1.msra.mxu0 0.0
    %517 = vmatprep.subr.mxu0 0.0
    %518 = vmatpush1.msra.mxu0 0.0
    %519 = vmatprep.mubr.f32.mxu0 0.0
    %520 = vmatmul.mubr.f32.gmra.mrb[0].mxu0 %v453
    %v521 = vpop.f32.mrb[0].mxu0
    %v522 = vadd.f32 0.0, %v521
    %v523 = vpop.f32.mrb[0].mxu0
    %524 = vdwg.mxu0
    %525 = vrot.lane.b32.xlu0 %v257, 64
    %v526 = vpop.permute.xlu0 %525
    %v529 = vsel %vm426, %v448, 0
    %531 = vmatprep.subr.mxu0 0.0
    %532 = vmatpush1.msra.mxu0 %v526
    %533 = vmatprep.subr.mxu0 0.0
    %534 = vmatpush1.msra.mxu0 0.0
    %535 = vmatprep.subr.mxu0 0.0
    %536 = vmatpush1.msra.mxu0 0.0
    %537 = vmatprep.subr.mxu0 0.0
    %538 = vmatpush1.msra.mxu0 0.0
    %539 = vmatprep.subr.mxu0 0.0
    %540 = vmatpush1.msra.mxu0 0.0
    %541 = vmatprep.subr.mxu0 0.0
    %542 = vmatpush1.msra.mxu0 0.0
    %543 = vmatprep.subr.mxu0 0.0
    %544 = vmatpush1.msra.mxu0 0.0
    %545 = vmatprep.subr.mxu0 0.0
    %546 = vmatpush1.msra.mxu0 0.0
    %547 = vmatprep.subr.mxu0 0.0
    %548 = vmatpush1.msra.mxu0 0.0
    %549 = vmatprep.subr.mxu0 0.0
    %550 = vmatpush1.msra.mxu0 0.0
    %551 = vmatprep.subr.mxu0 0.0
    %552 = vmatpush1.msra.mxu0 0.0
    %553 = vmatprep.subr.mxu0 0.0
    %554 = vmatpush1.msra.mxu0 0.0
    %555 = vmatprep.subr.mxu0 0.0
    %556 = vmatpush1.msra.mxu0 0.0
    %557 = vmatprep.subr.mxu0 0.0
    %558 = vmatpush1.msra.mxu0 0.0
    %559 = vmatprep.subr.mxu0 0.0
    %560 = vmatpush1.msra.mxu0 0.0
    %561 = vmatprep.subr.mxu0 0.0
    %562 = vmatpush1.msra.mxu0 0.0
    %563 = vmatprep.subr.mxu0 0.0
    %564 = vmatpush1.msra.mxu0 0.0
    %565 = vmatprep.subr.mxu0 0.0
    %566 = vmatpush1.msra.mxu0 0.0
    %567 = vmatprep.subr.mxu0 0.0
    %568 = vmatpush1.msra.mxu0 0.0
    %569 = vmatprep.subr.mxu0 0.0
    %570 = vmatpush1.msra.mxu0 0.0
    %571 = vmatprep.subr.mxu0 0.0
    %572 = vmatpush1.msra.mxu0 0.0
    %573 = vmatprep.subr.mxu0 0.0
    %574 = vmatpush1.msra.mxu0 0.0
    %575 = vmatprep.subr.mxu0 0.0
    %576 = vmatpush1.msra.mxu0 0.0
    %577 = vmatprep.subr.mxu0 0.0
    %578 = vmatpush1.msra.mxu0 0.0
    %579 = vmatprep.subr.mxu0 0.0
    %580 = vmatpush1.msra.mxu0 0.0
    %581 = vmatprep.subr.mxu0 0.0
    %582 = vmatpush1.msra.mxu0 0.0
    %583 = vmatprep.subr.mxu0 0.0
    %584 = vmatpush1.msra.mxu0 0.0
    %585 = vmatprep.subr.mxu0 0.0
    %586 = vmatpush1.msra.mxu0 0.0
    %587 = vmatprep.subr.mxu0 0.0
    %588 = vmatpush1.msra.mxu0 0.0
    %589 = vmatprep.subr.mxu0 0.0
    %590 = vmatpush1.msra.mxu0 0.0
    %591 = vmatprep.subr.mxu0 0.0
    %592 = vmatpush1.msra.mxu0 0.0
    %593 = vmatprep.subr.mxu0 0.0
    %594 = vmatpush1.msra.mxu0 0.0
    %595 = vmatprep.mubr.f32.mxu0 0.0
    %596 = vmatmul.mubr.f32.gmra.mrb[0].mxu0 %v529
    %v597 = vpop.f32.mrb[0].mxu0
    %v598 = vadd.f32 0.0, %v597
    %v599 = vpop.f32.mrb[0].mxu0
    %600 = vdwg.mxu0
    %v601 = vld [vmem:[%s4] sm:$0xff]
    %v602 = vld [vmem:[%s4 + $0x8] sm:$0xff]
    %v603 = vld [vmem:[%s4 + $0x10] sm:$0xff]
    %v604 = vld [vmem:[%s4 + $0x18] sm:$0xff]
    %v605 = vld [vmem:[#allocation8] sm:$0x1]
    %v607 = vlaneseq
    %v608 = vshrl.u32 %v607, 7
    %v609 = vsub.s32 0, %v608
    %v610 = vrot.slane %v605, %v609
    %v613 = vsel %vm178, %v522, 0
    %v616 = vsel %vm178, %v598, 0
    %618 = vmatprep.subr.mxu0 0.0
    %619 = vmatpush1.msra.mxu0 %v601
    %620 = vmatprep.subr.mxu0 0.0
    %621 = vmatpush1.msra.mxu0 %v602
    %622 = vmatprep.subr.mxu0 0.0
    %623 = vmatpush1.msra.mxu0 %v603
    %624 = vmatprep.subr.mxu0 0.0
    %625 = vmatpush1.msra.mxu0 %v604
    %626 = vmatprep.subr.mxu0 0.0
    %627 = vmatpush1.msra.mxu0 0.0
    %628 = vmatprep.subr.mxu0 0.0
    %629 = vmatpush1.msra.mxu0 0.0
    %630 = vmatprep.subr.mxu0 0.0
    %631 = vmatpush1.msra.mxu0 0.0
    %632 = vmatprep.subr.mxu0 0.0
    %633 = vmatpush1.msra.mxu0 0.0
    %634 = vmatprep.subr.mxu0 0.0
    %635 = vmatpush1.msra.mxu0 0.0
    %636 = vmatprep.subr.mxu0 0.0
    %637 = vmatpush1.msra.mxu0 0.0
    %638 = vmatprep.subr.mxu0 0.0
    %639 = vmatpush1.msra.mxu0 0.0
    %640 = vmatprep.subr.mxu0 0.0
    %641 = vmatpush1.msra.mxu0 0.0
    %642 = vmatprep.subr.mxu0 0.0
    %643 = vmatpush1.msra.mxu0 0.0
    %644 = vmatprep.subr.mxu0 0.0
    %645 = vmatpush1.msra.mxu0 0.0
    %646 = vmatprep.subr.mxu0 0.0
    %647 = vmatpush1.msra.mxu0 0.0
    %648 = vmatprep.subr.mxu0 0.0
    %649 = vmatpush1.msra.mxu0 0.0
    %650 = vmatprep.subr.mxu0 0.0
    %651 = vmatpush1.msra.mxu0 0.0
    %652 = vmatprep.subr.mxu0 0.0
    %653 = vmatpush1.msra.mxu0 0.0
    %654 = vmatprep.subr.mxu0 0.0
    %655 = vmatpush1.msra.mxu0 0.0
    %656 = vmatprep.subr.mxu0 0.0
    %657 = vmatpush1.msra.mxu0 0.0
    %658 = vmatprep.subr.mxu0 0.0
    %659 = vmatpush1.msra.mxu0 0.0
    %660 = vmatprep.subr.mxu0 0.0
    %661 = vmatpush1.msra.mxu0 0.0
    %662 = vmatprep.subr.mxu0 0.0
    %663 = vmatpush1.msra.mxu0 0.0
    %664 = vmatprep.subr.mxu0 0.0
    %665 = vmatpush1.msra.mxu0 0.0
    %666 = vmatprep.subr.mxu0 0.0
    %667 = vmatpush1.msra.mxu0 0.0
    %668 = vmatprep.subr.mxu0 0.0
    %669 = vmatpush1.msra.mxu0 0.0
    %670 = vmatprep.subr.mxu0 0.0
    %671 = vmatpush1.msra.mxu0 0.0
    %672 = vmatprep.subr.mxu0 0.0
    %673 = vmatpush1.msra.mxu0 0.0
    %674 = vmatprep.subr.mxu0 0.0
    %675 = vmatpush1.msra.mxu0 0.0
    %676 = vmatprep.subr.mxu0 0.0
    %677 = vmatpush1.msra.mxu0 0.0
    %678 = vmatprep.subr.mxu0 0.0
    %679 = vmatpush1.msra.mxu0 0.0
    %680 = vmatprep.subr.mxu0 0.0
    %681 = vmatpush1.msra.mxu0 0.0
    %682 = vmatprep.mubr.f32.mxu0 0.0
    %683 = vmatmul.mubr.f32.gmra.mrb[0].mxu0 %v613
    %v684 = vpop.f32.mrb[0].mxu0
    %v685 = vadd.f32 %v610, %v684
    %v686 = vpop.f32.mrb[0].mxu0
    %687 = vmatprep.mubr.f32.mxu0 0.0
    %688 = vmatmul.mubr.f32.gmra.mrb[0].mxu0 %v616
    %v689 = vpop.f32.mrb[0].mxu0
    %v690 = vadd.f32 %v610, %v689
    %v691 = vpop.f32.mrb[0].mxu0
    %692 = vdwg.mxu0
    %v693 = vadd.f32 %v163, %v685
    %v694 = vadd.f32 %v164, %v690
    %v695 = vsel %vm178, %v693, 0.0
    %696 = vadd.xlane.f32.xlu0 %v695
    %v697 = vpop.xlane.xlu0 %696
    %v698 = vsel %vm178, %v694, 0.0
    %699 = vadd.xlane.f32.xlu0 %v698
    %v700 = vpop.xlane.xlu0 %699
    %v701 = vrcp.pop 32.0
    %v702 = vmul.f32 %v697, %v701
    %v703 = vmul.f32 %v700, %v701
    %v704 = vsub.f32 %v693, %v702
    %v705 = vsub.f32 %v694, %v703
    %v706 = vmul.f32 %v704, %v704
    %v707 = vmul.f32 %v705, %v705
    %v708 = vsel %vm178, %v706, 0.0
    %709 = vadd.xlane.f32.xlu0 %v708
    %v710 = vpop.xlane.xlu0 %709
    %v711 = vsel %vm178, %v707, 0.0
    %712 = vadd.xlane.f32.xlu0 %v711
    %v713 = vpop.xlane.xlu0 %712
    %v714 = vmul.f32 %v710, %v701
    %v715 = vmul.f32 %v713, %v701
    %v716 = vadd.f32 %v714, 1e-05
    %v717 = vadd.f32 %v715, 1e-05
    %v718 = vrsqrt.pop %v716
    %v719 = vrsqrt.pop %v717
    %v720 = vmul.f32 %v704, %v718
    %v721 = vmul.f32 %v705, %v719
    %v722 = vld [vmem:[#allocation10] sm:$0x1]
    %v724 = vlaneseq
    %v725 = vshrl.u32 %v724, 7
    %v726 = vsub.s32 0, %v725
    %v727 = vrot.slane %v722, %v726
    %v729 = vmul.f32 %v720, %v727
    %v730 = vmul.f32 %v721, %v727
    %v731 = vld [vmem:[#allocation11] sm:$0x1]
    %v733 = vlaneseq
    %v734 = vshrl.u32 %v733, 7
    %v735 = vsub.s32 0, %v734
    %v736 = vrot.slane %v731, %v735
    %v738 = vadd.f32 %v729, %v736
    %v739 = vadd.f32 %v730, %v736
    %v740 = vld [vmem:[%s8] sm:$0xff]
    %v741 = vld [vmem:[%s8 + $0x8] sm:$0xff]
    %v742 = vld [vmem:[%s8 + $0x10] sm:$0xff]
    %v743 = vld [vmem:[%s8 + $0x18] sm:$0xff]
    %v744 = vld [vmem:[#allocation13] sm:$0x1]
    %v746 = vlaneseq
    %v747 = vshrl.u32 %v746, 7
    %v748 = vsub.s32 0, %v747
    %v749 = vrot.slane %v744, %v748
    %v752 = vsel %vm178, %v738, 0
    %v755 = vsel %vm178, %v739, 0
    %757 = vmatprep.subr.mxu0 0.0
    %758 = vmatpush1.msra.mxu0 %v740
    %759 = vmatprep.subr.mxu0 0.0
    %760 = vmatpush1.msra.mxu0 %v741
    %761 = vmatprep.subr.mxu0 0.0
    %762 = vmatpush1.msra.mxu0 %v742
    %763 = vmatprep.subr.mxu0 0.0
    %764 = vmatpush1.msra.mxu0 %v743
    %765 = vmatprep.subr.mxu0 0.0
    %766 = vmatpush1.msra.mxu0 0.0
    %767 = vmatprep.subr.mxu0 0.0
    %768 = vmatpush1.msra.mxu0 0.0
    %769 = vmatprep.subr.mxu0 0.0
    %770 = vmatpush1.msra.mxu0 0.0
    %771 = vmatprep.subr.mxu0 0.0
    %772 = vmatpush1.msra.mxu0 0.0
    %773 = vmatprep.subr.mxu0 0.0
    %774 = vmatpush1.msra.mxu0 0.0
    %775 = vmatprep.subr.mxu0 0.0
    %776 = vmatpush1.msra.mxu0 0.0
    %777 = vmatprep.subr.mxu0 0.0
    %778 = vmatpush1.msra.mxu0 0.0
    %779 = vmatprep.subr.mxu0 0.0
    %780 = vmatpush1.msra.mxu0 0.0
    %781 = vmatprep.subr.mxu0 0.0
    %782 = vmatpush1.msra.mxu0 0.0
    %783 = vmatprep.subr.mxu0 0.0
    %784 = vmatpush1.msra.mxu0 0.0
    %785 = vmatprep.subr.mxu0 0.0
    %786 = vmatpush1.msra.mxu0 0.0
    %787 = vmatprep.subr.mxu0 0.0
    %788 = vmatpush1.msra.mxu0 0.0
    %789 = vmatprep.subr.mxu0 0.0
    %790 = vmatpush1.msra.mxu0 0.0
    %791 = vmatprep.subr.mxu0 0.0
    %792 = vmatpush1.msra.mxu0 0.0
    %793 = vmatprep.subr.mxu0 0.0
    %794 = vmatpush1.msra.mxu0 0.0
    %795 = vmatprep.subr.mxu0 0.0
    %796 = vmatpush1.msra.mxu0 0.0
    %797 = vmatprep.subr.mxu0 0.0
    %798 = vmatpush1.msra.mxu0 0.0
    %799 = vmatprep.subr.mxu0 0.0
    %800 = vmatpush1.msra.mxu0 0.0
    %801 = vmatprep.subr.mxu0 0.0
    %802 = vmatpush1.msra.mxu0 0.0
    %803 = vmatprep.subr.mxu0 0.0
    %804 = vmatpush1.msra.mxu0 0.0
    %805 = vmatprep.subr.mxu0 0.0
    %806 = vmatpush1.msra.mxu0 0.0
    %807 = vmatprep.subr.mxu0 0.0
    %808 = vmatpush1.msra.mxu0 0.0
    %809 = vmatprep.subr.mxu0 0.0
    %810 = vmatpush1.msra.mxu0 0.0
    %811 = vmatprep.subr.mxu0 0.0
    %812 = vmatpush1.msra.mxu0 0.0
    %813 = vmatprep.subr.mxu0 0.0
    %814 = vmatpush1.msra.mxu0 0.0
    %815 = vmatprep.subr.mxu0 0.0
    %816 = vmatpush1.msra.mxu0 0.0
    %817 = vmatprep.subr.mxu0 0.0
    %818 = vmatpush1.msra.mxu0 0.0
    %819 = vmatprep.subr.mxu0 0.0
    %820 = vmatpush1.msra.mxu0 0.0
    %821 = vmatprep.mubr.f32.mxu0 0.0
    %822 = vmatmul.mubr.f32.gmra.mrb[0].mxu0 %v752
    %v823 = vpop.f32.mrb[0].mxu0
    %v824 = vadd.f32 %v749, %v823
    %v825 = vpop.f32.mrb[0].mxu0
    %826 = vmatprep.mubr.f32.mxu0 0.0
    %827 = vmatmul.mubr.f32.gmra.mrb[0].mxu0 %v755
    %v828 = vpop.f32.mrb[0].mxu0
    %v829 = vadd.f32 %v749, %v828
    %v830 = vpop.f32.mrb[0].mxu0
    %831 = vdwg.mxu0
    %v832 = vmax.f32 %v824, 0.0
    %v833 = vmax.f32 %v829, 0.0
    %v834 = vld [vmem:[%s10] sm:$0xff]
    %v835 = vld [vmem:[%s10 + $0x8] sm:$0xff]
    %v836 = vld [vmem:[%s10 + $0x10] sm:$0xff]
    %v837 = vld [vmem:[%s10 + $0x18] sm:$0xff]
    %v838 = vld [vmem:[%s10 + $0x20] sm:$0xff]
    %v839 = vld [vmem:[%s10 + $0x28] sm:$0xff]
    %v840 = vld [vmem:[%s10 + $0x30] sm:$0xff]
    %v841 = vld [vmem:[%s10 + $0x38] sm:$0xff]
    %v842 = vld [vmem:[#allocation14] sm:$0x1]
    %v844 = vlaneseq
    %v845 = vshrl.u32 %v844, 7
    %v846 = vsub.s32 0, %v845
    %v847 = vrot.slane %v842, %v846
    %vm849 = vcmask 523264
    %v851 = vsel %vm849, %v832, 0
    %v854 = vsel %vm849, %v833, 0
    %856 = vmatprep.subr.mxu0 0.0
    %857 = vmatpush1.msra.mxu0 %v834
    %858 = vmatprep.subr.mxu0 0.0
    %859 = vmatpush1.msra.mxu0 %v835
    %860 = vmatprep.subr.mxu0 0.0
    %861 = vmatpush1.msra.mxu0 %v836
    %862 = vmatprep.subr.mxu0 0.0
    %863 = vmatpush1.msra.mxu0 %v837
    %864 = vmatprep.subr.mxu0 0.0
    %865 = vmatpush1.msra.mxu0 %v838
    %866 = vmatprep.subr.mxu0 0.0
    %867 = vmatpush1.msra.mxu0 %v839
    %868 = vmatprep.subr.mxu0 0.0
    %869 = vmatpush1.msra.mxu0 %v840
    %870 = vmatprep.subr.mxu0 0.0
    %871 = vmatpush1.msra.mxu0 %v841
    %872 = vmatprep.subr.mxu0 0.0
    %873 = vmatpush1.msra.mxu0 0.0
    %874 = vmatprep.subr.mxu0 0.0
    %875 = vmatpush1.msra.mxu0 0.0
    %876 = vmatprep.subr.mxu0 0.0
    %877 = vmatpush1.msra.mxu0 0.0
    %878 = vmatprep.subr.mxu0 0.0
    %879 = vmatpush1.msra.mxu0 0.0
    %880 = vmatprep.subr.mxu0 0.0
    %881 = vmatpush1.msra.mxu0 0.0
    %882 = vmatprep.subr.mxu0 0.0
    %883 = vmatpush1.msra.mxu0 0.0
    %884 = vmatprep.subr.mxu0 0.0
    %885 = vmatpush1.msra.mxu0 0.0
    %886 = vmatprep.subr.mxu0 0.0
    %887 = vmatpush1.msra.mxu0 0.0
    %888 = vmatprep.subr.mxu0 0.0
    %889 = vmatpush1.msra.mxu0 0.0
    %890 = vmatprep.subr.mxu0 0.0
    %891 = vmatpush1.msra.mxu0 0.0
    %892 = vmatprep.subr.mxu0 0.0
    %893 = vmatpush1.msra.mxu0 0.0
    %894 = vmatprep.subr.mxu0 0.0
    %895 = vmatpush1.msra.mxu0 0.0
    %896 = vmatprep.subr.mxu0 0.0
    %897 = vmatpush1.msra.mxu0 0.0
    %898 = vmatprep.subr.mxu0 0.0
    %899 = vmatpush1.msra.mxu0 0.0
    %900 = vmatprep.subr.mxu0 0.0
    %901 = vmatpush1.msra.mxu0 0.0
    %902 = vmatprep.subr.mxu0 0.0
    %903 = vmatpush1.msra.mxu0 0.0
    %904 = vmatprep.subr.mxu0 0.0
    %905 = vmatpush1.msra.mxu0 0.0
    %906 = vmatprep.subr.mxu0 0.0
    %907 = vmatpush1.msra.mxu0 0.0
    %908 = vmatprep.subr.mxu0 0.0
    %909 = vmatpush1.msra.mxu0 0.0
    %910 = vmatprep.subr.mxu0 0.0
    %911 = vmatpush1.msra.mxu0 0.0
    %912 = vmatprep.subr.mxu0 0.0
    %913 = vmatpush1.msra.mxu0 0.0
    %914 = vmatprep.subr.mxu0 0.0
    %915 = vmatpush1.msra.mxu0 0.0
    %916 = vmatprep.subr.mxu0 0.0
    %917 = vmatpush1.msra.mxu0 0.0
    %918 = vmatprep.subr.mxu0 0.0
    %919 = vmatpush1.msra.mxu0 0.0
    %920 = vmatprep.mubr.f32.mxu0 0.0
    %921 = vmatmul.mubr.f32.gmra.mrb[0].mxu0 %v851
    %v922 = vpop.f32.mrb[0].mxu0
    %v923 = vadd.f32 %v847, %v922
    %v924 = vpop.f32.mrb[0].mxu0
    %925 = vmatprep.mubr.f32.mxu0 0.0
    %926 = vmatmul.mubr.f32.gmra.mrb[0].mxu0 %v854
    %v927 = vpop.f32.mrb[0].mxu0
    %v928 = vadd.f32 %v847, %v927
    %v929 = vpop.f32.mrb[0].mxu0
    %930 = vdwg.mxu0
    %v931 = vadd.f32 %v738, %v923
    %v932 = vadd.f32 %v739, %v928
    %v933 = vsel %vm178, %v931, 0.0
    %934 = vadd.xlane.f32.xlu0 %v933
    %v935 = vpop.xlane.xlu0 %934
    %v936 = vsel %vm178, %v932, 0.0
    %937 = vadd.xlane.f32.xlu0 %v936
    %v938 = vpop.xlane.xlu0 %937
    %v939 = vmul.f32 %v935, %v701
    %v940 = vmul.f32 %v938, %v701
    %v941 = vsub.f32 %v931, %v939
    %v942 = vsub.f32 %v932, %v940
    %v943 = vmul.f32 %v941, %v941
    %v944 = vmul.f32 %v942, %v942
    %v945 = vsel %vm178, %v943, 0.0
    %946 = vadd.xlane.f32.xlu0 %v945
    %v947 = vpop.xlane.xlu0 %946
    %v948 = vsel %vm178, %v944, 0.0
    %949 = vadd.xlane.f32.xlu0 %v948
    %v950 = vpop.xlane.xlu0 %949
    %v951 = vmul.f32 %v947, %v701
    %v952 = vmul.f32 %v950, %v701
    %v953 = vadd.f32 %v951, 1e-05
    %v954 = vadd.f32 %v952, 1e-05
    %v955 = vrsqrt.pop %v953
    %v956 = vrsqrt.pop %v954
    %v957 = vmul.f32 %v941, %v955
    %v958 = vmul.f32 %v942, %v956
    %v959 = vld [vmem:[%s12] sm:$0x1]
    %v961 = vlaneseq
    %v962 = vshrl.u32 %v961, 7
    %v963 = vsub.s32 0, %v962
    %v964 = vrot.slane %v959, %v963
    %v966 = vmul.f32 %v957, %v964
    %v967 = vmul.f32 %v958, %v964
    %v968 = vld [vmem:[%s13] sm:$0x1]
    %v970 = vlaneseq
    %v971 = vshrl.u32 %v970, 7
    %v972 = vsub.s32 0, %v971
    %v973 = vrot.slane %v968, %v972
    %v975 = vadd.f32 %v966, %v973
    %v976 = vadd.f32 %v967, %v973
    %s977 = scalar_lea.vmem %s2, 32
    %v978 = vld [vmem:[%s977] sm:$0xff]
    %v979 = vld [vmem:[%s977 + $0x8] sm:$0xff]
    %v980 = vld [vmem:[%s977 + $0x10] sm:$0xff]
    %v981 = vld [vmem:[%s977 + $0x18] sm:$0xff]
    %s982 = scalar_lea.vmem [#allocation7], 1
    %v983 = vld [vmem:[%s982] sm:$0x1]
    %v985 = vlaneseq
    %v986 = vshrl.u32 %v985, 7
    %v987 = vsub.s32 0, %v986
    %v988 = vrot.slane %v983, %v987
    %v991 = vsel %vm178, %v975, 0
    %v994 = vsel %vm178, %v976, 0
    %996 = vmatprep.subr.mxu0 0.0
    %997 = vmatpush1.msra.mxu0 %v978
    %998 = vmatprep.subr.mxu0 0.0
    %999 = vmatpush1.msra.mxu0 %v979
    %1000 = vmatprep.subr.mxu0 0.0
    %1001 = vmatpush1.msra.mxu0 %v980
    %1002 = vmatprep.subr.mxu0 0.0
    %1003 = vmatpush1.msra.mxu0 %v981
    %1004 = vmatprep.subr.mxu0 0.0
    %1005 = vmatpush1.msra.mxu0 0.0
    %1006 = vmatprep.subr.mxu0 0.0
    %1007 = vmatpush1.msra.mxu0 0.0
    %1008 = vmatprep.subr.mxu0 0.0
    %1009 = vmatpush1.msra.mxu0 0.0
    %1010 = vmatprep.subr.mxu0 0.0
    %1011 = vmatpush1.msra.mxu0 0.0
    %1012 = vmatprep.subr.mxu0 0.0
    %1013 = vmatpush1.msra.mxu0 0.0
    %1014 = vmatprep.subr.mxu0 0.0
    %1015 = vmatpush1.msra.mxu0 0.0
    %1016 = vmatprep.subr.mxu0 0.0
    %1017 = vmatpush1.msra.mxu0 0.0
    %1018 = vmatprep.subr.mxu0 0.0
    %1019 = vmatpush1.msra.mxu0 0.0
    %1020 = vmatprep.subr.mxu0 0.0
    %1021 = vmatpush1.msra.mxu0 0.0
    %1022 = vmatprep.subr.mxu0 0.0
    %1023 = vmatpush1.msra.mxu0 0.0
    %1024 = vmatprep.subr.mxu0 0.0
    %1025 = vmatpush1.msra.mxu0 0.0
    %1026 = vmatprep.subr.mxu0 0.0
    %1027 = vmatpush1.msra.mxu0 0.0
    %1028 = vmatprep.subr.mxu0 0.0
    %1029 = vmatpush1.msra.mxu0 0.0
    %1030 = vmatprep.subr.mxu0 0.0
    %1031 = vmatpush1.msra.mxu0 0.0
    %1032 = vmatprep.subr.mxu0 0.0
    %1033 = vmatpush1.msra.mxu0 0.0
    %1034 = vmatprep.subr.mxu0 0.0
    %1035 = vmatpush1.msra.mxu0 0.0
    %1036 = vmatprep.subr.mxu0 0.0
    %1037 = vmatpush1.msra.mxu0 0.0
    %1038 = vmatprep.subr.mxu0 0.0
    %1039 = vmatpush1.msra.mxu0 0.0
    %1040 = vmatprep.subr.mxu0 0.0
    %1041 = vmatpush1.msra.mxu0 0.0
    %1042 = vmatprep.subr.mxu0 0.0
    %1043 = vmatpush1.msra.mxu0 0.0
    %1044 = vmatprep.subr.mxu0 0.0
    %1045 = vmatpush1.msra.mxu0 0.0
    %1046 = vmatprep.subr.mxu0 0.0
    %1047 = vmatpush1.msra.mxu0 0.0
    %1048 = vmatprep.subr.mxu0 0.0
    %1049 = vmatpush1.msra.mxu0 0.0
    %1050 = vmatprep.subr.mxu0 0.0
    %1051 = vmatpush1.msra.mxu0 0.0
    %1052 = vmatprep.subr.mxu0 0.0
    %1053 = vmatpush1.msra.mxu0 0.0
    %1054 = vmatprep.subr.mxu0 0.0
    %1055 = vmatpush1.msra.mxu0 0.0
    %1056 = vmatprep.subr.mxu0 0.0
    %1057 = vmatpush1.msra.mxu0 0.0
    %1058 = vmatprep.subr.mxu0 0.0
    %1059 = vmatpush1.msra.mxu0 0.0
    %1060 = vmatprep.mubr.f32.mxu0 0.0
    %1061 = vmatmul.mubr.f32.gmra.mrb[0].mxu0 %v991
    %v1062 = vpop.f32.mrb[0].mxu0
    %v1063 = vadd.f32 %v988, %v1062
    %v1064 = vpop.f32.mrb[0].mxu0
    %1065 = vmatprep.mubr.f32.mxu0 0.0
    %1066 = vmatmul.mubr.f32.gmra.mrb[0].mxu0 %v994
    %v1067 = vpop.f32.mrb[0].mxu0
    %v1068 = vadd.f32 %v988, %v1067
    %v1069 = vpop.f32.mrb[0].mxu0
    %1070 = vdwg.mxu0
    %1072 = vrot.lane.b32.xlu0 %v1063, 96
    %v1073 = vpop.permute.xlu0 %1072
    %v1074 = vsel %vm178, %v1063, 0
    %v1076 = vsel %vm178, %v1073, 0
    %1078 = vmatprep.subr.mxu0 0.0
    %1079 = vmatpush1.xpose.msra.mxu0 %v1076
    %1080 = vmatprep.subr.mxu0 0.0
    %1081 = vmatpush1.xpose.msra.mxu0 0.0
    %1082 = vmatprep.subr.mxu0 0.0
    %1083 = vmatpush1.xpose.msra.mxu0 0.0
    %1084 = vmatprep.subr.mxu0 0.0
    %1085 = vmatpush1.xpose.msra.mxu0 0.0
    %1086 = vmatprep.subr.mxu0 0.0
    %1087 = vmatpush1.xpose.msra.mxu0 0.0
    %1088 = vmatprep.subr.mxu0 0.0
    %1089 = vmatpush1.xpose.msra.mxu0 0.0
    %1090 = vmatprep.subr.mxu0 0.0
    %1091 = vmatpush1.xpose.msra.mxu0 0.0
    %1092 = vmatprep.subr.mxu0 0.0
    %1093 = vmatpush1.xpose.msra.mxu0 0.0
    %1094 = vmatprep.subr.mxu0 0.0
    %1095 = vmatpush1.xpose.msra.mxu0 0.0
    %1096 = vmatprep.subr.mxu0 0.0
    %1097 = vmatpush1.xpose.msra.mxu0 0.0
    %1098 = vmatprep.subr.mxu0 0.0
    %1099 = vmatpush1.xpose.msra.mxu0 0.0
    %1100 = vmatprep.subr.mxu0 0.0
    %1101 = vmatpush1.xpose.msra.mxu0 0.0
    %1102 = vmatprep.subr.mxu0 0.0
    %1103 = vmatpush1.xpose.msra.mxu0 0.0
    %1104 = vmatprep.subr.mxu0 0.0
    %1105 = vmatpush1.xpose.msra.mxu0 0.0
    %1106 = vmatprep.subr.mxu0 0.0
    %1107 = vmatpush1.xpose.msra.mxu0 0.0
    %1108 = vmatprep.subr.mxu0 0.0
    %1109 = vmatpush1.xpose.msra.mxu0 0.0
    %1110 = vmatprep.subr.mxu0 0.0
    %1111 = vmatpush1.xpose.msra.mxu0 0.0
    %1112 = vmatprep.subr.mxu0 0.0
    %1113 = vmatpush1.xpose.msra.mxu0 0.0
    %1114 = vmatprep.subr.mxu0 0.0
    %1115 = vmatpush1.xpose.msra.mxu0 0.0
    %1116 = vmatprep.subr.mxu0 0.0
    %1117 = vmatpush1.xpose.msra.mxu0 0.0
    %1118 = vmatprep.subr.mxu0 0.0
    %1119 = vmatpush1.xpose.msra.mxu0 0.0
    %1120 = vmatprep.subr.mxu0 0.0
    %1121 = vmatpush1.xpose.msra.mxu0 0.0
    %1122 = vmatprep.subr.mxu0 0.0
    %1123 = vmatpush1.xpose.msra.mxu0 0.0
    %1124 = vmatprep.subr.mxu0 0.0
    %1125 = vmatpush1.xpose.msra.mxu0 0.0
    %1126 = vmatprep.subr.mxu0 0.0
    %1127 = vmatpush1.xpose.msra.mxu0 0.0
    %1128 = vmatprep.subr.mxu0 0.0
    %1129 = vmatpush1.xpose.msra.mxu0 0.0
    %1130 = vmatprep.subr.mxu0 0.0
    %1131 = vmatpush1.xpose.msra.mxu0 0.0
    %1132 = vmatprep.subr.mxu0 0.0
    %1133 = vmatpush1.xpose.msra.mxu0 0.0
    %1134 = vmatprep.subr.mxu0 0.0
    %1135 = vmatpush1.xpose.msra.mxu0 0.0
    %1136 = vmatprep.subr.mxu0 0.0
    %1137 = vmatpush1.xpose.msra.mxu0 0.0
    %1138 = vmatprep.subr.mxu0 0.0
    %1139 = vmatpush1.xpose.msra.mxu0 0.0
    %1140 = vmatprep.subr.mxu0 0.0
    %1141 = vmatpush1.xpose.msra.mxu0 0.0
    %1142 = vmatprep.mubr.f32.mxu0 0.0
    %1143 = vmatmul.mubr.f32.gmra.mrb[0].mxu0 %v1074
    %v1144 = vpop.f32.mrb[0].mxu0
    %v1145 = vadd.f32 %v265, %v1144
    %v1146 = vpop.f32.mrb[0].mxu0
    %1147 = vdwg.mxu0
    %1149 = vrot.lane.b32.xlu0 %v1068, 96
    %v1150 = vpop.permute.xlu0 %1149
    %v1151 = vsel %vm178, %v1068, 0
    %v1153 = vsel %vm178, %v1150, 0
    %1155 = vmatprep.subr.mxu0 0.0
    %1156 = vmatpush1.xpose.msra.mxu0 %v1153
    %1157 = vmatprep.subr.mxu0 0.0
    %1158 = vmatpush1.xpose.msra.mxu0 0.0
    %1159 = vmatprep.subr.mxu0 0.0
    %1160 = vmatpush1.xpose.msra.mxu0 0.0
    %1161 = vmatprep.subr.mxu0 0.0
    %1162 = vmatpush1.xpose.msra.mxu0 0.0
    %1163 = vmatprep.subr.mxu0 0.0
    %1164 = vmatpush1.xpose.msra.mxu0 0.0
    %1165 = vmatprep.subr.mxu0 0.0
    %1166 = vmatpush1.xpose.msra.mxu0 0.0
    %1167 = vmatprep.subr.mxu0 0.0
    %1168 = vmatpush1.xpose.msra.mxu0 0.0
    %1169 = vmatprep.subr.mxu0 0.0
    %1170 = vmatpush1.xpose.msra.mxu0 0.0
    %1171 = vmatprep.subr.mxu0 0.0
    %1172 = vmatpush1.xpose.msra.mxu0 0.0
    %1173 = vmatprep.subr.mxu0 0.0
    %1174 = vmatpush1.xpose.msra.mxu0 0.0
    %1175 = vmatprep.subr.mxu0 0.0
    %1176 = vmatpush1.xpose.msra.mxu0 0.0
    %1177 = vmatprep.subr.mxu0 0.0
    %1178 = vmatpush1.xpose.msra.mxu0 0.0
    %1179 = vmatprep.subr.mxu0 0.0
    %1180 = vmatpush1.xpose.msra.mxu0 0.0
    %1181 = vmatprep.subr.mxu0 0.0
    %1182 = vmatpush1.xpose.msra.mxu0 0.0
    %1183 = vmatprep.subr.mxu0 0.0
    %1184 = vmatpush1.xpose.msra.mxu0 0.0
    %1185 = vmatprep.subr.mxu0 0.0
    %1186 = vmatpush1.xpose.msra.mxu0 0.0
    %1187 = vmatprep.subr.mxu0 0.0
    %1188 = vmatpush1.xpose.msra.mxu0 0.0
    %1189 = vmatprep.subr.mxu0 0.0
    %1190 = vmatpush1.xpose.msra.mxu0 0.0
    %1191 = vmatprep.subr.mxu0 0.0
    %1192 = vmatpush1.xpose.msra.mxu0 0.0
    %1193 = vmatprep.subr.mxu0 0.0
    %1194 = vmatpush1.xpose.msra.mxu0 0.0
    %1195 = vmatprep.subr.mxu0 0.0
    %1196 = vmatpush1.xpose.msra.mxu0 0.0
    %1197 = vmatprep.subr.mxu0 0.0
    %1198 = vmatpush1.xpose.msra.mxu0 0.0
    %1199 = vmatprep.subr.mxu0 0.0
    %1200 = vmatpush1.xpose.msra.mxu0 0.0
    %1201 = vmatprep.subr.mxu0 0.0
    %1202 = vmatpush1.xpose.msra.mxu0 0.0
    %1203 = vmatprep.subr.mxu0 0.0
    %1204 = vmatpush1.xpose.msra.mxu0 0.0
    %1205 = vmatprep.subr.mxu0 0.0
    %1206 = vmatpush1.xpose.msra.mxu0 0.0
    %1207 = vmatprep.subr.mxu0 0.0
    %1208 = vmatpush1.xpose.msra.mxu0 0.0
    %1209 = vmatprep.subr.mxu0 0.0
    %1210 = vmatpush1.xpose.msra.mxu0 0.0
    %1211 = vmatprep.subr.mxu0 0.0
    %1212 = vmatpush1.xpose.msra.mxu0 0.0
    %1213 = vmatprep.subr.mxu0 0.0
    %1214 = vmatpush1.xpose.msra.mxu0 0.0
    %1215 = vmatprep.subr.mxu0 0.0
    %1216 = vmatpush1.xpose.msra.mxu0 0.0
    %1217 = vmatprep.subr.mxu0 0.0
    %1218 = vmatpush1.xpose.msra.mxu0 0.0
    %1219 = vmatprep.mubr.f32.mxu0 0.0
    %1220 = vmatmul.mubr.f32.gmra.mrb[0].mxu0 %v1151
    %v1221 = vpop.f32.mrb[0].mxu0
    %v1222 = vadd.f32 %v269, %v1221
    %v1223 = vpop.f32.mrb[0].mxu0
    %1224 = vdwg.mxu0
    %v1225 = vsel %vm426, %v1145, -inf
    %1226 = vmax.xlane.f32.xlu0 %v1225
    %v1227 = vpop.xlane.xlu0 %1226
    %v1228 = vsel %vm426, %v1222, -inf
    %1229 = vmax.xlane.f32.xlu0 %v1228
    %v1230 = vpop.xlane.xlu0 %1229
    %v1231 = vsub.f32 %v1145, %v1227
    %v1232 = vsub.f32 %v1222, %v1230
    %v1233 = vmul.f32 %v1231, 1.442695
    %v1234 = vpow.pop %v1233
    %v1235 = vmul.f32 %v1232, 1.442695
    %v1236 = vpow.pop %v1235
    %v1237 = vsel %vm426, %v1234, 0.0
    %1238 = vadd.xlane.f32.xlu0 %v1237
    %v1239 = vpop.xlane.xlu0 %1238
    %v1240 = vsel %vm426, %v1236, 0.0
    %1241 = vadd.xlane.f32.xlu0 %v1240
    %v1242 = vpop.xlane.xlu0 %1241
    %v1243 = vrcp.pop %v1239
    %v1244 = vrcp.pop %v1242
    %v1245 = vmul.f32 %v1234, %v1243
    %v1246 = vmul.f32 %v1236, %v1244
    %1247 = vrot.lane.b32.xlu0 %v1063, 64
    %v1248 = vpop.permute.xlu0 %1247
    %v1251 = vsel %vm426, %v1245, 0
    %1253 = vmatprep.subr.mxu0 0.0
    %1254 = vmatpush1.msra.mxu0 %v1248
    %1255 = vmatprep.subr.mxu0 0.0
    %1256 = vmatpush1.msra.mxu0 0.0
    %1257 = vmatprep.subr.mxu0 0.0
    %1258 = vmatpush1.msra.mxu0 0.0
    %1259 = vmatprep.subr.mxu0 0.0
    %1260 = vmatpush1.msra.mxu0 0.0
    %1261 = vmatprep.subr.mxu0 0.0
    %1262 = vmatpush1.msra.mxu0 0.0
    %1263 = vmatprep.subr.mxu0 0.0
    %1264 = vmatpush1.msra.mxu0 0.0
    %1265 = vmatprep.subr.mxu0 0.0
    %1266 = vmatpush1.msra.mxu0 0.0
    %1267 = vmatprep.subr.mxu0 0.0
    %1268 = vmatpush1.msra.mxu0 0.0
    %1269 = vmatprep.subr.mxu0 0.0
    %1270 = vmatpush1.msra.mxu0 0.0
    %1271 = vmatprep.subr.mxu0 0.0
    %1272 = vmatpush1.msra.mxu0 0.0
    %1273 = vmatprep.subr.mxu0 0.0
    %1274 = vmatpush1.msra.mxu0 0.0
    %1275 = vmatprep.subr.mxu0 0.0
    %1276 = vmatpush1.msra.mxu0 0.0
    %1277 = vmatprep.subr.mxu0 0.0
    %1278 = vmatpush1.msra.mxu0 0.0
    %1279 = vmatprep.subr.mxu0 0.0
    %1280 = vmatpush1.msra.mxu0 0.0
    %1281 = vmatprep.subr.mxu0 0.0
    %1282 = vmatpush1.msra.mxu0 0.0
    %1283 = vmatprep.subr.mxu0 0.0
    %1284 = vmatpush1.msra.mxu0 0.0
    %1285 = vmatprep.subr.mxu0 0.0
    %1286 = vmatpush1.msra.mxu0 0.0
    %1287 = vmatprep.subr.mxu0 0.0
    %1288 = vmatpush1.msra.mxu0 0.0
    %1289 = vmatprep.subr.mxu0 0.0
    %1290 = vmatpush1.msra.mxu0 0.0
    %1291 = vmatprep.subr.mxu0 0.0
    %1292 = vmatpush1.msra.mxu0 0.0
    %1293 = vmatprep.subr.mxu0 0.0
    %1294 = vmatpush1.msra.mxu0 0.0
    %1295 = vmatprep.subr.mxu0 0.0
    %1296 = vmatpush1.msra.mxu0 0.0
    %1297 = vmatprep.subr.mxu0 0.0
    %1298 = vmatpush1.msra.mxu0 0.0
    %1299 = vmatprep.subr.mxu0 0.0
    %1300 = vmatpush1.msra.mxu0 0.0
    %1301 = vmatprep.subr.mxu0 0.0
    %1302 = vmatpush1.msra.mxu0 0.0
    %1303 = vmatprep.subr.mxu0 0.0
    %1304 = vmatpush1.msra.mxu0 0.0
    %1305 = vmatprep.subr.mxu0 0.0
    %1306 = vmatpush1.msra.mxu0 0.0
    %1307 = vmatprep.subr.mxu0 0.0
    %1308 = vmatpush1.msra.mxu0 0.0
    %1309 = vmatprep.subr.mxu0 0.0
    %1310 = vmatpush1.msra.mxu0 0.0
    %1311 = vmatprep.subr.mxu0 0.0
    %1312 = vmatpush1.msra.mxu0 0.0
    %1313 = vmatprep.subr.mxu0 0.0
    %1314 = vmatpush1.msra.mxu0 0.0
    %1315 = vmatprep.subr.mxu0 0.0
    %1316 = vmatpush1.msra.mxu0 0.0
    %1317 = vmatprep.mubr.f32.mxu0 0.0
    %1318 = vmatmul.mubr.f32.gmra.mrb[0].mxu0 %v1251
    %v1319 = vpop.f32.mrb[0].mxu0
    %v1320 = vadd.f32 0.0, %v1319
    %v1321 = vpop.f32.mrb[0].mxu0
    %1322 = vdwg.mxu0
    %1323 = vrot.lane.b32.xlu0 %v1068, 64
    %v1324 = vpop.permute.xlu0 %1323
    %v1327 = vsel %vm426, %v1246, 0
    %1329 = vmatprep.subr.mxu0 0.0
    %1330 = vmatpush1.msra.mxu0 %v1324
    %1331 = vmatprep.subr.mxu0 0.0
    %1332 = vmatpush1.msra.mxu0 0.0
    %1333 = vmatprep.subr.mxu0 0.0
    %1334 = vmatpush1.msra.mxu0 0.0
    %1335 = vmatprep.subr.mxu0 0.0
    %1336 = vmatpush1.msra.mxu0 0.0
    %1337 = vmatprep.subr.mxu0 0.0
    %1338 = vmatpush1.msra.mxu0 0.0
    %1339 = vmatprep.subr.mxu0 0.0
    %1340 = vmatpush1.msra.mxu0 0.0
    %1341 = vmatprep.subr.mxu0 0.0
    %1342 = vmatpush1.msra.mxu0 0.0
    %1343 = vmatprep.subr.mxu0 0.0
    %1344 = vmatpush1.msra.mxu0 0.0
    %1345 = vmatprep.subr.mxu0 0.0
    %1346 = vmatpush1.msra.mxu0 0.0
    %1347 = vmatprep.subr.mxu0 0.0
    %1348 = vmatpush1.msra.mxu0 0.0
    %1349 = vmatprep.subr.mxu0 0.0
    %1350 = vmatpush1.msra.mxu0 0.0
    %1351 = vmatprep.subr.mxu0 0.0
    %1352 = vmatpush1.msra.mxu0 0.0
    %1353 = vmatprep.subr.mxu0 0.0
    %1354 = vmatpush1.msra.mxu0 0.0
    %1355 = vmatprep.subr.mxu0 0.0
    %1356 = vmatpush1.msra.mxu0 0.0
    %1357 = vmatprep.subr.mxu0 0.0
    %1358 = vmatpush1.msra.mxu0 0.0
    %1359 = vmatprep.subr.mxu0 0.0
    %1360 = vmatpush1.msra.mxu0 0.0
    %1361 = vmatprep.subr.mxu0 0.0
    %1362 = vmatpush1.msra.mxu0 0.0
    %1363 = vmatprep.subr.mxu0 0.0
    %1364 = vmatpush1.msra.mxu0 0.0
    %1365 = vmatprep.subr.mxu0 0.0
    %1366 = vmatpush1.msra.mxu0 0.0
    %1367 = vmatprep.subr.mxu0 0.0
    %1368 = vmatpush1.msra.mxu0 0.0
    %1369 = vmatprep.subr.mxu0 0.0
    %1370 = vmatpush1.msra.mxu0 0.0
    %1371 = vmatprep.subr.mxu0 0.0
    %1372 = vmatpush1.msra.mxu0 0.0
    %1373 = vmatprep.subr.mxu0 0.0
    %1374 = vmatpush1.msra.mxu0 0.0
    %1375 = vmatprep.subr.mxu0 0.0
    %1376 = vmatpush1.msra.mxu0 0.0
    %1377 = vmatprep.subr.mxu0 0.0
    %1378 = vmatpush1.msra.mxu0 0.0
    %1379 = vmatprep.subr.mxu0 0.0
    %1380 = vmatpush1.msra.mxu0 0.0
    %1381 = vmatprep.subr.mxu0 0.0
    %1382 = vmatpush1.msra.mxu0 0.0
    %1383 = vmatprep.subr.mxu0 0.0
    %1384 = vmatpush1.msra.mxu0 0.0
    %1385 = vmatprep.subr.mxu0 0.0
    %1386 = vmatpush1.msra.mxu0 0.0
    %1387 = vmatprep.subr.mxu0 0.0
    %1388 = vmatpush1.msra.mxu0 0.0
    %1389 = vmatprep.subr.mxu0 0.0
    %1390 = vmatpush1.msra.mxu0 0.0
    %1391 = vmatprep.subr.mxu0 0.0
    %1392 = vmatpush1.msra.mxu0 0.0
    %1393 = vmatprep.mubr.f32.mxu0 0.0
    %1394 = vmatmul.mubr.f32.gmra.mrb[0].mxu0 %v1327
    %v1395 = vpop.f32.mrb[0].mxu0
    %v1396 = vadd.f32 0.0, %v1395
    %v1397 = vpop.f32.mrb[0].mxu0
    %1398 = vdwg.mxu0
    %s1399 = scalar_lea.vmem %s4, 32
    %v1400 = vld [vmem:[%s1399] sm:$0xff]
    %v1401 = vld [vmem:[%s1399 + $0x8] sm:$0xff]
    %v1402 = vld [vmem:[%s1399 + $0x10] sm:$0xff]
    %v1403 = vld [vmem:[%s1399 + $0x18] sm:$0xff]
    %s1404 = scalar_lea.vmem [#allocation8], 1
    %v1405 = vld [vmem:[%s1404] sm:$0x1]
    %v1407 = vlaneseq
    %v1408 = vshrl.u32 %v1407, 7
    %v1409 = vsub.s32 0, %v1408
    %v1410 = vrot.slane %v1405, %v1409
    %v1413 = vsel %vm178, %v1320, 0
    %v1416 = vsel %vm178, %v1396, 0
    %1418 = vmatprep.subr.mxu0 0.0
    %1419 = vmatpush1.msra.mxu0 %v1400
    %1420 = vmatprep.subr.mxu0 0.0
    %1421 = vmatpush1.msra.mxu0 %v1401
    %1422 = vmatprep.subr.mxu0 0.0
    %1423 = vmatpush1.msra.mxu0 %v1402
    %1424 = vmatprep.subr.mxu0 0.0
    %1425 = vmatpush1.msra.mxu0 %v1403
    %1426 = vmatprep.subr.mxu0 0.0
    %1427 = vmatpush1.msra.mxu0 0.0
    %1428 = vmatprep.subr.mxu0 0.0
    %1429 = vmatpush1.msra.mxu0 0.0
    %1430 = vmatprep.subr.mxu0 0.0
    %1431 = vmatpush1.msra.mxu0 0.0
    %1432 = vmatprep.subr.mxu0 0.0
    %1433 = vmatpush1.msra.mxu0 0.0
    %1434 = vmatprep.subr.mxu0 0.0
    %1435 = vmatpush1.msra.mxu0 0.0
    %1436 = vmatprep.subr.mxu0 0.0
    %1437 = vmatpush1.msra.mxu0 0.0
    %1438 = vmatprep.subr.mxu0 0.0
    %1439 = vmatpush1.msra.mxu0 0.0
    %1440 = vmatprep.subr.mxu0 0.0
    %1441 = vmatpush1.msra.mxu0 0.0
    %1442 = vmatprep.subr.mxu0 0.0
    %1443 = vmatpush1.msra.mxu0 0.0
    %1444 = vmatprep.subr.mxu0 0.0
    %1445 = vmatpush1.msra.mxu0 0.0
    %1446 = vmatprep.subr.mxu0 0.0
    %1447 = vmatpush1.msra.mxu0 0.0
    %1448 = vmatprep.subr.mxu0 0.0
    %1449 = vmatpush1.msra.mxu0 0.0
    %1450 = vmatprep.subr.mxu0 0.0
    %1451 = vmatpush1.msra.mxu0 0.0
    %1452 = vmatprep.subr.mxu0 0.0
    %1453 = vmatpush1.msra.mxu0 0.0
    %1454 = vmatprep.subr.mxu0 0.0
    %1455 = vmatpush1.msra.mxu0 0.0
    %1456 = vmatprep.subr.mxu0 0.0
    %1457 = vmatpush1.msra.mxu0 0.0
    %1458 = vmatprep.subr.mxu0 0.0
    %1459 = vmatpush1.msra.mxu0 0.0
    %1460 = vmatprep.subr.mxu0 0.0
    %1461 = vmatpush1.msra.mxu0 0.0
    %1462 = vmatprep.subr.mxu0 0.0
    %1463 = vmatpush1.msra.mxu0 0.0
    %1464 = vmatprep.subr.mxu0 0.0
    %1465 = vmatpush1.msra.mxu0 0.0
    %1466 = vmatprep.subr.mxu0 0.0
    %1467 = vmatpush1.msra.mxu0 0.0
    %1468 = vmatprep.subr.mxu0 0.0
    %1469 = vmatpush1.msra.mxu0 0.0
    %1470 = vmatprep.subr.mxu0 0.0
    %1471 = vmatpush1.msra.mxu0 0.0
    %1472 = vmatprep.subr.mxu0 0.0
    %1473 = vmatpush1.msra.mxu0 0.0
    %1474 = vmatprep.subr.mxu0 0.0
    %1475 = vmatpush1.msra.mxu0 0.0
    %1476 = vmatprep.subr.mxu0 0.0
    %1477 = vmatpush1.msra.mxu0 0.0
    %1478 = vmatprep.subr.mxu0 0.0
    %1479 = vmatpush1.msra.mxu0 0.0
    %1480 = vmatprep.subr.mxu0 0.0
    %1481 = vmatpush1.msra.mxu0 0.0
    %1482 = vmatprep.mubr.f32.mxu0 0.0
    %1483 = vmatmul.mubr.f32.gmra.mrb[0].mxu0 %v1413
    %v1484 = vpop.f32.mrb[0].mxu0
    %v1485 = vadd.f32 %v1410, %v1484
    %v1486 = vpop.f32.mrb[0].mxu0
    %1487 = vmatprep.mubr.f32.mxu0 0.0
    %1488 = vmatmul.mubr.f32.gmra.mrb[0].mxu0 %v1416
    %v1489 = vpop.f32.mrb[0].mxu0
    %v1490 = vadd.f32 %v1410, %v1489
    %v1491 = vpop.f32.mrb[0].mxu0
    %1492 = vdwg.mxu0
    %v1493 = vadd.f32 %v975, %v1485
    %v1494 = vadd.f32 %v976, %v1490
    %v1495 = vsel %vm178, %v1493, 0.0
    %1496 = vadd.xlane.f32.xlu0 %v1495
    %v1497 = vpop.xlane.xlu0 %1496
    %v1498 = vsel %vm178, %v1494, 0.0
    %1499 = vadd.xlane.f32.xlu0 %v1498
    %v1500 = vpop.xlane.xlu0 %1499
    %v1501 = vmul.f32 %v1497, %v701
    %v1502 = vmul.f32 %v1500, %v701
    %v1503 = vsub.f32 %v1493, %v1501
    %v1504 = vsub.f32 %v1494, %v1502
    %v1505 = vmul.f32 %v1503, %v1503
    %v1506 = vmul.f32 %v1504, %v1504
    %v1507 = vsel %vm178, %v1505, 0.0
    %1508 = vadd.xlane.f32.xlu0 %v1507
    %v1509 = vpop.xlane.xlu0 %1508
    %v1510 = vsel %vm178, %v1506, 0.0
    %1511 = vadd.xlane.f32.xlu0 %v1510
    %v1512 = vpop.xlane.xlu0 %1511
    %v1513 = vmul.f32 %v1509, %v701
    %v1514 = vmul.f32 %v1512, %v701
    %v1515 = vadd.f32 %v1513, 1e-05
    %v1516 = vadd.f32 %v1514, 1e-05
    %v1517 = vrsqrt.pop %v1515
    %v1518 = vrsqrt.pop %v1516
    %v1519 = vmul.f32 %v1503, %v1517
    %v1520 = vmul.f32 %v1504, %v1518
    %s1521 = scalar_lea.vmem [#allocation10], 1
    %v1522 = vld [vmem:[%s1521] sm:$0x1]
    %v1524 = vlaneseq
    %v1525 = vshrl.u32 %v1524, 7
    %v1526 = vsub.s32 0, %v1525
    %v1527 = vrot.slane %v1522, %v1526
    %v1529 = vmul.f32 %v1519, %v1527
    %v1530 = vmul.f32 %v1520, %v1527
    %s1531 = scalar_lea.vmem [#allocation11], 1
    %v1532 = vld [vmem:[%s1531] sm:$0x1]
    %v1534 = vlaneseq
    %v1535 = vshrl.u32 %v1534, 7
    %v1536 = vsub.s32 0, %v1535
    %v1537 = vrot.slane %v1532, %v1536
    %v1539 = vadd.f32 %v1529, %v1537
    %v1540 = vadd.f32 %v1530, %v1537
    %s1541 = scalar_lea.vmem %s8, 32
    %v1542 = vld [vmem:[%s1541] sm:$0xff]
    %v1543 = vld [vmem:[%s1541 + $0x8] sm:$0xff]
    %v1544 = vld [vmem:[%s1541 + $0x10] sm:$0xff]
    %v1545 = vld [vmem:[%s1541 + $0x18] sm:$0xff]
    %s1546 = scalar_lea.vmem [#allocation13], 1
    %v1547 = vld [vmem:[%s1546] sm:$0x1]
    %v1549 = vlaneseq
    %v1550 = vshrl.u32 %v1549, 7
    %v1551 = vsub.s32 0, %v1550
    %v1552 = vrot.slane %v1547, %v1551
    %v1555 = vsel %vm178, %v1539, 0
    %v1558 = vsel %vm178, %v1540, 0
    %1560 = vmatprep.subr.mxu0 0.0
    %1561 = vmatpush1.msra.mxu0 %v1542
    %1562 = vmatprep.subr.mxu0 0.0
    %1563 = vmatpush1.msra.mxu0 %v1543
    %1564 = vmatprep.subr.mxu0 0.0
    %1565 = vmatpush1.msra.mxu0 %v1544
    %1566 = vmatprep.subr.mxu0 0.0
    %1567 = vmatpush1.msra.mxu0 %v1545
    %1568 = vmatprep.subr.mxu0 0.0
    %1569 = vmatpush1.msra.mxu0 0.0
    %1570 = vmatprep.subr.mxu0 0.0
    %1571 = vmatpush1.msra.mxu0 0.0
    %1572 = vmatprep.subr.mxu0 0.0
    %1573 = vmatpush1.msra.mxu0 0.0
    %1574 = vmatprep.subr.mxu0 0.0
    %1575 = vmatpush1.msra.mxu0 0.0
    %1576 = vmatprep.subr.mxu0 0.0
    %1577 = vmatpush1.msra.mxu0 0.0
    %1578 = vmatprep.subr.mxu0 0.0
    %1579 = vmatpush1.msra.mxu0 0.0
    %1580 = vmatprep.subr.mxu0 0.0
    %1581 = vmatpush1.msra.mxu0 0.0
    %1582 = vmatprep.subr.mxu0 0.0
    %1583 = vmatpush1.msra.mxu0 0.0
    %1584 = vmatprep.subr.mxu0 0.0
    %1585 = vmatpush1.msra.mxu0 0.0
    %1586 = vmatprep.subr.mxu0 0.0
    %1587 = vmatpush1.msra.mxu0 0.0
    %1588 = vmatprep.subr.mxu0 0.0
    %1589 = vmatpush1.msra.mxu0 0.0
    %1590 = vmatprep.subr.mxu0 0.0
    %1591 = vmatpush1.msra.mxu0 0.0
    %1592 = vmatprep.subr.mxu0 0.0
    %1593 = vmatpush1.msra.mxu0 0.0
    %1594 = vmatprep.subr.mxu0 0.0
    %1595 = vmatpush1.msra.mxu0 0.0
    %1596 = vmatprep.subr.mxu0 0.0
    %1597 = vmatpush1.msra.mxu0 0.0
    %1598 = vmatprep.subr.mxu0 0.0
    %1599 = vmatpush1.msra.mxu0 0.0
    %1600 = vmatprep.subr.mxu0 0.0
    %1601 = vmatpush1.msra.mxu0 0.0
    %1602 = vmatprep.subr.mxu0 0.0
    %1603 = vmatpush1.msra.mxu0 0.0
    %1604 = vmatprep.subr.mxu0 0.0
    %1605 = vmatpush1.msra.mxu0 0.0
    %1606 = vmatprep.subr.mxu0 0.0
    %1607 = vmatpush1.msra.mxu0 0.0
    %1608 = vmatprep.subr.mxu0 0.0
    %1609 = vmatpush1.msra.mxu0 0.0
    %1610 = vmatprep.subr.mxu0 0.0
    %1611 = vmatpush1.msra.mxu0 0.0
    %1612 = vmatprep.subr.mxu0 0.0
    %1613 = vmatpush1.msra.mxu0 0.0
    %1614 = vmatprep.subr.mxu0 0.0
    %1615 = vmatpush1.msra.mxu0 0.0
    %1616 = vmatprep.subr.mxu0 0.0
    %1617 = vmatpush1.msra.mxu0 0.0
    %1618 = vmatprep.subr.mxu0 0.0
    %1619 = vmatpush1.msra.mxu0 0.0
    %1620 = vmatprep.subr.mxu0 0.0
    %1621 = vmatpush1.msra.mxu0 0.0
    %1622 = vmatprep.subr.mxu0 0.0
    %1623 = vmatpush1.msra.mxu0 0.0
    %1624 = vmatprep.mubr.f32.mxu0 0.0
    %1625 = vmatmul.mubr.f32.gmra.mrb[0].mxu0 %v1555
    %v1626 = vpop.f32.mrb[0].mxu0
    %v1627 = vadd.f32 %v1552, %v1626
    %v1628 = vpop.f32.mrb[0].mxu0
    %1629 = vmatprep.mubr.f32.mxu0 0.0
    %1630 = vmatmul.mubr.f32.gmra.mrb[0].mxu0 %v1558
    %v1631 = vpop.f32.mrb[0].mxu0
    %v1632 = vadd.f32 %v1552, %v1631
    %v1633 = vpop.f32.mrb[0].mxu0
    %1634 = vdwg.mxu0
    %v1635 = vmax.f32 %v1627, 0.0
    %v1636 = vmax.f32 %v1632, 0.0
    %s1637 = scalar_lea.vmem %s10, 64
    %v1638 = vld [vmem:[%s1637] sm:$0xff]
    %v1639 = vld [vmem:[%s1637 + $0x8] sm:$0xff]
    %v1640 = vld [vmem:[%s1637 + $0x10] sm:$0xff]
    %v1641 = vld [vmem:[%s1637 + $0x18] sm:$0xff]
    %v1642 = vld [vmem:[%s1637 + $0x20] sm:$0xff]
    %v1643 = vld [vmem:[%s1637 + $0x28] sm:$0xff]
    %v1644 = vld [vmem:[%s1637 + $0x30] sm:$0xff]
    %v1645 = vld [vmem:[%s1637 + $0x38] sm:$0xff]
    %s1646 = scalar_lea.vmem [#allocation14], 1
    %v1647 = vld [vmem:[%s1646] sm:$0x1]
    %v1649 = vlaneseq
    %v1650 = vshrl.u32 %v1649, 7
    %v1651 = vsub.s32 0, %v1650
    %v1652 = vrot.slane %v1647, %v1651
    %v1655 = vsel %vm849, %v1635, 0
    %v1658 = vsel %vm849, %v1636, 0
    %1660 = vmatprep.subr.mxu0 0.0
    %1661 = vmatpush1.msra.mxu0 %v1638
    %1662 = vmatprep.subr.mxu0 0.0
    %1663 = vmatpush1.msra.mxu0 %v1639
    %1664 = vmatprep.subr.mxu0 0.0
    %1665 = vmatpush1.msra.mxu0 %v1640
    %1666 = vmatprep.subr.mxu0 0.0
    %1667 = vmatpush1.msra.mxu0 %v1641
    %1668 = vmatprep.subr.mxu0 0.0
    %1669 = vmatpush1.msra.mxu0 %v1642
    %1670 = vmatprep.subr.mxu0 0.0
    %1671 = vmatpush1.msra.mxu0 %v1643
    %1672 = vmatprep.subr.mxu0 0.0
    %1673 = vmatpush1.msra.mxu0 %v1644
    %1674 = vmatprep.subr.mxu0 0.0
    %1675 = vmatpush1.msra.mxu0 %v1645
    %1676 = vmatprep.subr.mxu0 0.0
    %1677 = vmatpush1.msra.mxu0 0.0
    %1678 = vmatprep.subr.mxu0 0.0
    %1679 = vmatpush1.msra.mxu0 0.0
    %1680 = vmatprep.subr.mxu0 0.0
    %1681 = vmatpush1.msra.mxu0 0.0
    %1682 = vmatprep.subr.mxu0 0.0
    %1683 = vmatpush1.msra.mxu0 0.0
    %1684 = vmatprep.subr.mxu0 0.0
    %1685 = vmatpush1.msra.mxu0 0.0
    %1686 = vmatprep.subr.mxu0 0.0
    %1687 = vmatpush1.msra.mxu0 0.0
    %1688 = vmatprep.subr.mxu0 0.0
    %1689 = vmatpush1.msra.mxu0 0.0
    %1690 = vmatprep.subr.mxu0 0.0
    %1691 = vmatpush1.msra.mxu0 0.0
    %1692 = vmatprep.subr.mxu0 0.0
    %1693 = vmatpush1.msra.mxu0 0.0
    %1694 = vmatprep.subr.mxu0 0.0
    %1695 = vmatpush1.msra.mxu0 0.0
    %1696 = vmatprep.subr.mxu0 0.0
    %1697 = vmatpush1.msra.mxu0 0.0
    %1698 = vmatprep.subr.mxu0 0.0
    %1699 = vmatpush1.msra.mxu0 0.0
    %1700 = vmatprep.subr.mxu0 0.0
    %1701 = vmatpush1.msra.mxu0 0.0
    %1702 = vmatprep.subr.mxu0 0.0
    %1703 = vmatpush1.msra.mxu0 0.0
    %1704 = vmatprep.subr.mxu0 0.0
    %1705 = vmatpush1.msra.mxu0 0.0
    %1706 = vmatprep.subr.mxu0 0.0
    %1707 = vmatpush1.msra.mxu0 0.0
    %1708 = vmatprep.subr.mxu0 0.0
    %1709 = vmatpush1.msra.mxu0 0.0
    %1710 = vmatprep.subr.mxu0 0.0
    %1711 = vmatpush1.msra.mxu0 0.0
    %1712 = vmatprep.subr.mxu0 0.0
    %1713 = vmatpush1.msra.mxu0 0.0
    %1714 = vmatprep.subr.mxu0 0.0
    %1715 = vmatpush1.msra.mxu0 0.0
    %1716 = vmatprep.subr.mxu0 0.0
    %1717 = vmatpush1.msra.mxu0 0.0
    %1718 = vmatprep.subr.mxu0 0.0
    %1719 = vmatpush1.msra.mxu0 0.0
    %1720 = vmatprep.subr.mxu0 0.0
    %1721 = vmatpush1.msra.mxu0 0.0
    %1722 = vmatprep.subr.mxu0 0.0
    %1723 = vmatpush1.msra.mxu0 0.0
    %1724 = vmatprep.mubr.f32.mxu0 0.0
    %1725 = vmatmul.mubr.f32.gmra.mrb[0].mxu0 %v1655
    %v1726 = vpop.f32.mrb[0].mxu0
    %v1727 = vadd.f32 %v1652, %v1726
    %v1728 = vpop.f32.mrb[0].mxu0
    %1729 = vmatprep.mubr.f32.mxu0 0.0
    %1730 = vmatmul.mubr.f32.gmra.mrb[0].mxu0 %v1658
    %v1731 = vpop.f32.mrb[0].mxu0
    %v1732 = vadd.f32 %v1652, %v1731
    %v1733 = vpop.f32.mrb[0].mxu0
    %1734 = vdwg.mxu0
    %v1735 = vadd.f32 %v1539, %v1727
    %v1736 = vadd.f32 %v1540, %v1732
    %v1737 = vsel %vm178, %v1735, 0.0
    %1738 = vadd.xlane.f32.xlu0 %v1737
    %v1739 = vpop.xlane.xlu0 %1738
    %v1740 = vsel %vm178, %v1736, 0.0
    %1741 = vadd.xlane.f32.xlu0 %v1740
    %v1742 = vpop.xlane.xlu0 %1741
    %v1743 = vmul.f32 %v1739, %v701
    %v1744 = vmul.f32 %v1742, %v701
    %v1745 = vsub.f32 %v1735, %v1743
    %v1746 = vsub.f32 %v1736, %v1744
    %v1747 = vmul.f32 %v1745, %v1745
    %v1748 = vmul.f32 %v1746, %v1746
    %v1749 = vsel %vm178, %v1747, 0.0
    %1750 = vadd.xlane.f32.xlu0 %v1749
    %v1751 = vpop.xlane.xlu0 %1750
    %v1752 = vsel %vm178, %v1748, 0.0
    %1753 = vadd.xlane.f32.xlu0 %v1752
    %v1754 = vpop.xlane.xlu0 %1753
    %v1755 = vmul.f32 %v1751, %v701
    %v1756 = vmul.f32 %v1754, %v701
    %v1757 = vadd.f32 %v1755, 1e-05
    %v1758 = vadd.f32 %v1756, 1e-05
    %v1759 = vrsqrt.pop %v1757
    %v1760 = vrsqrt.pop %v1758
    %v1761 = vmul.f32 %v1745, %v1759
    %v1762 = vmul.f32 %v1746, %v1760
    %s1763 = scalar_lea.vmem %s12, 1
    %v1764 = vld [vmem:[%s1763] sm:$0x1]
    %v1766 = vlaneseq
    %v1767 = vshrl.u32 %v1766, 7
    %v1768 = vsub.s32 0, %v1767
    %v1769 = vrot.slane %v1764, %v1768
    %v1771 = vmul.f32 %v1761, %v1769
    %v1772 = vmul.f32 %v1762, %v1769
    %s1773 = scalar_lea.vmem %s13, 1
    %v1774 = vld [vmem:[%s1773] sm:$0x1]
    %v1776 = vlaneseq
    %v1777 = vshrl.u32 %v1776, 7
    %v1778 = vsub.s32 0, %v1777
    %v1779 = vrot.slane %v1774, %v1778
    %v1781 = vadd.f32 %v1771, %v1779
    %v1782 = vadd.f32 %v1772, %v1779
    %s1783 = scalar_lea.vmem %s2, 64
    %v1784 = vld [vmem:[%s1783] sm:$0xff]
    %v1785 = vld [vmem:[%s1783 + $0x8] sm:$0xff]
    %v1786 = vld [vmem:[%s1783 + $0x10] sm:$0xff]
    %v1787 = vld [vmem:[%s1783 + $0x18] sm:$0xff]
    %s1788 = scalar_lea.vmem [#allocation7], 2
    %v1789 = vld [vmem:[%s1788] sm:$0x1]
    %v1791 = vlaneseq
    %v1792 = vshrl.u32 %v1791, 7
    %v1793 = vsub.s32 0, %v1792
    %v1794 = vrot.slane %v1789, %v1793
    %v1797 = vsel %vm178, %v1781, 0
    %v1800 = vsel %vm178, %v1782, 0
    %1802 = vmatprep.subr.mxu0 0.0
    %1803 = vmatpush1.msra.mxu0 %v1784
    %1804 = vmatprep.subr.mxu0 0.0
    %1805 = vmatpush1.msra.mxu0 %v1785
    %1806 = vmatprep.subr.mxu0 0.0
    %1807 = vmatpush1.msra.mxu0 %v1786
    %1808 = vmatprep.subr.mxu0 0.0
    %1809 = vmatpush1.msra.mxu0 %v1787
    %1810 = vmatprep.subr.mxu0 0.0
    %1811 = vmatpush1.msra.mxu0 0.0
    %1812 = vmatprep.subr.mxu0 0.0
    %1813 = vmatpush1.msra.mxu0 0.0
    %1814 = vmatprep.subr.mxu0 0.0
    %1815 = vmatpush1.msra.mxu0 0.0
    %1816 = vmatprep.subr.mxu0 0.0
    %1817 = vmatpush1.msra.mxu0 0.0
    %1818 = vmatprep.subr.mxu0 0.0
    %1819 = vmatpush1.msra.mxu0 0.0
    %1820 = vmatprep.subr.mxu0 0.0
    %1821 = vmatpush1.msra.mxu0 0.0
    %1822 = vmatprep.subr.mxu0 0.0
    %1823 = vmatpush1.msra.mxu0 0.0
    %1824 = vmatprep.subr.mxu0 0.0
    %1825 = vmatpush1.msra.mxu0 0.0
    %1826 = vmatprep.subr.mxu0 0.0
    %1827 = vmatpush1.msra.mxu0 0.0
    %1828 = vmatprep.subr.mxu0 0.0
    %1829 = vmatpush1.msra.mxu0 0.0
    %1830 = vmatprep.subr.mxu0 0.0
    %1831 = vmatpush1.msra.mxu0 0.0
    %1832 = vmatprep.subr.mxu0 0.0
    %1833 = vmatpush1.msra.mxu0 0.0
    %1834 = vmatprep.subr.mxu0 0.0
    %1835 = vmatpush1.msra.mxu0 0.0
    %1836 = vmatprep.subr.mxu0 0.0
    %1837 = vmatpush1.msra.mxu0 0.0
    %1838 = vmatprep.subr.mxu0 0.0
    %1839 = vmatpush1.msra.mxu0 0.0
    %1840 = vmatprep.subr.mxu0 0.0
    %1841 = vmatpush1.msra.mxu0 0.0
    %1842 = vmatprep.subr.mxu0 0.0
    %1843 = vmatpush1.msra.mxu0 0.0
    %1844 = vmatprep.subr.mxu0 0.0
    %1845 = vmatpush1.msra.mxu0 0.0
    %1846 = vmatprep.subr.mxu0 0.0
    %1847 = vmatpush1.msra.mxu0 0.0
    %1848 = vmatprep.subr.mxu0 0.0
    %1849 = vmatpush1.msra.mxu0 0.0
    %1850 = vmatprep.subr.mxu0 0.0
    %1851 = vmatpush1.msra.mxu0 0.0
    %1852 = vmatprep.subr.mxu0 0.0
    %1853 = vmatpush1.msra.mxu0 0.0
    %1854 = vmatprep.subr.mxu0 0.0
    %1855 = vmatpush1.msra.mxu0 0.0
    %1856 = vmatprep.subr.mxu0 0.0
    %1857 = vmatpush1.msra.mxu0 0.0
    %1858 = vmatprep.subr.mxu0 0.0
    %1859 = vmatpush1.msra.mxu0 0.0
    %1860 = vmatprep.subr.mxu0 0.0
    %1861 = vmatpush1.msra.mxu0 0.0
    %1862 = vmatprep.subr.mxu0 0.0
    %1863 = vmatpush1.msra.mxu0 0.0
    %1864 = vmatprep.subr.mxu0 0.0
    %1865 = vmatpush1.msra.mxu0 0.0
    %1866 = vmatprep.mubr.f32.mxu0 0.0
    %1867 = vmatmul.mubr.f32.gmra.mrb[0].mxu0 %v1797
    %v1868 = vpop.f32.mrb[0].mxu0
    %v1869 = vadd.f32 %v1794, %v1868
    %v1870 = vpop.f32.mrb[0].mxu0
    %1871 = vmatprep.mubr.f32.mxu0 0.0
    %1872 = vmatmul.mubr.f32.gmra.mrb[0].mxu0 %v1800
    %v1873 = vpop.f32.mrb[0].mxu0
    %v1874 = vadd.f32 %v1794, %v1873
    %v1875 = vpop.f32.mrb[0].mxu0
    %1876 = vdwg.mxu0
    %1878 = vrot.lane.b32.xlu0 %v1869, 96
    %v1879 = vpop.permute.xlu0 %1878
    %v1880 = vsel %vm178, %v1869, 0
    %v1882 = vsel %vm178, %v1879, 0
    %1884 = vmatprep.subr.mxu0 0.0
    %1885 = vmatpush1.xpose.msra.mxu0 %v1882
    %1886 = vmatprep.subr.mxu0 0.0
    %1887 = vmatpush1.xpose.msra.mxu0 0.0
    %1888 = vmatprep.subr.mxu0 0.0
    %1889 = vmatpush1.xpose.msra.mxu0 0.0
    %1890 = vmatprep.subr.mxu0 0.0
    %1891 = vmatpush1.xpose.msra.mxu0 0.0
    %1892 = vmatprep.subr.mxu0 0.0
    %1893 = vmatpush1.xpose.msra.mxu0 0.0
    %1894 = vmatprep.subr.mxu0 0.0
    %1895 = vmatpush1.xpose.msra.mxu0 0.0
    %1896 = vmatprep.subr.mxu0 0.0
    %1897 = vmatpush1.xpose.msra.mxu0 0.0
    %1898 = vmatprep.subr.mxu0 0.0
    %1899 = vmatpush1.xpose.msra.mxu0 0.0
    %1900 = vmatprep.subr.mxu0 0.0
    %1901 = vmatpush1.xpose.msra.mxu0 0.0
    %1902 = vmatprep.subr.mxu0 0.0
    %1903 = vmatpush1.xpose.msra.mxu0 0.0
    %1904 = vmatprep.subr.mxu0 0.0
    %1905 = vmatpush1.xpose.msra.mxu0 0.0
    %1906 = vmatprep.subr.mxu0 0.0
    %1907 = vmatpush1.xpose.msra.mxu0 0.0
    %1908 = vmatprep.subr.mxu0 0.0
    %1909 = vmatpush1.xpose.msra.mxu0 0.0
    %1910 = vmatprep.subr.mxu0 0.0
    %1911 = vmatpush1.xpose.msra.mxu0 0.0
    %1912 = vmatprep.subr.mxu0 0.0
    %1913 = vmatpush1.xpose.msra.mxu0 0.0
    %1914 = vmatprep.subr.mxu0 0.0
    %1915 = vmatpush1.xpose.msra.mxu0 0.0
    %1916 = vmatprep.subr.mxu0 0.0
    %1917 = vmatpush1.xpose.msra.mxu0 0.0
    %1918 = vmatprep.subr.mxu0 0.0
    %1919 = vmatpush1.xpose.msra.mxu0 0.0
    %1920 = vmatprep.subr.mxu0 0.0
    %1921 = vmatpush1.xpose.msra.mxu0 0.0
    %1922 = vmatprep.subr.mxu0 0.0
    %1923 = vmatpush1.xpose.msra.mxu0 0.0
    %1924 = vmatprep.subr.mxu0 0.0
    %1925 = vmatpush1.xpose.msra.mxu0 0.0
    %1926 = vmatprep.subr.mxu0 0.0
    %1927 = vmatpush1.xpose.msra.mxu0 0.0
    %1928 = vmatprep.subr.mxu0 0.0
    %1929 = vmatpush1.xpose.msra.mxu0 0.0
    %1930 = vmatprep.subr.mxu0 0.0
    %1931 = vmatpush1.xpose.msra.mxu0 0.0
    %1932 = vmatprep.subr.mxu0 0.0
    %1933 = vmatpush1.xpose.msra.mxu0 0.0
    %1934 = vmatprep.subr.mxu0 0.0
    %1935 = vmatpush1.xpose.msra.mxu0 0.0
    %1936 = vmatprep.subr.mxu0 0.0
    %1937 = vmatpush1.xpose.msra.mxu0 0.0
    %1938 = vmatprep.subr.mxu0 0.0
    %1939 = vmatpush1.xpose.msra.mxu0 0.0
    %1940 = vmatprep.subr.mxu0 0.0
    %1941 = vmatpush1.xpose.msra.mxu0 0.0
    %1942 = vmatprep.subr.mxu0 0.0
    %1943 = vmatpush1.xpose.msra.mxu0 0.0
    %1944 = vmatprep.subr.mxu0 0.0
    %1945 = vmatpush1.xpose.msra.mxu0 0.0
    %1946 = vmatprep.subr.mxu0 0.0
    %1947 = vmatpush1.xpose.msra.mxu0 0.0
    %1948 = vmatprep.mubr.f32.mxu0 0.0
    %1949 = vmatmul.mubr.f32.gmra.mrb[0].mxu0 %v1880
    %v1950 = vpop.f32.mrb[0].mxu0
    %v1951 = vadd.f32 %v265, %v1950
    %v1952 = vpop.f32.mrb[0].mxu0
    %1953 = vdwg.mxu0
    %1955 = vrot.lane.b32.xlu0 %v1874, 96
    %v1956 = vpop.permute.xlu0 %1955
    %v1957 = vsel %vm178, %v1874, 0
    %v1959 = vsel %vm178, %v1956, 0
    %1961 = vmatprep.subr.mxu0 0.0
    %1962 = vmatpush1.xpose.msra.mxu0 %v1959
    %1963 = vmatprep.subr.mxu0 0.0
    %1964 = vmatpush1.xpose.msra.mxu0 0.0
    %1965 = vmatprep.subr.mxu0 0.0
    %1966 = vmatpush1.xpose.msra.mxu0 0.0
    %1967 = vmatprep.subr.mxu0 0.0
    %1968 = vmatpush1.xpose.msra.mxu0 0.0
    %1969 = vmatprep.subr.mxu0 0.0
    %1970 = vmatpush1.xpose.msra.mxu0 0.0
    %1971 = vmatprep.subr.mxu0 0.0
    %1972 = vmatpush1.xpose.msra.mxu0 0.0
    %1973 = vmatprep.subr.mxu0 0.0
    %1974 = vmatpush1.xpose.msra.mxu0 0.0
    %1975 = vmatprep.subr.mxu0 0.0
    %1976 = vmatpush1.xpose.msra.mxu0 0.0
    %1977 = vmatprep.subr.mxu0 0.0
    %1978 = vmatpush1.xpose.msra.mxu0 0.0
    %1979 = vmatprep.subr.mxu0 0.0
    %1980 = vmatpush1.xpose.msra.mxu0 0.0
    %1981 = vmatprep.subr.mxu0 0.0
    %1982 = vmatpush1.xpose.msra.mxu0 0.0
    %1983 = vmatprep.subr.mxu0 0.0
    %1984 = vmatpush1.xpose.msra.mxu0 0.0
    %1985 = vmatprep.subr.mxu0 0.0
    %1986 = vmatpush1.xpose.msra.mxu0 0.0
    %1987 = vmatprep.subr.mxu0 0.0
    %1988 = vmatpush1.xpose.msra.mxu0 0.0
    %1989 = vmatprep.subr.mxu0 0.0
    %1990 = vmatpush1.xpose.msra.mxu0 0.0
    %1991 = vmatprep.subr.mxu0 0.0
    %1992 = vmatpush1.xpose.msra.mxu0 0.0
    %1993 = vmatprep.subr.mxu0 0.0
    %1994 = vmatpush1.xpose.msra.mxu0 0.0
    %1995 = vmatprep.subr.mxu0 0.0
    %1996 = vmatpush1.xpose.msra.mxu0 0.0
    %1997 = vmatprep.subr.mxu0 0.0
    %1998 = vmatpush1.xpose.msra.mxu0 0.0
    %1999 = vmatprep.subr.mxu0 0.0
    %2000 = vmatpush1.xpose.msra.mxu0 0.0
    %2001 = vmatprep.subr.mxu0 0.0
    %2002 = vmatpush1.xpose.msra.mxu0 0.0
    %2003 = vmatprep.subr.mxu0 0.0
    %2004 = vmatpush1.xpose.msra.mxu0 0.0
    %2005 = vmatprep.subr.mxu0 0.0
    %2006 = vmatpush1.xpose.msra.mxu0 0.0
    %2007 = vmatprep.subr.mxu0 0.0
    %2008 = vmatpush1.xpose.msra.mxu0 0.0
    %2009 = vmatprep.subr.mxu0 0.0
    %2010 = vmatpush1.xpose.msra.mxu0 0.0
    %2011 = vmatprep.subr.mxu0 0.0
    %2012 = vmatpush1.xpose.msra.mxu0 0.0
    %2013 = vmatprep.subr.mxu0 0.0
    %2014 = vmatpush1.xpose.msra.mxu0 0.0
    %2015 = vmatprep.subr.mxu0 0.0
    %2016 = vmatpush1.xpose.msra.mxu0 0.0
    %2017 = vmatprep.subr.mxu0 0.0
    %2018 = vmatpush1.xpose.msra.mxu0 0.0
    %2019 = vmatprep.subr.mxu0 0.0
    %2020 = vmatpush1.xpose.msra.mxu0 0.0
    %2021 = vmatprep.subr.mxu0 0.0
    %2022 = vmatpush1.xpose.msra.mxu0 0.0
    %2023 = vmatprep.subr.mxu0 0.0
    %2024 = vmatpush1.xpose.msra.mxu0 0.0
    %2025 = vmatprep.mubr.f32.mxu0 0.0
    %2026 = vmatmul.mubr.f32.gmra.mrb[0].mxu0 %v1957
    %v2027 = vpop.f32.mrb[0].mxu0
    %v2028 = vadd.f32 %v269, %v2027
    %v2029 = vpop.f32.mrb[0].mxu0
    %2030 = vdwg.mxu0
    %v2031 = vsel %vm426, %v1951, -inf
    %2032 = vmax.xlane.f32.xlu0 %v2031
    %v2033 = vpop.xlane.xlu0 %2032
    %v2034 = vsel %vm426, %v2028, -inf
    %2035 = vmax.xlane.f32.xlu0 %v2034
    %v2036 = vpop.xlane.xlu0 %2035
    %v2037 = vsub.f32 %v1951, %v2033
    %v2038 = vsub.f32 %v2028, %v2036
    %v2039 = vmul.f32 %v2037, 1.442695
    %v2040 = vpow.pop %v2039
    %v2041 = vmul.f32 %v2038, 1.442695
    %v2042 = vpow.pop %v2041
    %v2043 = vsel %vm426, %v2040, 0.0
    %2044 = vadd.xlane.f32.xlu0 %v2043
    %v2045 = vpop.xlane.xlu0 %2044
    %v2046 = vsel %vm426, %v2042, 0.0
    %2047 = vadd.xlane.f32.xlu0 %v2046
    %v2048 = vpop.xlane.xlu0 %2047
    %v2049 = vrcp.pop %v2045
    %v2050 = vrcp.pop %v2048
    %v2051 = vmul.f32 %v2040, %v2049
    %v2052 = vmul.f32 %v2042, %v2050
    %2053 = vrot.lane.b32.xlu0 %v1869, 64
    %v2054 = vpop.permute.xlu0 %2053
    %v2057 = vsel %vm426, %v2051, 0
    %2059 = vmatprep.subr.mxu0 0.0
    %2060 = vmatpush1.msra.mxu0 %v2054
    %2061 = vmatprep.subr.mxu0 0.0
    %2062 = vmatpush1.msra.mxu0 0.0
    %2063 = vmatprep.subr.mxu0 0.0
    %2064 = vmatpush1.msra.mxu0 0.0
    %2065 = vmatprep.subr.mxu0 0.0
    %2066 = vmatpush1.msra.mxu0 0.0
    %2067 = vmatprep.subr.mxu0 0.0
    %2068 = vmatpush1.msra.mxu0 0.0
    %2069 = vmatprep.subr.mxu0 0.0
    %2070 = vmatpush1.msra.mxu0 0.0
    %2071 = vmatprep.subr.mxu0 0.0
    %2072 = vmatpush1.msra.mxu0 0.0
    %2073 = vmatprep.subr.mxu0 0.0
    %2074 = vmatpush1.msra.mxu0 0.0
    %2075 = vmatprep.subr.mxu0 0.0
    %2076 = vmatpush1.msra.mxu0 0.0
    %2077 = vmatprep.subr.mxu0 0.0
    %2078 = vmatpush1.msra.mxu0 0.0
    %2079 = vmatprep.subr.mxu0 0.0
    %2080 = vmatpush1.msra.mxu0 0.0
    %2081 = vmatprep.subr.mxu0 0.0
    %2082 = vmatpush1.msra.mxu0 0.0
    %2083 = vmatprep.subr.mxu0 0.0
    %2084 = vmatpush1.msra.mxu0 0.0
    %2085 = vmatprep.subr.mxu0 0.0
    %2086 = vmatpush1.msra.mxu0 0.0
    %2087 = vmatprep.subr.mxu0 0.0
    %2088 = vmatpush1.msra.mxu0 0.0
    %2089 = vmatprep.subr.mxu0 0.0
    %2090 = vmatpush1.msra.mxu0 0.0
    %2091 = vmatprep.subr.mxu0 0.0
    %2092 = vmatpush1.msra.mxu0 0.0
    %2093 = vmatprep.subr.mxu0 0.0
    %2094 = vmatpush1.msra.mxu0 0.0
    %2095 = vmatprep.subr.mxu0 0.0
    %2096 = vmatpush1.msra.mxu0 0.0
    %2097 = vmatprep.subr.mxu0 0.0
    %2098 = vmatpush1.msra.mxu0 0.0
    %2099 = vmatprep.subr.mxu0 0.0
    %2100 = vmatpush1.msra.mxu0 0.0
    %2101 = vmatprep.subr.mxu0 0.0
    %2102 = vmatpush1.msra.mxu0 0.0
    %2103 = vmatprep.subr.mxu0 0.0
    %2104 = vmatpush1.msra.mxu0 0.0
    %2105 = vmatprep.subr.mxu0 0.0
    %2106 = vmatpush1.msra.mxu0 0.0
    %2107 = vmatprep.subr.mxu0 0.0
    %2108 = vmatpush1.msra.mxu0 0.0
    %2109 = vmatprep.subr.mxu0 0.0
    %2110 = vmatpush1.msra.mxu0 0.0
    %2111 = vmatprep.subr.mxu0 0.0
    %2112 = vmatpush1.msra.mxu0 0.0
    %2113 = vmatprep.subr.mxu0 0.0
    %2114 = vmatpush1.msra.mxu0 0.0
    %2115 = vmatprep.subr.mxu0 0.0
    %2116 = vmatpush1.msra.mxu0 0.0
    %2117 = vmatprep.subr.mxu0 0.0
    %2118 = vmatpush1.msra.mxu0 0.0
    %2119 = vmatprep.subr.mxu0 0.0
    %2120 = vmatpush1.msra.mxu0 0.0
    %2121 = vmatprep.subr.mxu0 0.0
    %2122 = vmatpush1.msra.mxu0 0.0
    %2123 = vmatprep.mubr.f32.mxu0 0.0
    %2124 = vmatmul.mubr.f32.gmra.mrb[0].mxu0 %v2057
    %v2125 = vpop.f32.mrb[0].mxu0
    %v2126 = vadd.f32 0.0, %v2125
    %v2127 = vpop.f32.mrb[0].mxu0
    %2128 = vdwg.mxu0
    %2129 = vrot.lane.b32.xlu0 %v1874, 64
    %v2130 = vpop.permute.xlu0 %2129
    %v2133 = vsel %vm426, %v2052, 0
    %2135 = vmatprep.subr.mxu0 0.0
    %2136 = vmatpush1.msra.mxu0 %v2130
    %2137 = vmatprep.subr.mxu0 0.0
    %2138 = vmatpush1.msra.mxu0 0.0
    %2139 = vmatprep.subr.mxu0 0.0
    %2140 = vmatpush1.msra.mxu0 0.0
    %2141 = vmatprep.subr.mxu0 0.0
    %2142 = vmatpush1.msra.mxu0 0.0
    %2143 = vmatprep.subr.mxu0 0.0
    %2144 = vmatpush1.msra.mxu0 0.0
    %2145 = vmatprep.subr.mxu0 0.0
    %2146 = vmatpush1.msra.mxu0 0.0
    %2147 = vmatprep.subr.mxu0 0.0
    %2148 = vmatpush1.msra.mxu0 0.0
    %2149 = vmatprep.subr.mxu0 0.0
    %2150 = vmatpush1.msra.mxu0 0.0
    %2151 = vmatprep.subr.mxu0 0.0
    %2152 = vmatpush1.msra.mxu0 0.0
    %2153 = vmatprep.subr.mxu0 0.0
    %2154 = vmatpush1.msra.mxu0 0.0
    %2155 = vmatprep.subr.mxu0 0.0
    %2156 = vmatpush1.msra.mxu0 0.0
    %2157 = vmatprep.subr.mxu0 0.0
    %2158 = vmatpush1.msra.mxu0 0.0
    %2159 = vmatprep.subr.mxu0 0.0
    %2160 = vmatpush1.msra.mxu0 0.0
    %2161 = vmatprep.subr.mxu0 0.0
    %2162 = vmatpush1.msra.mxu0 0.0
    %2163 = vmatprep.subr.mxu0 0.0
    %2164 = vmatpush1.msra.mxu0 0.0
    %2165 = vmatprep.subr.mxu0 0.0
    %2166 = vmatpush1.msra.mxu0 0.0
    %2167 = vmatprep.subr.mxu0 0.0
    %2168 = vmatpush1.msra.mxu0 0.0
    %2169 = vmatprep.subr.mxu0 0.0
    %2170 = vmatpush1.msra.mxu0 0.0
    %2171 = vmatprep.subr.mxu0 0.0
    %2172 = vmatpush1.msra.mxu0 0.0
    %2173 = vmatprep.subr.mxu0 0.0
    %2174 = vmatpush1.msra.mxu0 0.0
    %2175 = vmatprep.subr.mxu0 0.0
    %2176 = vmatpush1.msra.mxu0 0.0
    %2177 = vmatprep.subr.mxu0 0.0
    %2178 = vmatpush1.msra.mxu0 0.0
    %2179 = vmatprep.subr.mxu0 0.0
    %2180 = vmatpush1.msra.mxu0 0.0
    %2181 = vmatprep.subr.mxu0 0.0
    %2182 = vmatpush1.msra.mxu0 0.0
    %2183 = vmatprep.subr.mxu0 0.0
    %2184 = vmatpush1.msra.mxu0 0.0
    %2185 = vmatprep.subr.mxu0 0.0
    %2186 = vmatpush1.msra.mxu0 0.0
    %2187 = vmatprep.subr.mxu0 0.0
    %2188 = vmatpush1.msra.mxu0 0.0
    %2189 = vmatprep.subr.mxu0 0.0
    %2190 = vmatpush1.msra.mxu0 0.0
    %2191 = vmatprep.subr.mxu0 0.0
    %2192 = vmatpush1.msra.mxu0 0.0
    %2193 = vmatprep.subr.mxu0 0.0
    %2194 = vmatpush1.msra.mxu0 0.0
    %2195 = vmatprep.subr.mxu0 0.0
    %2196 = vmatpush1.msra.mxu0 0.0
    %2197 = vmatprep.subr.mxu0 0.0
    %2198 = vmatpush1.msra.mxu0 0.0
    %2199 = vmatprep.mubr.f32.mxu0 0.0
    %2200 = vmatmul.mubr.f32.gmra.mrb[0].mxu0 %v2133
    %v2201 = vpop.f32.mrb[0].mxu0
    %v2202 = vadd.f32 0.0, %v2201
    %v2203 = vpop.f32.mrb[0].mxu0
    %2204 = vdwg.mxu0
    %s2205 = scalar_lea.vmem %s4, 64
    %v2206 = vld [vmem:[%s2205] sm:$0xff]
    %v2207 = vld [vmem:[%s2205 + $0x8] sm:$0xff]
    %v2208 = vld [vmem:[%s2205 + $0x10] sm:$0xff]
    %v2209 = vld [vmem:[%s2205 + $0x18] sm:$0xff]
    %s2210 = scalar_lea.vmem [#allocation8], 2
    %v2211 = vld [vmem:[%s2210] sm:$0x1]
    %v2213 = vlaneseq
    %v2214 = vshrl.u32 %v2213, 7
    %v2215 = vsub.s32 0, %v2214
    %v2216 = vrot.slane %v2211, %v2215
    %v2219 = vsel %vm178, %v2126, 0
    %v2222 = vsel %vm178, %v2202, 0
    %2224 = vmatprep.subr.mxu0 0.0
    %2225 = vmatpush1.msra.mxu0 %v2206
    %2226 = vmatprep.subr.mxu0 0.0
    %2227 = vmatpush1.msra.mxu0 %v2207
    %2228 = vmatprep.subr.mxu0 0.0
    %2229 = vmatpush1.msra.mxu0 %v2208
    %2230 = vmatprep.subr.mxu0 0.0
    %2231 = vmatpush1.msra.mxu0 %v2209
    %2232 = vmatprep.subr.mxu0 0.0
    %2233 = vmatpush1.msra.mxu0 0.0
    %2234 = vmatprep.subr.mxu0 0.0
    %2235 = vmatpush1.msra.mxu0 0.0
    %2236 = vmatprep.subr.mxu0 0.0
    %2237 = vmatpush1.msra.mxu0 0.0
    %2238 = vmatprep.subr.mxu0 0.0
    %2239 = vmatpush1.msra.mxu0 0.0
    %2240 = vmatprep.subr.mxu0 0.0
    %2241 = vmatpush1.msra.mxu0 0.0
    %2242 = vmatprep.subr.mxu0 0.0
    %2243 = vmatpush1.msra.mxu0 0.0
    %2244 = vmatprep.subr.mxu0 0.0
    %2245 = vmatpush1.msra.mxu0 0.0
    %2246 = vmatprep.subr.mxu0 0.0
    %2247 = vmatpush1.msra.mxu0 0.0
    %2248 = vmatprep.subr.mxu0 0.0
    %2249 = vmatpush1.msra.mxu0 0.0
    %2250 = vmatprep.subr.mxu0 0.0
    %2251 = vmatpush1.msra.mxu0 0.0
    %2252 = vmatprep.subr.mxu0 0.0
    %2253 = vmatpush1.msra.mxu0 0.0
    %2254 = vmatprep.subr.mxu0 0.0
    %2255 = vmatpush1.msra.mxu0 0.0
    %2256 = vmatprep.subr.mxu0 0.0
    %2257 = vmatpush1.msra.mxu0 0.0
    %2258 = vmatprep.subr.mxu0 0.0
    %2259 = vmatpush1.msra.mxu0 0.0
    %2260 = vmatprep.subr.mxu0 0.0
    %2261 = vmatpush1.msra.mxu0 0.0
    %2262 = vmatprep.subr.mxu0 0.0
    %2263 = vmatpush1.msra.mxu0 0.0
    %2264 = vmatprep.subr.mxu0 0.0
    %2265 = vmatpush1.msra.mxu0 0.0
    %2266 = vmatprep.subr.mxu0 0.0
    %2267 = vmatpush1.msra.mxu0 0.0
    %2268 = vmatprep.subr.mxu0 0.0
    %2269 = vmatpush1.msra.mxu0 0.0
    %2270 = vmatprep.subr.mxu0 0.0
    %2271 = vmatpush1.msra.mxu0 0.0
    %2272 = vmatprep.subr.mxu0 0.0
    %2273 = vmatpush1.msra.mxu0 0.0
    %2274 = vmatprep.subr.mxu0 0.0
    %2275 = vmatpush1.msra.mxu0 0.0
    %2276 = vmatprep.subr.mxu0 0.0
    %2277 = vmatpush1.msra.mxu0 0.0
    %2278 = vmatprep.subr.mxu0 0.0
    %2279 = vmatpush1.msra.mxu0 0.0
    %2280 = vmatprep.subr.mxu0 0.0
    %2281 = vmatpush1.msra.mxu0 0.0
    %2282 = vmatprep.subr.mxu0 0.0
    %2283 = vmatpush1.msra.mxu0 0.0
    %2284 = vmatprep.subr.mxu0 0.0
    %2285 = vmatpush1.msra.mxu0 0.0
    %2286 = vmatprep.subr.mxu0 0.0
    %2287 = vmatpush1.msra.mxu0 0.0
    %2288 = vmatprep.mubr.f32.mxu0 0.0
    %2289 = vmatmul.mubr.f32.gmra.mrb[0].mxu0 %v2219
    %v2290 = vpop.f32.mrb[0].mxu0
    %v2291 = vadd.f32 %v2216, %v2290
    %v2292 = vpop.f32.mrb[0].mxu0
    %2293 = vmatprep.mubr.f32.mxu0 0.0
    %2294 = vmatmul.mubr.f32.gmra.mrb[0].mxu0 %v2222
    %v2295 = vpop.f32.mrb[0].mxu0
    %v2296 = vadd.f32 %v2216, %v2295
    %v2297 = vpop.f32.mrb[0].mxu0
    %2298 = vdwg.mxu0
    %v2299 = vadd.f32 %v1781, %v2291
    %v2300 = vadd.f32 %v1782, %v2296
    %v2301 = vsel %vm178, %v2299, 0.0
    %2302 = vadd.xlane.f32.xlu0 %v2301
    %v2303 = vpop.xlane.xlu0 %2302
    %v2304 = vsel %vm178, %v2300, 0.0
    %2305 = vadd.xlane.f32.xlu0 %v2304
    %v2306 = vpop.xlane.xlu0 %2305
    %v2307 = vmul.f32 %v2303, %v701
    %v2308 = vmul.f32 %v2306, %v701
    %v2309 = vsub.f32 %v2299, %v2307
    %v2310 = vsub.f32 %v2300, %v2308
    %v2311 = vmul.f32 %v2309, %v2309
    %v2312 = vmul.f32 %v2310, %v2310
    %v2313 = vsel %vm178, %v2311, 0.0
    %2314 = vadd.xlane.f32.xlu0 %v2313
    %v2315 = vpop.xlane.xlu0 %2314
    %v2316 = vsel %vm178, %v2312, 0.0
    %2317 = vadd.xlane.f32.xlu0 %v2316
    %v2318 = vpop.xlane.xlu0 %2317
    %v2319 = vmul.f32 %v2315, %v701
    %v2320 = vmul.f32 %v2318, %v701
    %v2321 = vadd.f32 %v2319, 1e-05
    %v2322 = vadd.f32 %v2320, 1e-05
    %v2323 = vrsqrt.pop %v2321
    %v2324 = vrsqrt.pop %v2322
    %v2325 = vmul.f32 %v2309, %v2323
    %v2326 = vmul.f32 %v2310, %v2324
    %s2327 = scalar_lea.vmem [#allocation10], 2
    %v2328 = vld [vmem:[%s2327] sm:$0x1]
    %v2330 = vlaneseq
    %v2331 = vshrl.u32 %v2330, 7
    %v2332 = vsub.s32 0, %v2331
    %v2333 = vrot.slane %v2328, %v2332
    %v2335 = vmul.f32 %v2325, %v2333
    %v2336 = vmul.f32 %v2326, %v2333
    %s2337 = scalar_lea.vmem [#allocation11], 2
    %v2338 = vld [vmem:[%s2337] sm:$0x1]
    %v2340 = vlaneseq
    %v2341 = vshrl.u32 %v2340, 7
    %v2342 = vsub.s32 0, %v2341
    %v2343 = vrot.slane %v2338, %v2342
    %v2345 = vadd.f32 %v2335, %v2343
    %v2346 = vadd.f32 %v2336, %v2343
    %s2347 = scalar_lea.vmem %s8, 64
    %v2348 = vld [vmem:[%s2347] sm:$0xff]
    %v2349 = vld [vmem:[%s2347 + $0x8] sm:$0xff]
    %v2350 = vld [vmem:[%s2347 + $0x10] sm:$0xff]
    %v2351 = vld [vmem:[%s2347 + $0x18] sm:$0xff]
    %s2352 = scalar_lea.vmem [#allocation13], 2
    %v2353 = vld [vmem:[%s2352] sm:$0x1]
    %v2355 = vlaneseq
    %v2356 = vshrl.u32 %v2355, 7
    %v2357 = vsub.s32 0, %v2356
    %v2358 = vrot.slane %v2353, %v2357
    %v2361 = vsel %vm178, %v2345, 0
    %v2364 = vsel %vm178, %v2346, 0
    %2366 = vmatprep.subr.mxu0 0.0
    %2367 = vmatpush1.msra.mxu0 %v2348
    %2368 = vmatprep.subr.mxu0 0.0
    %2369 = vmatpush1.msra.mxu0 %v2349
    %2370 = vmatprep.subr.mxu0 0.0
    %2371 = vmatpush1.msra.mxu0 %v2350
    %2372 = vmatprep.subr.mxu0 0.0
    %2373 = vmatpush1.msra.mxu0 %v2351
    %2374 = vmatprep.subr.mxu0 0.0
    %2375 = vmatpush1.msra.mxu0 0.0
    %2376 = vmatprep.subr.mxu0 0.0
    %2377 = vmatpush1.msra.mxu0 0.0
    %2378 = vmatprep.subr.mxu0 0.0
    %2379 = vmatpush1.msra.mxu0 0.0
    %2380 = vmatprep.subr.mxu0 0.0
    %2381 = vmatpush1.msra.mxu0 0.0
    %2382 = vmatprep.subr.mxu0 0.0
    %2383 = vmatpush1.msra.mxu0 0.0
    %2384 = vmatprep.subr.mxu0 0.0
    %2385 = vmatpush1.msra.mxu0 0.0
    %2386 = vmatprep.subr.mxu0 0.0
    %2387 = vmatpush1.msra.mxu0 0.0
    %2388 = vmatprep.subr.mxu0 0.0
    %2389 = vmatpush1.msra.mxu0 0.0
    %2390 = vmatprep.subr.mxu0 0.0
    %2391 = vmatpush1.msra.mxu0 0.0
    %2392 = vmatprep.subr.mxu0 0.0
    %2393 = vmatpush1.msra.mxu0 0.0
    %2394 = vmatprep.subr.mxu0 0.0
    %2395 = vmatpush1.msra.mxu0 0.0
    %2396 = vmatprep.subr.mxu0 0.0
    %2397 = vmatpush1.msra.mxu0 0.0
    %2398 = vmatprep.subr.mxu0 0.0
    %2399 = vmatpush1.msra.mxu0 0.0
    %2400 = vmatprep.subr.mxu0 0.0
    %2401 = vmatpush1.msra.mxu0 0.0
    %2402 = vmatprep.subr.mxu0 0.0
    %2403 = vmatpush1.msra.mxu0 0.0
    %2404 = vmatprep.subr.mxu0 0.0
    %2405 = vmatpush1.msra.mxu0 0.0
    %2406 = vmatprep.subr.mxu0 0.0
    %2407 = vmatpush1.msra.mxu0 0.0
    %2408 = vmatprep.subr.mxu0 0.0
    %2409 = vmatpush1.msra.mxu0 0.0
    %2410 = vmatprep.subr.mxu0 0.0
    %2411 = vmatpush1.msra.mxu0 0.0
    %2412 = vmatprep.subr.mxu0 0.0
    %2413 = vmatpush1.msra.mxu0 0.0
    %2414 = vmatprep.subr.mxu0 0.0
    %2415 = vmatpush1.msra.mxu0 0.0
    %2416 = vmatprep.subr.mxu0 0.0
    %2417 = vmatpush1.msra.mxu0 0.0
    %2418 = vmatprep.subr.mxu0 0.0
    %2419 = vmatpush1.msra.mxu0 0.0
    %2420 = vmatprep.subr.mxu0 0.0
    %2421 = vmatpush1.msra.mxu0 0.0
    %2422 = vmatprep.subr.mxu0 0.0
    %2423 = vmatpush1.msra.mxu0 0.0
    %2424 = vmatprep.subr.mxu0 0.0
    %2425 = vmatpush1.msra.mxu0 0.0
    %2426 = vmatprep.subr.mxu0 0.0
    %2427 = vmatpush1.msra.mxu0 0.0
    %2428 = vmatprep.subr.mxu0 0.0
    %2429 = vmatpush1.msra.mxu0 0.0
    %2430 = vmatprep.mubr.f32.mxu0 0.0
    %2431 = vmatmul.mubr.f32.gmra.mrb[0].mxu0 %v2361
    %v2432 = vpop.f32.mrb[0].mxu0
    %v2433 = vadd.f32 %v2358, %v2432
    %v2434 = vpop.f32.mrb[0].mxu0
    %2435 = vmatprep.mubr.f32.mxu0 0.0
    %2436 = vmatmul.mubr.f32.gmra.mrb[0].mxu0 %v2364
    %v2437 = vpop.f32.mrb[0].mxu0
    %v2438 = vadd.f32 %v2358, %v2437
    %v2439 = vpop.f32.mrb[0].mxu0
    %2440 = vdwg.mxu0
    %v2441 = vmax.f32 %v2433, 0.0
    %v2442 = vmax.f32 %v2438, 0.0
    %s2443 = scalar_lea.vmem %s10, 128
    %v2444 = vld [vmem:[%s2443] sm:$0xff]
    %v2445 = vld [vmem:[%s2443 + $0x8] sm:$0xff]
    %v2446 = vld [vmem:[%s2443 + $0x10] sm:$0xff]
    %v2447 = vld [vmem:[%s2443 + $0x18] sm:$0xff]
    %v2448 = vld [vmem:[%s2443 + $0x20] sm:$0xff]
    %v2449 = vld [vmem:[%s2443 + $0x28] sm:$0xff]
    %v2450 = vld [vmem:[%s2443 + $0x30] sm:$0xff]
    %v2451 = vld [vmem:[%s2443 + $0x38] sm:$0xff]
    %s2452 = scalar_lea.vmem [#allocation14], 2
    %v2453 = vld [vmem:[%s2452] sm:$0x1]
    %v2455 = vlaneseq
    %v2456 = vshrl.u32 %v2455, 7
    %v2457 = vsub.s32 0, %v2456
    %v2458 = vrot.slane %v2453, %v2457
    %v2461 = vsel %vm849, %v2441, 0
    %v2464 = vsel %vm849, %v2442, 0
    %2466 = vmatprep.subr.mxu0 0.0
    %2467 = vmatpush1.msra.mxu0 %v2444
    %2468 = vmatprep.subr.mxu0 0.0
    %2469 = vmatpush1.msra.mxu0 %v2445
    %2470 = vmatprep.subr.mxu0 0.0
    %2471 = vmatpush1.msra.mxu0 %v2446
    %2472 = vmatprep.subr.mxu0 0.0
    %2473 = vmatpush1.msra.mxu0 %v2447
    %2474 = vmatprep.subr.mxu0 0.0
    %2475 = vmatpush1.msra.mxu0 %v2448
    %2476 = vmatprep.subr.mxu0 0.0
    %2477 = vmatpush1.msra.mxu0 %v2449
    %2478 = vmatprep.subr.mxu0 0.0
    %2479 = vmatpush1.msra.mxu0 %v2450
    %2480 = vmatprep.subr.mxu0 0.0
    %2481 = vmatpush1.msra.mxu0 %v2451
    %2482 = vmatprep.subr.mxu0 0.0
    %2483 = vmatpush1.msra.mxu0 0.0
    %2484 = vmatprep.subr.mxu0 0.0
    %2485 = vmatpush1.msra.mxu0 0.0
    %2486 = vmatprep.subr.mxu0 0.0
    %2487 = vmatpush1.msra.mxu0 0.0
    %2488 = vmatprep.subr.mxu0 0.0
    %2489 = vmatpush1.msra.mxu0 0.0
    %2490 = vmatprep.subr.mxu0 0.0
    %2491 = vmatpush1.msra.mxu0 0.0
    %2492 = vmatprep.subr.mxu0 0.0
    %2493 = vmatpush1.msra.mxu0 0.0
    %2494 = vmatprep.subr.mxu0 0.0
    %2495 = vmatpush1.msra.mxu0 0.0
    %2496 = vmatprep.subr.mxu0 0.0
    %2497 = vmatpush1.msra.mxu0 0.0
    %2498 = vmatprep.subr.mxu0 0.0
    %2499 = vmatpush1.msra.mxu0 0.0
    %2500 = vmatprep.subr.mxu0 0.0
    %2501 = vmatpush1.msra.mxu0 0.0
    %2502 = vmatprep.subr.mxu0 0.0
    %2503 = vmatpush1.msra.mxu0 0.0
    %2504 = vmatprep.subr.mxu0 0.0
    %2505 = vmatpush1.msra.mxu0 0.0
    %2506 = vmatprep.subr.mxu0 0.0
    %2507 = vmatpush1.msra.mxu0 0.0
    %2508 = vmatprep.subr.mxu0 0.0
    %2509 = vmatpush1.msra.mxu0 0.0
    %2510 = vmatprep.subr.mxu0 0.0
    %2511 = vmatpush1.msra.mxu0 0.0
    %2512 = vmatprep.subr.mxu0 0.0
    %2513 = vmatpush1.msra.mxu0 0.0
    %2514 = vmatprep.subr.mxu0 0.0
    %2515 = vmatpush1.msra.mxu0 0.0
    %2516 = vmatprep.subr.mxu0 0.0
    %2517 = vmatpush1.msra.mxu0 0.0
    %2518 = vmatprep.subr.mxu0 0.0
    %2519 = vmatpush1.msra.mxu0 0.0
    %2520 = vmatprep.subr.mxu0 0.0
    %2521 = vmatpush1.msra.mxu0 0.0
    %2522 = vmatprep.subr.mxu0 0.0
    %2523 = vmatpush1.msra.mxu0 0.0
    %2524 = vmatprep.subr.mxu0 0.0
    %2525 = vmatpush1.msra.mxu0 0.0
    %2526 = vmatprep.subr.mxu0 0.0
    %2527 = vmatpush1.msra.mxu0 0.0
    %2528 = vmatprep.subr.mxu0 0.0
    %2529 = vmatpush1.msra.mxu0 0.0
    %2530 = vmatprep.mubr.f32.mxu0 0.0
    %2531 = vmatmul.mubr.f32.gmra.mrb[0].mxu0 %v2461
    %v2532 = vpop.f32.mrb[0].mxu0
    %v2533 = vadd.f32 %v2458, %v2532
    %v2534 = vpop.f32.mrb[0].mxu0
    %2535 = vmatprep.mubr.f32.mxu0 0.0
    %2536 = vmatmul.mubr.f32.gmra.mrb[0].mxu0 %v2464
    %v2537 = vpop.f32.mrb[0].mxu0
    %v2538 = vadd.f32 %v2458, %v2537
    %v2539 = vpop.f32.mrb[0].mxu0
    %2540 = vdwg.mxu0
    %v2541 = vadd.f32 %v2345, %v2533
    %v2542 = vadd.f32 %v2346, %v2538
    %v2543 = vsel %vm178, %v2541, 0.0
    %2544 = vadd.xlane.f32.xlu0 %v2543
    %v2545 = vpop.xlane.xlu0 %2544
    %v2546 = vsel %vm178, %v2542, 0.0
    %2547 = vadd.xlane.f32.xlu0 %v2546
    %v2548 = vpop.xlane.xlu0 %2547
    %v2549 = vmul.f32 %v2545, %v701
    %v2550 = vmul.f32 %v2548, %v701
    %v2551 = vsub.f32 %v2541, %v2549
    %v2552 = vsub.f32 %v2542, %v2550
    %v2553 = vmul.f32 %v2551, %v2551
    %v2554 = vmul.f32 %v2552, %v2552
    %v2555 = vsel %vm178, %v2553, 0.0
    %2556 = vadd.xlane.f32.xlu0 %v2555
    %v2557 = vpop.xlane.xlu0 %2556
    %v2558 = vsel %vm178, %v2554, 0.0
    %2559 = vadd.xlane.f32.xlu0 %v2558
    %v2560 = vpop.xlane.xlu0 %2559
    %v2561 = vmul.f32 %v2557, %v701
    %v2562 = vmul.f32 %v2560, %v701
    %v2563 = vadd.f32 %v2561, 1e-05
    %v2564 = vadd.f32 %v2562, 1e-05
    %v2565 = vrsqrt.pop %v2563
    %v2566 = vrsqrt.pop %v2564
    %v2567 = vmul.f32 %v2551, %v2565
    %v2568 = vmul.f32 %v2552, %v2566
    %s2569 = scalar_lea.vmem %s12, 2
    %v2570 = vld [vmem:[%s2569] sm:$0x1]
    %v2572 = vlaneseq
    %v2573 = vshrl.u32 %v2572, 7
    %v2574 = vsub.s32 0, %v2573
    %v2575 = vrot.slane %v2570, %v2574
    %v2577 = vmul.f32 %v2567, %v2575
    %v2578 = vmul.f32 %v2568, %v2575
    %s2579 = scalar_lea.vmem %s13, 2
    %v2580 = vld [vmem:[%s2579] sm:$0x1]
    %v2582 = vlaneseq
    %v2583 = vshrl.u32 %v2582, 7
    %v2584 = vsub.s32 0, %v2583
    %v2585 = vrot.slane %v2580, %v2584
    %v2587 = vadd.f32 %v2577, %v2585
    %v2588 = vadd.f32 %v2578, %v2585
    %s2589 = scalar_lea.vmem %s2, 96
    %v2590 = vld [vmem:[%s2589] sm:$0xff]
    %v2591 = vld [vmem:[%s2589 + $0x8] sm:$0xff]
    %v2592 = vld [vmem:[%s2589 + $0x10] sm:$0xff]
    %v2593 = vld [vmem:[%s2589 + $0x18] sm:$0xff]
    %s2594 = scalar_lea.vmem [#allocation7], 3
    %v2595 = vld [vmem:[%s2594] sm:$0x1]
    %v2597 = vlaneseq
    %v2598 = vshrl.u32 %v2597, 7
    %v2599 = vsub.s32 0, %v2598
    %v2600 = vrot.slane %v2595, %v2599
    %v2603 = vsel %vm178, %v2587, 0
    %v2606 = vsel %vm178, %v2588, 0
    %2608 = vmatprep.subr.mxu0 0.0
    %2609 = vmatpush1.msra.mxu0 %v2590
    %2610 = vmatprep.subr.mxu0 0.0
    %2611 = vmatpush1.msra.mxu0 %v2591
    %2612 = vmatprep.subr.mxu0 0.0
    %2613 = vmatpush1.msra.mxu0 %v2592
    %2614 = vmatprep.subr.mxu0 0.0
    %2615 = vmatpush1.msra.mxu0 %v2593
    %2616 = vmatprep.subr.mxu0 0.0
    %2617 = vmatpush1.msra.mxu0 0.0
    %2618 = vmatprep.subr.mxu0 0.0
    %2619 = vmatpush1.msra.mxu0 0.0
    %2620 = vmatprep.subr.mxu0 0.0
    %2621 = vmatpush1.msra.mxu0 0.0
    %2622 = vmatprep.subr.mxu0 0.0
    %2623 = vmatpush1.msra.mxu0 0.0
    %2624 = vmatprep.subr.mxu0 0.0
    %2625 = vmatpush1.msra.mxu0 0.0
    %2626 = vmatprep.subr.mxu0 0.0
    %2627 = vmatpush1.msra.mxu0 0.0
    %2628 = vmatprep.subr.mxu0 0.0
    %2629 = vmatpush1.msra.mxu0 0.0
    %2630 = vmatprep.subr.mxu0 0.0
    %2631 = vmatpush1.msra.mxu0 0.0
    %2632 = vmatprep.subr.mxu0 0.0
    %2633 = vmatpush1.msra.mxu0 0.0
    %2634 = vmatprep.subr.mxu0 0.0
    %2635 = vmatpush1.msra.mxu0 0.0
    %2636 = vmatprep.subr.mxu0 0.0
    %2637 = vmatpush1.msra.mxu0 0.0
    %2638 = vmatprep.subr.mxu0 0.0
    %2639 = vmatpush1.msra.mxu0 0.0
    %2640 = vmatprep.subr.mxu0 0.0
    %2641 = vmatpush1.msra.mxu0 0.0
    %2642 = vmatprep.subr.mxu0 0.0
    %2643 = vmatpush1.msra.mxu0 0.0
    %2644 = vmatprep.subr.mxu0 0.0
    %2645 = vmatpush1.msra.mxu0 0.0
    %2646 = vmatprep.subr.mxu0 0.0
    %2647 = vmatpush1.msra.mxu0 0.0
    %2648 = vmatprep.subr.mxu0 0.0
    %2649 = vmatpush1.msra.mxu0 0.0
    %2650 = vmatprep.subr.mxu0 0.0
    %2651 = vmatpush1.msra.mxu0 0.0
    %2652 = vmatprep.subr.mxu0 0.0
    %2653 = vmatpush1.msra.mxu0 0.0
    %2654 = vmatprep.subr.mxu0 0.0
    %2655 = vmatpush1.msra.mxu0 0.0
    %2656 = vmatprep.subr.mxu0 0.0
    %2657 = vmatpush1.msra.mxu0 0.0
    %2658 = vmatprep.subr.mxu0 0.0
    %2659 = vmatpush1.msra.mxu0 0.0
    %2660 = vmatprep.subr.mxu0 0.0
    %2661 = vmatpush1.msra.mxu0 0.0
    %2662 = vmatprep.subr.mxu0 0.0
    %2663 = vmatpush1.msra.mxu0 0.0
    %2664 = vmatprep.subr.mxu0 0.0
    %2665 = vmatpush1.msra.mxu0 0.0
    %2666 = vmatprep.subr.mxu0 0.0
    %2667 = vmatpush1.msra.mxu0 0.0
    %2668 = vmatprep.subr.mxu0 0.0
    %2669 = vmatpush1.msra.mxu0 0.0
    %2670 = vmatprep.subr.mxu0 0.0
    %2671 = vmatpush1.msra.mxu0 0.0
    %2672 = vmatprep.mubr.f32.mxu0 0.0
    %2673 = vmatmul.mubr.f32.gmra.mrb[0].mxu0 %v2603
    %v2674 = vpop.f32.mrb[0].mxu0
    %v2675 = vadd.f32 %v2600, %v2674
    %v2676 = vpop.f32.mrb[0].mxu0
    %2677 = vmatprep.mubr.f32.mxu0 0.0
    %2678 = vmatmul.mubr.f32.gmra.mrb[0].mxu0 %v2606
    %v2679 = vpop.f32.mrb[0].mxu0
    %v2680 = vadd.f32 %v2600, %v2679
    %v2681 = vpop.f32.mrb[0].mxu0
    %2682 = vdwg.mxu0
    %2684 = vrot.lane.b32.xlu0 %v2675, 96
    %v2685 = vpop.permute.xlu0 %2684
    %v2686 = vsel %vm178, %v2675, 0
    %v2688 = vsel %vm178, %v2685, 0
    %2690 = vmatprep.subr.mxu0 0.0
    %2691 = vmatpush1.xpose.msra.mxu0 %v2688
    %2692 = vmatprep.subr.mxu0 0.0
    %2693 = vmatpush1.xpose.msra.mxu0 0.0
    %2694 = vmatprep.subr.mxu0 0.0
    %2695 = vmatpush1.xpose.msra.mxu0 0.0
    %2696 = vmatprep.subr.mxu0 0.0
    %2697 = vmatpush1.xpose.msra.mxu0 0.0
    %2698 = vmatprep.subr.mxu0 0.0
    %2699 = vmatpush1.xpose.msra.mxu0 0.0
    %2700 = vmatprep.subr.mxu0 0.0
    %2701 = vmatpush1.xpose.msra.mxu0 0.0
    %2702 = vmatprep.subr.mxu0 0.0
    %2703 = vmatpush1.xpose.msra.mxu0 0.0
    %2704 = vmatprep.subr.mxu0 0.0
    %2705 = vmatpush1.xpose.msra.mxu0 0.0
    %2706 = vmatprep.subr.mxu0 0.0
    %2707 = vmatpush1.xpose.msra.mxu0 0.0
    %2708 = vmatprep.subr.mxu0 0.0
    %2709 = vmatpush1.xpose.msra.mxu0 0.0
    %2710 = vmatprep.subr.mxu0 0.0
    %2711 = vmatpush1.xpose.msra.mxu0 0.0
    %2712 = vmatprep.subr.mxu0 0.0
    %2713 = vmatpush1.xpose.msra.mxu0 0.0
    %2714 = vmatprep.subr.mxu0 0.0
    %2715 = vmatpush1.xpose.msra.mxu0 0.0
    %2716 = vmatprep.subr.mxu0 0.0
    %2717 = vmatpush1.xpose.msra.mxu0 0.0
    %2718 = vmatprep.subr.mxu0 0.0
    %2719 = vmatpush1.xpose.msra.mxu0 0.0
    %2720 = vmatprep.subr.mxu0 0.0
    %2721 = vmatpush1.xpose.msra.mxu0 0.0
    %2722 = vmatprep.subr.mxu0 0.0
    %2723 = vmatpush1.xpose.msra.mxu0 0.0
    %2724 = vmatprep.subr.mxu0 0.0
    %2725 = vmatpush1.xpose.msra.mxu0 0.0
    %2726 = vmatprep.subr.mxu0 0.0
    %2727 = vmatpush1.xpose.msra.mxu0 0.0
    %2728 = vmatprep.subr.mxu0 0.0
    %2729 = vmatpush1.xpose.msra.mxu0 0.0
    %2730 = vmatprep.subr.mxu0 0.0
    %2731 = vmatpush1.xpose.msra.mxu0 0.0
    %2732 = vmatprep.subr.mxu0 0.0
    %2733 = vmatpush1.xpose.msra.mxu0 0.0
    %2734 = vmatprep.subr.mxu0 0.0
    %2735 = vmatpush1.xpose.msra.mxu0 0.0
    %2736 = vmatprep.subr.mxu0 0.0
    %2737 = vmatpush1.xpose.msra.mxu0 0.0
    %2738 = vmatprep.subr.mxu0 0.0
    %2739 = vmatpush1.xpose.msra.mxu0 0.0
    %2740 = vmatprep.subr.mxu0 0.0
    %2741 = vmatpush1.xpose.msra.mxu0 0.0
    %2742 = vmatprep.subr.mxu0 0.0
    %2743 = vmatpush1.xpose.msra.mxu0 0.0
    %2744 = vmatprep.subr.mxu0 0.0
    %2745 = vmatpush1.xpose.msra.mxu0 0.0
    %2746 = vmatprep.subr.mxu0 0.0
    %2747 = vmatpush1.xpose.msra.mxu0 0.0
    %2748 = vmatprep.subr.mxu0 0.0
    %2749 = vmatpush1.xpose.msra.mxu0 0.0
    %2750 = vmatprep.subr.mxu0 0.0
    %2751 = vmatpush1.xpose.msra.mxu0 0.0
    %2752 = vmatprep.subr.mxu0 0.0
    %2753 = vmatpush1.xpose.msra.mxu0 0.0
    %2754 = vmatprep.mubr.f32.mxu0 0.0
    %2755 = vmatmul.mubr.f32.gmra.mrb[0].mxu0 %v2686
    %v2756 = vpop.f32.mrb[0].mxu0
    %v2757 = vadd.f32 %v265, %v2756
    %v2758 = vpop.f32.mrb[0].mxu0
    %2759 = vdwg.mxu0
    %2761 = vrot.lane.b32.xlu0 %v2680, 96
    %v2762 = vpop.permute.xlu0 %2761
    %v2763 = vsel %vm178, %v2680, 0
    %v2765 = vsel %vm178, %v2762, 0
    %2767 = vmatprep.subr.mxu0 0.0
    %2768 = vmatpush1.xpose.msra.mxu0 %v2765
    %2769 = vmatprep.subr.mxu0 0.0
    %2770 = vmatpush1.xpose.msra.mxu0 0.0
    %2771 = vmatprep.subr.mxu0 0.0
    %2772 = vmatpush1.xpose.msra.mxu0 0.0
    %2773 = vmatprep.subr.mxu0 0.0
    %2774 = vmatpush1.xpose.msra.mxu0 0.0
    %2775 = vmatprep.subr.mxu0 0.0
    %2776 = vmatpush1.xpose.msra.mxu0 0.0
    %2777 = vmatprep.subr.mxu0 0.0
    %2778 = vmatpush1.xpose.msra.mxu0 0.0
    %2779 = vmatprep.subr.mxu0 0.0
    %2780 = vmatpush1.xpose.msra.mxu0 0.0
    %2781 = vmatprep.subr.mxu0 0.0
    %2782 = vmatpush1.xpose.msra.mxu0 0.0
    %2783 = vmatprep.subr.mxu0 0.0
    %2784 = vmatpush1.xpose.msra.mxu0 0.0
    %2785 = vmatprep.subr.mxu0 0.0
    %2786 = vmatpush1.xpose.msra.mxu0 0.0
    %2787 = vmatprep.subr.mxu0 0.0
    %2788 = vmatpush1.xpose.msra.mxu0 0.0
    %2789 = vmatprep.subr.mxu0 0.0
    %2790 = vmatpush1.xpose.msra.mxu0 0.0
    %2791 = vmatprep.subr.mxu0 0.0
    %2792 = vmatpush1.xpose.msra.mxu0 0.0
    %2793 = vmatprep.subr.mxu0 0.0
    %2794 = vmatpush1.xpose.msra.mxu0 0.0
    %2795 = vmatprep.subr.mxu0 0.0
    %2796 = vmatpush1.xpose.msra.mxu0 0.0
    %2797 = vmatprep.subr.mxu0 0.0
    %2798 = vmatpush1.xpose.msra.mxu0 0.0
    %2799 = vmatprep.subr.mxu0 0.0
    %2800 = vmatpush1.xpose.msra.mxu0 0.0
    %2801 = vmatprep.subr.mxu0 0.0
    %2802 = vmatpush1.xpose.msra.mxu0 0.0
    %2803 = vmatprep.subr.mxu0 0.0
    %2804 = vmatpush1.xpose.msra.mxu0 0.0
    %2805 = vmatprep.subr.mxu0 0.0
    %2806 = vmatpush1.xpose.msra.mxu0 0.0
    %2807 = vmatprep.subr.mxu0 0.0
    %2808 = vmatpush1.xpose.msra.mxu0 0.0
    %2809 = vmatprep.subr.mxu0 0.0
    %2810 = vmatpush1.xpose.msra.mxu0 0.0
    %2811 = vmatprep.subr.mxu0 0.0
    %2812 = vmatpush1.xpose.msra.mxu0 0.0
    %2813 = vmatprep.subr.mxu0 0.0
    %2814 = vmatpush1.xpose.msra.mxu0 0.0
    %2815 = vmatprep.subr.mxu0 0.0
    %2816 = vmatpush1.xpose.msra.mxu0 0.0
    %2817 = vmatprep.subr.mxu0 0.0
    %2818 = vmatpush1.xpose.msra.mxu0 0.0
    %2819 = vmatprep.subr.mxu0 0.0
    %2820 = vmatpush1.xpose.msra.mxu0 0.0
    %2821 = vmatprep.subr.mxu0 0.0
    %2822 = vmatpush1.xpose.msra.mxu0 0.0
    %2823 = vmatprep.subr.mxu0 0.0
    %2824 = vmatpush1.xpose.msra.mxu0 0.0
    %2825 = vmatprep.subr.mxu0 0.0
    %2826 = vmatpush1.xpose.msra.mxu0 0.0
    %2827 = vmatprep.subr.mxu0 0.0
    %2828 = vmatpush1.xpose.msra.mxu0 0.0
    %2829 = vmatprep.subr.mxu0 0.0
    %2830 = vmatpush1.xpose.msra.mxu0 0.0
    %2831 = vmatprep.mubr.f32.mxu0 0.0
    %2832 = vmatmul.mubr.f32.gmra.mrb[0].mxu0 %v2763
    %v2833 = vpop.f32.mrb[0].mxu0
    %v2834 = vadd.f32 %v269, %v2833
    %v2835 = vpop.f32.mrb[0].mxu0
    %2836 = vdwg.mxu0
    %v2837 = vsel %vm426, %v2757, -inf
    %2838 = vmax.xlane.f32.xlu0 %v2837
    %v2839 = vpop.xlane.xlu0 %2838
    %v2840 = vsel %vm426, %v2834, -inf
    %2841 = vmax.xlane.f32.xlu0 %v2840
    %v2842 = vpop.xlane.xlu0 %2841
    %v2843 = vsub.f32 %v2757, %v2839
    %v2844 = vsub.f32 %v2834, %v2842
    %v2845 = vmul.f32 %v2843, 1.442695
    %v2846 = vpow.pop %v2845
    %v2847 = vmul.f32 %v2844, 1.442695
    %v2848 = vpow.pop %v2847
    %v2849 = vsel %vm426, %v2846, 0.0
    %2850 = vadd.xlane.f32.xlu0 %v2849
    %v2851 = vpop.xlane.xlu0 %2850
    %v2852 = vsel %vm426, %v2848, 0.0
    %2853 = vadd.xlane.f32.xlu0 %v2852
    %v2854 = vpop.xlane.xlu0 %2853
    %v2855 = vrcp.pop %v2851
    %v2856 = vrcp.pop %v2854
    %v2857 = vmul.f32 %v2846, %v2855
    %v2858 = vmul.f32 %v2848, %v2856
    %2859 = vrot.lane.b32.xlu0 %v2675, 64
    %v2860 = vpop.permute.xlu0 %2859
    %v2863 = vsel %vm426, %v2857, 0
    %2865 = vmatprep.subr.mxu0 0.0
    %2866 = vmatpush1.msra.mxu0 %v2860
    %2867 = vmatprep.subr.mxu0 0.0
    %2868 = vmatpush1.msra.mxu0 0.0
    %2869 = vmatprep.subr.mxu0 0.0
    %2870 = vmatpush1.msra.mxu0 0.0
    %2871 = vmatprep.subr.mxu0 0.0
    %2872 = vmatpush1.msra.mxu0 0.0
    %2873 = vmatprep.subr.mxu0 0.0
    %2874 = vmatpush1.msra.mxu0 0.0
    %2875 = vmatprep.subr.mxu0 0.0
    %2876 = vmatpush1.msra.mxu0 0.0
    %2877 = vmatprep.subr.mxu0 0.0
    %2878 = vmatpush1.msra.mxu0 0.0
    %2879 = vmatprep.subr.mxu0 0.0
    %2880 = vmatpush1.msra.mxu0 0.0
    %2881 = vmatprep.subr.mxu0 0.0
    %2882 = vmatpush1.msra.mxu0 0.0
    %2883 = vmatprep.subr.mxu0 0.0
    %2884 = vmatpush1.msra.mxu0 0.0
    %2885 = vmatprep.subr.mxu0 0.0
    %2886 = vmatpush1.msra.mxu0 0.0
    %2887 = vmatprep.subr.mxu0 0.0
    %2888 = vmatpush1.msra.mxu0 0.0
    %2889 = vmatprep.subr.mxu0 0.0
    %2890 = vmatpush1.msra.mxu0 0.0
    %2891 = vmatprep.subr.mxu0 0.0
    %2892 = vmatpush1.msra.mxu0 0.0
    %2893 = vmatprep.subr.mxu0 0.0
    %2894 = vmatpush1.msra.mxu0 0.0
    %2895 = vmatprep.subr.mxu0 0.0
    %2896 = vmatpush1.msra.mxu0 0.0
    %2897 = vmatprep.subr.mxu0 0.0
    %2898 = vmatpush1.msra.mxu0 0.0
    %2899 = vmatprep.subr.mxu0 0.0
    %2900 = vmatpush1.msra.mxu0 0.0
    %2901 = vmatprep.subr.mxu0 0.0
    %2902 = vmatpush1.msra.mxu0 0.0
    %2903 = vmatprep.subr.mxu0 0.0
    %2904 = vmatpush1.msra.mxu0 0.0
    %2905 = vmatprep.subr.mxu0 0.0
    %2906 = vmatpush1.msra.mxu0 0.0
    %2907 = vmatprep.subr.mxu0 0.0
    %2908 = vmatpush1.msra.mxu0 0.0
    %2909 = vmatprep.subr.mxu0 0.0
    %2910 = vmatpush1.msra.mxu0 0.0
    %2911 = vmatprep.subr.mxu0 0.0
    %2912 = vmatpush1.msra.mxu0 0.0
    %2913 = vmatprep.subr.mxu0 0.0
    %2914 = vmatpush1.msra.mxu0 0.0
    %2915 = vmatprep.subr.mxu0 0.0
    %2916 = vmatpush1.msra.mxu0 0.0
    %2917 = vmatprep.subr.mxu0 0.0
    %2918 = vmatpush1.msra.mxu0 0.0
    %2919 = vmatprep.subr.mxu0 0.0
    %2920 = vmatpush1.msra.mxu0 0.0
    %2921 = vmatprep.subr.mxu0 0.0
    %2922 = vmatpush1.msra.mxu0 0.0
    %2923 = vmatprep.subr.mxu0 0.0
    %2924 = vmatpush1.msra.mxu0 0.0
    %2925 = vmatprep.subr.mxu0 0.0
    %2926 = vmatpush1.msra.mxu0 0.0
    %2927 = vmatprep.subr.mxu0 0.0
    %2928 = vmatpush1.msra.mxu0 0.0
    %2929 = vmatprep.mubr.f32.mxu0 0.0
    %2930 = vmatmul.mubr.f32.gmra.mrb[0].mxu0 %v2863
    %v2931 = vpop.f32.mrb[0].mxu0
    %v2932 = vadd.f32 0.0, %v2931
    %v2933 = vpop.f32.mrb[0].mxu0
    %2934 = vdwg.mxu0
    %2935 = vrot.lane.b32.xlu0 %v2680, 64
    %v2936 = vpop.permute.xlu0 %2935
    %v2939 = vsel %vm426, %v2858, 0
    %2941 = vmatprep.subr.mxu0 0.0
    %2942 = vmatpush1.msra.mxu0 %v2936
    %2943 = vmatprep.subr.mxu0 0.0
    %2944 = vmatpush1.msra.mxu0 0.0
    %2945 = vmatprep.subr.mxu0 0.0
    %2946 = vmatpush1.msra.mxu0 0.0
    %2947 = vmatprep.subr.mxu0 0.0
    %2948 = vmatpush1.msra.mxu0 0.0
    %2949 = vmatprep.subr.mxu0 0.0
    %2950 = vmatpush1.msra.mxu0 0.0
    %2951 = vmatprep.subr.mxu0 0.0
    %2952 = vmatpush1.msra.mxu0 0.0
    %2953 = vmatprep.subr.mxu0 0.0
    %2954 = vmatpush1.msra.mxu0 0.0
    %2955 = vmatprep.subr.mxu0 0.0
    %2956 = vmatpush1.msra.mxu0 0.0
    %2957 = vmatprep.subr.mxu0 0.0
    %2958 = vmatpush1.msra.mxu0 0.0
    %2959 = vmatprep.subr.mxu0 0.0
    %2960 = vmatpush1.msra.mxu0 0.0
    %2961 = vmatprep.subr.mxu0 0.0
    %2962 = vmatpush1.msra.mxu0 0.0
    %2963 = vmatprep.subr.mxu0 0.0
    %2964 = vmatpush1.msra.mxu0 0.0
    %2965 = vmatprep.subr.mxu0 0.0
    %2966 = vmatpush1.msra.mxu0 0.0
    %2967 = vmatprep.subr.mxu0 0.0
    %2968 = vmatpush1.msra.mxu0 0.0
    %2969 = vmatprep.subr.mxu0 0.0
    %2970 = vmatpush1.msra.mxu0 0.0
    %2971 = vmatprep.subr.mxu0 0.0
    %2972 = vmatpush1.msra.mxu0 0.0
    %2973 = vmatprep.subr.mxu0 0.0
    %2974 = vmatpush1.msra.mxu0 0.0
    %2975 = vmatprep.subr.mxu0 0.0
    %2976 = vmatpush1.msra.mxu0 0.0
    %2977 = vmatprep.subr.mxu0 0.0
    %2978 = vmatpush1.msra.mxu0 0.0
    %2979 = vmatprep.subr.mxu0 0.0
    %2980 = vmatpush1.msra.mxu0 0.0
    %2981 = vmatprep.subr.mxu0 0.0
    %2982 = vmatpush1.msra.mxu0 0.0
    %2983 = vmatprep.subr.mxu0 0.0
    %2984 = vmatpush1.msra.mxu0 0.0
    %2985 = vmatprep.subr.mxu0 0.0
    %2986 = vmatpush1.msra.mxu0 0.0
    %2987 = vmatprep.subr.mxu0 0.0
    %2988 = vmatpush1.msra.mxu0 0.0
    %2989 = vmatprep.subr.mxu0 0.0
    %2990 = vmatpush1.msra.mxu0 0.0
    %2991 = vmatprep.subr.mxu0 0.0
    %2992 = vmatpush1.msra.mxu0 0.0
    %2993 = vmatprep.subr.mxu0 0.0
    %2994 = vmatpush1.msra.mxu0 0.0
    %2995 = vmatprep.subr.mxu0 0.0
    %2996 = vmatpush1.msra.mxu0 0.0
    %2997 = vmatprep.subr.mxu0 0.0
    %2998 = vmatpush1.msra.mxu0 0.0
    %2999 = vmatprep.subr.mxu0 0.0
    %3000 = vmatpush1.msra.mxu0 0.0
    %3001 = vmatprep.subr.mxu0 0.0
    %3002 = vmatpush1.msra.mxu0 0.0
    %3003 = vmatprep.subr.mxu0 0.0
    %3004 = vmatpush1.msra.mxu0 0.0
    %3005 = vmatprep.mubr.f32.mxu0 0.0
    %3006 = vmatmul.mubr.f32.gmra.mrb[0].mxu0 %v2939
    %v3007 = vpop.f32.mrb[0].mxu0
    %v3008 = vadd.f32 0.0, %v3007
    %v3009 = vpop.f32.mrb[0].mxu0
    %3010 = vdwg.mxu0
    %s3011 = scalar_lea.vmem %s4, 96
    %v3012 = vld [vmem:[%s3011] sm:$0xff]
    %v3013 = vld [vmem:[%s3011 + $0x8] sm:$0xff]
    %v3014 = vld [vmem:[%s3011 + $0x10] sm:$0xff]
    %v3015 = vld [vmem:[%s3011 + $0x18] sm:$0xff]
    %s3016 = scalar_lea.vmem [#allocation8], 3
    %v3017 = vld [vmem:[%s3016] sm:$0x1]
    %v3019 = vlaneseq
    %v3020 = vshrl.u32 %v3019, 7
    %v3021 = vsub.s32 0, %v3020
    %v3022 = vrot.slane %v3017, %v3021
    %v3025 = vsel %vm178, %v2932, 0
    %v3028 = vsel %vm178, %v3008, 0
    %3030 = vmatprep.subr.mxu0 0.0
    %3031 = vmatpush1.msra.mxu0 %v3012
    %3032 = vmatprep.subr.mxu0 0.0
    %3033 = vmatpush1.msra.mxu0 %v3013
    %3034 = vmatprep.subr.mxu0 0.0
    %3035 = vmatpush1.msra.mxu0 %v3014
    %3036 = vmatprep.subr.mxu0 0.0
    %3037 = vmatpush1.msra.mxu0 %v3015
    %3038 = vmatprep.subr.mxu0 0.0
    %3039 = vmatpush1.msra.mxu0 0.0
    %3040 = vmatprep.subr.mxu0 0.0
    %3041 = vmatpush1.msra.mxu0 0.0
    %3042 = vmatprep.subr.mxu0 0.0
    %3043 = vmatpush1.msra.mxu0 0.0
    %3044 = vmatprep.subr.mxu0 0.0
    %3045 = vmatpush1.msra.mxu0 0.0
    %3046 = vmatprep.subr.mxu0 0.0
    %3047 = vmatpush1.msra.mxu0 0.0
    %3048 = vmatprep.subr.mxu0 0.0
    %3049 = vmatpush1.msra.mxu0 0.0
    %3050 = vmatprep.subr.mxu0 0.0
    %3051 = vmatpush1.msra.mxu0 0.0
    %3052 = vmatprep.subr.mxu0 0.0
    %3053 = vmatpush1.msra.mxu0 0.0
    %3054 = vmatprep.subr.mxu0 0.0
    %3055 = vmatpush1.msra.mxu0 0.0
    %3056 = vmatprep.subr.mxu0 0.0
    %3057 = vmatpush1.msra.mxu0 0.0
    %3058 = vmatprep.subr.mxu0 0.0
    %3059 = vmatpush1.msra.mxu0 0.0
    %3060 = vmatprep.subr.mxu0 0.0
    %3061 = vmatpush1.msra.mxu0 0.0
    %3062 = vmatprep.subr.mxu0 0.0
    %3063 = vmatpush1.msra.mxu0 0.0
    %3064 = vmatprep.subr.mxu0 0.0
    %3065 = vmatpush1.msra.mxu0 0.0
    %3066 = vmatprep.subr.mxu0 0.0
    %3067 = vmatpush1.msra.mxu0 0.0
    %3068 = vmatprep.subr.mxu0 0.0
    %3069 = vmatpush1.msra.mxu0 0.0
    %3070 = vmatprep.subr.mxu0 0.0
    %3071 = vmatpush1.msra.mxu0 0.0
    %3072 = vmatprep.subr.mxu0 0.0
    %3073 = vmatpush1.msra.mxu0 0.0
    %3074 = vmatprep.subr.mxu0 0.0
    %3075 = vmatpush1.msra.mxu0 0.0
    %3076 = vmatprep.subr.mxu0 0.0
    %3077 = vmatpush1.msra.mxu0 0.0
    %3078 = vmatprep.subr.mxu0 0.0
    %3079 = vmatpush1.msra.mxu0 0.0
    %3080 = vmatprep.subr.mxu0 0.0
    %3081 = vmatpush1.msra.mxu0 0.0
    %3082 = vmatprep.subr.mxu0 0.0
    %3083 = vmatpush1.msra.mxu0 0.0
    %3084 = vmatprep.subr.mxu0 0.0
    %3085 = vmatpush1.msra.mxu0 0.0
    %3086 = vmatprep.subr.mxu0 0.0
    %3087 = vmatpush1.msra.mxu0 0.0
    %3088 = vmatprep.subr.mxu0 0.0
    %3089 = vmatpush1.msra.mxu0 0.0
    %3090 = vmatprep.subr.mxu0 0.0
    %3091 = vmatpush1.msra.mxu0 0.0
    %3092 = vmatprep.subr.mxu0 0.0
    %3093 = vmatpush1.msra.mxu0 0.0
    %3094 = vmatprep.mubr.f32.mxu0 0.0
    %3095 = vmatmul.mubr.f32.gmra.mrb[0].mxu0 %v3025
    %v3096 = vpop.f32.mrb[0].mxu0
    %v3097 = vadd.f32 %v3022, %v3096
    %v3098 = vpop.f32.mrb[0].mxu0
    %3099 = vmatprep.mubr.f32.mxu0 0.0
    %3100 = vmatmul.mubr.f32.gmra.mrb[0].mxu0 %v3028
    %v3101 = vpop.f32.mrb[0].mxu0
    %v3102 = vadd.f32 %v3022, %v3101
    %v3103 = vpop.f32.mrb[0].mxu0
    %3104 = vdwg.mxu0
    %v3105 = vadd.f32 %v2587, %v3097
    %v3106 = vadd.f32 %v2588, %v3102
    %v3107 = vsel %vm178, %v3105, 0.0
    %3108 = vadd.xlane.f32.xlu0 %v3107
    %v3109 = vpop.xlane.xlu0 %3108
    %v3110 = vsel %vm178, %v3106, 0.0
    %3111 = vadd.xlane.f32.xlu0 %v3110
    %v3112 = vpop.xlane.xlu0 %3111
    %v3113 = vmul.f32 %v3109, %v701
    %v3114 = vmul.f32 %v3112, %v701
    %v3115 = vsub.f32 %v3105, %v3113
    %v3116 = vsub.f32 %v3106, %v3114
    %v3117 = vmul.f32 %v3115, %v3115
    %v3118 = vmul.f32 %v3116, %v3116
    %v3119 = vsel %vm178, %v3117, 0.0
    %3120 = vadd.xlane.f32.xlu0 %v3119
    %v3121 = vpop.xlane.xlu0 %3120
    %v3122 = vsel %vm178, %v3118, 0.0
    %3123 = vadd.xlane.f32.xlu0 %v3122
    %v3124 = vpop.xlane.xlu0 %3123
    %v3125 = vmul.f32 %v3121, %v701
    %v3126 = vmul.f32 %v3124, %v701
    %v3127 = vadd.f32 %v3125, 1e-05
    %v3128 = vadd.f32 %v3126, 1e-05
    %v3129 = vrsqrt.pop %v3127
    %v3130 = vrsqrt.pop %v3128
    %v3131 = vmul.f32 %v3115, %v3129
    %v3132 = vmul.f32 %v3116, %v3130
    %s3133 = scalar_lea.vmem [#allocation10], 3
    %v3134 = vld [vmem:[%s3133] sm:$0x1]
    %v3136 = vlaneseq
    %v3137 = vshrl.u32 %v3136, 7
    %v3138 = vsub.s32 0, %v3137
    %v3139 = vrot.slane %v3134, %v3138
    %v3141 = vmul.f32 %v3131, %v3139
    %v3142 = vmul.f32 %v3132, %v3139
    %s3143 = scalar_lea.vmem [#allocation11], 3
    %v3144 = vld [vmem:[%s3143] sm:$0x1]
    %v3146 = vlaneseq
    %v3147 = vshrl.u32 %v3146, 7
    %v3148 = vsub.s32 0, %v3147
    %v3149 = vrot.slane %v3144, %v3148
    %v3151 = vadd.f32 %v3141, %v3149
    %v3152 = vadd.f32 %v3142, %v3149
    %s3153 = scalar_lea.vmem %s8, 96
    %v3154 = vld [vmem:[%s3153] sm:$0xff]
    %v3155 = vld [vmem:[%s3153 + $0x8] sm:$0xff]
    %v3156 = vld [vmem:[%s3153 + $0x10] sm:$0xff]
    %v3157 = vld [vmem:[%s3153 + $0x18] sm:$0xff]
    %s3158 = scalar_lea.vmem [#allocation13], 3
    %v3159 = vld [vmem:[%s3158] sm:$0x1]
    %v3161 = vlaneseq
    %v3162 = vshrl.u32 %v3161, 7
    %v3163 = vsub.s32 0, %v3162
    %v3164 = vrot.slane %v3159, %v3163
    %v3167 = vsel %vm178, %v3151, 0
    %v3170 = vsel %vm178, %v3152, 0
    %3172 = vmatprep.subr.mxu0 0.0
    %3173 = vmatpush1.msra.mxu0 %v3154
    %3174 = vmatprep.subr.mxu0 0.0
    %3175 = vmatpush1.msra.mxu0 %v3155
    %3176 = vmatprep.subr.mxu0 0.0
    %3177 = vmatpush1.msra.mxu0 %v3156
    %3178 = vmatprep.subr.mxu0 0.0
    %3179 = vmatpush1.msra.mxu0 %v3157
    %3180 = vmatprep.subr.mxu0 0.0
    %3181 = vmatpush1.msra.mxu0 0.0
    %3182 = vmatprep.subr.mxu0 0.0
    %3183 = vmatpush1.msra.mxu0 0.0
    %3184 = vmatprep.subr.mxu0 0.0
    %3185 = vmatpush1.msra.mxu0 0.0
    %3186 = vmatprep.subr.mxu0 0.0
    %3187 = vmatpush1.msra.mxu0 0.0
    %3188 = vmatprep.subr.mxu0 0.0
    %3189 = vmatpush1.msra.mxu0 0.0
    %3190 = vmatprep.subr.mxu0 0.0
    %3191 = vmatpush1.msra.mxu0 0.0
    %3192 = vmatprep.subr.mxu0 0.0
    %3193 = vmatpush1.msra.mxu0 0.0
    %3194 = vmatprep.subr.mxu0 0.0
    %3195 = vmatpush1.msra.mxu0 0.0
    %3196 = vmatprep.subr.mxu0 0.0
    %3197 = vmatpush1.msra.mxu0 0.0
    %3198 = vmatprep.subr.mxu0 0.0
    %3199 = vmatpush1.msra.mxu0 0.0
    %3200 = vmatprep.subr.mxu0 0.0
    %3201 = vmatpush1.msra.mxu0 0.0
    %3202 = vmatprep.subr.mxu0 0.0
    %3203 = vmatpush1.msra.mxu0 0.0
    %3204 = vmatprep.subr.mxu0 0.0
    %3205 = vmatpush1.msra.mxu0 0.0
    %3206 = vmatprep.subr.mxu0 0.0
    %3207 = vmatpush1.msra.mxu0 0.0
    %3208 = vmatprep.subr.mxu0 0.0
    %3209 = vmatpush1.msra.mxu0 0.0
    %3210 = vmatprep.subr.mxu0 0.0
    %3211 = vmatpush1.msra.mxu0 0.0
    %3212 = vmatprep.subr.mxu0 0.0
    %3213 = vmatpush1.msra.mxu0 0.0
    %3214 = vmatprep.subr.mxu0 0.0
    %3215 = vmatpush1.msra.mxu0 0.0
    %3216 = vmatprep.subr.mxu0 0.0
    %3217 = vmatpush1.msra.mxu0 0.0
    %3218 = vmatprep.subr.mxu0 0.0
    %3219 = vmatpush1.msra.mxu0 0.0
    %3220 = vmatprep.subr.mxu0 0.0
    %3221 = vmatpush1.msra.mxu0 0.0
    %3222 = vmatprep.subr.mxu0 0.0
    %3223 = vmatpush1.msra.mxu0 0.0
    %3224 = vmatprep.subr.mxu0 0.0
    %3225 = vmatpush1.msra.mxu0 0.0
    %3226 = vmatprep.subr.mxu0 0.0
    %3227 = vmatpush1.msra.mxu0 0.0
    %3228 = vmatprep.subr.mxu0 0.0
    %3229 = vmatpush1.msra.mxu0 0.0
    %3230 = vmatprep.subr.mxu0 0.0
    %3231 = vmatpush1.msra.mxu0 0.0
    %3232 = vmatprep.subr.mxu0 0.0
    %3233 = vmatpush1.msra.mxu0 0.0
    %3234 = vmatprep.subr.mxu0 0.0
    %3235 = vmatpush1.msra.mxu0 0.0
    %3236 = vmatprep.mubr.f32.mxu0 0.0
    %3237 = vmatmul.mubr.f32.gmra.mrb[0].mxu0 %v3167
    %v3238 = vpop.f32.mrb[0].mxu0
    %v3239 = vadd.f32 %v3164, %v3238
    %v3240 = vpop.f32.mrb[0].mxu0
    %3241 = vmatprep.mubr.f32.mxu0 0.0
    %3242 = vmatmul.mubr.f32.gmra.mrb[0].mxu0 %v3170
    %v3243 = vpop.f32.mrb[0].mxu0
    %v3244 = vadd.f32 %v3164, %v3243
    %v3245 = vpop.f32.mrb[0].mxu0
    %3246 = vdwg.mxu0
    %v3247 = vmax.f32 %v3239, 0.0
    %v3248 = vmax.f32 %v3244, 0.0
    %s3249 = scalar_lea.vmem %s10, 192
    %v3250 = vld [vmem:[%s3249] sm:$0xff]
    %v3251 = vld [vmem:[%s3249 + $0x8] sm:$0xff]
    %v3252 = vld [vmem:[%s3249 + $0x10] sm:$0xff]
    %v3253 = vld [vmem:[%s3249 + $0x18] sm:$0xff]
    %v3254 = vld [vmem:[%s3249 + $0x20] sm:$0xff]
    %v3255 = vld [vmem:[%s3249 + $0x28] sm:$0xff]
    %v3256 = vld [vmem:[%s3249 + $0x30] sm:$0xff]
    %v3257 = vld [vmem:[%s3249 + $0x38] sm:$0xff]
    %s3258 = scalar_lea.vmem [#allocation14], 3
    %v3259 = vld [vmem:[%s3258] sm:$0x1]
    %v3261 = vlaneseq
    %v3262 = vshrl.u32 %v3261, 7
    %v3263 = vsub.s32 0, %v3262
    %v3264 = vrot.slane %v3259, %v3263
    %v3267 = vsel %vm849, %v3247, 0
    %v3270 = vsel %vm849, %v3248, 0
    %3272 = vmatprep.subr.mxu0 0.0
    %3273 = vmatpush1.msra.mxu0 %v3250
    %3274 = vmatprep.subr.mxu0 0.0
    %3275 = vmatpush1.msra.mxu0 %v3251
    %3276 = vmatprep.subr.mxu0 0.0
    %3277 = vmatpush1.msra.mxu0 %v3252
    %3278 = vmatprep.subr.mxu0 0.0
    %3279 = vmatpush1.msra.mxu0 %v3253
    %3280 = vmatprep.subr.mxu0 0.0
    %3281 = vmatpush1.msra.mxu0 %v3254
    %3282 = vmatprep.subr.mxu0 0.0
    %3283 = vmatpush1.msra.mxu0 %v3255
    %3284 = vmatprep.subr.mxu0 0.0
    %3285 = vmatpush1.msra.mxu0 %v3256
    %3286 = vmatprep.subr.mxu0 0.0
    %3287 = vmatpush1.msra.mxu0 %v3257
    %3288 = vmatprep.subr.mxu0 0.0
    %3289 = vmatpush1.msra.mxu0 0.0
    %3290 = vmatprep.subr.mxu0 0.0
    %3291 = vmatpush1.msra.mxu0 0.0
    %3292 = vmatprep.subr.mxu0 0.0
    %3293 = vmatpush1.msra.mxu0 0.0
    %3294 = vmatprep.subr.mxu0 0.0
    %3295 = vmatpush1.msra.mxu0 0.0
    %3296 = vmatprep.subr.mxu0 0.0
    %3297 = vmatpush1.msra.mxu0 0.0
    %3298 = vmatprep.subr.mxu0 0.0
    %3299 = vmatpush1.msra.mxu0 0.0
    %3300 = vmatprep.subr.mxu0 0.0
    %3301 = vmatpush1.msra.mxu0 0.0
    %3302 = vmatprep.subr.mxu0 0.0
    %3303 = vmatpush1.msra.mxu0 0.0
    %3304 = vmatprep.subr.mxu0 0.0
    %3305 = vmatpush1.msra.mxu0 0.0
    %3306 = vmatprep.subr.mxu0 0.0
    %3307 = vmatpush1.msra.mxu0 0.0
    %3308 = vmatprep.subr.mxu0 0.0
    %3309 = vmatpush1.msra.mxu0 0.0
    %3310 = vmatprep.subr.mxu0 0.0
    %3311 = vmatpush1.msra.mxu0 0.0
    %3312 = vmatprep.subr.mxu0 0.0
    %3313 = vmatpush1.msra.mxu0 0.0
    %3314 = vmatprep.subr.mxu0 0.0
    %3315 = vmatpush1.msra.mxu0 0.0
    %3316 = vmatprep.subr.mxu0 0.0
    %3317 = vmatpush1.msra.mxu0 0.0
    %3318 = vmatprep.subr.mxu0 0.0
    %3319 = vmatpush1.msra.mxu0 0.0
    %3320 = vmatprep.subr.mxu0 0.0
    %3321 = vmatpush1.msra.mxu0 0.0
    %3322 = vmatprep.subr.mxu0 0.0
    %3323 = vmatpush1.msra.mxu0 0.0
    %3324 = vmatprep.subr.mxu0 0.0
    %3325 = vmatpush1.msra.mxu0 0.0
    %3326 = vmatprep.subr.mxu0 0.0
    %3327 = vmatpush1.msra.mxu0 0.0
    %3328 = vmatprep.subr.mxu0 0.0
    %3329 = vmatpush1.msra.mxu0 0.0
    %3330 = vmatprep.subr.mxu0 0.0
    %3331 = vmatpush1.msra.mxu0 0.0
    %3332 = vmatprep.subr.mxu0 0.0
    %3333 = vmatpush1.msra.mxu0 0.0
    %3334 = vmatprep.subr.mxu0 0.0
    %3335 = vmatpush1.msra.mxu0 0.0
    %3336 = vmatprep.mubr.f32.mxu0 0.0
    %3337 = vmatmul.mubr.f32.gmra.mrb[0].mxu0 %v3267
    %v3338 = vpop.f32.mrb[0].mxu0
    %v3339 = vadd.f32 %v3264, %v3338
    %v3340 = vpop.f32.mrb[0].mxu0
    %3341 = vmatprep.mubr.f32.mxu0 0.0
    %3342 = vmatmul.mubr.f32.gmra.mrb[0].mxu0 %v3270
    %v3343 = vpop.f32.mrb[0].mxu0
    %v3344 = vadd.f32 %v3264, %v3343
    %v3345 = vpop.f32.mrb[0].mxu0
    %3346 = vdwg.mxu0
    %v3347 = vadd.f32 %v3151, %v3339
    %v3348 = vadd.f32 %v3152, %v3344
    %v3349 = vsel %vm178, %v3347, 0.0
    %3350 = vadd.xlane.f32.xlu0 %v3349
    %v3351 = vpop.xlane.xlu0 %3350
    %v3352 = vsel %vm178, %v3348, 0.0
    %3353 = vadd.xlane.f32.xlu0 %v3352
    %v3354 = vpop.xlane.xlu0 %3353
    %v3355 = vmul.f32 %v3351, %v701
    %v3356 = vmul.f32 %v3354, %v701
    %v3357 = vsub.f32 %v3347, %v3355
    %v3358 = vsub.f32 %v3348, %v3356
    %v3359 = vmul.f32 %v3357, %v3357
    %v3360 = vmul.f32 %v3358, %v3358
    %v3361 = vsel %vm178, %v3359, 0.0
    %3362 = vadd.xlane.f32.xlu0 %v3361
    %v3363 = vpop.xlane.xlu0 %3362
    %v3364 = vsel %vm178, %v3360, 0.0
    %3365 = vadd.xlane.f32.xlu0 %v3364
    %v3366 = vpop.xlane.xlu0 %3365
    %v3367 = vmul.f32 %v3363, %v701
    %v3368 = vmul.f32 %v3366, %v701
    %v3369 = vadd.f32 %v3367, 1e-05
    %v3370 = vadd.f32 %v3368, 1e-05
    %v3371 = vrsqrt.pop %v3369
    %v3372 = vrsqrt.pop %v3370
    %v3373 = vmul.f32 %v3357, %v3371
    %v3374 = vmul.f32 %v3358, %v3372
    %s3375 = scalar_lea.vmem %s12, 3
    %v3376 = vld [vmem:[%s3375] sm:$0x1]
    %v3378 = vlaneseq
    %v3379 = vshrl.u32 %v3378, 7
    %v3380 = vsub.s32 0, %v3379
    %v3381 = vrot.slane %v3376, %v3380
    %v3383 = vmul.f32 %v3373, %v3381
    %v3384 = vmul.f32 %v3374, %v3381
    %s3385 = scalar_lea.vmem %s13, 3
    %v3386 = vld [vmem:[%s3385] sm:$0x1]
    %v3388 = vlaneseq
    %v3389 = vshrl.u32 %v3388, 7
    %v3390 = vsub.s32 0, %v3389
    %v3391 = vrot.slane %v3386, %v3390
    %v3393 = vadd.f32 %v3383, %v3391
    %v3394 = vadd.f32 %v3384, %v3391
    %s3395 = scalar_lea.vmem %s2, 128
    %v3396 = vld [vmem:[%s3395] sm:$0xff]
    %v3397 = vld [vmem:[%s3395 + $0x8] sm:$0xff]
    %v3398 = vld [vmem:[%s3395 + $0x10] sm:$0xff]
    %v3399 = vld [vmem:[%s3395 + $0x18] sm:$0xff]
    %s3400 = scalar_lea.vmem [#allocation7], 4
    %v3401 = vld [vmem:[%s3400] sm:$0x1]
    %v3403 = vlaneseq
    %v3404 = vshrl.u32 %v3403, 7
    %v3405 = vsub.s32 0, %v3404
    %v3406 = vrot.slane %v3401, %v3405
    %v3409 = vsel %vm178, %v3393, 0
    %v3412 = vsel %vm178, %v3394, 0
    %3414 = vmatprep.subr.mxu0 0.0
    %3415 = vmatpush1.msra.mxu0 %v3396
    %3416 = vmatprep.subr.mxu0 0.0
    %3417 = vmatpush1.msra.mxu0 %v3397
    %3418 = vmatprep.subr.mxu0 0.0
    %3419 = vmatpush1.msra.mxu0 %v3398
    %3420 = vmatprep.subr.mxu0 0.0
    %3421 = vmatpush1.msra.mxu0 %v3399
    %3422 = vmatprep.subr.mxu0 0.0
    %3423 = vmatpush1.msra.mxu0 0.0
    %3424 = vmatprep.subr.mxu0 0.0
    %3425 = vmatpush1.msra.mxu0 0.0
    %3426 = vmatprep.subr.mxu0 0.0
    %3427 = vmatpush1.msra.mxu0 0.0
    %3428 = vmatprep.subr.mxu0 0.0
    %3429 = vmatpush1.msra.mxu0 0.0
    %3430 = vmatprep.subr.mxu0 0.0
    %3431 = vmatpush1.msra.mxu0 0.0
    %3432 = vmatprep.subr.mxu0 0.0
    %3433 = vmatpush1.msra.mxu0 0.0
    %3434 = vmatprep.subr.mxu0 0.0
    %3435 = vmatpush1.msra.mxu0 0.0
    %3436 = vmatprep.subr.mxu0 0.0
    %3437 = vmatpush1.msra.mxu0 0.0
    %3438 = vmatprep.subr.mxu0 0.0
    %3439 = vmatpush1.msra.mxu0 0.0
    %3440 = vmatprep.subr.mxu0 0.0
    %3441 = vmatpush1.msra.mxu0 0.0
    %3442 = vmatprep.subr.mxu0 0.0
    %3443 = vmatpush1.msra.mxu0 0.0
    %3444 = vmatprep.subr.mxu0 0.0
    %3445 = vmatpush1.msra.mxu0 0.0
    %3446 = vmatprep.subr.mxu0 0.0
    %3447 = vmatpush1.msra.mxu0 0.0
    %3448 = vmatprep.subr.mxu0 0.0
    %3449 = vmatpush1.msra.mxu0 0.0
    %3450 = vmatprep.subr.mxu0 0.0
    %3451 = vmatpush1.msra.mxu0 0.0
    %3452 = vmatprep.subr.mxu0 0.0
    %3453 = vmatpush1.msra.mxu0 0.0
    %3454 = vmatprep.subr.mxu0 0.0
    %3455 = vmatpush1.msra.mxu0 0.0
    %3456 = vmatprep.subr.mxu0 0.0
    %3457 = vmatpush1.msra.mxu0 0.0
    %3458 = vmatprep.subr.mxu0 0.0
    %3459 = vmatpush1.msra.mxu0 0.0
    %3460 = vmatprep.subr.mxu0 0.0
    %3461 = vmatpush1.msra.mxu0 0.0
    %3462 = vmatprep.subr.mxu0 0.0
    %3463 = vmatpush1.msra.mxu0 0.0
    %3464 = vmatprep.subr.mxu0 0.0
    %3465 = vmatpush1.msra.mxu0 0.0
    %3466 = vmatprep.subr.mxu0 0.0
    %3467 = vmatpush1.msra.mxu0 0.0
    %3468 = vmatprep.subr.mxu0 0.0
    %3469 = vmatpush1.msra.mxu0 0.0
    %3470 = vmatprep.subr.mxu0 0.0
    %3471 = vmatpush1.msra.mxu0 0.0
    %3472 = vmatprep.subr.mxu0 0.0
    %3473 = vmatpush1.msra.mxu0 0.0
    %3474 = vmatprep.subr.mxu0 0.0
    %3475 = vmatpush1.msra.mxu0 0.0
    %3476 = vmatprep.subr.mxu0 0.0
    %3477 = vmatpush1.msra.mxu0 0.0
    %3478 = vmatprep.mubr.f32.mxu0 0.0
    %3479 = vmatmul.mubr.f32.gmra.mrb[0].mxu0 %v3409
    %v3480 = vpop.f32.mrb[0].mxu0
    %v3481 = vadd.f32 %v3406, %v3480
    %v3482 = vpop.f32.mrb[0].mxu0
    %3483 = vmatprep.mubr.f32.mxu0 0.0
    %3484 = vmatmul.mubr.f32.gmra.mrb[0].mxu0 %v3412
    %v3485 = vpop.f32.mrb[0].mxu0
    %v3486 = vadd.f32 %v3406, %v3485
    %v3487 = vpop.f32.mrb[0].mxu0
    %3488 = vdwg.mxu0
    %3490 = vrot.lane.b32.xlu0 %v3481, 96
    %v3491 = vpop.permute.xlu0 %3490
    %v3492 = vsel %vm178, %v3481, 0
    %v3494 = vsel %vm178, %v3491, 0
    %3496 = vmatprep.subr.mxu0 0.0
    %3497 = vmatpush1.xpose.msra.mxu0 %v3494
    %3498 = vmatprep.subr.mxu0 0.0
    %3499 = vmatpush1.xpose.msra.mxu0 0.0
    %3500 = vmatprep.subr.mxu0 0.0
    %3501 = vmatpush1.xpose.msra.mxu0 0.0
    %3502 = vmatprep.subr.mxu0 0.0
    %3503 = vmatpush1.xpose.msra.mxu0 0.0
    %3504 = vmatprep.subr.mxu0 0.0
    %3505 = vmatpush1.xpose.msra.mxu0 0.0
    %3506 = vmatprep.subr.mxu0 0.0
    %3507 = vmatpush1.xpose.msra.mxu0 0.0
    %3508 = vmatprep.subr.mxu0 0.0
    %3509 = vmatpush1.xpose.msra.mxu0 0.0
    %3510 = vmatprep.subr.mxu0 0.0
    %3511 = vmatpush1.xpose.msra.mxu0 0.0
    %3512 = vmatprep.subr.mxu0 0.0
    %3513 = vmatpush1.xpose.msra.mxu0 0.0
    %3514 = vmatprep.subr.mxu0 0.0
    %3515 = vmatpush1.xpose.msra.mxu0 0.0
    %3516 = vmatprep.subr.mxu0 0.0
    %3517 = vmatpush1.xpose.msra.mxu0 0.0
    %3518 = vmatprep.subr.mxu0 0.0
    %3519 = vmatpush1.xpose.msra.mxu0 0.0
    %3520 = vmatprep.subr.mxu0 0.0
    %3521 = vmatpush1.xpose.msra.mxu0 0.0
    %3522 = vmatprep.subr.mxu0 0.0
    %3523 = vmatpush1.xpose.msra.mxu0 0.0
    %3524 = vmatprep.subr.mxu0 0.0
    %3525 = vmatpush1.xpose.msra.mxu0 0.0
    %3526 = vmatprep.subr.mxu0 0.0
    %3527 = vmatpush1.xpose.msra.mxu0 0.0
    %3528 = vmatprep.subr.mxu0 0.0
    %3529 = vmatpush1.xpose.msra.mxu0 0.0
    %3530 = vmatprep.subr.mxu0 0.0
    %3531 = vmatpush1.xpose.msra.mxu0 0.0
    %3532 = vmatprep.subr.mxu0 0.0
    %3533 = vmatpush1.xpose.msra.mxu0 0.0
    %3534 = vmatprep.subr.mxu0 0.0
    %3535 = vmatpush1.xpose.msra.mxu0 0.0
    %3536 = vmatprep.subr.mxu0 0.0
    %3537 = vmatpush1.xpose.msra.mxu0 0.0
    %3538 = vmatprep.subr.mxu0 0.0
    %3539 = vmatpush1.xpose.msra.mxu0 0.0
    %3540 = vmatprep.subr.mxu0 0.0
    %3541 = vmatpush1.xpose.msra.mxu0 0.0
    %3542 = vmatprep.subr.mxu0 0.0
    %3543 = vmatpush1.xpose.msra.mxu0 0.0
    %3544 = vmatprep.subr.mxu0 0.0
    %3545 = vmatpush1.xpose.msra.mxu0 0.0
    %3546 = vmatprep.subr.mxu0 0.0
    %3547 = vmatpush1.xpose.msra.mxu0 0.0
    %3548 = vmatprep.subr.mxu0 0.0
    %3549 = vmatpush1.xpose.msra.mxu0 0.0
    %3550 = vmatprep.subr.mxu0 0.0
    %3551 = vmatpush1.xpose.msra.mxu0 0.0
    %3552 = vmatprep.subr.mxu0 0.0
    %3553 = vmatpush1.xpose.msra.mxu0 0.0
    %3554 = vmatprep.subr.mxu0 0.0
    %3555 = vmatpush1.xpose.msra.mxu0 0.0
    %3556 = vmatprep.subr.mxu0 0.0
    %3557 = vmatpush1.xpose.msra.mxu0 0.0
    %3558 = vmatprep.subr.mxu0 0.0
    %3559 = vmatpush1.xpose.msra.mxu0 0.0
    %3560 = vmatprep.mubr.f32.mxu0 0.0
    %3561 = vmatmul.mubr.f32.gmra.mrb[0].mxu0 %v3492
    %v3562 = vpop.f32.mrb[0].mxu0
    %v3563 = vadd.f32 %v265, %v3562
    %v3564 = vpop.f32.mrb[0].mxu0
    %3565 = vdwg.mxu0
    %3567 = vrot.lane.b32.xlu0 %v3486, 96
    %v3568 = vpop.permute.xlu0 %3567
    %v3569 = vsel %vm178, %v3486, 0
    %v3571 = vsel %vm178, %v3568, 0
    %3573 = vmatprep.subr.mxu0 0.0
    %3574 = vmatpush1.xpose.msra.mxu0 %v3571
    %3575 = vmatprep.subr.mxu0 0.0
    %3576 = vmatpush1.xpose.msra.mxu0 0.0
    %3577 = vmatprep.subr.mxu0 0.0
    %3578 = vmatpush1.xpose.msra.mxu0 0.0
    %3579 = vmatprep.subr.mxu0 0.0
    %3580 = vmatpush1.xpose.msra.mxu0 0.0
    %3581 = vmatprep.subr.mxu0 0.0
    %3582 = vmatpush1.xpose.msra.mxu0 0.0
    %3583 = vmatprep.subr.mxu0 0.0
    %3584 = vmatpush1.xpose.msra.mxu0 0.0
    %3585 = vmatprep.subr.mxu0 0.0
    %3586 = vmatpush1.xpose.msra.mxu0 0.0
    %3587 = vmatprep.subr.mxu0 0.0
    %3588 = vmatpush1.xpose.msra.mxu0 0.0
    %3589 = vmatprep.subr.mxu0 0.0
    %3590 = vmatpush1.xpose.msra.mxu0 0.0
    %3591 = vmatprep.subr.mxu0 0.0
    %3592 = vmatpush1.xpose.msra.mxu0 0.0
    %3593 = vmatprep.subr.mxu0 0.0
    %3594 = vmatpush1.xpose.msra.mxu0 0.0
    %3595 = vmatprep.subr.mxu0 0.0
    %3596 = vmatpush1.xpose.msra.mxu0 0.0
    %3597 = vmatprep.subr.mxu0 0.0
    %3598 = vmatpush1.xpose.msra.mxu0 0.0
    %3599 = vmatprep.subr.mxu0 0.0
    %3600 = vmatpush1.xpose.msra.mxu0 0.0
    %3601 = vmatprep.subr.mxu0 0.0
    %3602 = vmatpush1.xpose.msra.mxu0 0.0
    %3603 = vmatprep.subr.mxu0 0.0
    %3604 = vmatpush1.xpose.msra.mxu0 0.0
    %3605 = vmatprep.subr.mxu0 0.0
    %3606 = vmatpush1.xpose.msra.mxu0 0.0
    %3607 = vmatprep.subr.mxu0 0.0
    %3608 = vmatpush1.xpose.msra.mxu0 0.0
    %3609 = vmatprep.subr.mxu0 0.0
    %3610 = vmatpush1.xpose.msra.mxu0 0.0
    %3611 = vmatprep.subr.mxu0 0.0
    %3612 = vmatpush1.xpose.msra.mxu0 0.0
    %3613 = vmatprep.subr.mxu0 0.0
    %3614 = vmatpush1.xpose.msra.mxu0 0.0
    %3615 = vmatprep.subr.mxu0 0.0
    %3616 = vmatpush1.xpose.msra.mxu0 0.0
    %3617 = vmatprep.subr.mxu0 0.0
    %3618 = vmatpush1.xpose.msra.mxu0 0.0
    %3619 = vmatprep.subr.mxu0 0.0
    %3620 = vmatpush1.xpose.msra.mxu0 0.0
    %3621 = vmatprep.subr.mxu0 0.0
    %3622 = vmatpush1.xpose.msra.mxu0 0.0
    %3623 = vmatprep.subr.mxu0 0.0
    %3624 = vmatpush1.xpose.msra.mxu0 0.0
    %3625 = vmatprep.subr.mxu0 0.0
    %3626 = vmatpush1.xpose.msra.mxu0 0.0
    %3627 = vmatprep.subr.mxu0 0.0
    %3628 = vmatpush1.xpose.msra.mxu0 0.0
    %3629 = vmatprep.subr.mxu0 0.0
    %3630 = vmatpush1.xpose.msra.mxu0 0.0
    %3631 = vmatprep.subr.mxu0 0.0
    %3632 = vmatpush1.xpose.msra.mxu0 0.0
    %3633 = vmatprep.subr.mxu0 0.0
    %3634 = vmatpush1.xpose.msra.mxu0 0.0
    %3635 = vmatprep.subr.mxu0 0.0
    %3636 = vmatpush1.xpose.msra.mxu0 0.0
    %3637 = vmatprep.mubr.f32.mxu0 0.0
    %3638 = vmatmul.mubr.f32.gmra.mrb[0].mxu0 %v3569
    %v3639 = vpop.f32.mrb[0].mxu0
    %v3640 = vadd.f32 %v269, %v3639
    %v3641 = vpop.f32.mrb[0].mxu0
    %3642 = vdwg.mxu0
    %v3643 = vsel %vm426, %v3563, -inf
    %3644 = vmax.xlane.f32.xlu0 %v3643
    %v3645 = vpop.xlane.xlu0 %3644
    %v3646 = vsel %vm426, %v3640, -inf
    %3647 = vmax.xlane.f32.xlu0 %v3646
    %v3648 = vpop.xlane.xlu0 %3647
    %v3649 = vsub.f32 %v3563, %v3645
    %v3650 = vsub.f32 %v3640, %v3648
    %v3651 = vmul.f32 %v3649, 1.442695
    %v3652 = vpow.pop %v3651
    %v3653 = vmul.f32 %v3650, 1.442695
    %v3654 = vpow.pop %v3653
    %v3655 = vsel %vm426, %v3652, 0.0
    %3656 = vadd.xlane.f32.xlu0 %v3655
    %v3657 = vpop.xlane.xlu0 %3656
    %v3658 = vsel %vm426, %v3654, 0.0
    %3659 = vadd.xlane.f32.xlu0 %v3658
    %v3660 = vpop.xlane.xlu0 %3659
    %v3661 = vrcp.pop %v3657
    %v3662 = vrcp.pop %v3660
    %v3663 = vmul.f32 %v3652, %v3661
    %v3664 = vmul.f32 %v3654, %v3662
    %3665 = vrot.lane.b32.xlu0 %v3481, 64
    %v3666 = vpop.permute.xlu0 %3665
    %v3669 = vsel %vm426, %v3663, 0
    %3671 = vmatprep.subr.mxu0 0.0
    %3672 = vmatpush1.msra.mxu0 %v3666
    %3673 = vmatprep.subr.mxu0 0.0
    %3674 = vmatpush1.msra.mxu0 0.0
    %3675 = vmatprep.subr.mxu0 0.0
    %3676 = vmatpush1.msra.mxu0 0.0
    %3677 = vmatprep.subr.mxu0 0.0
    %3678 = vmatpush1.msra.mxu0 0.0
    %3679 = vmatprep.subr.mxu0 0.0
    %3680 = vmatpush1.msra.mxu0 0.0
    %3681 = vmatprep.subr.mxu0 0.0
    %3682 = vmatpush1.msra.mxu0 0.0
    %3683 = vmatprep.subr.mxu0 0.0
    %3684 = vmatpush1.msra.mxu0 0.0
    %3685 = vmatprep.subr.mxu0 0.0
    %3686 = vmatpush1.msra.mxu0 0.0
    %3687 = vmatprep.subr.mxu0 0.0
    %3688 = vmatpush1.msra.mxu0 0.0
    %3689 = vmatprep.subr.mxu0 0.0
    %3690 = vmatpush1.msra.mxu0 0.0
    %3691 = vmatprep.subr.mxu0 0.0
    %3692 = vmatpush1.msra.mxu0 0.0
    %3693 = vmatprep.subr.mxu0 0.0
    %3694 = vmatpush1.msra.mxu0 0.0
    %3695 = vmatprep.subr.mxu0 0.0
    %3696 = vmatpush1.msra.mxu0 0.0
    %3697 = vmatprep.subr.mxu0 0.0
    %3698 = vmatpush1.msra.mxu0 0.0
    %3699 = vmatprep.subr.mxu0 0.0
    %3700 = vmatpush1.msra.mxu0 0.0
    %3701 = vmatprep.subr.mxu0 0.0
    %3702 = vmatpush1.msra.mxu0 0.0
    %3703 = vmatprep.subr.mxu0 0.0
    %3704 = vmatpush1.msra.mxu0 0.0
    %3705 = vmatprep.subr.mxu0 0.0
    %3706 = vmatpush1.msra.mxu0 0.0
    %3707 = vmatprep.subr.mxu0 0.0
    %3708 = vmatpush1.msra.mxu0 0.0
    %3709 = vmatprep.subr.mxu0 0.0
    %3710 = vmatpush1.msra.mxu0 0.0
    %3711 = vmatprep.subr.mxu0 0.0
    %3712 = vmatpush1.msra.mxu0 0.0
    %3713 = vmatprep.subr.mxu0 0.0
    %3714 = vmatpush1.msra.mxu0 0.0
    %3715 = vmatprep.subr.mxu0 0.0
    %3716 = vmatpush1.msra.mxu0 0.0
    %3717 = vmatprep.subr.mxu0 0.0
    %3718 = vmatpush1.msra.mxu0 0.0
    %3719 = vmatprep.subr.mxu0 0.0
    %3720 = vmatpush1.msra.mxu0 0.0
    %3721 = vmatprep.subr.mxu0 0.0
    %3722 = vmatpush1.msra.mxu0 0.0
    %3723 = vmatprep.subr.mxu0 0.0
    %3724 = vmatpush1.msra.mxu0 0.0
    %3725 = vmatprep.subr.mxu0 0.0
    %3726 = vmatpush1.msra.mxu0 0.0
    %3727 = vmatprep.subr.mxu0 0.0
    %3728 = vmatpush1.msra.mxu0 0.0
    %3729 = vmatprep.subr.mxu0 0.0
    %3730 = vmatpush1.msra.mxu0 0.0
    %3731 = vmatprep.subr.mxu0 0.0
    %3732 = vmatpush1.msra.mxu0 0.0
    %3733 = vmatprep.subr.mxu0 0.0
    %3734 = vmatpush1.msra.mxu0 0.0
    %3735 = vmatprep.mubr.f32.mxu0 0.0
    %3736 = vmatmul.mubr.f32.gmra.mrb[0].mxu0 %v3669
    %v3737 = vpop.f32.mrb[0].mxu0
    %v3738 = vadd.f32 0.0, %v3737
    %v3739 = vpop.f32.mrb[0].mxu0
    %3740 = vdwg.mxu0
    %3741 = vrot.lane.b32.xlu0 %v3486, 64
    %v3742 = vpop.permute.xlu0 %3741
    %v3745 = vsel %vm426, %v3664, 0
    %3747 = vmatprep.subr.mxu0 0.0
    %3748 = vmatpush1.msra.mxu0 %v3742
    %3749 = vmatprep.subr.mxu0 0.0
    %3750 = vmatpush1.msra.mxu0 0.0
    %3751 = vmatprep.subr.mxu0 0.0
    %3752 = vmatpush1.msra.mxu0 0.0
    %3753 = vmatprep.subr.mxu0 0.0
    %3754 = vmatpush1.msra.mxu0 0.0
    %3755 = vmatprep.subr.mxu0 0.0
    %3756 = vmatpush1.msra.mxu0 0.0
    %3757 = vmatprep.subr.mxu0 0.0
    %3758 = vmatpush1.msra.mxu0 0.0
    %3759 = vmatprep.subr.mxu0 0.0
    %3760 = vmatpush1.msra.mxu0 0.0
    %3761 = vmatprep.subr.mxu0 0.0
    %3762 = vmatpush1.msra.mxu0 0.0
    %3763 = vmatprep.subr.mxu0 0.0
    %3764 = vmatpush1.msra.mxu0 0.0
    %3765 = vmatprep.subr.mxu0 0.0
    %3766 = vmatpush1.msra.mxu0 0.0
    %3767 = vmatprep.subr.mxu0 0.0
    %3768 = vmatpush1.msra.mxu0 0.0
    %3769 = vmatprep.subr.mxu0 0.0
    %3770 = vmatpush1.msra.mxu0 0.0
    %3771 = vmatprep.subr.mxu0 0.0
    %3772 = vmatpush1.msra.mxu0 0.0
    %3773 = vmatprep.subr.mxu0 0.0
    %3774 = vmatpush1.msra.mxu0 0.0
    %3775 = vmatprep.subr.mxu0 0.0
    %3776 = vmatpush1.msra.mxu0 0.0
    %3777 = vmatprep.subr.mxu0 0.0
    %3778 = vmatpush1.msra.mxu0 0.0
    %3779 = vmatprep.subr.mxu0 0.0
    %3780 = vmatpush1.msra.mxu0 0.0
    %3781 = vmatprep.subr.mxu0 0.0
    %3782 = vmatpush1.msra.mxu0 0.0
    %3783 = vmatprep.subr.mxu0 0.0
    %3784 = vmatpush1.msra.mxu0 0.0
    %3785 = vmatprep.subr.mxu0 0.0
    %3786 = vmatpush1.msra.mxu0 0.0
    %3787 = vmatprep.subr.mxu0 0.0
    %3788 = vmatpush1.msra.mxu0 0.0
    %3789 = vmatprep.subr.mxu0 0.0
    %3790 = vmatpush1.msra.mxu0 0.0
    %3791 = vmatprep.subr.mxu0 0.0
    %3792 = vmatpush1.msra.mxu0 0.0
    %3793 = vmatprep.subr.mxu0 0.0
    %3794 = vmatpush1.msra.mxu0 0.0
    %3795 = vmatprep.subr.mxu0 0.0
    %3796 = vmatpush1.msra.mxu0 0.0
    %3797 = vmatprep.subr.mxu0 0.0
    %3798 = vmatpush1.msra.mxu0 0.0
    %3799 = vmatprep.subr.mxu0 0.0
    %3800 = vmatpush1.msra.mxu0 0.0
    %3801 = vmatprep.subr.mxu0 0.0
    %3802 = vmatpush1.msra.mxu0 0.0
    %3803 = vmatprep.subr.mxu0 0.0
    %3804 = vmatpush1.msra.mxu0 0.0
    %3805 = vmatprep.subr.mxu0 0.0
    %3806 = vmatpush1.msra.mxu0 0.0
    %3807 = vmatprep.subr.mxu0 0.0
    %3808 = vmatpush1.msra.mxu0 0.0
    %3809 = vmatprep.subr.mxu0 0.0
    %3810 = vmatpush1.msra.mxu0 0.0
    %3811 = vmatprep.mubr.f32.mxu0 0.0
    %3812 = vmatmul.mubr.f32.gmra.mrb[0].mxu0 %v3745
    %v3813 = vpop.f32.mrb[0].mxu0
    %v3814 = vadd.f32 0.0, %v3813
    %v3815 = vpop.f32.mrb[0].mxu0
    %3816 = vdwg.mxu0
    %s3817 = scalar_lea.vmem %s4, 128
    %v3818 = vld [vmem:[%s3817] sm:$0xff]
    %v3819 = vld [vmem:[%s3817 + $0x8] sm:$0xff]
    %v3820 = vld [vmem:[%s3817 + $0x10] sm:$0xff]
    %v3821 = vld [vmem:[%s3817 + $0x18] sm:$0xff]
    %s3822 = scalar_lea.vmem [#allocation8], 4
    %v3823 = vld [vmem:[%s3822] sm:$0x1]
    %v3825 = vlaneseq
    %v3826 = vshrl.u32 %v3825, 7
    %v3827 = vsub.s32 0, %v3826
    %v3828 = vrot.slane %v3823, %v3827
    %v3831 = vsel %vm178, %v3738, 0
    %v3834 = vsel %vm178, %v3814, 0
    %3836 = vmatprep.subr.mxu0 0.0
    %3837 = vmatpush1.msra.mxu0 %v3818
    %3838 = vmatprep.subr.mxu0 0.0
    %3839 = vmatpush1.msra.mxu0 %v3819
    %3840 = vmatprep.subr.mxu0 0.0
    %3841 = vmatpush1.msra.mxu0 %v3820
    %3842 = vmatprep.subr.mxu0 0.0
    %3843 = vmatpush1.msra.mxu0 %v3821
    %3844 = vmatprep.subr.mxu0 0.0
    %3845 = vmatpush1.msra.mxu0 0.0
    %3846 = vmatprep.subr.mxu0 0.0
    %3847 = vmatpush1.msra.mxu0 0.0
    %3848 = vmatprep.subr.mxu0 0.0
    %3849 = vmatpush1.msra.mxu0 0.0
    %3850 = vmatprep.subr.mxu0 0.0
    %3851 = vmatpush1.msra.mxu0 0.0
    %3852 = vmatprep.subr.mxu0 0.0
    %3853 = vmatpush1.msra.mxu0 0.0
    %3854 = vmatprep.subr.mxu0 0.0
    %3855 = vmatpush1.msra.mxu0 0.0
    %3856 = vmatprep.subr.mxu0 0.0
    %3857 = vmatpush1.msra.mxu0 0.0
    %3858 = vmatprep.subr.mxu0 0.0
    %3859 = vmatpush1.msra.mxu0 0.0
    %3860 = vmatprep.subr.mxu0 0.0
    %3861 = vmatpush1.msra.mxu0 0.0
    %3862 = vmatprep.subr.mxu0 0.0
    %3863 = vmatpush1.msra.mxu0 0.0
    %3864 = vmatprep.subr.mxu0 0.0
    %3865 = vmatpush1.msra.mxu0 0.0
    %3866 = vmatprep.subr.mxu0 0.0
    %3867 = vmatpush1.msra.mxu0 0.0
    %3868 = vmatprep.subr.mxu0 0.0
    %3869 = vmatpush1.msra.mxu0 0.0
    %3870 = vmatprep.subr.mxu0 0.0
    %3871 = vmatpush1.msra.mxu0 0.0
    %3872 = vmatprep.subr.mxu0 0.0
    %3873 = vmatpush1.msra.mxu0 0.0
    %3874 = vmatprep.subr.mxu0 0.0
    %3875 = vmatpush1.msra.mxu0 0.0
    %3876 = vmatprep.subr.mxu0 0.0
    %3877 = vmatpush1.msra.mxu0 0.0
    %3878 = vmatprep.subr.mxu0 0.0
    %3879 = vmatpush1.msra.mxu0 0.0
    %3880 = vmatprep.subr.mxu0 0.0
    %3881 = vmatpush1.msra.mxu0 0.0
    %3882 = vmatprep.subr.mxu0 0.0
    %3883 = vmatpush1.msra.mxu0 0.0
    %3884 = vmatprep.subr.mxu0 0.0
    %3885 = vmatpush1.msra.mxu0 0.0
    %3886 = vmatprep.subr.mxu0 0.0
    %3887 = vmatpush1.msra.mxu0 0.0
    %3888 = vmatprep.subr.mxu0 0.0
    %3889 = vmatpush1.msra.mxu0 0.0
    %3890 = vmatprep.subr.mxu0 0.0
    %3891 = vmatpush1.msra.mxu0 0.0
    %3892 = vmatprep.subr.mxu0 0.0
    %3893 = vmatpush1.msra.mxu0 0.0
    %3894 = vmatprep.subr.mxu0 0.0
    %3895 = vmatpush1.msra.mxu0 0.0
    %3896 = vmatprep.subr.mxu0 0.0
    %3897 = vmatpush1.msra.mxu0 0.0
    %3898 = vmatprep.subr.mxu0 0.0
    %3899 = vmatpush1.msra.mxu0 0.0
    %3900 = vmatprep.mubr.f32.mxu0 0.0
    %3901 = vmatmul.mubr.f32.gmra.mrb[0].mxu0 %v3831
    %v3902 = vpop.f32.mrb[0].mxu0
    %v3903 = vadd.f32 %v3828, %v3902
    %v3904 = vpop.f32.mrb[0].mxu0
    %3905 = vmatprep.mubr.f32.mxu0 0.0
    %3906 = vmatmul.mubr.f32.gmra.mrb[0].mxu0 %v3834
    %v3907 = vpop.f32.mrb[0].mxu0
    %v3908 = vadd.f32 %v3828, %v3907
    %v3909 = vpop.f32.mrb[0].mxu0
    %3910 = vdwg.mxu0
    %v3911 = vadd.f32 %v3393, %v3903
    %v3912 = vadd.f32 %v3394, %v3908
    %v3913 = vsel %vm178, %v3911, 0.0
    %3914 = vadd.xlane.f32.xlu0 %v3913
    %v3915 = vpop.xlane.xlu0 %3914
    %v3916 = vsel %vm178, %v3912, 0.0
    %3917 = vadd.xlane.f32.xlu0 %v3916
    %v3918 = vpop.xlane.xlu0 %3917
    %v3919 = vmul.f32 %v3915, %v701
    %v3920 = vmul.f32 %v3918, %v701
    %v3921 = vsub.f32 %v3911, %v3919
    %v3922 = vsub.f32 %v3912, %v3920
    %v3923 = vmul.f32 %v3921, %v3921
    %v3924 = vmul.f32 %v3922, %v3922
    %v3925 = vsel %vm178, %v3923, 0.0
    %3926 = vadd.xlane.f32.xlu0 %v3925
    %v3927 = vpop.xlane.xlu0 %3926
    %v3928 = vsel %vm178, %v3924, 0.0
    %3929 = vadd.xlane.f32.xlu0 %v3928
    %v3930 = vpop.xlane.xlu0 %3929
    %v3931 = vmul.f32 %v3927, %v701
    %v3932 = vmul.f32 %v3930, %v701
    %v3933 = vadd.f32 %v3931, 1e-05
    %v3934 = vadd.f32 %v3932, 1e-05
    %v3935 = vrsqrt.pop %v3933
    %v3936 = vrsqrt.pop %v3934
    %v3937 = vmul.f32 %v3921, %v3935
    %v3938 = vmul.f32 %v3922, %v3936
    %s3939 = scalar_lea.vmem [#allocation10], 4
    %v3940 = vld [vmem:[%s3939] sm:$0x1]
    %v3942 = vlaneseq
    %v3943 = vshrl.u32 %v3942, 7
    %v3944 = vsub.s32 0, %v3943
    %v3945 = vrot.slane %v3940, %v3944
    %v3947 = vmul.f32 %v3937, %v3945
    %v3948 = vmul.f32 %v3938, %v3945
    %s3949 = scalar_lea.vmem [#allocation11], 4
    %v3950 = vld [vmem:[%s3949] sm:$0x1]
    %v3952 = vlaneseq
    %v3953 = vshrl.u32 %v3952, 7
    %v3954 = vsub.s32 0, %v3953
    %v3955 = vrot.slane %v3950, %v3954
    %v3957 = vadd.f32 %v3947, %v3955
    %v3958 = vadd.f32 %v3948, %v3955
    %s3959 = scalar_lea.vmem %s8, 128
    %v3960 = vld [vmem:[%s3959] sm:$0xff]
    %v3961 = vld [vmem:[%s3959 + $0x8] sm:$0xff]
    %v3962 = vld [vmem:[%s3959 + $0x10] sm:$0xff]
    %v3963 = vld [vmem:[%s3959 + $0x18] sm:$0xff]
    %s3964 = scalar_lea.vmem [#allocation13], 4
    %v3965 = vld [vmem:[%s3964] sm:$0x1]
    %v3967 = vlaneseq
    %v3968 = vshrl.u32 %v3967, 7
    %v3969 = vsub.s32 0, %v3968
    %v3970 = vrot.slane %v3965, %v3969
    %v3973 = vsel %vm178, %v3957, 0
    %v3976 = vsel %vm178, %v3958, 0
    %3978 = vmatprep.subr.mxu0 0.0
    %3979 = vmatpush1.msra.mxu0 %v3960
    %3980 = vmatprep.subr.mxu0 0.0
    %3981 = vmatpush1.msra.mxu0 %v3961
    %3982 = vmatprep.subr.mxu0 0.0
    %3983 = vmatpush1.msra.mxu0 %v3962
    %3984 = vmatprep.subr.mxu0 0.0
    %3985 = vmatpush1.msra.mxu0 %v3963
    %3986 = vmatprep.subr.mxu0 0.0
    %3987 = vmatpush1.msra.mxu0 0.0
    %3988 = vmatprep.subr.mxu0 0.0
    %3989 = vmatpush1.msra.mxu0 0.0
    %3990 = vmatprep.subr.mxu0 0.0
    %3991 = vmatpush1.msra.mxu0 0.0
    %3992 = vmatprep.subr.mxu0 0.0
    %3993 = vmatpush1.msra.mxu0 0.0
    %3994 = vmatprep.subr.mxu0 0.0
    %3995 = vmatpush1.msra.mxu0 0.0
    %3996 = vmatprep.subr.mxu0 0.0
    %3997 = vmatpush1.msra.mxu0 0.0
    %3998 = vmatprep.subr.mxu0 0.0
    %3999 = vmatpush1.msra.mxu0 0.0
    %4000 = vmatprep.subr.mxu0 0.0
    %4001 = vmatpush1.msra.mxu0 0.0
    %4002 = vmatprep.subr.mxu0 0.0
    %4003 = vmatpush1.msra.mxu0 0.0
    %4004 = vmatprep.subr.mxu0 0.0
    %4005 = vmatpush1.msra.mxu0 0.0
    %4006 = vmatprep.subr.mxu0 0.0
    %4007 = vmatpush1.msra.mxu0 0.0
    %4008 = vmatprep.subr.mxu0 0.0
    %4009 = vmatpush1.msra.mxu0 0.0
    %4010 = vmatprep.subr.mxu0 0.0
    %4011 = vmatpush1.msra.mxu0 0.0
    %4012 = vmatprep.subr.mxu0 0.0
    %4013 = vmatpush1.msra.mxu0 0.0
    %4014 = vmatprep.subr.mxu0 0.0
    %4015 = vmatpush1.msra.mxu0 0.0
    %4016 = vmatprep.subr.mxu0 0.0
    %4017 = vmatpush1.msra.mxu0 0.0
    %4018 = vmatprep.subr.mxu0 0.0
    %4019 = vmatpush1.msra.mxu0 0.0
    %4020 = vmatprep.subr.mxu0 0.0
    %4021 = vmatpush1.msra.mxu0 0.0
    %4022 = vmatprep.subr.mxu0 0.0
    %4023 = vmatpush1.msra.mxu0 0.0
    %4024 = vmatprep.subr.mxu0 0.0
    %4025 = vmatpush1.msra.mxu0 0.0
    %4026 = vmatprep.subr.mxu0 0.0
    %4027 = vmatpush1.msra.mxu0 0.0
    %4028 = vmatprep.subr.mxu0 0.0
    %4029 = vmatpush1.msra.mxu0 0.0
    %4030 = vmatprep.subr.mxu0 0.0
    %4031 = vmatpush1.msra.mxu0 0.0
    %4032 = vmatprep.subr.mxu0 0.0
    %4033 = vmatpush1.msra.mxu0 0.0
    %4034 = vmatprep.subr.mxu0 0.0
    %4035 = vmatpush1.msra.mxu0 0.0
    %4036 = vmatprep.subr.mxu0 0.0
    %4037 = vmatpush1.msra.mxu0 0.0
    %4038 = vmatprep.subr.mxu0 0.0
    %4039 = vmatpush1.msra.mxu0 0.0
    %4040 = vmatprep.subr.mxu0 0.0
    %4041 = vmatpush1.msra.mxu0 0.0
    %4042 = vmatprep.mubr.f32.mxu0 0.0
    %4043 = vmatmul.mubr.f32.gmra.mrb[0].mxu0 %v3973
    %v4044 = vpop.f32.mrb[0].mxu0
    %v4045 = vadd.f32 %v3970, %v4044
    %v4046 = vpop.f32.mrb[0].mxu0
    %4047 = vmatprep.mubr.f32.mxu0 0.0
    %4048 = vmatmul.mubr.f32.gmra.mrb[0].mxu0 %v3976
    %v4049 = vpop.f32.mrb[0].mxu0
    %v4050 = vadd.f32 %v3970, %v4049
    %v4051 = vpop.f32.mrb[0].mxu0
    %4052 = vdwg.mxu0
    %v4053 = vmax.f32 %v4045, 0.0
    %v4054 = vmax.f32 %v4050, 0.0
    %s4055 = scalar_lea.vmem %s10, 256
    %v4056 = vld [vmem:[%s4055] sm:$0xff]
    %v4057 = vld [vmem:[%s4055 + $0x8] sm:$0xff]
    %v4058 = vld [vmem:[%s4055 + $0x10] sm:$0xff]
    %v4059 = vld [vmem:[%s4055 + $0x18] sm:$0xff]
    %v4060 = vld [vmem:[%s4055 + $0x20] sm:$0xff]
    %v4061 = vld [vmem:[%s4055 + $0x28] sm:$0xff]
    %v4062 = vld [vmem:[%s4055 + $0x30] sm:$0xff]
    %v4063 = vld [vmem:[%s4055 + $0x38] sm:$0xff]
    %s4064 = scalar_lea.vmem [#allocation14], 4
    %v4065 = vld [vmem:[%s4064] sm:$0x1]
    %v4067 = vlaneseq
    %v4068 = vshrl.u32 %v4067, 7
    %v4069 = vsub.s32 0, %v4068
    %v4070 = vrot.slane %v4065, %v4069
    %v4073 = vsel %vm849, %v4053, 0
    %v4076 = vsel %vm849, %v4054, 0
    %4078 = vmatprep.subr.mxu0 0.0
    %4079 = vmatpush1.msra.mxu0 %v4056
    %4080 = vmatprep.subr.mxu0 0.0
    %4081 = vmatpush1.msra.mxu0 %v4057
    %4082 = vmatprep.subr.mxu0 0.0
    %4083 = vmatpush1.msra.mxu0 %v4058
    %4084 = vmatprep.subr.mxu0 0.0
    %4085 = vmatpush1.msra.mxu0 %v4059
    %4086 = vmatprep.subr.mxu0 0.0
    %4087 = vmatpush1.msra.mxu0 %v4060
    %4088 = vmatprep.subr.mxu0 0.0
    %4089 = vmatpush1.msra.mxu0 %v4061
    %4090 = vmatprep.subr.mxu0 0.0
    %4091 = vmatpush1.msra.mxu0 %v4062
    %4092 = vmatprep.subr.mxu0 0.0
    %4093 = vmatpush1.msra.mxu0 %v4063
    %4094 = vmatprep.subr.mxu0 0.0
    %4095 = vmatpush1.msra.mxu0 0.0
    %4096 = vmatprep.subr.mxu0 0.0
    %4097 = vmatpush1.msra.mxu0 0.0
    %4098 = vmatprep.subr.mxu0 0.0
    %4099 = vmatpush1.msra.mxu0 0.0
    %4100 = vmatprep.subr.mxu0 0.0
    %4101 = vmatpush1.msra.mxu0 0.0
    %4102 = vmatprep.subr.mxu0 0.0
    %4103 = vmatpush1.msra.mxu0 0.0
    %4104 = vmatprep.subr.mxu0 0.0
    %4105 = vmatpush1.msra.mxu0 0.0
    %4106 = vmatprep.subr.mxu0 0.0
    %4107 = vmatpush1.msra.mxu0 0.0
    %4108 = vmatprep.subr.mxu0 0.0
    %4109 = vmatpush1.msra.mxu0 0.0
    %4110 = vmatprep.subr.mxu0 0.0
    %4111 = vmatpush1.msra.mxu0 0.0
    %4112 = vmatprep.subr.mxu0 0.0
    %4113 = vmatpush1.msra.mxu0 0.0
    %4114 = vmatprep.subr.mxu0 0.0
    %4115 = vmatpush1.msra.mxu0 0.0
    %4116 = vmatprep.subr.mxu0 0.0
    %4117 = vmatpush1.msra.mxu0 0.0
    %4118 = vmatprep.subr.mxu0 0.0
    %4119 = vmatpush1.msra.mxu0 0.0
    %4120 = vmatprep.subr.mxu0 0.0
    %4121 = vmatpush1.msra.mxu0 0.0
    %4122 = vmatprep.subr.mxu0 0.0
    %4123 = vmatpush1.msra.mxu0 0.0
    %4124 = vmatprep.subr.mxu0 0.0
    %4125 = vmatpush1.msra.mxu0 0.0
    %4126 = vmatprep.subr.mxu0 0.0
    %4127 = vmatpush1.msra.mxu0 0.0
    %4128 = vmatprep.subr.mxu0 0.0
    %4129 = vmatpush1.msra.mxu0 0.0
    %4130 = vmatprep.subr.mxu0 0.0
    %4131 = vmatpush1.msra.mxu0 0.0
    %4132 = vmatprep.subr.mxu0 0.0
    %4133 = vmatpush1.msra.mxu0 0.0
    %4134 = vmatprep.subr.mxu0 0.0
    %4135 = vmatpush1.msra.mxu0 0.0
    %4136 = vmatprep.subr.mxu0 0.0
    %4137 = vmatpush1.msra.mxu0 0.0
    %4138 = vmatprep.subr.mxu0 0.0
    %4139 = vmatpush1.msra.mxu0 0.0
    %4140 = vmatprep.subr.mxu0 0.0
    %4141 = vmatpush1.msra.mxu0 0.0
    %4142 = vmatprep.mubr.f32.mxu0 0.0
    %4143 = vmatmul.mubr.f32.gmra.mrb[0].mxu0 %v4073
    %v4144 = vpop.f32.mrb[0].mxu0
    %v4145 = vadd.f32 %v4070, %v4144
    %v4146 = vpop.f32.mrb[0].mxu0
    %4147 = vmatprep.mubr.f32.mxu0 0.0
    %4148 = vmatmul.mubr.f32.gmra.mrb[0].mxu0 %v4076
    %v4149 = vpop.f32.mrb[0].mxu0
    %v4150 = vadd.f32 %v4070, %v4149
    %v4151 = vpop.f32.mrb[0].mxu0
    %4152 = vdwg.mxu0
    %v4153 = vadd.f32 %v3957, %v4145
    %v4154 = vadd.f32 %v3958, %v4150
    %v4155 = vsel %vm178, %v4153, 0.0
    %4156 = vadd.xlane.f32.xlu0 %v4155
    %v4157 = vpop.xlane.xlu0 %4156
    %v4158 = vsel %vm178, %v4154, 0.0
    %4159 = vadd.xlane.f32.xlu0 %v4158
    %v4160 = vpop.xlane.xlu0 %4159
    %v4161 = vmul.f32 %v4157, %v701
    %v4162 = vmul.f32 %v4160, %v701
    %v4163 = vsub.f32 %v4153, %v4161
    %v4164 = vsub.f32 %v4154, %v4162
    %v4165 = vmul.f32 %v4163, %v4163
    %v4166 = vmul.f32 %v4164, %v4164
    %v4167 = vsel %vm178, %v4165, 0.0
    %4168 = vadd.xlane.f32.xlu0 %v4167
    %v4169 = vpop.xlane.xlu0 %4168
    %v4170 = vsel %vm178, %v4166, 0.0
    %4171 = vadd.xlane.f32.xlu0 %v4170
    %v4172 = vpop.xlane.xlu0 %4171
    %v4173 = vmul.f32 %v4169, %v701
    %v4174 = vmul.f32 %v4172, %v701
    %v4175 = vadd.f32 %v4173, 1e-05
    %v4176 = vadd.f32 %v4174, 1e-05
    %v4177 = vrsqrt.pop %v4175
    %v4178 = vrsqrt.pop %v4176
    %v4179 = vmul.f32 %v4163, %v4177
    %v4180 = vmul.f32 %v4164, %v4178
    %s4181 = scalar_lea.vmem %s12, 4
    %v4182 = vld [vmem:[%s4181] sm:$0x1]
    %v4184 = vlaneseq
    %v4185 = vshrl.u32 %v4184, 7
    %v4186 = vsub.s32 0, %v4185
    %v4187 = vrot.slane %v4182, %v4186
    %v4189 = vmul.f32 %v4179, %v4187
    %v4190 = vmul.f32 %v4180, %v4187
    %s4191 = scalar_lea.vmem %s13, 4
    %v4192 = vld [vmem:[%s4191] sm:$0x1]
    %v4194 = vlaneseq
    %v4195 = vshrl.u32 %v4194, 7
    %v4196 = vsub.s32 0, %v4195
    %v4197 = vrot.slane %v4192, %v4196
    %v4199 = vadd.f32 %v4189, %v4197
    %v4200 = vadd.f32 %v4190, %v4197
    %s4201 = scalar_lea.vmem %s2, 160
    %v4202 = vld [vmem:[%s4201] sm:$0xff]
    %v4203 = vld [vmem:[%s4201 + $0x8] sm:$0xff]
    %v4204 = vld [vmem:[%s4201 + $0x10] sm:$0xff]
    %v4205 = vld [vmem:[%s4201 + $0x18] sm:$0xff]
    %s4206 = scalar_lea.vmem [#allocation7], 5
    %v4207 = vld [vmem:[%s4206] sm:$0x1]
    %v4209 = vlaneseq
    %v4210 = vshrl.u32 %v4209, 7
    %v4211 = vsub.s32 0, %v4210
    %v4212 = vrot.slane %v4207, %v4211
    %v4215 = vsel %vm178, %v4199, 0
    %v4218 = vsel %vm178, %v4200, 0
    %4220 = vmatprep.subr.mxu0 0.0
    %4221 = vmatpush1.msra.mxu0 %v4202
    %4222 = vmatprep.subr.mxu0 0.0
    %4223 = vmatpush1.msra.mxu0 %v4203
    %4224 = vmatprep.subr.mxu0 0.0
    %4225 = vmatpush1.msra.mxu0 %v4204
    %4226 = vmatprep.subr.mxu0 0.0
    %4227 = vmatpush1.msra.mxu0 %v4205
    %4228 = vmatprep.subr.mxu0 0.0
    %4229 = vmatpush1.msra.mxu0 0.0
    %4230 = vmatprep.subr.mxu0 0.0
    %4231 = vmatpush1.msra.mxu0 0.0
    %4232 = vmatprep.subr.mxu0 0.0
    %4233 = vmatpush1.msra.mxu0 0.0
    %4234 = vmatprep.subr.mxu0 0.0
    %4235 = vmatpush1.msra.mxu0 0.0
    %4236 = vmatprep.subr.mxu0 0.0
    %4237 = vmatpush1.msra.mxu0 0.0
    %4238 = vmatprep.subr.mxu0 0.0
    %4239 = vmatpush1.msra.mxu0 0.0
    %4240 = vmatprep.subr.mxu0 0.0
    %4241 = vmatpush1.msra.mxu0 0.0
    %4242 = vmatprep.subr.mxu0 0.0
    %4243 = vmatpush1.msra.mxu0 0.0
    %4244 = vmatprep.subr.mxu0 0.0
    %4245 = vmatpush1.msra.mxu0 0.0
    %4246 = vmatprep.subr.mxu0 0.0
    %4247 = vmatpush1.msra.mxu0 0.0
    %4248 = vmatprep.subr.mxu0 0.0
    %4249 = vmatpush1.msra.mxu0 0.0
    %4250 = vmatprep.subr.mxu0 0.0
    %4251 = vmatpush1.msra.mxu0 0.0
    %4252 = vmatprep.subr.mxu0 0.0
    %4253 = vmatpush1.msra.mxu0 0.0
    %4254 = vmatprep.subr.mxu0 0.0
    %4255 = vmatpush1.msra.mxu0 0.0
    %4256 = vmatprep.subr.mxu0 0.0
    %4257 = vmatpush1.msra.mxu0 0.0
    %4258 = vmatprep.subr.mxu0 0.0
    %4259 = vmatpush1.msra.mxu0 0.0
    %4260 = vmatprep.subr.mxu0 0.0
    %4261 = vmatpush1.msra.mxu0 0.0
    %4262 = vmatprep.subr.mxu0 0.0
    %4263 = vmatpush1.msra.mxu0 0.0
    %4264 = vmatprep.subr.mxu0 0.0
    %4265 = vmatpush1.msra.mxu0 0.0
    %4266 = vmatprep.subr.mxu0 0.0
    %4267 = vmatpush1.msra.mxu0 0.0
    %4268 = vmatprep.subr.mxu0 0.0
    %4269 = vmatpush1.msra.mxu0 0.0
    %4270 = vmatprep.subr.mxu0 0.0
    %4271 = vmatpush1.msra.mxu0 0.0
    %4272 = vmatprep.subr.mxu0 0.0
    %4273 = vmatpush1.msra.mxu0 0.0
    %4274 = vmatprep.subr.mxu0 0.0
    %4275 = vmatpush1.msra.mxu0 0.0
    %4276 = vmatprep.subr.mxu0 0.0
    %4277 = vmatpush1.msra.mxu0 0.0
    %4278 = vmatprep.subr.mxu0 0.0
    %4279 = vmatpush1.msra.mxu0 0.0
    %4280 = vmatprep.subr.mxu0 0.0
    %4281 = vmatpush1.msra.mxu0 0.0
    %4282 = vmatprep.subr.mxu0 0.0
    %4283 = vmatpush1.msra.mxu0 0.0
    %4284 = vmatprep.mubr.f32.mxu0 0.0
    %4285 = vmatmul.mubr.f32.gmra.mrb[0].mxu0 %v4215
    %v4286 = vpop.f32.mrb[0].mxu0
    %v4287 = vadd.f32 %v4212, %v4286
    %v4288 = vpop.f32.mrb[0].mxu0
    %4289 = vmatprep.mubr.f32.mxu0 0.0
    %4290 = vmatmul.mubr.f32.gmra.mrb[0].mxu0 %v4218
    %v4291 = vpop.f32.mrb[0].mxu0
    %v4292 = vadd.f32 %v4212, %v4291
    %v4293 = vpop.f32.mrb[0].mxu0
    %4294 = vdwg.mxu0
    %4296 = vrot.lane.b32.xlu0 %v4287, 96
    %v4297 = vpop.permute.xlu0 %4296
    %v4298 = vsel %vm178, %v4287, 0
    %v4300 = vsel %vm178, %v4297, 0
    %4302 = vmatprep.subr.mxu0 0.0
    %4303 = vmatpush1.xpose.msra.mxu0 %v4300
    %4304 = vmatprep.subr.mxu0 0.0
    %4305 = vmatpush1.xpose.msra.mxu0 0.0
    %4306 = vmatprep.subr.mxu0 0.0
    %4307 = vmatpush1.xpose.msra.mxu0 0.0
    %4308 = vmatprep.subr.mxu0 0.0
    %4309 = vmatpush1.xpose.msra.mxu0 0.0
    %4310 = vmatprep.subr.mxu0 0.0
    %4311 = vmatpush1.xpose.msra.mxu0 0.0
    %4312 = vmatprep.subr.mxu0 0.0
    %4313 = vmatpush1.xpose.msra.mxu0 0.0
    %4314 = vmatprep.subr.mxu0 0.0
    %4315 = vmatpush1.xpose.msra.mxu0 0.0
    %4316 = vmatprep.subr.mxu0 0.0
    %4317 = vmatpush1.xpose.msra.mxu0 0.0
    %4318 = vmatprep.subr.mxu0 0.0
    %4319 = vmatpush1.xpose.msra.mxu0 0.0
    %4320 = vmatprep.subr.mxu0 0.0
    %4321 = vmatpush1.xpose.msra.mxu0 0.0
    %4322 = vmatprep.subr.mxu0 0.0
    %4323 = vmatpush1.xpose.msra.mxu0 0.0
    %4324 = vmatprep.subr.mxu0 0.0
    %4325 = vmatpush1.xpose.msra.mxu0 0.0
    %4326 = vmatprep.subr.mxu0 0.0
    %4327 = vmatpush1.xpose.msra.mxu0 0.0
    %4328 = vmatprep.subr.mxu0 0.0
    %4329 = vmatpush1.xpose.msra.mxu0 0.0
    %4330 = vmatprep.subr.mxu0 0.0
    %4331 = vmatpush1.xpose.msra.mxu0 0.0
    %4332 = vmatprep.subr.mxu0 0.0
    %4333 = vmatpush1.xpose.msra.mxu0 0.0
    %4334 = vmatprep.subr.mxu0 0.0
    %4335 = vmatpush1.xpose.msra.mxu0 0.0
    %4336 = vmatprep.subr.mxu0 0.0
    %4337 = vmatpush1.xpose.msra.mxu0 0.0
    %4338 = vmatprep.subr.mxu0 0.0
    %4339 = vmatpush1.xpose.msra.mxu0 0.0
    %4340 = vmatprep.subr.mxu0 0.0
    %4341 = vmatpush1.xpose.msra.mxu0 0.0
    %4342 = vmatprep.subr.mxu0 0.0
    %4343 = vmatpush1.xpose.msra.mxu0 0.0
    %4344 = vmatprep.subr.mxu0 0.0
    %4345 = vmatpush1.xpose.msra.mxu0 0.0
    %4346 = vmatprep.subr.mxu0 0.0
    %4347 = vmatpush1.xpose.msra.mxu0 0.0
    %4348 = vmatprep.subr.mxu0 0.0
    %4349 = vmatpush1.xpose.msra.mxu0 0.0
    %4350 = vmatprep.subr.mxu0 0.0
    %4351 = vmatpush1.xpose.msra.mxu0 0.0
    %4352 = vmatprep.subr.mxu0 0.0
    %4353 = vmatpush1.xpose.msra.mxu0 0.0
    %4354 = vmatprep.subr.mxu0 0.0
    %4355 = vmatpush1.xpose.msra.mxu0 0.0
    %4356 = vmatprep.subr.mxu0 0.0
    %4357 = vmatpush1.xpose.msra.mxu0 0.0
    %4358 = vmatprep.subr.mxu0 0.0
    %4359 = vmatpush1.xpose.msra.mxu0 0.0
    %4360 = vmatprep.subr.mxu0 0.0
    %4361 = vmatpush1.xpose.msra.mxu0 0.0
    %4362 = vmatprep.subr.mxu0 0.0
    %4363 = vmatpush1.xpose.msra.mxu0 0.0
    %4364 = vmatprep.subr.mxu0 0.0
    %4365 = vmatpush1.xpose.msra.mxu0 0.0
    %4366 = vmatprep.mubr.f32.mxu0 0.0
    %4367 = vmatmul.mubr.f32.gmra.mrb[0].mxu0 %v4298
    %v4368 = vpop.f32.mrb[0].mxu0
    %v4369 = vadd.f32 %v265, %v4368
    %v4370 = vpop.f32.mrb[0].mxu0
    %4371 = vdwg.mxu0
    %4373 = vrot.lane.b32.xlu0 %v4292, 96
    %v4374 = vpop.permute.xlu0 %4373
    %v4375 = vsel %vm178, %v4292, 0
    %v4377 = vsel %vm178, %v4374, 0
    %4379 = vmatprep.subr.mxu0 0.0
    %4380 = vmatpush1.xpose.msra.mxu0 %v4377
    %4381 = vmatprep.subr.mxu0 0.0
    %4382 = vmatpush1.xpose.msra.mxu0 0.0
    %4383 = vmatprep.subr.mxu0 0.0
    %4384 = vmatpush1.xpose.msra.mxu0 0.0
    %4385 = vmatprep.subr.mxu0 0.0
    %4386 = vmatpush1.xpose.msra.mxu0 0.0
    %4387 = vmatprep.subr.mxu0 0.0
    %4388 = vmatpush1.xpose.msra.mxu0 0.0
    %4389 = vmatprep.subr.mxu0 0.0
    %4390 = vmatpush1.xpose.msra.mxu0 0.0
    %4391 = vmatprep.subr.mxu0 0.0
    %4392 = vmatpush1.xpose.msra.mxu0 0.0
    %4393 = vmatprep.subr.mxu0 0.0
    %4394 = vmatpush1.xpose.msra.mxu0 0.0
    %4395 = vmatprep.subr.mxu0 0.0
    %4396 = vmatpush1.xpose.msra.mxu0 0.0
    %4397 = vmatprep.subr.mxu0 0.0
    %4398 = vmatpush1.xpose.msra.mxu0 0.0
    %4399 = vmatprep.subr.mxu0 0.0
    %4400 = vmatpush1.xpose.msra.mxu0 0.0
    %4401 = vmatprep.subr.mxu0 0.0
    %4402 = vmatpush1.xpose.msra.mxu0 0.0
    %4403 = vmatprep.subr.mxu0 0.0
    %4404 = vmatpush1.xpose.msra.mxu0 0.0
    %4405 = vmatprep.subr.mxu0 0.0
    %4406 = vmatpush1.xpose.msra.mxu0 0.0
    %4407 = vmatprep.subr.mxu0 0.0
    %4408 = vmatpush1.xpose.msra.mxu0 0.0
    %4409 = vmatprep.subr.mxu0 0.0
    %4410 = vmatpush1.xpose.msra.mxu0 0.0
    %4411 = vmatprep.subr.mxu0 0.0
    %4412 = vmatpush1.xpose.msra.mxu0 0.0
    %4413 = vmatprep.subr.mxu0 0.0
    %4414 = vmatpush1.xpose.msra.mxu0 0.0
    %4415 = vmatprep.subr.mxu0 0.0
    %4416 = vmatpush1.xpose.msra.mxu0 0.0
    %4417 = vmatprep.subr.mxu0 0.0
    %4418 = vmatpush1.xpose.msra.mxu0 0.0
    %4419 = vmatprep.subr.mxu0 0.0
    %4420 = vmatpush1.xpose.msra.mxu0 0.0
    %4421 = vmatprep.subr.mxu0 0.0
    %4422 = vmatpush1.xpose.msra.mxu0 0.0
    %4423 = vmatprep.subr.mxu0 0.0
    %4424 = vmatpush1.xpose.msra.mxu0 0.0
    %4425 = vmatprep.subr.mxu0 0.0
    %4426 = vmatpush1.xpose.msra.mxu0 0.0
    %4427 = vmatprep.subr.mxu0 0.0
    %4428 = vmatpush1.xpose.msra.mxu0 0.0
    %4429 = vmatprep.subr.mxu0 0.0
    %4430 = vmatpush1.xpose.msra.mxu0 0.0
    %4431 = vmatprep.subr.mxu0 0.0
    %4432 = vmatpush1.xpose.msra.mxu0 0.0
    %4433 = vmatprep.subr.mxu0 0.0
    %4434 = vmatpush1.xpose.msra.mxu0 0.0
    %4435 = vmatprep.subr.mxu0 0.0
    %4436 = vmatpush1.xpose.msra.mxu0 0.0
    %4437 = vmatprep.subr.mxu0 0.0
    %4438 = vmatpush1.xpose.msra.mxu0 0.0
    %4439 = vmatprep.subr.mxu0 0.0
    %4440 = vmatpush1.xpose.msra.mxu0 0.0
    %4441 = vmatprep.subr.mxu0 0.0
    %4442 = vmatpush1.xpose.msra.mxu0 0.0
    %4443 = vmatprep.mubr.f32.mxu0 0.0
    %4444 = vmatmul.mubr.f32.gmra.mrb[0].mxu0 %v4375
    %v4445 = vpop.f32.mrb[0].mxu0
    %v4446 = vadd.f32 %v269, %v4445
    %v4447 = vpop.f32.mrb[0].mxu0
    %4448 = vdwg.mxu0
    %v4449 = vsel %vm426, %v4369, -inf
    %4450 = vmax.xlane.f32.xlu0 %v4449
    %v4451 = vpop.xlane.xlu0 %4450
    %v4452 = vsel %vm426, %v4446, -inf
    %4453 = vmax.xlane.f32.xlu0 %v4452
    %v4454 = vpop.xlane.xlu0 %4453
    %v4455 = vsub.f32 %v4369, %v4451
    %v4456 = vsub.f32 %v4446, %v4454
    %v4457 = vmul.f32 %v4455, 1.442695
    %v4458 = vpow.pop %v4457
    %v4459 = vmul.f32 %v4456, 1.442695
    %v4460 = vpow.pop %v4459
    %v4461 = vsel %vm426, %v4458, 0.0
    %4462 = vadd.xlane.f32.xlu0 %v4461
    %v4463 = vpop.xlane.xlu0 %4462
    %v4464 = vsel %vm426, %v4460, 0.0
    %4465 = vadd.xlane.f32.xlu0 %v4464
    %v4466 = vpop.xlane.xlu0 %4465
    %v4467 = vrcp.pop %v4463
    %v4468 = vrcp.pop %v4466
    %v4469 = vmul.f32 %v4458, %v4467
    %v4470 = vmul.f32 %v4460, %v4468
    %4471 = vrot.lane.b32.xlu0 %v4287, 64
    %v4472 = vpop.permute.xlu0 %4471
    %v4475 = vsel %vm426, %v4469, 0
    %4477 = vmatprep.subr.mxu0 0.0
    %4478 = vmatpush1.msra.mxu0 %v4472
    %4479 = vmatprep.subr.mxu0 0.0
    %4480 = vmatpush1.msra.mxu0 0.0
    %4481 = vmatprep.subr.mxu0 0.0
    %4482 = vmatpush1.msra.mxu0 0.0
    %4483 = vmatprep.subr.mxu0 0.0
    %4484 = vmatpush1.msra.mxu0 0.0
    %4485 = vmatprep.subr.mxu0 0.0
    %4486 = vmatpush1.msra.mxu0 0.0
    %4487 = vmatprep.subr.mxu0 0.0
    %4488 = vmatpush1.msra.mxu0 0.0
    %4489 = vmatprep.subr.mxu0 0.0
    %4490 = vmatpush1.msra.mxu0 0.0
    %4491 = vmatprep.subr.mxu0 0.0
    %4492 = vmatpush1.msra.mxu0 0.0
    %4493 = vmatprep.subr.mxu0 0.0
    %4494 = vmatpush1.msra.mxu0 0.0
    %4495 = vmatprep.subr.mxu0 0.0
    %4496 = vmatpush1.msra.mxu0 0.0
    %4497 = vmatprep.subr.mxu0 0.0
    %4498 = vmatpush1.msra.mxu0 0.0
    %4499 = vmatprep.subr.mxu0 0.0
    %4500 = vmatpush1.msra.mxu0 0.0
    %4501 = vmatprep.subr.mxu0 0.0
    %4502 = vmatpush1.msra.mxu0 0.0
    %4503 = vmatprep.subr.mxu0 0.0
    %4504 = vmatpush1.msra.mxu0 0.0
    %4505 = vmatprep.subr.mxu0 0.0
    %4506 = vmatpush1.msra.mxu0 0.0
    %4507 = vmatprep.subr.mxu0 0.0
    %4508 = vmatpush1.msra.mxu0 0.0
    %4509 = vmatprep.subr.mxu0 0.0
    %4510 = vmatpush1.msra.mxu0 0.0
    %4511 = vmatprep.subr.mxu0 0.0
    %4512 = vmatpush1.msra.mxu0 0.0
    %4513 = vmatprep.subr.mxu0 0.0
    %4514 = vmatpush1.msra.mxu0 0.0
    %4515 = vmatprep.subr.mxu0 0.0
    %4516 = vmatpush1.msra.mxu0 0.0
    %4517 = vmatprep.subr.mxu0 0.0
    %4518 = vmatpush1.msra.mxu0 0.0
    %4519 = vmatprep.subr.mxu0 0.0
    %4520 = vmatpush1.msra.mxu0 0.0
    %4521 = vmatprep.subr.mxu0 0.0
    %4522 = vmatpush1.msra.mxu0 0.0
    %4523 = vmatprep.subr.mxu0 0.0
    %4524 = vmatpush1.msra.mxu0 0.0
    %4525 = vmatprep.subr.mxu0 0.0
    %4526 = vmatpush1.msra.mxu0 0.0
    %4527 = vmatprep.subr.mxu0 0.0
    %4528 = vmatpush1.msra.mxu0 0.0
    %4529 = vmatprep.subr.mxu0 0.0
    %4530 = vmatpush1.msra.mxu0 0.0
    %4531 = vmatprep.subr.mxu0 0.0
    %4532 = vmatpush1.msra.mxu0 0.0
    %4533 = vmatprep.subr.mxu0 0.0
    %4534 = vmatpush1.msra.mxu0 0.0
    %4535 = vmatprep.subr.mxu0 0.0
    %4536 = vmatpush1.msra.mxu0 0.0
    %4537 = vmatprep.subr.mxu0 0.0
    %4538 = vmatpush1.msra.mxu0 0.0
    %4539 = vmatprep.subr.mxu0 0.0
    %4540 = vmatpush1.msra.mxu0 0.0
    %4541 = vmatprep.mubr.f32.mxu0 0.0
    %4542 = vmatmul.mubr.f32.gmra.mrb[0].mxu0 %v4475
    %v4543 = vpop.f32.mrb[0].mxu0
    %v4544 = vadd.f32 0.0, %v4543
    %v4545 = vpop.f32.mrb[0].mxu0
    %4546 = vdwg.mxu0
    %4547 = vrot.lane.b32.xlu0 %v4292, 64
    %v4548 = vpop.permute.xlu0 %4547
    %v4551 = vsel %vm426, %v4470, 0
    %4553 = vmatprep.subr.mxu0 0.0
    %4554 = vmatpush1.msra.mxu0 %v4548
    %4555 = vmatprep.subr.mxu0 0.0
    %4556 = vmatpush1.msra.mxu0 0.0
    %4557 = vmatprep.subr.mxu0 0.0
    %4558 = vmatpush1.msra.mxu0 0.0
    %4559 = vmatprep.subr.mxu0 0.0
    %4560 = vmatpush1.msra.mxu0 0.0
    %4561 = vmatprep.subr.mxu0 0.0
    %4562 = vmatpush1.msra.mxu0 0.0
    %4563 = vmatprep.subr.mxu0 0.0
    %4564 = vmatpush1.msra.mxu0 0.0
    %4565 = vmatprep.subr.mxu0 0.0
    %4566 = vmatpush1.msra.mxu0 0.0
    %4567 = vmatprep.subr.mxu0 0.0
    %4568 = vmatpush1.msra.mxu0 0.0
    %4569 = vmatprep.subr.mxu0 0.0
    %4570 = vmatpush1.msra.mxu0 0.0
    %4571 = vmatprep.subr.mxu0 0.0
    %4572 = vmatpush1.msra.mxu0 0.0
    %4573 = vmatprep.subr.mxu0 0.0
    %4574 = vmatpush1.msra.mxu0 0.0
    %4575 = vmatprep.subr.mxu0 0.0
    %4576 = vmatpush1.msra.mxu0 0.0
    %4577 = vmatprep.subr.mxu0 0.0
    %4578 = vmatpush1.msra.mxu0 0.0
    %4579 = vmatprep.subr.mxu0 0.0
    %4580 = vmatpush1.msra.mxu0 0.0
    %4581 = vmatprep.subr.mxu0 0.0
    %4582 = vmatpush1.msra.mxu0 0.0
    %4583 = vmatprep.subr.mxu0 0.0
    %4584 = vmatpush1.msra.mxu0 0.0
    %4585 = vmatprep.subr.mxu0 0.0
    %4586 = vmatpush1.msra.mxu0 0.0
    %4587 = vmatprep.subr.mxu0 0.0
    %4588 = vmatpush1.msra.mxu0 0.0
    %4589 = vmatprep.subr.mxu0 0.0
    %4590 = vmatpush1.msra.mxu0 0.0
    %4591 = vmatprep.subr.mxu0 0.0
    %4592 = vmatpush1.msra.mxu0 0.0
    %4593 = vmatprep.subr.mxu0 0.0
    %4594 = vmatpush1.msra.mxu0 0.0
    %4595 = vmatprep.subr.mxu0 0.0
    %4596 = vmatpush1.msra.mxu0 0.0
    %4597 = vmatprep.subr.mxu0 0.0
    %4598 = vmatpush1.msra.mxu0 0.0
    %4599 = vmatprep.subr.mxu0 0.0
    %4600 = vmatpush1.msra.mxu0 0.0
    %4601 = vmatprep.subr.mxu0 0.0
    %4602 = vmatpush1.msra.mxu0 0.0
    %4603 = vmatprep.subr.mxu0 0.0
    %4604 = vmatpush1.msra.mxu0 0.0
    %4605 = vmatprep.subr.mxu0 0.0
    %4606 = vmatpush1.msra.mxu0 0.0
    %4607 = vmatprep.subr.mxu0 0.0
    %4608 = vmatpush1.msra.mxu0 0.0
    %4609 = vmatprep.subr.mxu0 0.0
    %4610 = vmatpush1.msra.mxu0 0.0
    %4611 = vmatprep.subr.mxu0 0.0
    %4612 = vmatpush1.msra.mxu0 0.0
    %4613 = vmatprep.subr.mxu0 0.0
    %4614 = vmatpush1.msra.mxu0 0.0
    %4615 = vmatprep.subr.mxu0 0.0
    %4616 = vmatpush1.msra.mxu0 0.0
    %4617 = vmatprep.mubr.f32.mxu0 0.0
    %4618 = vmatmul.mubr.f32.gmra.mrb[0].mxu0 %v4551
    %v4619 = vpop.f32.mrb[0].mxu0
    %v4620 = vadd.f32 0.0, %v4619
    %v4621 = vpop.f32.mrb[0].mxu0
    %4622 = vdwg.mxu0
    %s4623 = scalar_lea.vmem %s4, 160
    %v4624 = vld [vmem:[%s4623] sm:$0xff]
    %v4625 = vld [vmem:[%s4623 + $0x8] sm:$0xff]
    %v4626 = vld [vmem:[%s4623 + $0x10] sm:$0xff]
    %v4627 = vld [vmem:[%s4623 + $0x18] sm:$0xff]
    %s4628 = scalar_lea.vmem [#allocation8], 5
    %v4629 = vld [vmem:[%s4628] sm:$0x1]
    %v4631 = vlaneseq
    %v4632 = vshrl.u32 %v4631, 7
    %v4633 = vsub.s32 0, %v4632
    %v4634 = vrot.slane %v4629, %v4633
    %v4637 = vsel %vm178, %v4544, 0
    %v4640 = vsel %vm178, %v4620, 0
    %4642 = vmatprep.subr.mxu0 0.0
    %4643 = vmatpush1.msra.mxu0 %v4624
    %4644 = vmatprep.subr.mxu0 0.0
    %4645 = vmatpush1.msra.mxu0 %v4625
    %4646 = vmatprep.subr.mxu0 0.0
    %4647 = vmatpush1.msra.mxu0 %v4626
    %4648 = vmatprep.subr.mxu0 0.0
    %4649 = vmatpush1.msra.mxu0 %v4627
    %4650 = vmatprep.subr.mxu0 0.0
    %4651 = vmatpush1.msra.mxu0 0.0
    %4652 = vmatprep.subr.mxu0 0.0
    %4653 = vmatpush1.msra.mxu0 0.0
    %4654 = vmatprep.subr.mxu0 0.0
    %4655 = vmatpush1.msra.mxu0 0.0
    %4656 = vmatprep.subr.mxu0 0.0
    %4657 = vmatpush1.msra.mxu0 0.0
    %4658 = vmatprep.subr.mxu0 0.0
    %4659 = vmatpush1.msra.mxu0 0.0
    %4660 = vmatprep.subr.mxu0 0.0
    %4661 = vmatpush1.msra.mxu0 0.0
    %4662 = vmatprep.subr.mxu0 0.0
    %4663 = vmatpush1.msra.mxu0 0.0
    %4664 = vmatprep.subr.mxu0 0.0
    %4665 = vmatpush1.msra.mxu0 0.0
    %4666 = vmatprep.subr.mxu0 0.0
    %4667 = vmatpush1.msra.mxu0 0.0
    %4668 = vmatprep.subr.mxu0 0.0
    %4669 = vmatpush1.msra.mxu0 0.0
    %4670 = vmatprep.subr.mxu0 0.0
    %4671 = vmatpush1.msra.mxu0 0.0
    %4672 = vmatprep.subr.mxu0 0.0
    %4673 = vmatpush1.msra.mxu0 0.0
    %4674 = vmatprep.subr.mxu0 0.0
    %4675 = vmatpush1.msra.mxu0 0.0
    %4676 = vmatprep.subr.mxu0 0.0
    %4677 = vmatpush1.msra.mxu0 0.0
    %4678 = vmatprep.subr.mxu0 0.0
    %4679 = vmatpush1.msra.mxu0 0.0
    %4680 = vmatprep.subr.mxu0 0.0
    %4681 = vmatpush1.msra.mxu0 0.0
    %4682 = vmatprep.subr.mxu0 0.0
    %4683 = vmatpush1.msra.mxu0 0.0
    %4684 = vmatprep.subr.mxu0 0.0
    %4685 = vmatpush1.msra.mxu0 0.0
    %4686 = vmatprep.subr.mxu0 0.0
    %4687 = vmatpush1.msra.mxu0 0.0
    %4688 = vmatprep.subr.mxu0 0.0
    %4689 = vmatpush1.msra.mxu0 0.0
    %4690 = vmatprep.subr.mxu0 0.0
    %4691 = vmatpush1.msra.mxu0 0.0
    %4692 = vmatprep.subr.mxu0 0.0
    %4693 = vmatpush1.msra.mxu0 0.0
    %4694 = vmatprep.subr.mxu0 0.0
    %4695 = vmatpush1.msra.mxu0 0.0
    %4696 = vmatprep.subr.mxu0 0.0
    %4697 = vmatpush1.msra.mxu0 0.0
    %4698 = vmatprep.subr.mxu0 0.0
    %4699 = vmatpush1.msra.mxu0 0.0
    %4700 = vmatprep.subr.mxu0 0.0
    %4701 = vmatpush1.msra.mxu0 0.0
    %4702 = vmatprep.subr.mxu0 0.0
    %4703 = vmatpush1.msra.mxu0 0.0
    %4704 = vmatprep.subr.mxu0 0.0
    %4705 = vmatpush1.msra.mxu0 0.0
    %4706 = vmatprep.mubr.f32.mxu0 0.0
    %4707 = vmatmul.mubr.f32.gmra.mrb[0].mxu0 %v4637
    %v4708 = vpop.f32.mrb[0].mxu0
    %v4709 = vadd.f32 %v4634, %v4708
    %v4710 = vpop.f32.mrb[0].mxu0
    %4711 = vmatprep.mubr.f32.mxu0 0.0
    %4712 = vmatmul.mubr.f32.gmra.mrb[0].mxu0 %v4640
    %v4713 = vpop.f32.mrb[0].mxu0
    %v4714 = vadd.f32 %v4634, %v4713
    %v4715 = vpop.f32.mrb[0].mxu0
    %4716 = vdwg.mxu0
    %v4717 = vadd.f32 %v4199, %v4709
    %v4718 = vadd.f32 %v4200, %v4714
    %v4719 = vsel %vm178, %v4717, 0.0
    %4720 = vadd.xlane.f32.xlu0 %v4719
    %v4721 = vpop.xlane.xlu0 %4720
    %v4722 = vsel %vm178, %v4718, 0.0
    %4723 = vadd.xlane.f32.xlu0 %v4722
    %v4724 = vpop.xlane.xlu0 %4723
    %v4725 = vmul.f32 %v4721, %v701
    %v4726 = vmul.f32 %v4724, %v701
    %v4727 = vsub.f32 %v4717, %v4725
    %v4728 = vsub.f32 %v4718, %v4726
    %v4729 = vmul.f32 %v4727, %v4727
    %v4730 = vmul.f32 %v4728, %v4728
    %v4731 = vsel %vm178, %v4729, 0.0
    %4732 = vadd.xlane.f32.xlu0 %v4731
    %v4733 = vpop.xlane.xlu0 %4732
    %v4734 = vsel %vm178, %v4730, 0.0
    %4735 = vadd.xlane.f32.xlu0 %v4734
    %v4736 = vpop.xlane.xlu0 %4735
    %v4737 = vmul.f32 %v4733, %v701
    %v4738 = vmul.f32 %v4736, %v701
    %v4739 = vadd.f32 %v4737, 1e-05
    %v4740 = vadd.f32 %v4738, 1e-05
    %v4741 = vrsqrt.pop %v4739
    %v4742 = vrsqrt.pop %v4740
    %v4743 = vmul.f32 %v4727, %v4741
    %v4744 = vmul.f32 %v4728, %v4742
    %s4745 = scalar_lea.vmem [#allocation10], 5
    %v4746 = vld [vmem:[%s4745] sm:$0x1]
    %v4748 = vlaneseq
    %v4749 = vshrl.u32 %v4748, 7
    %v4750 = vsub.s32 0, %v4749
    %v4751 = vrot.slane %v4746, %v4750
    %v4753 = vmul.f32 %v4743, %v4751
    %v4754 = vmul.f32 %v4744, %v4751
    %s4755 = scalar_lea.vmem [#allocation11], 5
    %v4756 = vld [vmem:[%s4755] sm:$0x1]
    %v4758 = vlaneseq
    %v4759 = vshrl.u32 %v4758, 7
    %v4760 = vsub.s32 0, %v4759
    %v4761 = vrot.slane %v4756, %v4760
    %v4763 = vadd.f32 %v4753, %v4761
    %v4764 = vadd.f32 %v4754, %v4761
    %s4765 = scalar_lea.vmem %s8, 160
    %v4766 = vld [vmem:[%s4765] sm:$0xff]
    %v4767 = vld [vmem:[%s4765 + $0x8] sm:$0xff]
    %v4768 = vld [vmem:[%s4765 + $0x10] sm:$0xff]
    %v4769 = vld [vmem:[%s4765 + $0x18] sm:$0xff]
    %s4770 = scalar_lea.vmem [#allocation13], 5
    %v4771 = vld [vmem:[%s4770] sm:$0x1]
    %v4773 = vlaneseq
    %v4774 = vshrl.u32 %v4773, 7
    %v4775 = vsub.s32 0, %v4774
    %v4776 = vrot.slane %v4771, %v4775
    %v4779 = vsel %vm178, %v4763, 0
    %v4782 = vsel %vm178, %v4764, 0
    %4784 = vmatprep.subr.mxu0 0.0
    %4785 = vmatpush1.msra.mxu0 %v4766
    %4786 = vmatprep.subr.mxu0 0.0
    %4787 = vmatpush1.msra.mxu0 %v4767
    %4788 = vmatprep.subr.mxu0 0.0
    %4789 = vmatpush1.msra.mxu0 %v4768
    %4790 = vmatprep.subr.mxu0 0.0
    %4791 = vmatpush1.msra.mxu0 %v4769
    %4792 = vmatprep.subr.mxu0 0.0
    %4793 = vmatpush1.msra.mxu0 0.0
    %4794 = vmatprep.subr.mxu0 0.0
    %4795 = vmatpush1.msra.mxu0 0.0
    %4796 = vmatprep.subr.mxu0 0.0
    %4797 = vmatpush1.msra.mxu0 0.0
    %4798 = vmatprep.subr.mxu0 0.0
    %4799 = vmatpush1.msra.mxu0 0.0
    %4800 = vmatprep.subr.mxu0 0.0
    %4801 = vmatpush1.msra.mxu0 0.0
    %4802 = vmatprep.subr.mxu0 0.0
    %4803 = vmatpush1.msra.mxu0 0.0
    %4804 = vmatprep.subr.mxu0 0.0
    %4805 = vmatpush1.msra.mxu0 0.0
    %4806 = vmatprep.subr.mxu0 0.0
    %4807 = vmatpush1.msra.mxu0 0.0
    %4808 = vmatprep.subr.mxu0 0.0
    %4809 = vmatpush1.msra.mxu0 0.0
    %4810 = vmatprep.subr.mxu0 0.0
    %4811 = vmatpush1.msra.mxu0 0.0
    %4812 = vmatprep.subr.mxu0 0.0
    %4813 = vmatpush1.msra.mxu0 0.0
    %4814 = vmatprep.subr.mxu0 0.0
    %4815 = vmatpush1.msra.mxu0 0.0
    %4816 = vmatprep.subr.mxu0 0.0
    %4817 = vmatpush1.msra.mxu0 0.0
    %4818 = vmatprep.subr.mxu0 0.0
    %4819 = vmatpush1.msra.mxu0 0.0
    %4820 = vmatprep.subr.mxu0 0.0
    %4821 = vmatpush1.msra.mxu0 0.0
    %4822 = vmatprep.subr.mxu0 0.0
    %4823 = vmatpush1.msra.mxu0 0.0
    %4824 = vmatprep.subr.mxu0 0.0
    %4825 = vmatpush1.msra.mxu0 0.0
    %4826 = vmatprep.subr.mxu0 0.0
    %4827 = vmatpush1.msra.mxu0 0.0
    %4828 = vmatprep.subr.mxu0 0.0
    %4829 = vmatpush1.msra.mxu0 0.0
    %4830 = vmatprep.subr.mxu0 0.0
    %4831 = vmatpush1.msra.mxu0 0.0
    %4832 = vmatprep.subr.mxu0 0.0
    %4833 = vmatpush1.msra.mxu0 0.0
    %4834 = vmatprep.subr.mxu0 0.0
    %4835 = vmatpush1.msra.mxu0 0.0
    %4836 = vmatprep.subr.mxu0 0.0
    %4837 = vmatpush1.msra.mxu0 0.0
    %4838 = vmatprep.subr.mxu0 0.0
    %4839 = vmatpush1.msra.mxu0 0.0
    %4840 = vmatprep.subr.mxu0 0.0
    %4841 = vmatpush1.msra.mxu0 0.0
    %4842 = vmatprep.subr.mxu0 0.0
    %4843 = vmatpush1.msra.mxu0 0.0
    %4844 = vmatprep.subr.mxu0 0.0
    %4845 = vmatpush1.msra.mxu0 0.0
    %4846 = vmatprep.subr.mxu0 0.0
    %4847 = vmatpush1.msra.mxu0 0.0
    %4848 = vmatprep.mubr.f32.mxu0 0.0
    %4849 = vmatmul.mubr.f32.gmra.mrb[0].mxu0 %v4779
    %v4850 = vpop.f32.mrb[0].mxu0
    %v4851 = vadd.f32 %v4776, %v4850
    %v4852 = vpop.f32.mrb[0].mxu0
    %4853 = vmatprep.mubr.f32.mxu0 0.0
    %4854 = vmatmul.mubr.f32.gmra.mrb[0].mxu0 %v4782
    %v4855 = vpop.f32.mrb[0].mxu0
    %v4856 = vadd.f32 %v4776, %v4855
    %v4857 = vpop.f32.mrb[0].mxu0
    %4858 = vdwg.mxu0
    %v4859 = vmax.f32 %v4851, 0.0
    %v4860 = vmax.f32 %v4856, 0.0
    %s4861 = scalar_lea.vmem %s10, 320
    %v4862 = vld [vmem:[%s4861] sm:$0xff]
    %v4863 = vld [vmem:[%s4861 + $0x8] sm:$0xff]
    %v4864 = vld [vmem:[%s4861 + $0x10] sm:$0xff]
    %v4865 = vld [vmem:[%s4861 + $0x18] sm:$0xff]
    %v4866 = vld [vmem:[%s4861 + $0x20] sm:$0xff]
    %v4867 = vld [vmem:[%s4861 + $0x28] sm:$0xff]
    %v4868 = vld [vmem:[%s4861 + $0x30] sm:$0xff]
    %v4869 = vld [vmem:[%s4861 + $0x38] sm:$0xff]
    %s4870 = scalar_lea.vmem [#allocation14], 5
    %v4871 = vld [vmem:[%s4870] sm:$0x1]
    %v4873 = vlaneseq
    %v4874 = vshrl.u32 %v4873, 7
    %v4875 = vsub.s32 0, %v4874
    %v4876 = vrot.slane %v4871, %v4875
    %v4879 = vsel %vm849, %v4859, 0
    %v4882 = vsel %vm849, %v4860, 0
    %4884 = vmatprep.subr.mxu0 0.0
    %4885 = vmatpush1.msra.mxu0 %v4862
    %4886 = vmatprep.subr.mxu0 0.0
    %4887 = vmatpush1.msra.mxu0 %v4863
    %4888 = vmatprep.subr.mxu0 0.0
    %4889 = vmatpush1.msra.mxu0 %v4864
    %4890 = vmatprep.subr.mxu0 0.0
    %4891 = vmatpush1.msra.mxu0 %v4865
    %4892 = vmatprep.subr.mxu0 0.0
    %4893 = vmatpush1.msra.mxu0 %v4866
    %4894 = vmatprep.subr.mxu0 0.0
    %4895 = vmatpush1.msra.mxu0 %v4867
    %4896 = vmatprep.subr.mxu0 0.0
    %4897 = vmatpush1.msra.mxu0 %v4868
    %4898 = vmatprep.subr.mxu0 0.0
    %4899 = vmatpush1.msra.mxu0 %v4869
    %4900 = vmatprep.subr.mxu0 0.0
    %4901 = vmatpush1.msra.mxu0 0.0
    %4902 = vmatprep.subr.mxu0 0.0
    %4903 = vmatpush1.msra.mxu0 0.0
    %4904 = vmatprep.subr.mxu0 0.0
    %4905 = vmatpush1.msra.mxu0 0.0
    %4906 = vmatprep.subr.mxu0 0.0
    %4907 = vmatpush1.msra.mxu0 0.0
    %4908 = vmatprep.subr.mxu0 0.0
    %4909 = vmatpush1.msra.mxu0 0.0
    %4910 = vmatprep.subr.mxu0 0.0
    %4911 = vmatpush1.msra.mxu0 0.0
    %4912 = vmatprep.subr.mxu0 0.0
    %4913 = vmatpush1.msra.mxu0 0.0
    %4914 = vmatprep.subr.mxu0 0.0
    %4915 = vmatpush1.msra.mxu0 0.0
    %4916 = vmatprep.subr.mxu0 0.0
    %4917 = vmatpush1.msra.mxu0 0.0
    %4918 = vmatprep.subr.mxu0 0.0
    %4919 = vmatpush1.msra.mxu0 0.0
    %4920 = vmatprep.subr.mxu0 0.0
    %4921 = vmatpush1.msra.mxu0 0.0
    %4922 = vmatprep.subr.mxu0 0.0
    %4923 = vmatpush1.msra.mxu0 0.0
    %4924 = vmatprep.subr.mxu0 0.0
    %4925 = vmatpush1.msra.mxu0 0.0
    %4926 = vmatprep.subr.mxu0 0.0
    %4927 = vmatpush1.msra.mxu0 0.0
    %4928 = vmatprep.subr.mxu0 0.0
    %4929 = vmatpush1.msra.mxu0 0.0
    %4930 = vmatprep.subr.mxu0 0.0
    %4931 = vmatpush1.msra.mxu0 0.0
    %4932 = vmatprep.subr.mxu0 0.0
    %4933 = vmatpush1.msra.mxu0 0.0
    %4934 = vmatprep.subr.mxu0 0.0
    %4935 = vmatpush1.msra.mxu0 0.0
    %4936 = vmatprep.subr.mxu0 0.0
    %4937 = vmatpush1.msra.mxu0 0.0
    %4938 = vmatprep.subr.mxu0 0.0
    %4939 = vmatpush1.msra.mxu0 0.0
    %4940 = vmatprep.subr.mxu0 0.0
    %4941 = vmatpush1.msra.mxu0 0.0
    %4942 = vmatprep.subr.mxu0 0.0
    %4943 = vmatpush1.msra.mxu0 0.0
    %4944 = vmatprep.subr.mxu0 0.0
    %4945 = vmatpush1.msra.mxu0 0.0
    %4946 = vmatprep.subr.mxu0 0.0
    %4947 = vmatpush1.msra.mxu0 0.0
    %4948 = vmatprep.mubr.f32.mxu0 0.0
    %4949 = vmatmul.mubr.f32.gmra.mrb[0].mxu0 %v4879
    %v4950 = vpop.f32.mrb[0].mxu0
    %v4951 = vadd.f32 %v4876, %v4950
    %v4952 = vpop.f32.mrb[0].mxu0
    %4953 = vmatprep.mubr.f32.mxu0 0.0
    %4954 = vmatmul.mubr.f32.gmra.mrb[0].mxu0 %v4882
    %v4955 = vpop.f32.mrb[0].mxu0
    %v4956 = vadd.f32 %v4876, %v4955
    %v4957 = vpop.f32.mrb[0].mxu0
    %4958 = vdwg.mxu0
    %v4959 = vadd.f32 %v4763, %v4951
    %v4960 = vadd.f32 %v4764, %v4956
    %v4961 = vsel %vm178, %v4959, 0.0
    %4962 = vadd.xlane.f32.xlu0 %v4961
    %v4963 = vpop.xlane.xlu0 %4962
    %v4964 = vsel %vm178, %v4960, 0.0
    %4965 = vadd.xlane.f32.xlu0 %v4964
    %v4966 = vpop.xlane.xlu0 %4965
    %v4967 = vmul.f32 %v4963, %v701
    %v4968 = vmul.f32 %v4966, %v701
    %v4969 = vsub.f32 %v4959, %v4967
    %v4970 = vsub.f32 %v4960, %v4968
    %v4971 = vmul.f32 %v4969, %v4969
    %v4972 = vmul.f32 %v4970, %v4970
    %v4973 = vsel %vm178, %v4971, 0.0
    %4974 = vadd.xlane.f32.xlu0 %v4973
    %v4975 = vpop.xlane.xlu0 %4974
    %v4976 = vsel %vm178, %v4972, 0.0
    %4977 = vadd.xlane.f32.xlu0 %v4976
    %v4978 = vpop.xlane.xlu0 %4977
    %v4979 = vmul.f32 %v4975, %v701
    %v4980 = vmul.f32 %v4978, %v701
    %v4981 = vadd.f32 %v4979, 1e-05
    %v4982 = vadd.f32 %v4980, 1e-05
    %v4983 = vrsqrt.pop %v4981
    %v4984 = vrsqrt.pop %v4982
    %v4985 = vmul.f32 %v4969, %v4983
    %v4986 = vmul.f32 %v4970, %v4984
    %s4987 = scalar_lea.vmem %s12, 5
    %v4988 = vld [vmem:[%s4987] sm:$0x1]
    %v4990 = vlaneseq
    %v4991 = vshrl.u32 %v4990, 7
    %v4992 = vsub.s32 0, %v4991
    %v4993 = vrot.slane %v4988, %v4992
    %v4995 = vmul.f32 %v4985, %v4993
    %v4996 = vmul.f32 %v4986, %v4993
    %s4997 = scalar_lea.vmem %s13, 5
    %v4998 = vld [vmem:[%s4997] sm:$0x1]
    %v5000 = vlaneseq
    %v5001 = vshrl.u32 %v5000, 7
    %v5002 = vsub.s32 0, %v5001
    %v5003 = vrot.slane %v4998, %v5002
    %v5005 = vadd.f32 %v4995, %v5003
    %v5006 = vadd.f32 %v4996, %v5003
    %v5007 = vld [vmem:[%s14] sm:$0xff]
    %v5008 = vld [vmem:[%s14 + $0x8] sm:$0xff]
    %v5009 = vld [vmem:[%s14 + $0x10] sm:$0xff]
    %v5010 = vld [vmem:[%s14 + $0x18] sm:$0xff]
    %v5011 = vld [vmem:[%s15] sm:$0x1]
    %v5013 = vlaneseq
    %v5014 = vshrl.u32 %v5013, 7
    %v5015 = vsub.s32 0, %v5014
    %v5016 = vrot.slane %v5011, %v5015
    %v5019 = vsel %vm178, %v5005, 0
    %v5022 = vsel %vm178, %v5006, 0
    %5024 = vmatprep.subr.mxu0 0.0
    %5025 = vmatpush1.msra.mxu0 %v5007
    %5026 = vmatprep.subr.mxu0 0.0
    %5027 = vmatpush1.msra.mxu0 %v5008
    %5028 = vmatprep.subr.mxu0 0.0
    %5029 = vmatpush1.msra.mxu0 %v5009
    %5030 = vmatprep.subr.mxu0 0.0
    %5031 = vmatpush1.msra.mxu0 %v5010
    %5032 = vmatprep.subr.mxu0 0.0
    %5033 = vmatpush1.msra.mxu0 0.0
    %5034 = vmatprep.subr.mxu0 0.0
    %5035 = vmatpush1.msra.mxu0 0.0
    %5036 = vmatprep.subr.mxu0 0.0
    %5037 = vmatpush1.msra.mxu0 0.0
    %5038 = vmatprep.subr.mxu0 0.0
    %5039 = vmatpush1.msra.mxu0 0.0
    %5040 = vmatprep.subr.mxu0 0.0
    %5041 = vmatpush1.msra.mxu0 0.0
    %5042 = vmatprep.subr.mxu0 0.0
    %5043 = vmatpush1.msra.mxu0 0.0
    %5044 = vmatprep.subr.mxu0 0.0
    %5045 = vmatpush1.msra.mxu0 0.0
    %5046 = vmatprep.subr.mxu0 0.0
    %5047 = vmatpush1.msra.mxu0 0.0
    %5048 = vmatprep.subr.mxu0 0.0
    %5049 = vmatpush1.msra.mxu0 0.0
    %5050 = vmatprep.subr.mxu0 0.0
    %5051 = vmatpush1.msra.mxu0 0.0
    %5052 = vmatprep.subr.mxu0 0.0
    %5053 = vmatpush1.msra.mxu0 0.0
    %5054 = vmatprep.subr.mxu0 0.0
    %5055 = vmatpush1.msra.mxu0 0.0
    %5056 = vmatprep.subr.mxu0 0.0
    %5057 = vmatpush1.msra.mxu0 0.0
    %5058 = vmatprep.subr.mxu0 0.0
    %5059 = vmatpush1.msra.mxu0 0.0
    %5060 = vmatprep.subr.mxu0 0.0
    %5061 = vmatpush1.msra.mxu0 0.0
    %5062 = vmatprep.subr.mxu0 0.0
    %5063 = vmatpush1.msra.mxu0 0.0
    %5064 = vmatprep.subr.mxu0 0.0
    %5065 = vmatpush1.msra.mxu0 0.0
    %5066 = vmatprep.subr.mxu0 0.0
    %5067 = vmatpush1.msra.mxu0 0.0
    %5068 = vmatprep.subr.mxu0 0.0
    %5069 = vmatpush1.msra.mxu0 0.0
    %5070 = vmatprep.subr.mxu0 0.0
    %5071 = vmatpush1.msra.mxu0 0.0
    %5072 = vmatprep.subr.mxu0 0.0
    %5073 = vmatpush1.msra.mxu0 0.0
    %5074 = vmatprep.subr.mxu0 0.0
    %5075 = vmatpush1.msra.mxu0 0.0
    %5076 = vmatprep.subr.mxu0 0.0
    %5077 = vmatpush1.msra.mxu0 0.0
    %5078 = vmatprep.subr.mxu0 0.0
    %5079 = vmatpush1.msra.mxu0 0.0
    %5080 = vmatprep.subr.mxu0 0.0
    %5081 = vmatpush1.msra.mxu0 0.0
    %5082 = vmatprep.subr.mxu0 0.0
    %5083 = vmatpush1.msra.mxu0 0.0
    %5084 = vmatprep.subr.mxu0 0.0
    %5085 = vmatpush1.msra.mxu0 0.0
    %5086 = vmatprep.subr.mxu0 0.0
    %5087 = vmatpush1.msra.mxu0 0.0
    %5088 = vmatprep.mubr.f32.mxu0 0.0
    %5089 = vmatmul.mubr.f32.gmra.mrb[0].mxu0 %v5019
    %v5090 = vpop.f32.mrb[0].mxu0
    %v5091 = vadd.f32 %v5016, %v5090
    %v5092 = vpop.f32.mrb[0].mxu0
    %5093 = vmatprep.mubr.f32.mxu0 0.0
    %5094 = vmatmul.mubr.f32.gmra.mrb[0].mxu0 %v5022
    %v5095 = vpop.f32.mrb[0].mxu0
    %v5096 = vadd.f32 %v5016, %v5095
    %v5097 = vpop.f32.mrb[0].mxu0
    %5098 = vdwg.mxu0
    %v5099 = vmax.f32 %v5091, 0.0
    %v5100 = vmax.f32 %v5096, 0.0
    %5101 = vst [vmem:[#allocation16] sm:$0xff] %v5099
    %5102 = vst [vmem:[#allocation16 + $0x8] sm:$0xff] %v5100
    // Predicated region
    $region98: #{tpu_custom_call.1} parent=1 // pred_check
      _
    $region99: #{tpu_custom_call.1} parent=1 // pred_check_branch
      %5104 = sbr.rel (0) target = $region101
    $region100: #{tpu_custom_call.1} parent=1 // pred_region
      %s5106 = ssub.s32 256, 256
      %5107 = vsyncadd [#allocation4], %s5106
      %s5108 = sshll.u32 [#allocation16], 4
      %s5109 = int_to_ptr.vmem [resolvable:$true] %s5108
      %5114 = dma.vmem_to_hbm [thread:$0]  %s5109, 256, %s16, [#allocation4], 128, 128, 8
    $region101: #{tpu_custom_call.1} parent=1 // pred_fallthru
      _
    // Predicated region
    $region102: #{tpu_custom_call.1} parent=1 // pred_check
      _
    $region103: #{tpu_custom_call.1} parent=1 // pred_check_branch
      %5116 = sbr.rel (0) target = $region105
    $region104: #{tpu_custom_call.1} parent=1 // pred_region
      %5117 = dma.done [#allocation4], 256
    $region105: #{tpu_custom_call.1} parent=1 // pred_fallthru
      _
    %5118 = vsyncpa [#allocation3], 1
    %5119 = vsyncpa [#allocation6], 1
    %5120 = vsyncpa [#allocation9], 1
    %5121 = vsyncpa [#allocation12], 1
    %5122 = vsyncpa [#allocation15], 1
    %5123 = vsyncpa [#allocation4], 1

</llo_original>
